<compile_context>
chip_gen: v6e
topology: v6e:2x2x1
jax: 0.10.0
libtpu: 0.0.40
codegen_flags: <defaults>
</compile_context>

<pallas_src>
import functools

import numpy as np

import jax
import jax.numpy as jnp
from jax import lax
from jax.experimental import pallas as pl
from jax.experimental.pallas import tpu as pltpu

# Set to jnp.bfloat16 on v6e/v7x to run the MXU at full rate and halve the
# 4 MiB d1-weight footprint (accumulation stays f32).  Default f32 to match
# the PyTorch reference numerics as closely as possible.
MATMUL_DTYPE = jnp.float32

CONV_CH = 32                # channels of every conv layer
KH = KW = 3                 # conv kernel size
TAPS = KH * KW              # 9
K_IM2COL = TAPS * CONV_CH   # 288


def _mm(a, b):
    if MATMUL_DTYPE != jnp.float32:
        a = a.astype(MATMUL_DTYPE)
        b = b.astype(MATMUL_DTYPE)
    return jnp.dot(a, b, preferred_element_type=jnp.float32)


# ---------------------------------------------------------------------------
# Kernel 1: fused conv stack (layer1 + layer2 + layer3 [+ residual] + ReLU)
# One grid step == one sample; everything stays in VMEM between layers.
# ---------------------------------------------------------------------------
def conv_stack_kernel(x_ref, w1_ref, b1_ref, w2_ref, b2_ref, w3_ref, b3_ref,
                      y3_ref, pad_ref, col_ref, *, H, W, residual):
    HW = H * W
    C = CONV_CH
    LEFT = 8  # interior starts at sublane column 8 -> tile-aligned interior stores

    # Zero the padded-activation scratch once per sample.  The 1-pixel halo
    # (rows 0 / H+1, cols LEFT-1 / LEFT+W) is never written afterwards, so it
    # stays zero and implements the 'same' padding of all three convs.
    pad_ref[...] = jnp.zeros_like(pad_ref)

    def conv(w_ref, b_ref, relu):
        # Build the im2col matrix [HW, 9*C] in VMEM.  The kw shift hits the
        # sublane axis (relayout), so it is done once per kw and reused for
        # the 3 kh taps (leading-dim slices are free).
        for kw in range(KW):
            plane = pad_ref[:, LEFT - 1 + kw:LEFT - 1 + kw + W, :]   # (H+2, W, C)
            for kh in range(KH):
                t = kh * KW + kw
                col_ref[:, t * C:(t + 1) * C] = plane[kh:kh + H].reshape(HW, C)
        # One K=288 MXU matmul per layer (instead of 9 small K<=32 matmuls).
        acc = _mm(col_ref[...], w_ref[...]) + b_ref[...]
        if relu:
            acc = jnp.maximum(acc, 0.0)
        return acc                                                    # (HW, C)

    def write_interior(act):
        pad_ref[1:H + 1, LEFT:LEFT + W, :] = act.reshape(H, W, C)

    # layer1: the single real input channel goes into channel 0 of the scratch;
    # channels 1..31 stay zero and the matching weight rows are zero, so the
    # same K=288 matmul path is reused (no special Cin=1 code path, and no
    # host-side zero padding of x).
    pad_ref[1:H + 1, LEFT:LEFT + W, 0:1] = x_ref[0]
    y1 = conv(w1_ref, b1_ref, relu=True)

    write_interior(y1)
    y2 = conv(w2_ref, b2_ref, relu=True)

    write_interior(y2)
    y3 = conv(w3_ref, b3_ref, relu=False)          # layer3: activation='none'

    if residual:
        y3 = y1 + y3
    y3_ref[0] = jnp.maximum(y3, 0.0)


def conv_stack(x_nhwc1, w1c, b1, w2c, b2, w3c, b3, *, residual):
    N, H, W, _ = x_nhwc1.shape
    HW = H * W
    C = CONV_CH

    wspec = pl.BlockSpec((K_IM2COL, C), lambda b: (0, 0))   # resident across grid
    bspec = pl.BlockSpec((1, C), lambda b: (0, 0))

    flops = N * 3 * 2 * HW * K_IM2COL * C
    bytes_accessed = 4 * (x_nhwc1.size + 3 * K_IM2COL * C + 3 * C + N * HW * C)

    return pl.pallas_call(
        functools.partial(conv_stack_kernel, H=H, W=W, residual=residual),
        out_shape=jax.ShapeDtypeStruct((N, HW, C), jnp.float32),
        grid_spec=pltpu.PrefetchScalarGridSpec(
            num_scalar_prefetch=0,
            grid=(N,),
            in_specs=[
                pl.BlockSpec((1, H, W, 1), lambda b: (b, 0, 0, 0)),
                wspec, bspec, wspec, bspec, wspec, bspec,
            ],
            out_specs=pl.BlockSpec((1, HW, C), lambda b: (b, 0, 0)),
            scratch_shapes=[
                pltpu.VMEM((H + 2, W + 16, C), jnp.float32),  # zero-padded activation
                pltpu.VMEM((HW, K_IM2COL), jnp.float32),      # im2col buffer
            ],
        ),
        compiler_params=pltpu.CompilerParams(
            dimension_semantics=("parallel",)),
        cost_estimate=pl.CostEstimate(
            flops=flops, transcendentals=0, bytes_accessed=bytes_accessed),
    )(x_nhwc1, w1c, b1, w2c, b2, w3c, b3)


# ---------------------------------------------------------------------------
# Kernel 2: fused MLP head (Linear(32*H*W,128)+ReLU -> Linear(128,10 padded to 128))
# Grid-less: the 4 MiB wd1 DMA dominates, so it is loaded exactly once.
# ---------------------------------------------------------------------------
def mlp_kernel(flat_ref, wd1_ref, bd1_ref, wd2_ref, bd2_ref, o_ref):
    h = jnp.maximum(_mm(flat_ref[...], wd1_ref[...]) + bd1_ref[...], 0.0)
    o_ref[...] = _mm(h, wd2_ref[...]) + bd2_ref[...]


def mlp_head(flat, wd1, bd1, wd2p, bd2p):
    N, K1 = flat.shape
    HID = wd1.shape[-1]       # 128
    NOUT = wd2p.shape[-1]     # 128 (zero-padded from 10 -> lane-dense store)

    vmem = pl.BlockSpec(memory_space=pltpu.MemorySpace.VMEM)
    flops = 2 * N * K1 * HID + 2 * N * HID * NOUT
    bytes_accessed = 4 * (flat.size + wd1.size + bd1.size + wd2p.size +
                          bd2p.size + N * NOUT)

    return pl.pallas_call(
        mlp_kernel,
        out_shape=jax.ShapeDtypeStruct((N, NOUT), jnp.float32),
        in_specs=[vmem, vmem, vmem, vmem, vmem],
        out_specs=vmem,
        cost_estimate=pl.CostEstimate(
            flops=flops, transcendentals=0, bytes_accessed=bytes_accessed),
    )(flat, wd1, bd1, wd2p, bd2p)


# ---------------------------------------------------------------------------
# Parameter handling
# ---------------------------------------------------------------------------
def init_torch_params(key, H, W):
    """Random parameters in the exact layouts the nn.Module would hold them."""
    ks = jax.random.split(key, 10)
    s = 0.05
    return {
        "conv1_w": jax.random.normal(ks[0], (32, 1, 3, 3), jnp.float32) * s,
        "conv1_b": jax.random.normal(ks[1], (32,), jnp.float32) * s,
        "conv2_w": jax.random.normal(ks[2], (32, 32, 3, 3), jnp.float32) * s,
        "conv2_b": jax.random.normal(ks[3], (32,), jnp.float32) * s,
        "conv3_w": jax.random.normal(ks[4], (32, 32, 3, 3), jnp.float32) * s,
        "conv3_b": jax.random.normal(ks[5], (32,), jnp.float32) * s,
        "d1_w": jax.random.normal(ks[6], (128, 32 * H * W), jnp.float32) * s,
        "d1_b": jax.random.normal(ks[7], (128,), jnp.float32) * s,
        "d2_w": jax.random.normal(ks[8], (10, 128), jnp.float32) * s,
        "d2_b": jax.random.normal(ks[9], (10,), jnp.float32) * s,
    }


def prepare_params(tp, H, W):
    """One-time (offline) repack of PyTorch-layout weights into kernel layout."""
    def conv_to_im2col(w):                        # [Cout, Cin, 3, 3] -> [9*32, Cout]
        cout, cin = w.shape[0], w.shape[1]
        w = jnp.transpose(w, (2, 3, 1, 0))        # [kh, kw, cin, cout]
        if cin < CONV_CH:                         # layer1: zero-pad Cin 1 -> 32
            w = jnp.pad(w, ((0, 0), (0, 0), (0, CONV_CH - cin), (0, 0)))
        return w.reshape(TAPS * CONV_CH, cout)

    # d1 weight: permute rows from NCHW-flatten order to NHWC-flatten order so
    # the kernel-side flatten is a free reshape (kills the (0,3,1,2) transpose).
    wd1 = tp["d1_w"].reshape(128, CONV_CH, H, W)
    wd1 = jnp.transpose(wd1, (2, 3, 1, 0)).reshape(H * W * CONV_CH, 128)

    # d2: transpose to [in, out] and zero-pad the 10 outputs to 128 lanes.
    wd2 = jnp.pad(jnp.transpose(tp["d2_w"]), ((0, 0), (0, 128 - 10)))
    bd2 = jnp.pad(tp["d2_b"], (0, 128 - 10)).reshape(1, 128)

    return {
        "w1c": conv_to_im2col(tp["conv1_w"]), "b1": tp["conv1_b"].reshape(1, CONV_CH),
        "w2c": conv_to_im2col(tp["conv2_w"]), "b2": tp["conv2_b"].reshape(1, CONV_CH),
        "w3c": conv_to_im2col(tp["conv3_w"]), "b3": tp["conv3_b"].reshape(1, CONV_CH),
        "wd1": wd1, "bd1": tp["d1_b"].reshape(1, 128),
        "wd2": wd2, "bd2": bd2,
    }


# ---------------------------------------------------------------------------
# Forward
# ---------------------------------------------------------------------------
@functools.partial(jax.jit, static_argnames=("fwd_method",))
def my_model_forward(params, x_nchw, fwd_method="vanilla"):
    if fwd_method not in ("vanilla", "residual"):
        raise ValueError(fwd_method)
    N, C, H, W = x_nchw.shape
    assert C == 1
    # NCHW with C==1 -> NHWC is a pure metadata reshape (no transpose / copy).
    x = x_nchw.reshape(N, H, W, 1).astype(jnp.float32)

    y3 = conv_stack(x, params["w1c"], params["b1"], params["w2c"], params["b2"],
                    params["w3c"], params["b3"],
                    residual=(fwd_method == "residual"))

    # nn.Flatten equivalent: wd1's rows were pre-permuted to NHWC order, so the
    # flatten is a free row-major reshape of the [N, H*W, 32] conv output.
    flat = y3.reshape(N, H * W * CONV_CH)

    out_padded = mlp_head(flat, params["wd1"], params["bd1"],
                          params["wd2"], params["bd2"])
    return out_padded[:, :10]


# ---------------------------------------------------------------------------
# Pure-JAX reference that mirrors the PyTorch module exactly (for validation)
# ---------------------------------------------------------------------------
def torch_reference(tp, x_nchw, fwd_method):
    dn = ("NCHW", "OIHW", "NCHW")

    def conv(x, w, b):
        y = lax.conv_general_dilated(x, w, (1, 1), ((1, 1), (1, 1)),
                                     dimension_numbers=dn)
        return y + b.reshape(1, -1, 1, 1)

    y1 = jax.nn.relu(conv(x_nchw, tp["conv1_w"], tp["conv1_b"]))
    y2 = jax.nn.relu(conv(y1, tp["conv2_w"], tp["conv2_b"]))
    y3 = conv(y2, tp["conv3_w"], tp["conv3_b"])
    y3 = jax.nn.relu(y1 + y3 if fwd_method == "residual" else y3)
    flat = y3.reshape(y3.shape[0], -1)               # NCHW flatten (nn.Flatten)
    d1 = jax.nn.relu(flat @ tp["d1_w"].T + tp["d1_b"])
    return d1 @ tp["d2_w"].T + tp["d2_b"]


if __name__ == "__main__":
    key = jax.random.PRNGKey(0)
    k_x, k_p = jax.random.split(key)

    N, C, H, W = 2, 1, 16, 16                        # module forces in_channels=1
    x = jax.random.normal(k_x, (N, C, H, W), jnp.float32)

    torch_params = init_torch_params(k_p, H, W)
    params = prepare_params(torch_params, H, W)

    out = my_model_forward(params, x, fwd_method="vanilla")
    out = jax.block_until_ready(out)
    assert out.shape == (N, 10), out.shape
    ref = torch_reference(torch_params, x, "vanilla")
    np.testing.assert_allclose(np.asarray(out), np.asarray(ref),
                               rtol=5e-2, atol=5e-3)

    out_res = jax.block_until_ready(
        my_model_forward(params, x, fwd_method="residual"))
    ref_res = torch_reference(torch_params, x, "residual")
    np.testing.assert_allclose(np.asarray(out_res), np.asarray(ref_res),
                               rtol=5e-2, atol=5e-3)

    print("KERNEL_OK")
</pallas_src>

<mosaic_0001>
module attributes {stable_mosaic.version = 11 : i64} {
  func.func @mlp_kernel(%arg0: memref<2x8192xf32, #tpu.memory_space<vmem>>, %arg1: memref<8192x128xf32, #tpu.memory_space<vmem>>, %arg2: memref<1x128xf32, #tpu.memory_space<vmem>>, %arg3: memref<128x128xf32, #tpu.memory_space<vmem>>, %arg4: memref<1x128xf32, #tpu.memory_space<vmem>>, %arg5: memref<2x128xf32, #tpu.memory_space<vmem>>) attributes {dimension_semantics = [], scalar_prefetch = 0 : i64, scratch_operands = 0 : i64, tpu.core_type = #tpu.core_type<tc>} {
    %c0 = arith.constant 0 : index
    %c0_0 = arith.constant 0 : index
    %0 = vector.load %arg0[%c0, %c0_0] : memref<2x8192xf32, #tpu.memory_space<vmem>>, vector<2x8192xf32>
    %c0_1 = arith.constant 0 : index
    %c0_2 = arith.constant 0 : index
    %1 = vector.load %arg1[%c0_1, %c0_2] : memref<8192x128xf32, #tpu.memory_space<vmem>>, vector<8192x128xf32>
    %cst = arith.constant dense<0.000000e+00> : vector<2x128xf32>
    %2 = tpu.matmul %0, %1, %cst {dimension_numbers = #tpu.dot_dimension_numbers<[1], [0], [0], [1], [0, 0, 1, 1], [], []>} : vector<2x8192xf32>, vector<8192x128xf32>, vector<2x128xf32> -> vector<2x128xf32>
    %c0_3 = arith.constant 0 : index
    %c0_4 = arith.constant 0 : index
    %3 = vector.load %arg2[%c0_3, %c0_4] : memref<1x128xf32, #tpu.memory_space<vmem>>, vector<1x128xf32>
    %4 = vector.broadcast %3 : vector<1x128xf32> to vector<2x128xf32>
    %5 = arith.addf %2, %4 : vector<2x128xf32>
    %cst_5 = arith.constant 0.000000e+00 : f32
    %6 = vector.broadcast %cst_5 : f32 to vector<2x128xf32>
    %7 = arith.maximumf %5, %6 : vector<2x128xf32>
    %c0_6 = arith.constant 0 : index
    %c0_7 = arith.constant 0 : index
    %8 = vector.load %arg3[%c0_6, %c0_7] : memref<128x128xf32, #tpu.memory_space<vmem>>, vector<128x128xf32>
    %cst_8 = arith.constant dense<0.000000e+00> : vector<2x128xf32>
    %9 = tpu.matmul %7, %8, %cst_8 {dimension_numbers = #tpu.dot_dimension_numbers<[1], [0], [0], [1], [0, 0, 1, 1], [], []>} : vector<2x128xf32>, vector<128x128xf32>, vector<2x128xf32> -> vector<2x128xf32>
    %c0_9 = arith.constant 0 : index
    %c0_10 = arith.constant 0 : index
    %10 = vector.load %arg4[%c0_9, %c0_10] : memref<1x128xf32, #tpu.memory_space<vmem>>, vector<1x128xf32>
    %11 = vector.broadcast %10 : vector<1x128xf32> to vector<2x128xf32>
    %12 = arith.addf %9, %11 : vector<2x128xf32>
    %c0_11 = arith.constant 0 : index
    %c0_12 = arith.constant 0 : index
    %13 = vector.load %arg5[%c0_11, %c0_12] : memref<2x128xf32, #tpu.memory_space<vmem>>, vector<2x128xf32>
    tpu.vector_store %arg5[%c0_11, %c0_12], %12 {strides = array<i32>} : memref<2x128xf32, #tpu.memory_space<vmem>>, vector<2x128xf32>,
    return
  }
}

module attributes {stable_mosaic.version = 11 : i64} {
  func.func @conv_stack_kernel(%arg0: i32, %arg1: memref<1x16x16x1xf32, #tpu.memory_space<vmem>>, %arg2: memref<288x32xf32, #tpu.memory_space<vmem>>, %arg3: memref<1x32xf32, #tpu.memory_space<vmem>>, %arg4: memref<288x32xf32, #tpu.memory_space<vmem>>, %arg5: memref<1x32xf32, #tpu.memory_space<vmem>>, %arg6: memref<288x32xf32, #tpu.memory_space<vmem>>, %arg7: memref<1x32xf32, #tpu.memory_space<vmem>>, %arg8: memref<1x256x32xf32, #tpu.memory_space<vmem>>, %arg9: memref<18x32x32xf32, #tpu.memory_space<vmem>>, %arg10: memref<256x288xf32, #tpu.memory_space<vmem>>) attributes {dimension_semantics = [#tpu.dimension_semantics<parallel>], iteration_bounds = array<i64: 2>, scalar_prefetch = 0 : i64, scratch_operands = 2 : i64, tpu.core_type = #tpu.core_type<tc>, window_params = [{transform_indices = @transform_0, window_bounds = array<i64: 1, 16, 16, 1>}, {pipeline_mode = #tpu.pipeline_mode<synchronous>, transform_indices = @transform_1, window_bounds = array<i64: 288, 32>}, {pipeline_mode = #tpu.pipeline_mode<synchronous>, transform_indices = @transform_2, window_bounds = array<i64: 1, 32>}, {pipeline_mode = #tpu.pipeline_mode<synchronous>, transform_indices = @transform_3, window_bounds = array<i64: 288, 32>}, {pipeline_mode = #tpu.pipeline_mode<synchronous>, transform_indices = @transform_4, window_bounds = array<i64: 1, 32>}, {pipeline_mode = #tpu.pipeline_mode<synchronous>, transform_indices = @transform_5, window_bounds = array<i64: 288, 32>}, {pipeline_mode = #tpu.pipeline_mode<synchronous>, transform_indices = @transform_6, window_bounds = array<i64: 1, 32>}, {transform_indices = @transform_7, window_bounds = array<i64: 1, 256, 32>}]} {
    %cst = arith.constant 0.000000e+00 : f32
    %0 = vector.broadcast %cst : f32 to vector<18x32x32xf32>
    %c0 = arith.constant 0 : index
    %c0_0 = arith.constant 0 : index
    %c0_1 = arith.constant 0 : index
    %1 = vector.load %arg9[%c0, %c0_0, %c0_1] : memref<18x32x32xf32, #tpu.memory_space<vmem>>, vector<18x32x32xf32>
    tpu.vector_store %arg9[%c0, %c0_0, %c0_1], %0 {strides = array<i32>} : memref<18x32x32xf32, #tpu.memory_space<vmem>>, vector<18x32x32xf32>,
    %c0_2 = arith.constant 0 : index
    %c0_3 = arith.constant 0 : index
    %c0_4 = arith.constant 0 : index
    %c0_5 = arith.constant 0 : index
    %2 = vector.load %arg1[%c0_2, %c0_3, %c0_4, %c0_5] : memref<1x16x16x1xf32, #tpu.memory_space<vmem>>, vector<1x16x16x1xf32>
    %3 = vector.shape_cast %2 : vector<1x16x16x1xf32> to vector<16x16x1xf32>
    %c1 = arith.constant 1 : index
    %c8 = arith.constant 8 : index
    %c0_6 = arith.constant 0 : index
    %4 = vector.load %arg9[%c1, %c8, %c0_6] : memref<18x32x32xf32, #tpu.memory_space<vmem>>, vector<16x16x1xf32>
    tpu.vector_store %arg9[%c1, %c8, %c0_6], %3 {strides = array<i32>} : memref<18x32x32xf32, #tpu.memory_space<vmem>>, vector<16x16x1xf32>,
    %c0_7 = arith.constant 0 : index
    %c7 = arith.constant 7 : index
    %c0_8 = arith.constant 0 : index
    %5 = vector.load %arg9[%c0_7, %c7, %c0_8] : memref<18x32x32xf32, #tpu.memory_space<vmem>>, vector<18x16x32xf32>
    %6 = vector.extract_strided_slice %5 {offsets = [0, 0, 0], sizes = [16, 16, 32], strides = [1, 1, 1]} : vector<18x16x32xf32> to vector<16x16x32xf32>
    %7 = vector.shape_cast %6 : vector<16x16x32xf32> to vector<256x32xf32>
    %c0_9 = arith.constant 0 : index
    %c0_10 = arith.constant 0 : index
    %8 = vector.load %arg10[%c0_9, %c0_10] : memref<256x288xf32, #tpu.memory_space<vmem>>, vector<256x32xf32>
    tpu.vector_store %arg10[%c0_9, %c0_10], %7 {strides = array<i32>} : memref<256x288xf32, #tpu.memory_space<vmem>>, vector<256x32xf32>,
    %9 = vector.extract_strided_slice %5 {offsets = [1, 0, 0], sizes = [16, 16, 32], strides = [1, 1, 1]} : vector<18x16x32xf32> to vector<16x16x32xf32>
    %10 = vector.shape_cast %9 : vector<16x16x32xf32> to vector<256x32xf32>
    %c0_11 = arith.constant 0 : index
    %c96 = arith.constant 96 : index
    %11 = vector.load %arg10[%c0_11, %c96] : memref<256x288xf32, #tpu.memory_space<vmem>>, vector<256x32xf32>
    tpu.vector_store %arg10[%c0_11, %c96], %10 {strides = array<i32>} : memref<256x288xf32, #tpu.memory_space<vmem>>, vector<256x32xf32>,
    %12 = vector.extract_strided_slice %5 {offsets = [2, 0, 0], sizes = [16, 16, 32], strides = [1, 1, 1]} : vector<18x16x32xf32> to vector<16x16x32xf32>
    %13 = vector.shape_cast %12 : vector<16x16x32xf32> to vector<256x32xf32>
    %c0_12 = arith.constant 0 : index
    %c192 = arith.constant 192 : index
    %14 = vector.load %arg10[%c0_12, %c192] : memref<256x288xf32, #tpu.memory_space<vmem>>, vector<256x32xf32>
    tpu.vector_store %arg10[%c0_12, %c192], %13 {strides = array<i32>} : memref<256x288xf32, #tpu.memory_space<vmem>>, vector<256x32xf32>,
    %c0_13 = arith.constant 0 : index
    %c8_14 = arith.constant 8 : index
    %c0_15 = arith.constant 0 : index
    %15 = vector.load %arg9[%c0_13, %c8_14, %c0_15] : memref<18x32x32xf32, #tpu.memory_space<vmem>>, vector<18x16x32xf32>
    %16 = vector.extract_strided_slice %15 {offsets = [0, 0, 0], sizes = [16, 16, 32], strides = [1, 1, 1]} : vector<18x16x32xf32> to vector<16x16x32xf32>
    %17 = vector.shape_cast %16 : vector<16x16x32xf32> to vector<256x32xf32>
    %c0_16 = arith.constant 0 : index
    %c32 = arith.constant 32 : index
    %18 = vector.load %arg10[%c0_16, %c32] : memref<256x288xf32, #tpu.memory_space<vmem>>, vector<256x32xf32>
    tpu.vector_store %arg10[%c0_16, %c32], %17 {strides = array<i32>} : memref<256x288xf32, #tpu.memory_space<vmem>>, vector<256x32xf32>,
    %19 = vector.extract_strided_slice %15 {offsets = [1, 0, 0], sizes = [16, 16, 32], strides = [1, 1, 1]} : vector<18x16x32xf32> to vector<16x16x32xf32>
    %20 = vector.shape_cast %19 : vector<16x16x32xf32> to vector<256x32xf32>
    %c0_17 = arith.constant 0 : index
    %c128 = arith.constant 128 : index
    %21 = vector.load %arg10[%c0_17, %c128] : memref<256x288xf32, #tpu.memory_space<vmem>>, vector<256x32xf32>
    tpu.vector_store %arg10[%c0_17, %c128], %20 {strides = array<i32>} : memref<256x288xf32, #tpu.memory_space<vmem>>, vector<256x32xf32>,
    %22 = vector.extract_strided_slice %15 {offsets = [2, 0, 0], sizes = [16, 16, 32], strides = [1, 1, 1]} : vector<18x16x32xf32> to vector<16x16x32xf32>
    %23 = vector.shape_cast %22 : vector<16x16x32xf32> to vector<256x32xf32>
    %c0_18 = arith.constant 0 : index
    %c224 = arith.constant 224 : index
    %24 = vector.load %arg10[%c0_18, %c224] : memref<256x288xf32, #tpu.memory_space<vmem>>, vector<256x32xf32>
    tpu.vector_store %arg10[%c0_18, %c224], %23 {strides = array<i32>} : memref<256x288xf32, #tpu.memory_space<vmem>>, vector<256x32xf32>,
    %c0_19 = arith.constant 0 : index
    %c9 = arith.constant 9 : index
    %c0_20 = arith.constant 0 : index
    %25 = vector.load %arg9[%c0_19, %c9, %c0_20] : memref<18x32x32xf32, #tpu.memory_space<vmem>>, vector<18x16x32xf32>
    %26 = vector.extract_strided_slice %25 {offsets = [0, 0, 0], sizes = [16, 16, 32], strides = [1, 1, 1]} : vector<18x16x32xf32> to vector<16x16x32xf32>
    %27 = vector.shape_cast %26 : vector<16x16x32xf32> to vector<256x32xf32>
    %c0_21 = arith.constant 0 : index
    %c64 = arith.constant 64 : index
    %28 = vector.load %arg10[%c0_21, %c64] : memref<256x288xf32, #tpu.memory_space<vmem>>, vector<256x32xf32>
    tpu.vector_store %arg10[%c0_21, %c64], %27 {strides = array<i32>} : memref<256x288xf32, #tpu.memory_space<vmem>>, vector<256x32xf32>,
    %29 = vector.extract_strided_slice %25 {offsets = [1, 0, 0], sizes = [16, 16, 32], strides = [1, 1, 1]} : vector<18x16x32xf32> to vector<16x16x32xf32>
    %30 = vector.shape_cast %29 : vector<16x16x32xf32> to vector<256x32xf32>
    %c0_22 = arith.constant 0 : index
    %c160 = arith.constant 160 : index
    %31 = vector.load %arg10[%c0_22, %c160] : memref<256x288xf32, #tpu.memory_space<vmem>>, vector<256x32xf32>
    tpu.vector_store %arg10[%c0_22, %c160], %30 {strides = array<i32>} : memref<256x288xf32, #tpu.memory_space<vmem>>, vector<256x32xf32>,
    %32 = vector.extract_strided_slice %25 {offsets = [2, 0, 0], sizes = [16, 16, 32], strides = [1, 1, 1]} : vector<18x16x32xf32> to vector<16x16x32xf32>
    %33 = vector.shape_cast %32 : vector<16x16x32xf32> to vector<256x32xf32>
    %c0_23 = arith.constant 0 : index
    %c256 = arith.constant 256 : index
    %34 = vector.load %arg10[%c0_23, %c256] : memref<256x288xf32, #tpu.memory_space<vmem>>, vector<256x32xf32>
    tpu.vector_store %arg10[%c0_23, %c256], %33 {strides = array<i32>} : memref<256x288xf32, #tpu.memory_space<vmem>>, vector<256x32xf32>,
    %c0_24 = arith.constant 0 : index
    %c0_25 = arith.constant 0 : index
    %35 = vector.load %arg10[%c0_24, %c0_25] : memref<256x288xf32, #tpu.memory_space<vmem>>, vector<256x288xf32>
    %c0_26 = arith.constant 0 : index
    %c0_27 = arith.constant 0 : index
    %36 = vector.load %arg2[%c0_26, %c0_27] : memref<288x32xf32, #tpu.memory_space<vmem>>, vector<288x32xf32>
    %cst_28 = arith.constant dense<0.000000e+00> : vector<256x32xf32>
    %37 = tpu.matmul %35, %36, %cst_28 {dimension_numbers = #tpu.dot_dimension_numbers<[1], [0], [0], [1], [0, 0, 1, 1], [], []>} : vector<256x288xf32>, vector<288x32xf32>, vector<256x32xf32> -> vector<256x32xf32>
    %c0_29 = arith.constant 0 : index
    %c0_30 = arith.constant 0 : index
    %38 = vector.load %arg3[%c0_29, %c0_30] : memref<1x32xf32, #tpu.memory_space<vmem>>, vector<1x32xf32>
    %39 = vector.broadcast %38 : vector<1x32xf32> to vector<256x32xf32>
    %40 = arith.addf %37, %39 : vector<256x32xf32>
    %cst_31 = arith.constant 0.000000e+00 : f32
    %41 = vector.broadcast %cst_31 : f32 to vector<256x32xf32>
    %42 = arith.maximumf %40, %41 : vector<256x32xf32>
    %43 = vector.shape_cast %42 : vector<256x32xf32> to vector<16x16x32xf32>
    %c1_32 = arith.constant 1 : index
    %c8_33 = arith.constant 8 : index
    %c0_34 = arith.constant 0 : index
    %44 = vector.load %arg9[%c1_32, %c8_33, %c0_34] : memref<18x32x32xf32, #tpu.memory_space<vmem>>, vector<16x16x32xf32>
    tpu.vector_store %arg9[%c1_32, %c8_33, %c0_34], %43 {strides = array<i32>} : memref<18x32x32xf32, #tpu.memory_space<vmem>>, vector<16x16x32xf32>,
    %c0_35 = arith.constant 0 : index
    %c7_36 = arith.constant 7 : index
    %c0_37 = arith.constant 0 : index
    %45 = vector.load %arg9[%c0_35, %c7_36, %c0_37] : memref<18x32x32xf32, #tpu.memory_space<vmem>>, vector<18x16x32xf32>
    %46 = vector.extract_strided_slice %45 {offsets = [0, 0, 0], sizes = [16, 16, 32], strides = [1, 1, 1]} : vector<18x16x32xf32> to vector<16x16x32xf32>
    %47 = vector.shape_cast %46 : vector<16x16x32xf32> to vector<256x32xf32>
    %c0_38 = arith.constant 0 : index
    %c0_39 = arith.constant 0 : index
    %48 = vector.load %arg10[%c0_38, %c0_39] : memref<256x288xf32, #tpu.memory_space<vmem>>, vector<256x32xf32>
    tpu.vector_store %arg10[%c0_38, %c0_39], %47 {strides = array<i32>} : memref<256x288xf32, #tpu.memory_space<vmem>>, vector<256x32xf32>,
    %49 = vector.extract_strided_slice %45 {offsets = [1, 0, 0], sizes = [16, 16, 32], strides = [1, 1, 1]} : vector<18x16x32xf32> to vector<16x16x32xf32>
    %50 = vector.shape_cast %49 : vector<16x16x32xf32> to vector<256x32xf32>
    %c0_40 = arith.constant 0 : index
    %c96_41 = arith.constant 96 : index
    %51 = vector.load %arg10[%c0_40, %c96_41] : memref<256x288xf32, #tpu.memory_space<vmem>>, vector<256x32xf32>
    tpu.vector_store %arg10[%c0_40, %c96_41], %50 {strides = array<i32>} : memref<256x288xf32, #tpu.memory_space<vmem>>, vector<256x32xf32>,
    %52 = vector.extract_strided_slice %45 {offsets = [2, 0, 0], sizes = [16, 16, 32], strides = [1, 1, 1]} : vector<18x16x32xf32> to vector<16x16x32xf32>
    %53 = vector.shape_cast %52 : vector<16x16x32xf32> to vector<256x32xf32>
    %c0_42 = arith.constant 0 : index
    %c192_43 = arith.constant 192 : index
    %54 = vector.load %arg10[%c0_42, %c192_43] : memref<256x288xf32, #tpu.memory_space<vmem>>, vector<256x32xf32>
    tpu.vector_store %arg10[%c0_42, %c192_43], %53 {strides = array<i32>} : memref<256x288xf32, #tpu.memory_space<vmem>>, vector<256x32xf32>,
    %c0_44 = arith.constant 0 : index
    %c8_45 = arith.constant 8 : index
    %c0_46 = arith.constant 0 : index
    %55 = vector.load %arg9[%c0_44, %c8_45, %c0_46] : memref<18x32x32xf32, #tpu.memory_space<vmem>>, vector<18x16x32xf32>
    %56 = vector.extract_strided_slice %55 {offsets = [0, 0, 0], sizes = [16, 16, 32], strides = [1, 1, 1]} : vector<18x16x32xf32> to vector<16x16x32xf32>
    %57 = vector.shape_cast %56 : vector<16x16x32xf32> to vector<256x32xf32>
    %c0_47 = arith.constant 0 : index
    %c32_48 = arith.constant 32 : index
    %58 = vector.load %arg10[%c0_47, %c32_48] : memref<256x288xf32, #tpu.memory_space<vmem>>, vector<256x32xf32>
    tpu.vector_store %arg10[%c0_47, %c32_48], %57 {strides = array<i32>} : memref<256x288xf32, #tpu.memory_space<vmem>>, vector<256x32xf32>,
    %59 = vector.extract_strided_slice %55 {offsets = [1, 0, 0], sizes = [16, 16, 32], strides = [1, 1, 1]} : vector<18x16x32xf32> to vector<16x16x32xf32>
    %60 = vector.shape_cast %59 : vector<16x16x32xf32> to vector<256x32xf32>
    %c0_49 = arith.constant 0 : index
    %c128_50 = arith.constant 128 : index
    %61 = vector.load %arg10[%c0_49, %c128_50] : memref<256x288xf32, #tpu.memory_space<vmem>>, vector<256x32xf32>
    tpu.vector_store %arg10[%c0_49, %c128_50], %60 {strides = array<i32>} : memref<256x288xf32, #tpu.memory_space<vmem>>, vector<256x32xf32>,
    %62 = vector.extract_strided_slice %55 {offsets = [2, 0, 0], sizes = [16, 16, 32], strides = [1, 1, 1]} : vector<18x16x32xf32> to vector<16x16x32xf32>
    %63 = vector.shape_cast %62 : vector<16x16x32xf32> to vector<256x32xf32>
    %c0_51 = arith.constant 0 : index
    %c224_52 = arith.constant 224 : index
    %64 = vector.load %arg10[%c0_51, %c224_52] : memref<256x288xf32, #tpu.memory_space<vmem>>, vector<256x32xf32>
    tpu.vector_store %arg10[%c0_51, %c224_52], %63 {strides = array<i32>} : memref<256x288xf32, #tpu.memory_space<vmem>>, vector<256x32xf32>,
    %c0_53 = arith.constant 0 : index
    %c9_54 = arith.constant 9 : index
    %c0_55 = arith.constant 0 : index
    %65 = vector.load %arg9[%c0_53, %c9_54, %c0_55] : memref<18x32x32xf32, #tpu.memory_space<vmem>>, vector<18x16x32xf32>
    %66 = vector.extract_strided_slice %65 {offsets = [0, 0, 0], sizes = [16, 16, 32], strides = [1, 1, 1]} : vector<18x16x32xf32> to vector<16x16x32xf32>
    %67 = vector.shape_cast %66 : vector<16x16x32xf32> to vector<256x32xf32>
    %c0_56 = arith.constant 0 : index
    %c64_57 = arith.constant 64 : index
    %68 = vector.load %arg10[%c0_56, %c64_57] : memref<256x288xf32, #tpu.memory_space<vmem>>, vector<256x32xf32>
    tpu.vector_store %arg10[%c0_56, %c64_57], %67 {strides = array<i32>} : memref<256x288xf32, #tpu.memory_space<vmem>>, vector<256x32xf32>,
    %69 = vector.extract_strided_slice %65 {offsets = [1, 0, 0], sizes = [16, 16, 32], strides = [1, 1, 1]} : vector<18x16x32xf32> to vector<16x16x32xf32>
    %70 = vector.shape_cast %69 : vector<16x16x32xf32> to vector<256x32xf32>
    %c0_58 = arith.constant 0 : index
    %c160_59 = arith.constant 160 : index
    %71 = vector.load %arg10[%c0_58, %c160_59] : memref<256x288xf32, #tpu.memory_space<vmem>>, vector<256x32xf32>
    tpu.vector_store %arg10[%c0_58, %c160_59], %70 {strides = array<i32>} : memref<256x288xf32, #tpu.memory_space<vmem>>, vector<256x32xf32>,
    %72 = vector.extract_strided_slice %65 {offsets = [2, 0, 0], sizes = [16, 16, 32], strides = [1, 1, 1]} : vector<18x16x32xf32> to vector<16x16x32xf32>
    %73 = vector.shape_cast %72 : vector<16x16x32xf32> to vector<256x32xf32>
    %c0_60 = arith.constant 0 : index
    %c256_61 = arith.constant 256 : index
    %74 = vector.load %arg10[%c0_60, %c256_61] : memref<256x288xf32, #tpu.memory_space<vmem>>, vector<256x32xf32>
    tpu.vector_store %arg10[%c0_60, %c256_61], %73 {strides = array<i32>} : memref<256x288xf32, #tpu.memory_space<vmem>>, vector<256x32xf32>,
    %c0_62 = arith.constant 0 : index
    %c0_63 = arith.constant 0 : index
    %75 = vector.load %arg10[%c0_62, %c0_63] : memref<256x288xf32, #tpu.memory_space<vmem>>, vector<256x288xf32>
    %c0_64 = arith.constant 0 : index
    %c0_65 = arith.constant 0 : index
    %76 = vector.load %arg4[%c0_64, %c0_65] : memref<288x32xf32, #tpu.memory_space<vmem>>, vector<288x32xf32>
    %cst_66 = arith.constant dense<0.000000e+00> : vector<256x32xf32>
    %77 = tpu.matmul %75, %76, %cst_66 {dimension_numbers = #tpu.dot_dimension_numbers<[1], [0], [0], [1], [0, 0, 1, 1], [], []>} : vector<256x288xf32>, vector<288x32xf32>, vector<256x32xf32> -> vector<256x32xf32>
    %c0_67 = arith.constant 0 : index
    %c0_68 = arith.constant 0 : index
    %78 = vector.load %arg5[%c0_67, %c0_68] : memref<1x32xf32, #tpu.memory_space<vmem>>, vector<1x32xf32>
    %79 = vector.broadcast %78 : vector<1x32xf32> to vector<256x32xf32>
    %80 = arith.addf %77, %79 : vector<256x32xf32>
    %cst_69 = arith.constant 0.000000e+00 : f32
    %81 = vector.broadcast %cst_69 : f32 to vector<256x32xf32>
    %82 = arith.maximumf %80, %81 : vector<256x32xf32>
    %83 = vector.shape_cast %82 : vector<256x32xf32> to vector<16x16x32xf32>
    %c1_70 = arith.constant 1 : index
    %c8_71 = arith.constant 8 : index
    %c0_72 = arith.constant 0 : index
    %84 = vector.load %arg9[%c1_70, %c8_71, %c0_72] : memref<18x32x32xf32, #tpu.memory_space<vmem>>, vector<16x16x32xf32>
    tpu.vector_store %arg9[%c1_70, %c8_71, %c0_72], %83 {strides = array<i32>} : memref<18x32x32xf32, #tpu.memory_space<vmem>>, vector<16x16x32xf32>,
    %c0_73 = arith.constant 0 : index
    %c7_74 = arith.constant 7 : index
    %c0_75 = arith.constant 0 : index
    %85 = vector.load %arg9[%c0_73, %c7_74, %c0_75] : memref<18x32x32xf32, #tpu.memory_space<vmem>>, vector<18x16x32xf32>
    %86 = vector.extract_strided_slice %85 {offsets = [0, 0, 0], sizes = [16, 16, 32], strides = [1, 1, 1]} : vector<18x16x32xf32> to vector<16x16x32xf32>
    %87 = vector.shape_cast %86 : vector<16x16x32xf32> to vector<256x32xf32>
    %c0_76 = arith.constant 0 : index
    %c0_77 = arith.constant 0 : index
    %88 = vector.load %arg10[%c0_76, %c0_77] : memref<256x288xf32, #tpu.memory_space<vmem>>, vector<256x32xf32>
    tpu.vector_store %arg10[%c0_76, %c0_77], %87 {strides = array<i32>} : memref<256x288xf32, #tpu.memory_space<vmem>>, vector<256x32xf32>,
    %89 = vector.extract_strided_slice %85 {offsets = [1, 0, 0], sizes = [16, 16, 32], strides = [1, 1, 1]} : vector<18x16x32xf32> to vector<16x16x32xf32>
    %90 = vector.shape_cast %89 : vector<16x16x32xf32> to vector<256x32xf32>
    %c0_78 = arith.constant 0 : index
    %c96_79 = arith.constant 96 : index
    %91 = vector.load %arg10[%c0_78, %c96_79] : memref<256x288xf32, #tpu.memory_space<vmem>>, vector<256x32xf32>
    tpu.vector_store %arg10[%c0_78, %c96_79], %90 {strides = array<i32>} : memref<256x288xf32, #tpu.memory_space<vmem>>, vector<256x32xf32>,
    %92 = vector.extract_strided_slice %85 {offsets = [2, 0, 0], sizes = [16, 16, 32], strides = [1, 1, 1]} : vector<18x16x32xf32> to vector<16x16x32xf32>
    %93 = vector.shape_cast %92 : vector<16x16x32xf32> to vector<256x32xf32>
    %c0_80 = arith.constant 0 : index
    %c192_81 = arith.constant 192 : index
    %94 = vector.load %arg10[%c0_80, %c192_81] : memref<256x288xf32, #tpu.memory_space<vmem>>, vector<256x32xf32>
    tpu.vector_store %arg10[%c0_80, %c192_81], %93 {strides = array<i32>} : memref<256x288xf32, #tpu.memory_space<vmem>>, vector<256x32xf32>,
    %c0_82 = arith.constant 0 : index
    %c8_83 = arith.constant 8 : index
    %c0_84 = arith.constant 0 : index
    %95 = vector.load %arg9[%c0_82, %c8_83, %c0_84] : memref<18x32x32xf32, #tpu.memory_space<vmem>>, vector<18x16x32xf32>
    %96 = vector.extract_strided_slice %95 {offsets = [0, 0, 0], sizes = [16, 16, 32], strides = [1, 1, 1]} : vector<18x16x32xf32> to vector<16x16x32xf32>
    %97 = vector.shape_cast %96 : vector<16x16x32xf32> to vector<256x32xf32>
    %c0_85 = arith.constant 0 : index
    %c32_86 = arith.constant 32 : index
    %98 = vector.load %arg10[%c0_85, %c32_86] : memref<256x288xf32, #tpu.memory_space<vmem>>, vector<256x32xf32>
    tpu.vector_store %arg10[%c0_85, %c32_86], %97 {strides = array<i32>} : memref<256x288xf32, #tpu.memory_space<vmem>>, vector<256x32xf32>,
    %99 = vector.extract_strided_slice %95 {offsets = [1, 0, 0], sizes = [16, 16, 32], strides = [1, 1, 1]} : vector<18x16x32xf32> to vector<16x16x32xf32>
    %100 = vector.shape_cast %99 : vector<16x16x32xf32> to vector<256x32xf32>
    %c0_87 = arith.constant 0 : index
    %c128_88 = arith.constant 128 : index
    %101 = vector.load %arg10[%c0_87, %c128_88] : memref<256x288xf32, #tpu.memory_space<vmem>>, vector<256x32xf32>
    tpu.vector_store %arg10[%c0_87, %c128_88], %100 {strides = array<i32>} : memref<256x288xf32, #tpu.memory_space<vmem>>, vector<256x32xf32>,
    %102 = vector.extract_strided_slice %95 {offsets = [2, 0, 0], sizes = [16, 16, 32], strides = [1, 1, 1]} : vector<18x16x32xf32> to vector<16x16x32xf32>
    %103 = vector.shape_cast %102 : vector<16x16x32xf32> to vector<256x32xf32>
    %c0_89 = arith.constant 0 : index
    %c224_90 = arith.constant 224 : index
    %104 = vector.load %arg10[%c0_89, %c224_90] : memref<256x288xf32, #tpu.memory_space<vmem>>, vector<256x32xf32>
    tpu.vector_store %arg10[%c0_89, %c224_90], %103 {strides = array<i32>} : memref<256x288xf32, #tpu.memory_space<vmem>>, vector<256x32xf32>,
    %c0_91 = arith.constant 0 : index
    %c9_92 = arith.constant 9 : index
    %c0_93 = arith.constant 0 : index
    %105 = vector.load %arg9[%c0_91, %c9_92, %c0_93] : memref<18x32x32xf32, #tpu.memory_space<vmem>>, vector<18x16x32xf32>
    %106 = vector.extract_strided_slice %105 {offsets = [0, 0, 0], sizes = [16, 16, 32], strides = [1, 1, 1]} : vector<18x16x32xf32> to vector<16x16x32xf32>
    %107 = vector.shape_cast %106 : vector<16x16x32xf32> to vector<256x32xf32>
    %c0_94 = arith.constant 0 : index
    %c64_95 = arith.constant 64 : index
    %108 = vector.load %arg10[%c0_94, %c64_95] : memref<256x288xf32, #tpu.memory_space<vmem>>, vector<256x32xf32>
    tpu.vector_store %arg10[%c0_94, %c64_95], %107 {strides = array<i32>} : memref<256x288xf32, #tpu.memory_space<vmem>>, vector<256x32xf32>,
    %109 = vector.extract_strided_slice %105 {offsets = [1, 0, 0], sizes = [16, 16, 32], strides = [1, 1, 1]} : vector<18x16x32xf32> to vector<16x16x32xf32>
    %110 = vector.shape_cast %109 : vector<16x16x32xf32> to vector<256x32xf32>
    %c0_96 = arith.constant 0 : index
    %c160_97 = arith.constant 160 : index
    %111 = vector.load %arg10[%c0_96, %c160_97] : memref<256x288xf32, #tpu.memory_space<vmem>>, vector<256x32xf32>
    tpu.vector_store %arg10[%c0_96, %c160_97], %110 {strides = array<i32>} : memref<256x288xf32, #tpu.memory_space<vmem>>, vector<256x32xf32>,
    %112 = vector.extract_strided_slice %105 {offsets = [2, 0, 0], sizes = [16, 16, 32], strides = [1, 1, 1]} : vector<18x16x32xf32> to vector<16x16x32xf32>
    %113 = vector.shape_cast %112 : vector<16x16x32xf32> to vector<256x32xf32>
    %c0_98 = arith.constant 0 : index
    %c256_99 = arith.constant 256 : index
    %114 = vector.load %arg10[%c0_98, %c256_99] : memref<256x288xf32, #tpu.memory_space<vmem>>, vector<256x32xf32>
    tpu.vector_store %arg10[%c0_98, %c256_99], %113 {strides = array<i32>} : memref<256x288xf32, #tpu.memory_space<vmem>>, vector<256x32xf32>,
    %c0_100 = arith.constant 0 : index
    %c0_101 = arith.constant 0 : index
    %115 = vector.load %arg10[%c0_100, %c0_101] : memref<256x288xf32, #tpu.memory_space<vmem>>, vector<256x288xf32>
    %c0_102 = arith.constant 0 : index
    %c0_103 = arith.constant 0 : index
    %116 = vector.load %arg6[%c0_102, %c0_103] : memref<288x32xf32, #tpu.memory_space<vmem>>, vector<288x32xf32>
    %cst_104 = arith.constant dense<0.000000e+00> : vector<256x32xf32>
    %117 = tpu.matmul %115, %116, %cst_104 {dimension_numbers = #tpu.dot_dimension_numbers<[1], [0], [0], [1], [0, 0, 1, 1], [], []>} : vector<256x288xf32>, vector<288x32xf32>, vector<256x32xf32> -> vector<256x32xf32>
    %c0_105 = arith.constant 0 : index
    %c0_106 = arith.constant 0 : index
    %118 = vector.load %arg7[%c0_105, %c0_106] : memref<1x32xf32, #tpu.memory_space<vmem>>, vector<1x32xf32>
    %119 = vector.broadcast %118 : vector<1x32xf32> to vector<256x32xf32>
    %120 = arith.addf %117, %119 : vector<256x32xf32>
    %cst_107 = arith.constant 0.000000e+00 : f32
    %121 = vector.broadcast %cst_107 : f32 to vector<256x32xf32>
    %122 = arith.maximumf %120, %121 : vector<256x32xf32>
    %c0_108 = arith.constant 0 : index
    %c0_109 = arith.constant 0 : index
    %c0_110 = arith.constant 0 : index
    %123 = vector.load %arg8[%c0_108, %c0_109, %c0_110] : memref<1x256x32xf32, #tpu.memory_space<vmem>>, vector<1x256x32xf32>
    %124 = vector.shape_cast %123 : vector<1x256x32xf32> to vector<256x32xf32>
    %125 = vector.shape_cast %122 : vector<256x32xf32> to vector<1x256x32xf32>
    tpu.vector_store %arg8[%c0_108, %c0_109, %c0_110], %125 {strides = array<i32>} : memref<1x256x32xf32, #tpu.memory_space<vmem>>, vector<1x256x32xf32>,
    return
  }
  func.func @transform_0(%arg0: i32) -> (i32, i32, i32, i32) {
    %c0_i32 = arith.constant 0 : i32
    %c0_i32_0 = arith.constant 0 : i32
    %c0_i32_1 = arith.constant 0 : i32
    %c0_i32_2 = arith.constant 0 : i32
    return %arg0, %c0_i32, %c0_i32_0, %c0_i32_1 : i32, i32, i32, i32
  }
  func.func @transform_1(%arg0: i32) -> (i32, i32) {
    %c0_i32 = arith.constant 0 : i32
    %c0_i32_0 = arith.constant 0 : i32
    %c0_i32_1 = arith.constant 0 : i32
    return %c0_i32, %c0_i32_0 : i32, i32
  }
  func.func @transform_2(%arg0: i32) -> (i32, i32) {
    %c0_i32 = arith.constant 0 : i32
    %c0_i32_0 = arith.constant 0 : i32
    %c0_i32_1 = arith.constant 0 : i32
    return %c0_i32, %c0_i32_0 : i32, i32
  }
  func.func @transform_3(%arg0: i32) -> (i32, i32) {
    %c0_i32 = arith.constant 0 : i32
    %c0_i32_0 = arith.constant 0 : i32
    %c0_i32_1 = arith.constant 0 : i32
    return %c0_i32, %c0_i32_0 : i32, i32
  }
  func.func @transform_4(%arg0: i32) -> (i32, i32) {
    %c0_i32 = arith.constant 0 : i32
    %c0_i32_0 = arith.constant 0 : i32
    %c0_i32_1 = arith.constant 0 : i32
    return %c0_i32, %c0_i32_0 : i32, i32
  }
  func.func @transform_5(%arg0: i32) -> (i32, i32) {
    %c0_i32 = arith.constant 0 : i32
    %c0_i32_0 = arith.constant 0 : i32
    %c0_i32_1 = arith.constant 0 : i32
    return %c0_i32, %c0_i32_0 : i32, i32
  }
  func.func @transform_6(%arg0: i32) -> (i32, i32) {
    %c0_i32 = arith.constant 0 : i32
    %c0_i32_0 = arith.constant 0 : i32
    %c0_i32_1 = arith.constant 0 : i32
    return %c0_i32, %c0_i32_0 : i32, i32
  }
  func.func @transform_7(%arg0: i32) -> (i32, i32, i32) {
    %c0_i32 = arith.constant 0 : i32
    %c0_i32_0 = arith.constant 0 : i32
    %c0_i32_1 = arith.constant 0 : i32
    return %arg0, %c0_i32, %c0_i32_0 : i32, i32, i32
  }
}

</mosaic_0001>

<llo_original>
// kernel: my_model_forward.3
$region0: #{my_model_forward.3}
  #allocation0 [shape = 'u32[]', space=smem, size = 0x4, offset = 0x4, fixed_abs, tag = 'smem constant byte address 0x4 - core index']
  #allocation1 [shape = 'u32[144,128]{1,0:T(1,128)}', space=vmem, size = 0x12000, scoped, tag = 'internal scratch']
  %s0 = inlined_call_operand.vmem [shape: f32[2,8192], index: 0, kind: input, shape index: {}]
  %s1 = inlined_call_operand.hbm [shape: f32[8192,128], index: 1, kind: input, shape index: {}]
  %s2 = inlined_call_operand.hbm [shape: f32[1,128], index: 2, kind: input, shape index: {}]
  %s3 = inlined_call_operand.hbm [shape: f32[128,128], index: 3, kind: input, shape index: {}]
  %s4 = inlined_call_operand.hbm [shape: f32[1,128], index: 4, kind: input, shape index: {}]
  %s5 = inlined_call_operand.hbm [shape: f32[2,128], index: 5, kind: output, shape index: {}]
  %s6 = sld [smem:[#allocation0]]
  $region46: #{my_model_forward.3} parent=0
    _
  %s8 = ssub.s32 1, %s6
  %s9 = scalar_select 0, %s8, %s6
  $region1: #{my_model_forward.3} parent=0
    #allocation2 [shape = 'u8[4194304]{0}', space=vmem, size = 0x400000, scoped, tag = 'input window, operand 1, single buffered']
    #allocation3 [shape = 's32[1]{0}', space=sflag, size = 0x4, scoped, tag = 'scoped memory for my_model_forward.3']
    #allocation4 [shape = 's32[1]{0}', space=sflag, size = 0x4, scoped, tag = 'scoped memory for my_model_forward.3']
    #allocation5 [shape = 'u8[512]{0}', space=vmem, size = 0x400, scoped, tag = 'input window, operand 2, single buffered']
    #allocation6 [shape = 's32[1]{0}', space=sflag, size = 0x4, scoped, tag = 'scoped memory for my_model_forward.3']
    #allocation7 [shape = 'u8[65536]{0}', space=vmem, size = 0x10000, scoped, tag = 'input window, operand 3, single buffered']
    #allocation8 [shape = 'u8[512]{0}', space=vmem, size = 0x400, scoped, tag = 'input window, operand 4, single buffered']
    #allocation9 [shape = 's32[1]{0}', space=sflag, size = 0x4, scoped, tag = 'scoped memory for my_model_forward.3']
    #allocation10 [shape = 'u8[1024]{0}', space=vmem, size = 0x400, scoped, tag = 'output window, operand 0, single buffered']
    %10 = vsyncpa [#allocation3], 0
    %11 = vsyncpa [#allocation6], 0
    %12 = vsyncpa [#allocation9], 0
    %13 = vsyncpa [#allocation4], 0
    // Predicated region
    $region2: #{my_model_forward.3} parent=1 // pred_check
      _
    $region3: #{my_model_forward.3} parent=1 // pred_check_branch
      %15 = sbr.rel (0) target = $region5
    $region4: #{my_model_forward.3} parent=1 // pred_region
      _
    $region5: #{my_model_forward.3} parent=1 // pred_fallthru
      _
    // Predicated region
    $region6: #{my_model_forward.3} parent=1 // pred_check
      _
    $region7: #{my_model_forward.3} parent=1 // pred_check_branch
      %17 = sbr.rel (0) target = $region9
    $region8: #{my_model_forward.3} parent=1 // pred_region
      %s19 = ssub.s32 131072, 131072
      %20 = vsyncadd [#allocation3], %s19
      %s21 = sshll.u32 [#allocation2], 4
      %s22 = int_to_ptr.vmem [resolvable:$true] %s21
      %27 = dma.hbm_to_vmem [thread:$0]  %s1, 131072, %s22, [#allocation3], 128, 128, 8
    $region9: #{my_model_forward.3} parent=1 // pred_fallthru
      _
    // Predicated region
    $region10: #{my_model_forward.3} parent=1 // pred_check
      _
    $region11: #{my_model_forward.3} parent=1 // pred_check_branch
      %29 = sbr.rel (0) target = $region13
    $region12: #{my_model_forward.3} parent=1 // pred_region
      %s31 = ssub.s32 16, 16
      %32 = vsyncadd [#allocation6], %s31
      %s34 = sshll.u32 [#allocation5], 4
      %s35 = int_to_ptr.vmem [resolvable:$true] %s34
      %37 = dma.hbm_to_vmem [thread:$0]  %s2, 16, %s35, [#allocation6]
    $region13: #{my_model_forward.3} parent=1 // pred_fallthru
      _
    // Predicated region
    $region14: #{my_model_forward.3} parent=1 // pred_check
      _
    $region15: #{my_model_forward.3} parent=1 // pred_check_branch
      %39 = sbr.rel (0) target = $region17
    $region16: #{my_model_forward.3} parent=1 // pred_region
      %s41 = ssub.s32 2048, 2048
      %42 = vsyncadd [#allocation6], %s41
      %s43 = sshll.u32 [#allocation7], 4
      %s44 = int_to_ptr.vmem [resolvable:$true] %s43
      %49 = dma.hbm_to_vmem [thread:$0]  %s3, 2048, %s44, [#allocation6], 128, 128, 8
    $region17: #{my_model_forward.3} parent=1 // pred_fallthru
      _
    // Predicated region
    $region18: #{my_model_forward.3} parent=1 // pred_check
      _
    $region19: #{my_model_forward.3} parent=1 // pred_check_branch
      %51 = sbr.rel (0) target = $region21
    $region20: #{my_model_forward.3} parent=1 // pred_region
      %s53 = ssub.s32 16, 16
      %54 = vsyncadd [#allocation9], %s53
      %s56 = sshll.u32 [#allocation8], 4
      %s57 = int_to_ptr.vmem [resolvable:$true] %s56
      %59 = dma.hbm_to_vmem [thread:$0]  %s4, 16, %s57, [#allocation9]
    $region21: #{my_model_forward.3} parent=1 // pred_fallthru
      _
    // Predicated region
    $region22: #{my_model_forward.3} parent=1 // pred_check
      _
    $region23: #{my_model_forward.3} parent=1 // pred_check_branch
      %61 = sbr.rel (0) target = $region25
    $region24: #{my_model_forward.3} parent=1 // pred_region
      %62 = dma.done [#allocation3], 131072
    $region25: #{my_model_forward.3} parent=1 // pred_fallthru
      _
    // Predicated region
    $region26: #{my_model_forward.3} parent=1 // pred_check
      _
    $region27: #{my_model_forward.3} parent=1 // pred_check_branch
      %64 = sbr.rel (0) target = $region29
    $region28: #{my_model_forward.3} parent=1 // pred_region
      %65 = dma.done [#allocation6], 16
    $region29: #{my_model_forward.3} parent=1 // pred_fallthru
      _
    // Predicated region
    $region30: #{my_model_forward.3} parent=1 // pred_check
      _
    $region31: #{my_model_forward.3} parent=1 // pred_check_branch
      %67 = sbr.rel (0) target = $region33
    $region32: #{my_model_forward.3} parent=1 // pred_region
      %68 = dma.done [#allocation6], 2048
    $region33: #{my_model_forward.3} parent=1 // pred_fallthru
      _
    // Predicated region
    $region34: #{my_model_forward.3} parent=1 // pred_check
      _
    $region35: #{my_model_forward.3} parent=1 // pred_check_branch
      %70 = sbr.rel (0) target = $region37
    $region36: #{my_model_forward.3} parent=1 // pred_region
      %71 = dma.done [#allocation9], 16
    $region37: #{my_model_forward.3} parent=1 // pred_fallthru
      _
    %v72 = vld [vmem:[%s0] sm:$0xff]
    %v73 = vld [vmem:[%s0 + $0x8] sm:$0xff]
    %v74 = vld [vmem:[%s0 + $0x10] sm:$0xff]
    %v75 = vld [vmem:[%s0 + $0x18] sm:$0xff]
    %v76 = vld [vmem:[%s0 + $0x20] sm:$0xff]
    %v77 = vld [vmem:[%s0 + $0x28] sm:$0xff]
    %v78 = vld [vmem:[%s0 + $0x30] sm:$0xff]
    %v79 = vld [vmem:[%s0 + $0x38] sm:$0xff]
    %v80 = vld [vmem:[%s0 + $0x40] sm:$0xff]
    %v81 = vld [vmem:[%s0 + $0x48] sm:$0xff]
    %v82 = vld [vmem:[%s0 + $0x50] sm:$0xff]
    %v83 = vld [vmem:[%s0 + $0x58] sm:$0xff]
    %v84 = vld [vmem:[%s0 + $0x60] sm:$0xff]
    %v85 = vld [vmem:[%s0 + $0x68] sm:$0xff]
    %v86 = vld [vmem:[%s0 + $0x70] sm:$0xff]
    %v87 = vld [vmem:[%s0 + $0x78] sm:$0xff]
    %v88 = vld [vmem:[#allocation2] sm:$0xff]
    %v89 = vld [vmem:[#allocation2 + $0x8] sm:$0xff]
    %v90 = vld [vmem:[#allocation2 + $0x10] sm:$0xff]
    %v91 = vld [vmem:[#allocation2 + $0x18] sm:$0xff]
    %v92 = vld [vmem:[#allocation2 + $0x20] sm:$0xff]
    %v93 = vld [vmem:[#allocation2 + $0x28] sm:$0xff]
    %v94 = vld [vmem:[#allocation2 + $0x30] sm:$0xff]
    %v95 = vld [vmem:[#allocation2 + $0x38] sm:$0xff]
    %v96 = vld [vmem:[#allocation2 + $0x40] sm:$0xff]
    %v97 = vld [vmem:[#allocation2 + $0x48] sm:$0xff]
    %v98 = vld [vmem:[#allocation2 + $0x50] sm:$0xff]
    %v99 = vld [vmem:[#allocation2 + $0x58] sm:$0xff]
    %v100 = vld [vmem:[#allocation2 + $0x60] sm:$0xff]
    %v101 = vld [vmem:[#allocation2 + $0x68] sm:$0xff]
    %v102 = vld [vmem:[#allocation2 + $0x70] sm:$0xff]
    %v103 = vld [vmem:[#allocation2 + $0x78] sm:$0xff]
    %v104 = vld [vmem:[#allocation2 + $0x80] sm:$0xff]
    %v105 = vld [vmem:[#allocation2 + $0x88] sm:$0xff]
    %v106 = vld [vmem:[#allocation2 + $0x90] sm:$0xff]
    %v107 = vld [vmem:[#allocation2 + $0x98] sm:$0xff]
    %v108 = vld [vmem:[#allocation2 + $0xa0] sm:$0xff]
    %v109 = vld [vmem:[#allocation2 + $0xa8] sm:$0xff]
    %v110 = vld [vmem:[#allocation2 + $0xb0] sm:$0xff]
    %v111 = vld [vmem:[#allocation2 + $0xb8] sm:$0xff]
    %v112 = vld [vmem:[#allocation2 + $0xc0] sm:$0xff]
    %v113 = vld [vmem:[#allocation2 + $0xc8] sm:$0xff]
    %v114 = vld [vmem:[#allocation2 + $0xd0] sm:$0xff]
    %v115 = vld [vmem:[#allocation2 + $0xd8] sm:$0xff]
    %v116 = vld [vmem:[#allocation2 + $0xe0] sm:$0xff]
    %v117 = vld [vmem:[#allocation2 + $0xe8] sm:$0xff]
    %v118 = vld [vmem:[#allocation2 + $0xf0] sm:$0xff]
    %v119 = vld [vmem:[#allocation2 + $0xf8] sm:$0xff]
    %v120 = vld [vmem:[#allocation2 + $0x100] sm:$0xff]
    %v121 = vld [vmem:[#allocation2 + $0x108] sm:$0xff]
    %v122 = vld [vmem:[#allocation2 + $0x110] sm:$0xff]
    %v123 = vld [vmem:[#allocation2 + $0x118] sm:$0xff]
    %v124 = vld [vmem:[#allocation2 + $0x120] sm:$0xff]
    %v125 = vld [vmem:[#allocation2 + $0x128] sm:$0xff]
    %v126 = vld [vmem:[#allocation2 + $0x130] sm:$0xff]
    %v127 = vld [vmem:[#allocation2 + $0x138] sm:$0xff]
    %v128 = vld [vmem:[#allocation2 + $0x140] sm:$0xff]
    %v129 = vld [vmem:[#allocation2 + $0x148] sm:$0xff]
    %v130 = vld [vmem:[#allocation2 + $0x150] sm:$0xff]
    %v131 = vld [vmem:[#allocation2 + $0x158] sm:$0xff]
    %v132 = vld [vmem:[#allocation2 + $0x160] sm:$0xff]
    %v133 = vld [vmem:[#allocation2 + $0x168] sm:$0xff]
    %v134 = vld [vmem:[#allocation2 + $0x170] sm:$0xff]
    %v135 = vld [vmem:[#allocation2 + $0x178] sm:$0xff]
    %v136 = vld [vmem:[#allocation2 + $0x180] sm:$0xff]
    %v137 = vld [vmem:[#allocation2 + $0x188] sm:$0xff]
    %v138 = vld [vmem:[#allocation2 + $0x190] sm:$0xff]
    %v139 = vld [vmem:[#allocation2 + $0x198] sm:$0xff]
    %v140 = vld [vmem:[#allocation2 + $0x1a0] sm:$0xff]
    %v141 = vld [vmem:[#allocation2 + $0x1a8] sm:$0xff]
    %v142 = vld [vmem:[#allocation2 + $0x1b0] sm:$0xff]
    %v143 = vld [vmem:[#allocation2 + $0x1b8] sm:$0xff]
    %v144 = vld [vmem:[#allocation2 + $0x1c0] sm:$0xff]
    %v145 = vld [vmem:[#allocation2 + $0x1c8] sm:$0xff]
    %v146 = vld [vmem:[#allocation2 + $0x1d0] sm:$0xff]
    %v147 = vld [vmem:[#allocation2 + $0x1d8] sm:$0xff]
    %v148 = vld [vmem:[#allocation2 + $0x1e0] sm:$0xff]
    %v149 = vld [vmem:[#allocation2 + $0x1e8] sm:$0xff]
    %v150 = vld [vmem:[#allocation2 + $0x1f0] sm:$0xff]
    %v151 = vld [vmem:[#allocation2 + $0x1f8] sm:$0xff]
    %v152 = vld [vmem:[#allocation2 + $0x200] sm:$0xff]
    %v153 = vld [vmem:[#allocation2 + $0x208] sm:$0xff]
    %v154 = vld [vmem:[#allocation2 + $0x210] sm:$0xff]
    %v155 = vld [vmem:[#allocation2 + $0x218] sm:$0xff]
    %v156 = vld [vmem:[#allocation2 + $0x220] sm:$0xff]
    %v157 = vld [vmem:[#allocation2 + $0x228] sm:$0xff]
    %v158 = vld [vmem:[#allocation2 + $0x230] sm:$0xff]
    %v159 = vld [vmem:[#allocation2 + $0x238] sm:$0xff]
    %v160 = vld [vmem:[#allocation2 + $0x240] sm:$0xff]
    %v161 = vld [vmem:[#allocation2 + $0x248] sm:$0xff]
    %v162 = vld [vmem:[#allocation2 + $0x250] sm:$0xff]
    %v163 = vld [vmem:[#allocation2 + $0x258] sm:$0xff]
    %v164 = vld [vmem:[#allocation2 + $0x260] sm:$0xff]
    %v165 = vld [vmem:[#allocation2 + $0x268] sm:$0xff]
    %v166 = vld [vmem:[#allocation2 + $0x270] sm:$0xff]
    %v167 = vld [vmem:[#allocation2 + $0x278] sm:$0xff]
    %v168 = vld [vmem:[#allocation2 + $0x280] sm:$0xff]
    %v169 = vld [vmem:[#allocation2 + $0x288] sm:$0xff]
    %v170 = vld [vmem:[#allocation2 + $0x290] sm:$0xff]
    %v171 = vld [vmem:[#allocation2 + $0x298] sm:$0xff]
    %v172 = vld [vmem:[#allocation2 + $0x2a0] sm:$0xff]
    %v173 = vld [vmem:[#allocation2 + $0x2a8] sm:$0xff]
    %v174 = vld [vmem:[#allocation2 + $0x2b0] sm:$0xff]
    %v175 = vld [vmem:[#allocation2 + $0x2b8] sm:$0xff]
    %v176 = vld [vmem:[#allocation2 + $0x2c0] sm:$0xff]
    %v177 = vld [vmem:[#allocation2 + $0x2c8] sm:$0xff]
    %v178 = vld [vmem:[#allocation2 + $0x2d0] sm:$0xff]
    %v179 = vld [vmem:[#allocation2 + $0x2d8] sm:$0xff]
    %v180 = vld [vmem:[#allocation2 + $0x2e0] sm:$0xff]
    %v181 = vld [vmem:[#allocation2 + $0x2e8] sm:$0xff]
    %v182 = vld [vmem:[#allocation2 + $0x2f0] sm:$0xff]
    %v183 = vld [vmem:[#allocation2 + $0x2f8] sm:$0xff]
    %v184 = vld [vmem:[#allocation2 + $0x300] sm:$0xff]
    %v185 = vld [vmem:[#allocation2 + $0x308] sm:$0xff]
    %v186 = vld [vmem:[#allocation2 + $0x310] sm:$0xff]
    %v187 = vld [vmem:[#allocation2 + $0x318] sm:$0xff]
    %v188 = vld [vmem:[#allocation2 + $0x320] sm:$0xff]
    %v189 = vld [vmem:[#allocation2 + $0x328] sm:$0xff]
    %v190 = vld [vmem:[#allocation2 + $0x330] sm:$0xff]
    %v191 = vld [vmem:[#allocation2 + $0x338] sm:$0xff]
    %v192 = vld [vmem:[#allocation2 + $0x340] sm:$0xff]
    %v193 = vld [vmem:[#allocation2 + $0x348] sm:$0xff]
    %v194 = vld [vmem:[#allocation2 + $0x350] sm:$0xff]
    %v195 = vld [vmem:[#allocation2 + $0x358] sm:$0xff]
    %v196 = vld [vmem:[#allocation2 + $0x360] sm:$0xff]
    %v197 = vld [vmem:[#allocation2 + $0x368] sm:$0xff]
    %v198 = vld [vmem:[#allocation2 + $0x370] sm:$0xff]
    %v199 = vld [vmem:[#allocation2 + $0x378] sm:$0xff]
    %v200 = vld [vmem:[#allocation2 + $0x380] sm:$0xff]
    %v201 = vld [vmem:[#allocation2 + $0x388] sm:$0xff]
    %v202 = vld [vmem:[#allocation2 + $0x390] sm:$0xff]
    %v203 = vld [vmem:[#allocation2 + $0x398] sm:$0xff]
    %v204 = vld [vmem:[#allocation2 + $0x3a0] sm:$0xff]
    %v205 = vld [vmem:[#allocation2 + $0x3a8] sm:$0xff]
    %v206 = vld [vmem:[#allocation2 + $0x3b0] sm:$0xff]
    %v207 = vld [vmem:[#allocation2 + $0x3b8] sm:$0xff]
    %v208 = vld [vmem:[#allocation2 + $0x3c0] sm:$0xff]
    %v209 = vld [vmem:[#allocation2 + $0x3c8] sm:$0xff]
    %v210 = vld [vmem:[#allocation2 + $0x3d0] sm:$0xff]
    %v211 = vld [vmem:[#allocation2 + $0x3d8] sm:$0xff]
    %v212 = vld [vmem:[#allocation2 + $0x3e0] sm:$0xff]
    %v213 = vld [vmem:[#allocation2 + $0x3e8] sm:$0xff]
    %v214 = vld [vmem:[#allocation2 + $0x3f0] sm:$0xff]
    %v215 = vld [vmem:[#allocation2 + $0x3f8] sm:$0xff]
    %v216 = vld [vmem:[#allocation2 + $0x400] sm:$0xff]
    %v217 = vld [vmem:[#allocation2 + $0x408] sm:$0xff]
    %v218 = vld [vmem:[#allocation2 + $0x410] sm:$0xff]
    %v219 = vld [vmem:[#allocation2 + $0x418] sm:$0xff]
    %v220 = vld [vmem:[#allocation2 + $0x420] sm:$0xff]
    %v221 = vld [vmem:[#allocation2 + $0x428] sm:$0xff]
    %v222 = vld [vmem:[#allocation2 + $0x430] sm:$0xff]
    %v223 = vld [vmem:[#allocation2 + $0x438] sm:$0xff]
    %v224 = vld [vmem:[#allocation2 + $0x440] sm:$0xff]
    %v225 = vld [vmem:[#allocation2 + $0x448] sm:$0xff]
    %v226 = vld [vmem:[#allocation2 + $0x450] sm:$0xff]
    %v227 = vld [vmem:[#allocation2 + $0x458] sm:$0xff]
    %v228 = vld [vmem:[#allocation2 + $0x460] sm:$0xff]
    %v229 = vld [vmem:[#allocation2 + $0x468] sm:$0xff]
    %v230 = vld [vmem:[#allocation2 + $0x470] sm:$0xff]
    %v231 = vld [vmem:[#allocation2 + $0x478] sm:$0xff]
    %v232 = vld [vmem:[#allocation2 + $0x480] sm:$0xff]
    %v233 = vld [vmem:[#allocation2 + $0x488] sm:$0xff]
    %v234 = vld [vmem:[#allocation2 + $0x490] sm:$0xff]
    %v235 = vld [vmem:[#allocation2 + $0x498] sm:$0xff]
    %v236 = vld [vmem:[#allocation2 + $0x4a0] sm:$0xff]
    %v237 = vld [vmem:[#allocation2 + $0x4a8] sm:$0xff]
    %v238 = vld [vmem:[#allocation2 + $0x4b0] sm:$0xff]
    %v239 = vld [vmem:[#allocation2 + $0x4b8] sm:$0xff]
    %v240 = vld [vmem:[#allocation2 + $0x4c0] sm:$0xff]
    %v241 = vld [vmem:[#allocation2 + $0x4c8] sm:$0xff]
    %v242 = vld [vmem:[#allocation2 + $0x4d0] sm:$0xff]
    %v243 = vld [vmem:[#allocation2 + $0x4d8] sm:$0xff]
    %v244 = vld [vmem:[#allocation2 + $0x4e0] sm:$0xff]
    %v245 = vld [vmem:[#allocation2 + $0x4e8] sm:$0xff]
    %v246 = vld [vmem:[#allocation2 + $0x4f0] sm:$0xff]
    %v247 = vld [vmem:[#allocation2 + $0x4f8] sm:$0xff]
    %v248 = vld [vmem:[#allocation2 + $0x500] sm:$0xff]
    %v249 = vld [vmem:[#allocation2 + $0x508] sm:$0xff]
    %v250 = vld [vmem:[#allocation2 + $0x510] sm:$0xff]
    %v251 = vld [vmem:[#allocation2 + $0x518] sm:$0xff]
    %v252 = vld [vmem:[#allocation2 + $0x520] sm:$0xff]
    %v253 = vld [vmem:[#allocation2 + $0x528] sm:$0xff]
    %v254 = vld [vmem:[#allocation2 + $0x530] sm:$0xff]
    %v255 = vld [vmem:[#allocation2 + $0x538] sm:$0xff]
    %v256 = vld [vmem:[#allocation2 + $0x540] sm:$0xff]
    %v257 = vld [vmem:[#allocation2 + $0x548] sm:$0xff]
    %v258 = vld [vmem:[#allocation2 + $0x550] sm:$0xff]
    %v259 = vld [vmem:[#allocation2 + $0x558] sm:$0xff]
    %v260 = vld [vmem:[#allocation2 + $0x560] sm:$0xff]
    %v261 = vld [vmem:[#allocation2 + $0x568] sm:$0xff]
    %v262 = vld [vmem:[#allocation2 + $0x570] sm:$0xff]
    %v263 = vld [vmem:[#allocation2 + $0x578] sm:$0xff]
    %v264 = vld [vmem:[#allocation2 + $0x580] sm:$0xff]
    %v265 = vld [vmem:[#allocation2 + $0x588] sm:$0xff]
    %v266 = vld [vmem:[#allocation2 + $0x590] sm:$0xff]
    %v267 = vld [vmem:[#allocation2 + $0x598] sm:$0xff]
    %v268 = vld [vmem:[#allocation2 + $0x5a0] sm:$0xff]
    %v269 = vld [vmem:[#allocation2 + $0x5a8] sm:$0xff]
    %v270 = vld [vmem:[#allocation2 + $0x5b0] sm:$0xff]
    %v271 = vld [vmem:[#allocation2 + $0x5b8] sm:$0xff]
    %v272 = vld [vmem:[#allocation2 + $0x5c0] sm:$0xff]
    %v273 = vld [vmem:[#allocation2 + $0x5c8] sm:$0xff]
    %v274 = vld [vmem:[#allocation2 + $0x5d0] sm:$0xff]
    %v275 = vld [vmem:[#allocation2 + $0x5d8] sm:$0xff]
    %v276 = vld [vmem:[#allocation2 + $0x5e0] sm:$0xff]
    %v277 = vld [vmem:[#allocation2 + $0x5e8] sm:$0xff]
    %v278 = vld [vmem:[#allocation2 + $0x5f0] sm:$0xff]
    %v279 = vld [vmem:[#allocation2 + $0x5f8] sm:$0xff]
    %v280 = vld [vmem:[#allocation2 + $0x600] sm:$0xff]
    %v281 = vld [vmem:[#allocation2 + $0x608] sm:$0xff]
    %v282 = vld [vmem:[#allocation2 + $0x610] sm:$0xff]
    %v283 = vld [vmem:[#allocation2 + $0x618] sm:$0xff]
    %v284 = vld [vmem:[#allocation2 + $0x620] sm:$0xff]
    %v285 = vld [vmem:[#allocation2 + $0x628] sm:$0xff]
    %v286 = vld [vmem:[#allocation2 + $0x630] sm:$0xff]
    %v287 = vld [vmem:[#allocation2 + $0x638] sm:$0xff]
    %v288 = vld [vmem:[#allocation2 + $0x640] sm:$0xff]
    %v289 = vld [vmem:[#allocation2 + $0x648] sm:$0xff]
    %v290 = vld [vmem:[#allocation2 + $0x650] sm:$0xff]
    %v291 = vld [vmem:[#allocation2 + $0x658] sm:$0xff]
    %v292 = vld [vmem:[#allocation2 + $0x660] sm:$0xff]
    %v293 = vld [vmem:[#allocation2 + $0x668] sm:$0xff]
    %v294 = vld [vmem:[#allocation2 + $0x670] sm:$0xff]
    %v295 = vld [vmem:[#allocation2 + $0x678] sm:$0xff]
    %v296 = vld [vmem:[#allocation2 + $0x680] sm:$0xff]
    %v297 = vld [vmem:[#allocation2 + $0x688] sm:$0xff]
    %v298 = vld [vmem:[#allocation2 + $0x690] sm:$0xff]
    %v299 = vld [vmem:[#allocation2 + $0x698] sm:$0xff]
    %v300 = vld [vmem:[#allocation2 + $0x6a0] sm:$0xff]
    %v301 = vld [vmem:[#allocation2 + $0x6a8] sm:$0xff]
    %v302 = vld [vmem:[#allocation2 + $0x6b0] sm:$0xff]
    %v303 = vld [vmem:[#allocation2 + $0x6b8] sm:$0xff]
    %v304 = vld [vmem:[#allocation2 + $0x6c0] sm:$0xff]
    %v305 = vld [vmem:[#allocation2 + $0x6c8] sm:$0xff]
    %v306 = vld [vmem:[#allocation2 + $0x6d0] sm:$0xff]
    %v307 = vld [vmem:[#allocation2 + $0x6d8] sm:$0xff]
    %v308 = vld [vmem:[#allocation2 + $0x6e0] sm:$0xff]
    %v309 = vld [vmem:[#allocation2 + $0x6e8] sm:$0xff]
    %v310 = vld [vmem:[#allocation2 + $0x6f0] sm:$0xff]
    %v311 = vld [vmem:[#allocation2 + $0x6f8] sm:$0xff]
    %v312 = vld [vmem:[#allocation2 + $0x700] sm:$0xff]
    %v313 = vld [vmem:[#allocation2 + $0x708] sm:$0xff]
    %v314 = vld [vmem:[#allocation2 + $0x710] sm:$0xff]
    %v315 = vld [vmem:[#allocation2 + $0x718] sm:$0xff]
    %v316 = vld [vmem:[#allocation2 + $0x720] sm:$0xff]
    %v317 = vld [vmem:[#allocation2 + $0x728] sm:$0xff]
    %v318 = vld [vmem:[#allocation2 + $0x730] sm:$0xff]
    %v319 = vld [vmem:[#allocation2 + $0x738] sm:$0xff]
    %v320 = vld [vmem:[#allocation2 + $0x740] sm:$0xff]
    %v321 = vld [vmem:[#allocation2 + $0x748] sm:$0xff]
    %v322 = vld [vmem:[#allocation2 + $0x750] sm:$0xff]
    %v323 = vld [vmem:[#allocation2 + $0x758] sm:$0xff]
    %v324 = vld [vmem:[#allocation2 + $0x760] sm:$0xff]
    %v325 = vld [vmem:[#allocation2 + $0x768] sm:$0xff]
    %v326 = vld [vmem:[#allocation2 + $0x770] sm:$0xff]
    %v327 = vld [vmem:[#allocation2 + $0x778] sm:$0xff]
    %v328 = vld [vmem:[#allocation2 + $0x780] sm:$0xff]
    %v329 = vld [vmem:[#allocation2 + $0x788] sm:$0xff]
    %v330 = vld [vmem:[#allocation2 + $0x790] sm:$0xff]
    %v331 = vld [vmem:[#allocation2 + $0x798] sm:$0xff]
    %v332 = vld [vmem:[#allocation2 + $0x7a0] sm:$0xff]
    %v333 = vld [vmem:[#allocation2 + $0x7a8] sm:$0xff]
    %v334 = vld [vmem:[#allocation2 + $0x7b0] sm:$0xff]
    %v335 = vld [vmem:[#allocation2 + $0x7b8] sm:$0xff]
    %v336 = vld [vmem:[#allocation2 + $0x7c0] sm:$0xff]
    %v337 = vld [vmem:[#allocation2 + $0x7c8] sm:$0xff]
    %v338 = vld [vmem:[#allocation2 + $0x7d0] sm:$0xff]
    %v339 = vld [vmem:[#allocation2 + $0x7d8] sm:$0xff]
    %v340 = vld [vmem:[#allocation2 + $0x7e0] sm:$0xff]
    %v341 = vld [vmem:[#allocation2 + $0x7e8] sm:$0xff]
    %v342 = vld [vmem:[#allocation2 + $0x7f0] sm:$0xff]
    %v343 = vld [vmem:[#allocation2 + $0x7f8] sm:$0xff]
    %v344 = vld [vmem:[#allocation2 + $0x800] sm:$0xff]
    %v345 = vld [vmem:[#allocation2 + $0x808] sm:$0xff]
    %v346 = vld [vmem:[#allocation2 + $0x810] sm:$0xff]
    %v347 = vld [vmem:[#allocation2 + $0x818] sm:$0xff]
    %v348 = vld [vmem:[#allocation2 + $0x820] sm:$0xff]
    %v349 = vld [vmem:[#allocation2 + $0x828] sm:$0xff]
    %v350 = vld [vmem:[#allocation2 + $0x830] sm:$0xff]
    %v351 = vld [vmem:[#allocation2 + $0x838] sm:$0xff]
    %v352 = vld [vmem:[#allocation2 + $0x840] sm:$0xff]
    %v353 = vld [vmem:[#allocation2 + $0x848] sm:$0xff]
    %v354 = vld [vmem:[#allocation2 + $0x850] sm:$0xff]
    %v355 = vld [vmem:[#allocation2 + $0x858] sm:$0xff]
    %v356 = vld [vmem:[#allocation2 + $0x860] sm:$0xff]
    %v357 = vld [vmem:[#allocation2 + $0x868] sm:$0xff]
    %v358 = vld [vmem:[#allocation2 + $0x870] sm:$0xff]
    %v359 = vld [vmem:[#allocation2 + $0x878] sm:$0xff]
    %v360 = vld [vmem:[#allocation2 + $0x880] sm:$0xff]
    %v361 = vld [vmem:[#allocation2 + $0x888] sm:$0xff]
    %v362 = vld [vmem:[#allocation2 + $0x890] sm:$0xff]
    %v363 = vld [vmem:[#allocation2 + $0x898] sm:$0xff]
    %v364 = vld [vmem:[#allocation2 + $0x8a0] sm:$0xff]
    %v365 = vld [vmem:[#allocation2 + $0x8a8] sm:$0xff]
    %v366 = vld [vmem:[#allocation2 + $0x8b0] sm:$0xff]
    %v367 = vld [vmem:[#allocation2 + $0x8b8] sm:$0xff]
    %v368 = vld [vmem:[#allocation2 + $0x8c0] sm:$0xff]
    %v369 = vld [vmem:[#allocation2 + $0x8c8] sm:$0xff]
    %v370 = vld [vmem:[#allocation2 + $0x8d0] sm:$0xff]
    %v371 = vld [vmem:[#allocation2 + $0x8d8] sm:$0xff]
    %v372 = vld [vmem:[#allocation2 + $0x8e0] sm:$0xff]
    %v373 = vld [vmem:[#allocation2 + $0x8e8] sm:$0xff]
    %v374 = vld [vmem:[#allocation2 + $0x8f0] sm:$0xff]
    %v375 = vld [vmem:[#allocation2 + $0x8f8] sm:$0xff]
    %v376 = vld [vmem:[#allocation2 + $0x900] sm:$0xff]
    %v377 = vld [vmem:[#allocation2 + $0x908] sm:$0xff]
    %v378 = vld [vmem:[#allocation2 + $0x910] sm:$0xff]
    %v379 = vld [vmem:[#allocation2 + $0x918] sm:$0xff]
    %v380 = vld [vmem:[#allocation2 + $0x920] sm:$0xff]
    %v381 = vld [vmem:[#allocation2 + $0x928] sm:$0xff]
    %v382 = vld [vmem:[#allocation2 + $0x930] sm:$0xff]
    %v383 = vld [vmem:[#allocation2 + $0x938] sm:$0xff]
    %v384 = vld [vmem:[#allocation2 + $0x940] sm:$0xff]
    %v385 = vld [vmem:[#allocation2 + $0x948] sm:$0xff]
    %v386 = vld [vmem:[#allocation2 + $0x950] sm:$0xff]
    %v387 = vld [vmem:[#allocation2 + $0x958] sm:$0xff]
    %v388 = vld [vmem:[#allocation2 + $0x960] sm:$0xff]
    %v389 = vld [vmem:[#allocation2 + $0x968] sm:$0xff]
    %v390 = vld [vmem:[#allocation2 + $0x970] sm:$0xff]
    %v391 = vld [vmem:[#allocation2 + $0x978] sm:$0xff]
    %v392 = vld [vmem:[#allocation2 + $0x980] sm:$0xff]
    %v393 = vld [vmem:[#allocation2 + $0x988] sm:$0xff]
    %v394 = vld [vmem:[#allocation2 + $0x990] sm:$0xff]
    %v395 = vld [vmem:[#allocation2 + $0x998] sm:$0xff]
    %v396 = vld [vmem:[#allocation2 + $0x9a0] sm:$0xff]
    %v397 = vld [vmem:[#allocation2 + $0x9a8] sm:$0xff]
    %v398 = vld [vmem:[#allocation2 + $0x9b0] sm:$0xff]
    %v399 = vld [vmem:[#allocation2 + $0x9b8] sm:$0xff]
    %v400 = vld [vmem:[#allocation2 + $0x9c0] sm:$0xff]
    %v401 = vld [vmem:[#allocation2 + $0x9c8] sm:$0xff]
    %v402 = vld [vmem:[#allocation2 + $0x9d0] sm:$0xff]
    %v403 = vld [vmem:[#allocation2 + $0x9d8] sm:$0xff]
    %v404 = vld [vmem:[#allocation2 + $0x9e0] sm:$0xff]
    %v405 = vld [vmem:[#allocation2 + $0x9e8] sm:$0xff]
    %v406 = vld [vmem:[#allocation2 + $0x9f0] sm:$0xff]
    %v407 = vld [vmem:[#allocation2 + $0x9f8] sm:$0xff]
    %v408 = vld [vmem:[#allocation2 + $0xa00] sm:$0xff]
    %v409 = vld [vmem:[#allocation2 + $0xa08] sm:$0xff]
    %v410 = vld [vmem:[#allocation2 + $0xa10] sm:$0xff]
    %v411 = vld [vmem:[#allocation2 + $0xa18] sm:$0xff]
    %v412 = vld [vmem:[#allocation2 + $0xa20] sm:$0xff]
    %v413 = vld [vmem:[#allocation2 + $0xa28] sm:$0xff]
    %v414 = vld [vmem:[#allocation2 + $0xa30] sm:$0xff]
    %v415 = vld [vmem:[#allocation2 + $0xa38] sm:$0xff]
    %v416 = vld [vmem:[#allocation2 + $0xa40] sm:$0xff]
    %v417 = vld [vmem:[#allocation2 + $0xa48] sm:$0xff]
    %v418 = vld [vmem:[#allocation2 + $0xa50] sm:$0xff]
    %v419 = vld [vmem:[#allocation2 + $0xa58] sm:$0xff]
    %v420 = vld [vmem:[#allocation2 + $0xa60] sm:$0xff]
    %v421 = vld [vmem:[#allocation2 + $0xa68] sm:$0xff]
    %v422 = vld [vmem:[#allocation2 + $0xa70] sm:$0xff]
    %v423 = vld [vmem:[#allocation2 + $0xa78] sm:$0xff]
    %v424 = vld [vmem:[#allocation2 + $0xa80] sm:$0xff]
    %v425 = vld [vmem:[#allocation2 + $0xa88] sm:$0xff]
    %v426 = vld [vmem:[#allocation2 + $0xa90] sm:$0xff]
    %v427 = vld [vmem:[#allocation2 + $0xa98] sm:$0xff]
    %v428 = vld [vmem:[#allocation2 + $0xaa0] sm:$0xff]
    %v429 = vld [vmem:[#allocation2 + $0xaa8] sm:$0xff]
    %v430 = vld [vmem:[#allocation2 + $0xab0] sm:$0xff]
    %v431 = vld [vmem:[#allocation2 + $0xab8] sm:$0xff]
    %v432 = vld [vmem:[#allocation2 + $0xac0] sm:$0xff]
    %v433 = vld [vmem:[#allocation2 + $0xac8] sm:$0xff]
    %v434 = vld [vmem:[#allocation2 + $0xad0] sm:$0xff]
    %v435 = vld [vmem:[#allocation2 + $0xad8] sm:$0xff]
    %v436 = vld [vmem:[#allocation2 + $0xae0] sm:$0xff]
    %v437 = vld [vmem:[#allocation2 + $0xae8] sm:$0xff]
    %v438 = vld [vmem:[#allocation2 + $0xaf0] sm:$0xff]
    %v439 = vld [vmem:[#allocation2 + $0xaf8] sm:$0xff]
    %v440 = vld [vmem:[#allocation2 + $0xb00] sm:$0xff]
    %v441 = vld [vmem:[#allocation2 + $0xb08] sm:$0xff]
    %v442 = vld [vmem:[#allocation2 + $0xb10] sm:$0xff]
    %v443 = vld [vmem:[#allocation2 + $0xb18] sm:$0xff]
    %v444 = vld [vmem:[#allocation2 + $0xb20] sm:$0xff]
    %v445 = vld [vmem:[#allocation2 + $0xb28] sm:$0xff]
    %v446 = vld [vmem:[#allocation2 + $0xb30] sm:$0xff]
    %v447 = vld [vmem:[#allocation2 + $0xb38] sm:$0xff]
    %v448 = vld [vmem:[#allocation2 + $0xb40] sm:$0xff]
    %v449 = vld [vmem:[#allocation2 + $0xb48] sm:$0xff]
    %v450 = vld [vmem:[#allocation2 + $0xb50] sm:$0xff]
    %v451 = vld [vmem:[#allocation2 + $0xb58] sm:$0xff]
    %v452 = vld [vmem:[#allocation2 + $0xb60] sm:$0xff]
    %v453 = vld [vmem:[#allocation2 + $0xb68] sm:$0xff]
    %v454 = vld [vmem:[#allocation2 + $0xb70] sm:$0xff]
    %v455 = vld [vmem:[#allocation2 + $0xb78] sm:$0xff]
    %v456 = vld [vmem:[#allocation2 + $0xb80] sm:$0xff]
    %v457 = vld [vmem:[#allocation2 + $0xb88] sm:$0xff]
    %v458 = vld [vmem:[#allocation2 + $0xb90] sm:$0xff]
    %v459 = vld [vmem:[#allocation2 + $0xb98] sm:$0xff]
    %v460 = vld [vmem:[#allocation2 + $0xba0] sm:$0xff]
    %v461 = vld [vmem:[#allocation2 + $0xba8] sm:$0xff]
    %v462 = vld [vmem:[#allocation2 + $0xbb0] sm:$0xff]
    %v463 = vld [vmem:[#allocation2 + $0xbb8] sm:$0xff]
    %v464 = vld [vmem:[#allocation2 + $0xbc0] sm:$0xff]
    %v465 = vld [vmem:[#allocation2 + $0xbc8] sm:$0xff]
    %v466 = vld [vmem:[#allocation2 + $0xbd0] sm:$0xff]
    %v467 = vld [vmem:[#allocation2 + $0xbd8] sm:$0xff]
    %v468 = vld [vmem:[#allocation2 + $0xbe0] sm:$0xff]
    %v469 = vld [vmem:[#allocation2 + $0xbe8] sm:$0xff]
    %v470 = vld [vmem:[#allocation2 + $0xbf0] sm:$0xff]
    %v471 = vld [vmem:[#allocation2 + $0xbf8] sm:$0xff]
    %v472 = vld [vmem:[#allocation2 + $0xc00] sm:$0xff]
    %v473 = vld [vmem:[#allocation2 + $0xc08] sm:$0xff]
    %v474 = vld [vmem:[#allocation2 + $0xc10] sm:$0xff]
    %v475 = vld [vmem:[#allocation2 + $0xc18] sm:$0xff]
    %v476 = vld [vmem:[#allocation2 + $0xc20] sm:$0xff]
    %v477 = vld [vmem:[#allocation2 + $0xc28] sm:$0xff]
    %v478 = vld [vmem:[#allocation2 + $0xc30] sm:$0xff]
    %v479 = vld [vmem:[#allocation2 + $0xc38] sm:$0xff]
    %v480 = vld [vmem:[#allocation2 + $0xc40] sm:$0xff]
    %v481 = vld [vmem:[#allocation2 + $0xc48] sm:$0xff]
    %v482 = vld [vmem:[#allocation2 + $0xc50] sm:$0xff]
    %v483 = vld [vmem:[#allocation2 + $0xc58] sm:$0xff]
    %v484 = vld [vmem:[#allocation2 + $0xc60] sm:$0xff]
    %v485 = vld [vmem:[#allocation2 + $0xc68] sm:$0xff]
    %v486 = vld [vmem:[#allocation2 + $0xc70] sm:$0xff]
    %v487 = vld [vmem:[#allocation2 + $0xc78] sm:$0xff]
    %v488 = vld [vmem:[#allocation2 + $0xc80] sm:$0xff]
    %v489 = vld [vmem:[#allocation2 + $0xc88] sm:$0xff]
    %v490 = vld [vmem:[#allocation2 + $0xc90] sm:$0xff]
    %v491 = vld [vmem:[#allocation2 + $0xc98] sm:$0xff]
    %v492 = vld [vmem:[#allocation2 + $0xca0] sm:$0xff]
    %v493 = vld [vmem:[#allocation2 + $0xca8] sm:$0xff]
    %v494 = vld [vmem:[#allocation2 + $0xcb0] sm:$0xff]
    %v495 = vld [vmem:[#allocation2 + $0xcb8] sm:$0xff]
    %v496 = vld [vmem:[#allocation2 + $0xcc0] sm:$0xff]
    %v497 = vld [vmem:[#allocation2 + $0xcc8] sm:$0xff]
    %v498 = vld [vmem:[#allocation2 + $0xcd0] sm:$0xff]
    %v499 = vld [vmem:[#allocation2 + $0xcd8] sm:$0xff]
    %v500 = vld [vmem:[#allocation2 + $0xce0] sm:$0xff]
    %v501 = vld [vmem:[#allocation2 + $0xce8] sm:$0xff]
    %v502 = vld [vmem:[#allocation2 + $0xcf0] sm:$0xff]
    %v503 = vld [vmem:[#allocation2 + $0xcf8] sm:$0xff]
    %v504 = vld [vmem:[#allocation2 + $0xd00] sm:$0xff]
    %v505 = vld [vmem:[#allocation2 + $0xd08] sm:$0xff]
    %v506 = vld [vmem:[#allocation2 + $0xd10] sm:$0xff]
    %v507 = vld [vmem:[#allocation2 + $0xd18] sm:$0xff]
    %v508 = vld [vmem:[#allocation2 + $0xd20] sm:$0xff]
    %v509 = vld [vmem:[#allocation2 + $0xd28] sm:$0xff]
    %v510 = vld [vmem:[#allocation2 + $0xd30] sm:$0xff]
    %v511 = vld [vmem:[#allocation2 + $0xd38] sm:$0xff]
    %v512 = vld [vmem:[#allocation2 + $0xd40] sm:$0xff]
    %v513 = vld [vmem:[#allocation2 + $0xd48] sm:$0xff]
    %v514 = vld [vmem:[#allocation2 + $0xd50] sm:$0xff]
    %v515 = vld [vmem:[#allocation2 + $0xd58] sm:$0xff]
    %v516 = vld [vmem:[#allocation2 + $0xd60] sm:$0xff]
    %v517 = vld [vmem:[#allocation2 + $0xd68] sm:$0xff]
    %v518 = vld [vmem:[#allocation2 + $0xd70] sm:$0xff]
    %v519 = vld [vmem:[#allocation2 + $0xd78] sm:$0xff]
    %v520 = vld [vmem:[#allocation2 + $0xd80] sm:$0xff]
    %v521 = vld [vmem:[#allocation2 + $0xd88] sm:$0xff]
    %v522 = vld [vmem:[#allocation2 + $0xd90] sm:$0xff]
    %v523 = vld [vmem:[#allocation2 + $0xd98] sm:$0xff]
    %v524 = vld [vmem:[#allocation2 + $0xda0] sm:$0xff]
    %v525 = vld [vmem:[#allocation2 + $0xda8] sm:$0xff]
    %v526 = vld [vmem:[#allocation2 + $0xdb0] sm:$0xff]
    %v527 = vld [vmem:[#allocation2 + $0xdb8] sm:$0xff]
    %v528 = vld [vmem:[#allocation2 + $0xdc0] sm:$0xff]
    %v529 = vld [vmem:[#allocation2 + $0xdc8] sm:$0xff]
    %v530 = vld [vmem:[#allocation2 + $0xdd0] sm:$0xff]
    %v531 = vld [vmem:[#allocation2 + $0xdd8] sm:$0xff]
    %v532 = vld [vmem:[#allocation2 + $0xde0] sm:$0xff]
    %v533 = vld [vmem:[#allocation2 + $0xde8] sm:$0xff]
    %v534 = vld [vmem:[#allocation2 + $0xdf0] sm:$0xff]
    %v535 = vld [vmem:[#allocation2 + $0xdf8] sm:$0xff]
    %v536 = vld [vmem:[#allocation2 + $0xe00] sm:$0xff]
    %v537 = vld [vmem:[#allocation2 + $0xe08] sm:$0xff]
    %v538 = vld [vmem:[#allocation2 + $0xe10] sm:$0xff]
    %v539 = vld [vmem:[#allocation2 + $0xe18] sm:$0xff]
    %v540 = vld [vmem:[#allocation2 + $0xe20] sm:$0xff]
    %v541 = vld [vmem:[#allocation2 + $0xe28] sm:$0xff]
    %v542 = vld [vmem:[#allocation2 + $0xe30] sm:$0xff]
    %v543 = vld [vmem:[#allocation2 + $0xe38] sm:$0xff]
    %v544 = vld [vmem:[#allocation2 + $0xe40] sm:$0xff]
    %v545 = vld [vmem:[#allocation2 + $0xe48] sm:$0xff]
    %v546 = vld [vmem:[#allocation2 + $0xe50] sm:$0xff]
    %v547 = vld [vmem:[#allocation2 + $0xe58] sm:$0xff]
    %v548 = vld [vmem:[#allocation2 + $0xe60] sm:$0xff]
    %v549 = vld [vmem:[#allocation2 + $0xe68] sm:$0xff]
    %v550 = vld [vmem:[#allocation2 + $0xe70] sm:$0xff]
    %v551 = vld [vmem:[#allocation2 + $0xe78] sm:$0xff]
    %v552 = vld [vmem:[#allocation2 + $0xe80] sm:$0xff]
    %v553 = vld [vmem:[#allocation2 + $0xe88] sm:$0xff]
    %v554 = vld [vmem:[#allocation2 + $0xe90] sm:$0xff]
    %v555 = vld [vmem:[#allocation2 + $0xe98] sm:$0xff]
    %v556 = vld [vmem:[#allocation2 + $0xea0] sm:$0xff]
    %v557 = vld [vmem:[#allocation2 + $0xea8] sm:$0xff]
    %v558 = vld [vmem:[#allocation2 + $0xeb0] sm:$0xff]
    %v559 = vld [vmem:[#allocation2 + $0xeb8] sm:$0xff]
    %v560 = vld [vmem:[#allocation2 + $0xec0] sm:$0xff]
    %v561 = vld [vmem:[#allocation2 + $0xec8] sm:$0xff]
    %v562 = vld [vmem:[#allocation2 + $0xed0] sm:$0xff]
    %v563 = vld [vmem:[#allocation2 + $0xed8] sm:$0xff]
    %v564 = vld [vmem:[#allocation2 + $0xee0] sm:$0xff]
    %v565 = vld [vmem:[#allocation2 + $0xee8] sm:$0xff]
    %v566 = vld [vmem:[#allocation2 + $0xef0] sm:$0xff]
    %v567 = vld [vmem:[#allocation2 + $0xef8] sm:$0xff]
    %v568 = vld [vmem:[#allocation2 + $0xf00] sm:$0xff]
    %v569 = vld [vmem:[#allocation2 + $0xf08] sm:$0xff]
    %v570 = vld [vmem:[#allocation2 + $0xf10] sm:$0xff]
    %v571 = vld [vmem:[#allocation2 + $0xf18] sm:$0xff]
    %v572 = vld [vmem:[#allocation2 + $0xf20] sm:$0xff]
    %v573 = vld [vmem:[#allocation2 + $0xf28] sm:$0xff]
    %v574 = vld [vmem:[#allocation2 + $0xf30] sm:$0xff]
    %v575 = vld [vmem:[#allocation2 + $0xf38] sm:$0xff]
    %v576 = vld [vmem:[#allocation2 + $0xf40] sm:$0xff]
    %v577 = vld [vmem:[#allocation2 + $0xf48] sm:$0xff]
    %v578 = vld [vmem:[#allocation2 + $0xf50] sm:$0xff]
    %v579 = vld [vmem:[#allocation2 + $0xf58] sm:$0xff]
    %v580 = vld [vmem:[#allocation2 + $0xf60] sm:$0xff]
    %v581 = vld [vmem:[#allocation2 + $0xf68] sm:$0xff]
    %v582 = vld [vmem:[#allocation2 + $0xf70] sm:$0xff]
    %v583 = vld [vmem:[#allocation2 + $0xf78] sm:$0xff]
    %v584 = vld [vmem:[#allocation2 + $0xf80] sm:$0xff]
    %v585 = vld [vmem:[#allocation2 + $0xf88] sm:$0xff]
    %v586 = vld [vmem:[#allocation2 + $0xf90] sm:$0xff]
    %v587 = vld [vmem:[#allocation2 + $0xf98] sm:$0xff]
    %v588 = vld [vmem:[#allocation2 + $0xfa0] sm:$0xff]
    %v589 = vld [vmem:[#allocation2 + $0xfa8] sm:$0xff]
    %v590 = vld [vmem:[#allocation2 + $0xfb0] sm:$0xff]
    %v591 = vld [vmem:[#allocation2 + $0xfb8] sm:$0xff]
    %v592 = vld [vmem:[#allocation2 + $0xfc0] sm:$0xff]
    %v593 = vld [vmem:[#allocation2 + $0xfc8] sm:$0xff]
    %v594 = vld [vmem:[#allocation2 + $0xfd0] sm:$0xff]
    %v595 = vld [vmem:[#allocation2 + $0xfd8] sm:$0xff]
    %v596 = vld [vmem:[#allocation2 + $0xfe0] sm:$0xff]
    %v597 = vld [vmem:[#allocation2 + $0xfe8] sm:$0xff]
    %v598 = vld [vmem:[#allocation2 + $0xff0] sm:$0xff]
    %v599 = vld [vmem:[#allocation2 + $0xff8] sm:$0xff]
    %v600 = vld [vmem:[#allocation2 + $0x1000] sm:$0xff]
    %v601 = vld [vmem:[#allocation2 + $0x1008] sm:$0xff]
    %v602 = vld [vmem:[#allocation2 + $0x1010] sm:$0xff]
    %v603 = vld [vmem:[#allocation2 + $0x1018] sm:$0xff]
    %v604 = vld [vmem:[#allocation2 + $0x1020] sm:$0xff]
    %v605 = vld [vmem:[#allocation2 + $0x1028] sm:$0xff]
    %v606 = vld [vmem:[#allocation2 + $0x1030] sm:$0xff]
    %v607 = vld [vmem:[#allocation2 + $0x1038] sm:$0xff]
    %v608 = vld [vmem:[#allocation2 + $0x1040] sm:$0xff]
    %v609 = vld [vmem:[#allocation2 + $0x1048] sm:$0xff]
    %v610 = vld [vmem:[#allocation2 + $0x1050] sm:$0xff]
    %v611 = vld [vmem:[#allocation2 + $0x1058] sm:$0xff]
    %v612 = vld [vmem:[#allocation2 + $0x1060] sm:$0xff]
    %v613 = vld [vmem:[#allocation2 + $0x1068] sm:$0xff]
    %v614 = vld [vmem:[#allocation2 + $0x1070] sm:$0xff]
    %v615 = vld [vmem:[#allocation2 + $0x1078] sm:$0xff]
    %v616 = vld [vmem:[#allocation2 + $0x1080] sm:$0xff]
    %v617 = vld [vmem:[#allocation2 + $0x1088] sm:$0xff]
    %v618 = vld [vmem:[#allocation2 + $0x1090] sm:$0xff]
    %v619 = vld [vmem:[#allocation2 + $0x1098] sm:$0xff]
    %v620 = vld [vmem:[#allocation2 + $0x10a0] sm:$0xff]
    %v621 = vld [vmem:[#allocation2 + $0x10a8] sm:$0xff]
    %v622 = vld [vmem:[#allocation2 + $0x10b0] sm:$0xff]
    %v623 = vld [vmem:[#allocation2 + $0x10b8] sm:$0xff]
    %v624 = vld [vmem:[#allocation2 + $0x10c0] sm:$0xff]
    %v625 = vld [vmem:[#allocation2 + $0x10c8] sm:$0xff]
    %v626 = vld [vmem:[#allocation2 + $0x10d0] sm:$0xff]
    %v627 = vld [vmem:[#allocation2 + $0x10d8] sm:$0xff]
    %v628 = vld [vmem:[#allocation2 + $0x10e0] sm:$0xff]
    %v629 = vld [vmem:[#allocation2 + $0x10e8] sm:$0xff]
    %v630 = vld [vmem:[#allocation2 + $0x10f0] sm:$0xff]
    %v631 = vld [vmem:[#allocation2 + $0x10f8] sm:$0xff]
    %v632 = vld [vmem:[#allocation2 + $0x1100] sm:$0xff]
    %v633 = vld [vmem:[#allocation2 + $0x1108] sm:$0xff]
    %v634 = vld [vmem:[#allocation2 + $0x1110] sm:$0xff]
    %v635 = vld [vmem:[#allocation2 + $0x1118] sm:$0xff]
    %v636 = vld [vmem:[#allocation2 + $0x1120] sm:$0xff]
    %v637 = vld [vmem:[#allocation2 + $0x1128] sm:$0xff]
    %v638 = vld [vmem:[#allocation2 + $0x1130] sm:$0xff]
    %v639 = vld [vmem:[#allocation2 + $0x1138] sm:$0xff]
    %v640 = vld [vmem:[#allocation2 + $0x1140] sm:$0xff]
    %v641 = vld [vmem:[#allocation2 + $0x1148] sm:$0xff]
    %v642 = vld [vmem:[#allocation2 + $0x1150] sm:$0xff]
    %v643 = vld [vmem:[#allocation2 + $0x1158] sm:$0xff]
    %v644 = vld [vmem:[#allocation2 + $0x1160] sm:$0xff]
    %v645 = vld [vmem:[#allocation2 + $0x1168] sm:$0xff]
    %v646 = vld [vmem:[#allocation2 + $0x1170] sm:$0xff]
    %v647 = vld [vmem:[#allocation2 + $0x1178] sm:$0xff]
    %v648 = vld [vmem:[#allocation2 + $0x1180] sm:$0xff]
    %v649 = vld [vmem:[#allocation2 + $0x1188] sm:$0xff]
    %v650 = vld [vmem:[#allocation2 + $0x1190] sm:$0xff]
    %v651 = vld [vmem:[#allocation2 + $0x1198] sm:$0xff]
    %v652 = vld [vmem:[#allocation2 + $0x11a0] sm:$0xff]
    %v653 = vld [vmem:[#allocation2 + $0x11a8] sm:$0xff]
    %v654 = vld [vmem:[#allocation2 + $0x11b0] sm:$0xff]
    %v655 = vld [vmem:[#allocation2 + $0x11b8] sm:$0xff]
    %v656 = vld [vmem:[#allocation2 + $0x11c0] sm:$0xff]
    %v657 = vld [vmem:[#allocation2 + $0x11c8] sm:$0xff]
    %v658 = vld [vmem:[#allocation2 + $0x11d0] sm:$0xff]
    %v659 = vld [vmem:[#allocation2 + $0x11d8] sm:$0xff]
    %v660 = vld [vmem:[#allocation2 + $0x11e0] sm:$0xff]
    %v661 = vld [vmem:[#allocation2 + $0x11e8] sm:$0xff]
    %v662 = vld [vmem:[#allocation2 + $0x11f0] sm:$0xff]
    %v663 = vld [vmem:[#allocation2 + $0x11f8] sm:$0xff]
    %v664 = vld [vmem:[#allocation2 + $0x1200] sm:$0xff]
    %v665 = vld [vmem:[#allocation2 + $0x1208] sm:$0xff]
    %v666 = vld [vmem:[#allocation2 + $0x1210] sm:$0xff]
    %v667 = vld [vmem:[#allocation2 + $0x1218] sm:$0xff]
    %v668 = vld [vmem:[#allocation2 + $0x1220] sm:$0xff]
    %v669 = vld [vmem:[#allocation2 + $0x1228] sm:$0xff]
    %v670 = vld [vmem:[#allocation2 + $0x1230] sm:$0xff]
    %v671 = vld [vmem:[#allocation2 + $0x1238] sm:$0xff]
    %v672 = vld [vmem:[#allocation2 + $0x1240] sm:$0xff]
    %v673 = vld [vmem:[#allocation2 + $0x1248] sm:$0xff]
    %v674 = vld [vmem:[#allocation2 + $0x1250] sm:$0xff]
    %v675 = vld [vmem:[#allocation2 + $0x1258] sm:$0xff]
    %v676 = vld [vmem:[#allocation2 + $0x1260] sm:$0xff]
    %v677 = vld [vmem:[#allocation2 + $0x1268] sm:$0xff]
    %v678 = vld [vmem:[#allocation2 + $0x1270] sm:$0xff]
    %v679 = vld [vmem:[#allocation2 + $0x1278] sm:$0xff]
    %v680 = vld [vmem:[#allocation2 + $0x1280] sm:$0xff]
    %v681 = vld [vmem:[#allocation2 + $0x1288] sm:$0xff]
    %v682 = vld [vmem:[#allocation2 + $0x1290] sm:$0xff]
    %v683 = vld [vmem:[#allocation2 + $0x1298] sm:$0xff]
    %v684 = vld [vmem:[#allocation2 + $0x12a0] sm:$0xff]
    %v685 = vld [vmem:[#allocation2 + $0x12a8] sm:$0xff]
    %v686 = vld [vmem:[#allocation2 + $0x12b0] sm:$0xff]
    %v687 = vld [vmem:[#allocation2 + $0x12b8] sm:$0xff]
    %v688 = vld [vmem:[#allocation2 + $0x12c0] sm:$0xff]
    %v689 = vld [vmem:[#allocation2 + $0x12c8] sm:$0xff]
    %v690 = vld [vmem:[#allocation2 + $0x12d0] sm:$0xff]
    %v691 = vld [vmem:[#allocation2 + $0x12d8] sm:$0xff]
    %v692 = vld [vmem:[#allocation2 + $0x12e0] sm:$0xff]
    %v693 = vld [vmem:[#allocation2 + $0x12e8] sm:$0xff]
    %v694 = vld [vmem:[#allocation2 + $0x12f0] sm:$0xff]
    %v695 = vld [vmem:[#allocation2 + $0x12f8] sm:$0xff]
    %v696 = vld [vmem:[#allocation2 + $0x1300] sm:$0xff]
    %v697 = vld [vmem:[#allocation2 + $0x1308] sm:$0xff]
    %v698 = vld [vmem:[#allocation2 + $0x1310] sm:$0xff]
    %v699 = vld [vmem:[#allocation2 + $0x1318] sm:$0xff]
    %v700 = vld [vmem:[#allocation2 + $0x1320] sm:$0xff]
    %v701 = vld [vmem:[#allocation2 + $0x1328] sm:$0xff]
    %v702 = vld [vmem:[#allocation2 + $0x1330] sm:$0xff]
    %v703 = vld [vmem:[#allocation2 + $0x1338] sm:$0xff]
    %v704 = vld [vmem:[#allocation2 + $0x1340] sm:$0xff]
    %v705 = vld [vmem:[#allocation2 + $0x1348] sm:$0xff]
    %v706 = vld [vmem:[#allocation2 + $0x1350] sm:$0xff]
    %v707 = vld [vmem:[#allocation2 + $0x1358] sm:$0xff]
    %v708 = vld [vmem:[#allocation2 + $0x1360] sm:$0xff]
    %v709 = vld [vmem:[#allocation2 + $0x1368] sm:$0xff]
    %v710 = vld [vmem:[#allocation2 + $0x1370] sm:$0xff]
    %v711 = vld [vmem:[#allocation2 + $0x1378] sm:$0xff]
    %v712 = vld [vmem:[#allocation2 + $0x1380] sm:$0xff]
    %v713 = vld [vmem:[#allocation2 + $0x1388] sm:$0xff]
    %v714 = vld [vmem:[#allocation2 + $0x1390] sm:$0xff]
    %v715 = vld [vmem:[#allocation2 + $0x1398] sm:$0xff]
    %v716 = vld [vmem:[#allocation2 + $0x13a0] sm:$0xff]
    %v717 = vld [vmem:[#allocation2 + $0x13a8] sm:$0xff]
    %v718 = vld [vmem:[#allocation2 + $0x13b0] sm:$0xff]
    %v719 = vld [vmem:[#allocation2 + $0x13b8] sm:$0xff]
    %v720 = vld [vmem:[#allocation2 + $0x13c0] sm:$0xff]
    %v721 = vld [vmem:[#allocation2 + $0x13c8] sm:$0xff]
    %v722 = vld [vmem:[#allocation2 + $0x13d0] sm:$0xff]
    %v723 = vld [vmem:[#allocation2 + $0x13d8] sm:$0xff]
    %v724 = vld [vmem:[#allocation2 + $0x13e0] sm:$0xff]
    %v725 = vld [vmem:[#allocation2 + $0x13e8] sm:$0xff]
    %v726 = vld [vmem:[#allocation2 + $0x13f0] sm:$0xff]
    %v727 = vld [vmem:[#allocation2 + $0x13f8] sm:$0xff]
    %v728 = vld [vmem:[#allocation2 + $0x1400] sm:$0xff]
    %v729 = vld [vmem:[#allocation2 + $0x1408] sm:$0xff]
    %v730 = vld [vmem:[#allocation2 + $0x1410] sm:$0xff]
    %v731 = vld [vmem:[#allocation2 + $0x1418] sm:$0xff]
    %v732 = vld [vmem:[#allocation2 + $0x1420] sm:$0xff]
    %v733 = vld [vmem:[#allocation2 + $0x1428] sm:$0xff]
    %v734 = vld [vmem:[#allocation2 + $0x1430] sm:$0xff]
    %v735 = vld [vmem:[#allocation2 + $0x1438] sm:$0xff]
    %v736 = vld [vmem:[#allocation2 + $0x1440] sm:$0xff]
    %v737 = vld [vmem:[#allocation2 + $0x1448] sm:$0xff]
    %v738 = vld [vmem:[#allocation2 + $0x1450] sm:$0xff]
    %v739 = vld [vmem:[#allocation2 + $0x1458] sm:$0xff]
    %v740 = vld [vmem:[#allocation2 + $0x1460] sm:$0xff]
    %v741 = vld [vmem:[#allocation2 + $0x1468] sm:$0xff]
    %v742 = vld [vmem:[#allocation2 + $0x1470] sm:$0xff]
    %v743 = vld [vmem:[#allocation2 + $0x1478] sm:$0xff]
    %v744 = vld [vmem:[#allocation2 + $0x1480] sm:$0xff]
    %v745 = vld [vmem:[#allocation2 + $0x1488] sm:$0xff]
    %v746 = vld [vmem:[#allocation2 + $0x1490] sm:$0xff]
    %v747 = vld [vmem:[#allocation2 + $0x1498] sm:$0xff]
    %v748 = vld [vmem:[#allocation2 + $0x14a0] sm:$0xff]
    %v749 = vld [vmem:[#allocation2 + $0x14a8] sm:$0xff]
    %v750 = vld [vmem:[#allocation2 + $0x14b0] sm:$0xff]
    %v751 = vld [vmem:[#allocation2 + $0x14b8] sm:$0xff]
    %v752 = vld [vmem:[#allocation2 + $0x14c0] sm:$0xff]
    %v753 = vld [vmem:[#allocation2 + $0x14c8] sm:$0xff]
    %v754 = vld [vmem:[#allocation2 + $0x14d0] sm:$0xff]
    %v755 = vld [vmem:[#allocation2 + $0x14d8] sm:$0xff]
    %v756 = vld [vmem:[#allocation2 + $0x14e0] sm:$0xff]
    %v757 = vld [vmem:[#allocation2 + $0x14e8] sm:$0xff]
    %v758 = vld [vmem:[#allocation2 + $0x14f0] sm:$0xff]
    %v759 = vld [vmem:[#allocation2 + $0x14f8] sm:$0xff]
    %v760 = vld [vmem:[#allocation2 + $0x1500] sm:$0xff]
    %v761 = vld [vmem:[#allocation2 + $0x1508] sm:$0xff]
    %v762 = vld [vmem:[#allocation2 + $0x1510] sm:$0xff]
    %v763 = vld [vmem:[#allocation2 + $0x1518] sm:$0xff]
    %v764 = vld [vmem:[#allocation2 + $0x1520] sm:$0xff]
    %v765 = vld [vmem:[#allocation2 + $0x1528] sm:$0xff]
    %v766 = vld [vmem:[#allocation2 + $0x1530] sm:$0xff]
    %v767 = vld [vmem:[#allocation2 + $0x1538] sm:$0xff]
    %v768 = vld [vmem:[#allocation2 + $0x1540] sm:$0xff]
    %v769 = vld [vmem:[#allocation2 + $0x1548] sm:$0xff]
    %v770 = vld [vmem:[#allocation2 + $0x1550] sm:$0xff]
    %v771 = vld [vmem:[#allocation2 + $0x1558] sm:$0xff]
    %v772 = vld [vmem:[#allocation2 + $0x1560] sm:$0xff]
    %v773 = vld [vmem:[#allocation2 + $0x1568] sm:$0xff]
    %v774 = vld [vmem:[#allocation2 + $0x1570] sm:$0xff]
    %v775 = vld [vmem:[#allocation2 + $0x1578] sm:$0xff]
    %v776 = vld [vmem:[#allocation2 + $0x1580] sm:$0xff]
    %v777 = vld [vmem:[#allocation2 + $0x1588] sm:$0xff]
    %v778 = vld [vmem:[#allocation2 + $0x1590] sm:$0xff]
    %v779 = vld [vmem:[#allocation2 + $0x1598] sm:$0xff]
    %v780 = vld [vmem:[#allocation2 + $0x15a0] sm:$0xff]
    %v781 = vld [vmem:[#allocation2 + $0x15a8] sm:$0xff]
    %v782 = vld [vmem:[#allocation2 + $0x15b0] sm:$0xff]
    %v783 = vld [vmem:[#allocation2 + $0x15b8] sm:$0xff]
    %v784 = vld [vmem:[#allocation2 + $0x15c0] sm:$0xff]
    %v785 = vld [vmem:[#allocation2 + $0x15c8] sm:$0xff]
    %v786 = vld [vmem:[#allocation2 + $0x15d0] sm:$0xff]
    %v787 = vld [vmem:[#allocation2 + $0x15d8] sm:$0xff]
    %v788 = vld [vmem:[#allocation2 + $0x15e0] sm:$0xff]
    %v789 = vld [vmem:[#allocation2 + $0x15e8] sm:$0xff]
    %v790 = vld [vmem:[#allocation2 + $0x15f0] sm:$0xff]
    %v791 = vld [vmem:[#allocation2 + $0x15f8] sm:$0xff]
    %v792 = vld [vmem:[#allocation2 + $0x1600] sm:$0xff]
    %v793 = vld [vmem:[#allocation2 + $0x1608] sm:$0xff]
    %v794 = vld [vmem:[#allocation2 + $0x1610] sm:$0xff]
    %v795 = vld [vmem:[#allocation2 + $0x1618] sm:$0xff]
    %v796 = vld [vmem:[#allocation2 + $0x1620] sm:$0xff]
    %v797 = vld [vmem:[#allocation2 + $0x1628] sm:$0xff]
    %v798 = vld [vmem:[#allocation2 + $0x1630] sm:$0xff]
    %v799 = vld [vmem:[#allocation2 + $0x1638] sm:$0xff]
    %v800 = vld [vmem:[#allocation2 + $0x1640] sm:$0xff]
    %v801 = vld [vmem:[#allocation2 + $0x1648] sm:$0xff]
    %v802 = vld [vmem:[#allocation2 + $0x1650] sm:$0xff]
    %v803 = vld [vmem:[#allocation2 + $0x1658] sm:$0xff]
    %v804 = vld [vmem:[#allocation2 + $0x1660] sm:$0xff]
    %v805 = vld [vmem:[#allocation2 + $0x1668] sm:$0xff]
    %v806 = vld [vmem:[#allocation2 + $0x1670] sm:$0xff]
    %v807 = vld [vmem:[#allocation2 + $0x1678] sm:$0xff]
    %v808 = vld [vmem:[#allocation2 + $0x1680] sm:$0xff]
    %v809 = vld [vmem:[#allocation2 + $0x1688] sm:$0xff]
    %v810 = vld [vmem:[#allocation2 + $0x1690] sm:$0xff]
    %v811 = vld [vmem:[#allocation2 + $0x1698] sm:$0xff]
    %v812 = vld [vmem:[#allocation2 + $0x16a0] sm:$0xff]
    %v813 = vld [vmem:[#allocation2 + $0x16a8] sm:$0xff]
    %v814 = vld [vmem:[#allocation2 + $0x16b0] sm:$0xff]
    %v815 = vld [vmem:[#allocation2 + $0x16b8] sm:$0xff]
    %v816 = vld [vmem:[#allocation2 + $0x16c0] sm:$0xff]
    %v817 = vld [vmem:[#allocation2 + $0x16c8] sm:$0xff]
    %v818 = vld [vmem:[#allocation2 + $0x16d0] sm:$0xff]
    %v819 = vld [vmem:[#allocation2 + $0x16d8] sm:$0xff]
    %v820 = vld [vmem:[#allocation2 + $0x16e0] sm:$0xff]
    %v821 = vld [vmem:[#allocation2 + $0x16e8] sm:$0xff]
    %v822 = vld [vmem:[#allocation2 + $0x16f0] sm:$0xff]
    %v823 = vld [vmem:[#allocation2 + $0x16f8] sm:$0xff]
    %v824 = vld [vmem:[#allocation2 + $0x1700] sm:$0xff]
    %v825 = vld [vmem:[#allocation2 + $0x1708] sm:$0xff]
    %v826 = vld [vmem:[#allocation2 + $0x1710] sm:$0xff]
    %v827 = vld [vmem:[#allocation2 + $0x1718] sm:$0xff]
    %v828 = vld [vmem:[#allocation2 + $0x1720] sm:$0xff]
    %v829 = vld [vmem:[#allocation2 + $0x1728] sm:$0xff]
    %v830 = vld [vmem:[#allocation2 + $0x1730] sm:$0xff]
    %v831 = vld [vmem:[#allocation2 + $0x1738] sm:$0xff]
    %v832 = vld [vmem:[#allocation2 + $0x1740] sm:$0xff]
    %v833 = vld [vmem:[#allocation2 + $0x1748] sm:$0xff]
    %v834 = vld [vmem:[#allocation2 + $0x1750] sm:$0xff]
    %v835 = vld [vmem:[#allocation2 + $0x1758] sm:$0xff]
    %v836 = vld [vmem:[#allocation2 + $0x1760] sm:$0xff]
    %v837 = vld [vmem:[#allocation2 + $0x1768] sm:$0xff]
    %v838 = vld [vmem:[#allocation2 + $0x1770] sm:$0xff]
    %v839 = vld [vmem:[#allocation2 + $0x1778] sm:$0xff]
    %v840 = vld [vmem:[#allocation2 + $0x1780] sm:$0xff]
    %v841 = vld [vmem:[#allocation2 + $0x1788] sm:$0xff]
    %v842 = vld [vmem:[#allocation2 + $0x1790] sm:$0xff]
    %v843 = vld [vmem:[#allocation2 + $0x1798] sm:$0xff]
    %v844 = vld [vmem:[#allocation2 + $0x17a0] sm:$0xff]
    %v845 = vld [vmem:[#allocation2 + $0x17a8] sm:$0xff]
    %v846 = vld [vmem:[#allocation2 + $0x17b0] sm:$0xff]
    %v847 = vld [vmem:[#allocation2 + $0x17b8] sm:$0xff]
    %v848 = vld [vmem:[#allocation2 + $0x17c0] sm:$0xff]
    %v849 = vld [vmem:[#allocation2 + $0x17c8] sm:$0xff]
    %v850 = vld [vmem:[#allocation2 + $0x17d0] sm:$0xff]
    %v851 = vld [vmem:[#allocation2 + $0x17d8] sm:$0xff]
    %v852 = vld [vmem:[#allocation2 + $0x17e0] sm:$0xff]
    %v853 = vld [vmem:[#allocation2 + $0x17e8] sm:$0xff]
    %v854 = vld [vmem:[#allocation2 + $0x17f0] sm:$0xff]
    %v855 = vld [vmem:[#allocation2 + $0x17f8] sm:$0xff]
    %v856 = vld [vmem:[#allocation2 + $0x1800] sm:$0xff]
    %v857 = vld [vmem:[#allocation2 + $0x1808] sm:$0xff]
    %v858 = vld [vmem:[#allocation2 + $0x1810] sm:$0xff]
    %v859 = vld [vmem:[#allocation2 + $0x1818] sm:$0xff]
    %v860 = vld [vmem:[#allocation2 + $0x1820] sm:$0xff]
    %v861 = vld [vmem:[#allocation2 + $0x1828] sm:$0xff]
    %v862 = vld [vmem:[#allocation2 + $0x1830] sm:$0xff]
    %v863 = vld [vmem:[#allocation2 + $0x1838] sm:$0xff]
    %v864 = vld [vmem:[#allocation2 + $0x1840] sm:$0xff]
    %v865 = vld [vmem:[#allocation2 + $0x1848] sm:$0xff]
    %v866 = vld [vmem:[#allocation2 + $0x1850] sm:$0xff]
    %v867 = vld [vmem:[#allocation2 + $0x1858] sm:$0xff]
    %v868 = vld [vmem:[#allocation2 + $0x1860] sm:$0xff]
    %v869 = vld [vmem:[#allocation2 + $0x1868] sm:$0xff]
    %v870 = vld [vmem:[#allocation2 + $0x1870] sm:$0xff]
    %v871 = vld [vmem:[#allocation2 + $0x1878] sm:$0xff]
    %v872 = vld [vmem:[#allocation2 + $0x1880] sm:$0xff]
    %v873 = vld [vmem:[#allocation2 + $0x1888] sm:$0xff]
    %v874 = vld [vmem:[#allocation2 + $0x1890] sm:$0xff]
    %v875 = vld [vmem:[#allocation2 + $0x1898] sm:$0xff]
    %v876 = vld [vmem:[#allocation2 + $0x18a0] sm:$0xff]
    %v877 = vld [vmem:[#allocation2 + $0x18a8] sm:$0xff]
    %v878 = vld [vmem:[#allocation2 + $0x18b0] sm:$0xff]
    %v879 = vld [vmem:[#allocation2 + $0x18b8] sm:$0xff]
    %v880 = vld [vmem:[#allocation2 + $0x18c0] sm:$0xff]
    %v881 = vld [vmem:[#allocation2 + $0x18c8] sm:$0xff]
    %v882 = vld [vmem:[#allocation2 + $0x18d0] sm:$0xff]
    %v883 = vld [vmem:[#allocation2 + $0x18d8] sm:$0xff]
    %v884 = vld [vmem:[#allocation2 + $0x18e0] sm:$0xff]
    %v885 = vld [vmem:[#allocation2 + $0x18e8] sm:$0xff]
    %v886 = vld [vmem:[#allocation2 + $0x18f0] sm:$0xff]
    %v887 = vld [vmem:[#allocation2 + $0x18f8] sm:$0xff]
    %v888 = vld [vmem:[#allocation2 + $0x1900] sm:$0xff]
    %v889 = vld [vmem:[#allocation2 + $0x1908] sm:$0xff]
    %v890 = vld [vmem:[#allocation2 + $0x1910] sm:$0xff]
    %v891 = vld [vmem:[#allocation2 + $0x1918] sm:$0xff]
    %v892 = vld [vmem:[#allocation2 + $0x1920] sm:$0xff]
    %v893 = vld [vmem:[#allocation2 + $0x1928] sm:$0xff]
    %v894 = vld [vmem:[#allocation2 + $0x1930] sm:$0xff]
    %v895 = vld [vmem:[#allocation2 + $0x1938] sm:$0xff]
    %v896 = vld [vmem:[#allocation2 + $0x1940] sm:$0xff]
    %v897 = vld [vmem:[#allocation2 + $0x1948] sm:$0xff]
    %v898 = vld [vmem:[#allocation2 + $0x1950] sm:$0xff]
    %v899 = vld [vmem:[#allocation2 + $0x1958] sm:$0xff]
    %v900 = vld [vmem:[#allocation2 + $0x1960] sm:$0xff]
    %v901 = vld [vmem:[#allocation2 + $0x1968] sm:$0xff]
    %v902 = vld [vmem:[#allocation2 + $0x1970] sm:$0xff]
    %v903 = vld [vmem:[#allocation2 + $0x1978] sm:$0xff]
    %v904 = vld [vmem:[#allocation2 + $0x1980] sm:$0xff]
    %v905 = vld [vmem:[#allocation2 + $0x1988] sm:$0xff]
    %v906 = vld [vmem:[#allocation2 + $0x1990] sm:$0xff]
    %v907 = vld [vmem:[#allocation2 + $0x1998] sm:$0xff]
    %v908 = vld [vmem:[#allocation2 + $0x19a0] sm:$0xff]
    %v909 = vld [vmem:[#allocation2 + $0x19a8] sm:$0xff]
    %v910 = vld [vmem:[#allocation2 + $0x19b0] sm:$0xff]
    %v911 = vld [vmem:[#allocation2 + $0x19b8] sm:$0xff]
    %v912 = vld [vmem:[#allocation2 + $0x19c0] sm:$0xff]
    %v913 = vld [vmem:[#allocation2 + $0x19c8] sm:$0xff]
    %v914 = vld [vmem:[#allocation2 + $0x19d0] sm:$0xff]
    %v915 = vld [vmem:[#allocation2 + $0x19d8] sm:$0xff]
    %v916 = vld [vmem:[#allocation2 + $0x19e0] sm:$0xff]
    %v917 = vld [vmem:[#allocation2 + $0x19e8] sm:$0xff]
    %v918 = vld [vmem:[#allocation2 + $0x19f0] sm:$0xff]
    %v919 = vld [vmem:[#allocation2 + $0x19f8] sm:$0xff]
    %v920 = vld [vmem:[#allocation2 + $0x1a00] sm:$0xff]
    %v921 = vld [vmem:[#allocation2 + $0x1a08] sm:$0xff]
    %v922 = vld [vmem:[#allocation2 + $0x1a10] sm:$0xff]
    %v923 = vld [vmem:[#allocation2 + $0x1a18] sm:$0xff]
    %v924 = vld [vmem:[#allocation2 + $0x1a20] sm:$0xff]
    %v925 = vld [vmem:[#allocation2 + $0x1a28] sm:$0xff]
    %v926 = vld [vmem:[#allocation2 + $0x1a30] sm:$0xff]
    %v927 = vld [vmem:[#allocation2 + $0x1a38] sm:$0xff]
    %v928 = vld [vmem:[#allocation2 + $0x1a40] sm:$0xff]
    %v929 = vld [vmem:[#allocation2 + $0x1a48] sm:$0xff]
    %v930 = vld [vmem:[#allocation2 + $0x1a50] sm:$0xff]
    %v931 = vld [vmem:[#allocation2 + $0x1a58] sm:$0xff]
    %v932 = vld [vmem:[#allocation2 + $0x1a60] sm:$0xff]
    %v933 = vld [vmem:[#allocation2 + $0x1a68] sm:$0xff]
    %v934 = vld [vmem:[#allocation2 + $0x1a70] sm:$0xff]
    %v935 = vld [vmem:[#allocation2 + $0x1a78] sm:$0xff]
    %v936 = vld [vmem:[#allocation2 + $0x1a80] sm:$0xff]
    %v937 = vld [vmem:[#allocation2 + $0x1a88] sm:$0xff]
    %v938 = vld [vmem:[#allocation2 + $0x1a90] sm:$0xff]
    %v939 = vld [vmem:[#allocation2 + $0x1a98] sm:$0xff]
    %v940 = vld [vmem:[#allocation2 + $0x1aa0] sm:$0xff]
    %v941 = vld [vmem:[#allocation2 + $0x1aa8] sm:$0xff]
    %v942 = vld [vmem:[#allocation2 + $0x1ab0] sm:$0xff]
    %v943 = vld [vmem:[#allocation2 + $0x1ab8] sm:$0xff]
    %v944 = vld [vmem:[#allocation2 + $0x1ac0] sm:$0xff]
    %v945 = vld [vmem:[#allocation2 + $0x1ac8] sm:$0xff]
    %v946 = vld [vmem:[#allocation2 + $0x1ad0] sm:$0xff]
    %v947 = vld [vmem:[#allocation2 + $0x1ad8] sm:$0xff]
    %v948 = vld [vmem:[#allocation2 + $0x1ae0] sm:$0xff]
    %v949 = vld [vmem:[#allocation2 + $0x1ae8] sm:$0xff]
    %v950 = vld [vmem:[#allocation2 + $0x1af0] sm:$0xff]
    %v951 = vld [vmem:[#allocation2 + $0x1af8] sm:$0xff]
    %v952 = vld [vmem:[#allocation2 + $0x1b00] sm:$0xff]
    %v953 = vld [vmem:[#allocation2 + $0x1b08] sm:$0xff]
    %v954 = vld [vmem:[#allocation2 + $0x1b10] sm:$0xff]
    %v955 = vld [vmem:[#allocation2 + $0x1b18] sm:$0xff]
    %v956 = vld [vmem:[#allocation2 + $0x1b20] sm:$0xff]
    %v957 = vld [vmem:[#allocation2 + $0x1b28] sm:$0xff]
    %v958 = vld [vmem:[#allocation2 + $0x1b30] sm:$0xff]
    %v959 = vld [vmem:[#allocation2 + $0x1b38] sm:$0xff]
    %v960 = vld [vmem:[#allocation2 + $0x1b40] sm:$0xff]
    %v961 = vld [vmem:[#allocation2 + $0x1b48] sm:$0xff]
    %v962 = vld [vmem:[#allocation2 + $0x1b50] sm:$0xff]
    %v963 = vld [vmem:[#allocation2 + $0x1b58] sm:$0xff]
    %v964 = vld [vmem:[#allocation2 + $0x1b60] sm:$0xff]
    %v965 = vld [vmem:[#allocation2 + $0x1b68] sm:$0xff]
    %v966 = vld [vmem:[#allocation2 + $0x1b70] sm:$0xff]
    %v967 = vld [vmem:[#allocation2 + $0x1b78] sm:$0xff]
    %v968 = vld [vmem:[#allocation2 + $0x1b80] sm:$0xff]
    %v969 = vld [vmem:[#allocation2 + $0x1b88] sm:$0xff]
    %v970 = vld [vmem:[#allocation2 + $0x1b90] sm:$0xff]
    %v971 = vld [vmem:[#allocation2 + $0x1b98] sm:$0xff]
    %v972 = vld [vmem:[#allocation2 + $0x1ba0] sm:$0xff]
    %v973 = vld [vmem:[#allocation2 + $0x1ba8] sm:$0xff]
    %v974 = vld [vmem:[#allocation2 + $0x1bb0] sm:$0xff]
    %v975 = vld [vmem:[#allocation2 + $0x1bb8] sm:$0xff]
    %v976 = vld [vmem:[#allocation2 + $0x1bc0] sm:$0xff]
    %v977 = vld [vmem:[#allocation2 + $0x1bc8] sm:$0xff]
    %v978 = vld [vmem:[#allocation2 + $0x1bd0] sm:$0xff]
    %v979 = vld [vmem:[#allocation2 + $0x1bd8] sm:$0xff]
    %v980 = vld [vmem:[#allocation2 + $0x1be0] sm:$0xff]
    %v981 = vld [vmem:[#allocation2 + $0x1be8] sm:$0xff]
    %v982 = vld [vmem:[#allocation2 + $0x1bf0] sm:$0xff]
    %v983 = vld [vmem:[#allocation2 + $0x1bf8] sm:$0xff]
    %v984 = vld [vmem:[#allocation2 + $0x1c00] sm:$0xff]
    %v985 = vld [vmem:[#allocation2 + $0x1c08] sm:$0xff]
    %v986 = vld [vmem:[#allocation2 + $0x1c10] sm:$0xff]
    %v987 = vld [vmem:[#allocation2 + $0x1c18] sm:$0xff]
    %v988 = vld [vmem:[#allocation2 + $0x1c20] sm:$0xff]
    %v989 = vld [vmem:[#allocation2 + $0x1c28] sm:$0xff]
    %v990 = vld [vmem:[#allocation2 + $0x1c30] sm:$0xff]
    %v991 = vld [vmem:[#allocation2 + $0x1c38] sm:$0xff]
    %v992 = vld [vmem:[#allocation2 + $0x1c40] sm:$0xff]
    %v993 = vld [vmem:[#allocation2 + $0x1c48] sm:$0xff]
    %v994 = vld [vmem:[#allocation2 + $0x1c50] sm:$0xff]
    %v995 = vld [vmem:[#allocation2 + $0x1c58] sm:$0xff]
    %v996 = vld [vmem:[#allocation2 + $0x1c60] sm:$0xff]
    %v997 = vld [vmem:[#allocation2 + $0x1c68] sm:$0xff]
    %v998 = vld [vmem:[#allocation2 + $0x1c70] sm:$0xff]
    %v999 = vld [vmem:[#allocation2 + $0x1c78] sm:$0xff]
    %v1000 = vld [vmem:[#allocation2 + $0x1c80] sm:$0xff]
    %v1001 = vld [vmem:[#allocation2 + $0x1c88] sm:$0xff]
    %v1002 = vld [vmem:[#allocation2 + $0x1c90] sm:$0xff]
    %v1003 = vld [vmem:[#allocation2 + $0x1c98] sm:$0xff]
    %v1004 = vld [vmem:[#allocation2 + $0x1ca0] sm:$0xff]
    %v1005 = vld [vmem:[#allocation2 + $0x1ca8] sm:$0xff]
    %v1006 = vld [vmem:[#allocation2 + $0x1cb0] sm:$0xff]
    %v1007 = vld [vmem:[#allocation2 + $0x1cb8] sm:$0xff]
    %v1008 = vld [vmem:[#allocation2 + $0x1cc0] sm:$0xff]
    %v1009 = vld [vmem:[#allocation2 + $0x1cc8] sm:$0xff]
    %v1010 = vld [vmem:[#allocation2 + $0x1cd0] sm:$0xff]
    %v1011 = vld [vmem:[#allocation2 + $0x1cd8] sm:$0xff]
    %v1012 = vld [vmem:[#allocation2 + $0x1ce0] sm:$0xff]
    %v1013 = vld [vmem:[#allocation2 + $0x1ce8] sm:$0xff]
    %v1014 = vld [vmem:[#allocation2 + $0x1cf0] sm:$0xff]
    %v1015 = vld [vmem:[#allocation2 + $0x1cf8] sm:$0xff]
    %v1016 = vld [vmem:[#allocation2 + $0x1d00] sm:$0xff]
    %v1017 = vld [vmem:[#allocation2 + $0x1d08] sm:$0xff]
    %v1018 = vld [vmem:[#allocation2 + $0x1d10] sm:$0xff]
    %v1019 = vld [vmem:[#allocation2 + $0x1d18] sm:$0xff]
    %v1020 = vld [vmem:[#allocation2 + $0x1d20] sm:$0xff]
    %v1021 = vld [vmem:[#allocation2 + $0x1d28] sm:$0xff]
    %v1022 = vld [vmem:[#allocation2 + $0x1d30] sm:$0xff]
    %v1023 = vld [vmem:[#allocation2 + $0x1d38] sm:$0xff]
    %v1024 = vld [vmem:[#allocation2 + $0x1d40] sm:$0xff]
    %v1025 = vld [vmem:[#allocation2 + $0x1d48] sm:$0xff]
    %v1026 = vld [vmem:[#allocation2 + $0x1d50] sm:$0xff]
    %v1027 = vld [vmem:[#allocation2 + $0x1d58] sm:$0xff]
    %v1028 = vld [vmem:[#allocation2 + $0x1d60] sm:$0xff]
    %v1029 = vld [vmem:[#allocation2 + $0x1d68] sm:$0xff]
    %v1030 = vld [vmem:[#allocation2 + $0x1d70] sm:$0xff]
    %v1031 = vld [vmem:[#allocation2 + $0x1d78] sm:$0xff]
    %v1032 = vld [vmem:[#allocation2 + $0x1d80] sm:$0xff]
    %v1033 = vld [vmem:[#allocation2 + $0x1d88] sm:$0xff]
    %v1034 = vld [vmem:[#allocation2 + $0x1d90] sm:$0xff]
    %v1035 = vld [vmem:[#allocation2 + $0x1d98] sm:$0xff]
    %v1036 = vld [vmem:[#allocation2 + $0x1da0] sm:$0xff]
    %v1037 = vld [vmem:[#allocation2 + $0x1da8] sm:$0xff]
    %v1038 = vld [vmem:[#allocation2 + $0x1db0] sm:$0xff]
    %v1039 = vld [vmem:[#allocation2 + $0x1db8] sm:$0xff]
    %v1040 = vld [vmem:[#allocation2 + $0x1dc0] sm:$0xff]
    %v1041 = vld [vmem:[#allocation2 + $0x1dc8] sm:$0xff]
    %v1042 = vld [vmem:[#allocation2 + $0x1dd0] sm:$0xff]
    %v1043 = vld [vmem:[#allocation2 + $0x1dd8] sm:$0xff]
    %v1044 = vld [vmem:[#allocation2 + $0x1de0] sm:$0xff]
    %v1045 = vld [vmem:[#allocation2 + $0x1de8] sm:$0xff]
    %v1046 = vld [vmem:[#allocation2 + $0x1df0] sm:$0xff]
    %v1047 = vld [vmem:[#allocation2 + $0x1df8] sm:$0xff]
    %v1048 = vld [vmem:[#allocation2 + $0x1e00] sm:$0xff]
    %v1049 = vld [vmem:[#allocation2 + $0x1e08] sm:$0xff]
    %v1050 = vld [vmem:[#allocation2 + $0x1e10] sm:$0xff]
    %v1051 = vld [vmem:[#allocation2 + $0x1e18] sm:$0xff]
    %v1052 = vld [vmem:[#allocation2 + $0x1e20] sm:$0xff]
    %v1053 = vld [vmem:[#allocation2 + $0x1e28] sm:$0xff]
    %v1054 = vld [vmem:[#allocation2 + $0x1e30] sm:$0xff]
    %v1055 = vld [vmem:[#allocation2 + $0x1e38] sm:$0xff]
    %v1056 = vld [vmem:[#allocation2 + $0x1e40] sm:$0xff]
    %v1057 = vld [vmem:[#allocation2 + $0x1e48] sm:$0xff]
    %v1058 = vld [vmem:[#allocation2 + $0x1e50] sm:$0xff]
    %v1059 = vld [vmem:[#allocation2 + $0x1e58] sm:$0xff]
    %v1060 = vld [vmem:[#allocation2 + $0x1e60] sm:$0xff]
    %v1061 = vld [vmem:[#allocation2 + $0x1e68] sm:$0xff]
    %v1062 = vld [vmem:[#allocation2 + $0x1e70] sm:$0xff]
    %v1063 = vld [vmem:[#allocation2 + $0x1e78] sm:$0xff]
    %v1064 = vld [vmem:[#allocation2 + $0x1e80] sm:$0xff]
    %v1065 = vld [vmem:[#allocation2 + $0x1e88] sm:$0xff]
    %v1066 = vld [vmem:[#allocation2 + $0x1e90] sm:$0xff]
    %v1067 = vld [vmem:[#allocation2 + $0x1e98] sm:$0xff]
    %v1068 = vld [vmem:[#allocation2 + $0x1ea0] sm:$0xff]
    %v1069 = vld [vmem:[#allocation2 + $0x1ea8] sm:$0xff]
    %v1070 = vld [vmem:[#allocation2 + $0x1eb0] sm:$0xff]
    %v1071 = vld [vmem:[#allocation2 + $0x1eb8] sm:$0xff]
    %v1072 = vld [vmem:[#allocation2 + $0x1ec0] sm:$0xff]
    %v1073 = vld [vmem:[#allocation2 + $0x1ec8] sm:$0xff]
    %v1074 = vld [vmem:[#allocation2 + $0x1ed0] sm:$0xff]
    %v1075 = vld [vmem:[#allocation2 + $0x1ed8] sm:$0xff]
    %v1076 = vld [vmem:[#allocation2 + $0x1ee0] sm:$0xff]
    %v1077 = vld [vmem:[#allocation2 + $0x1ee8] sm:$0xff]
    %v1078 = vld [vmem:[#allocation2 + $0x1ef0] sm:$0xff]
    %v1079 = vld [vmem:[#allocation2 + $0x1ef8] sm:$0xff]
    %v1080 = vld [vmem:[#allocation2 + $0x1f00] sm:$0xff]
    %v1081 = vld [vmem:[#allocation2 + $0x1f08] sm:$0xff]
    %v1082 = vld [vmem:[#allocation2 + $0x1f10] sm:$0xff]
    %v1083 = vld [vmem:[#allocation2 + $0x1f18] sm:$0xff]
    %v1084 = vld [vmem:[#allocation2 + $0x1f20] sm:$0xff]
    %v1085 = vld [vmem:[#allocation2 + $0x1f28] sm:$0xff]
    %v1086 = vld [vmem:[#allocation2 + $0x1f30] sm:$0xff]
    %v1087 = vld [vmem:[#allocation2 + $0x1f38] sm:$0xff]
    %v1088 = vld [vmem:[#allocation2 + $0x1f40] sm:$0xff]
    %v1089 = vld [vmem:[#allocation2 + $0x1f48] sm:$0xff]
    %v1090 = vld [vmem:[#allocation2 + $0x1f50] sm:$0xff]
    %v1091 = vld [vmem:[#allocation2 + $0x1f58] sm:$0xff]
    %v1092 = vld [vmem:[#allocation2 + $0x1f60] sm:$0xff]
    %v1093 = vld [vmem:[#allocation2 + $0x1f68] sm:$0xff]
    %v1094 = vld [vmem:[#allocation2 + $0x1f70] sm:$0xff]
    %v1095 = vld [vmem:[#allocation2 + $0x1f78] sm:$0xff]
    %v1096 = vld [vmem:[#allocation2 + $0x1f80] sm:$0xff]
    %v1097 = vld [vmem:[#allocation2 + $0x1f88] sm:$0xff]
    %v1098 = vld [vmem:[#allocation2 + $0x1f90] sm:$0xff]
    %v1099 = vld [vmem:[#allocation2 + $0x1f98] sm:$0xff]
    %v1100 = vld [vmem:[#allocation2 + $0x1fa0] sm:$0xff]
    %v1101 = vld [vmem:[#allocation2 + $0x1fa8] sm:$0xff]
    %v1102 = vld [vmem:[#allocation2 + $0x1fb0] sm:$0xff]
    %v1103 = vld [vmem:[#allocation2 + $0x1fb8] sm:$0xff]
    %v1104 = vld [vmem:[#allocation2 + $0x1fc0] sm:$0xff]
    %v1105 = vld [vmem:[#allocation2 + $0x1fc8] sm:$0xff]
    %v1106 = vld [vmem:[#allocation2 + $0x1fd0] sm:$0xff]
    %v1107 = vld [vmem:[#allocation2 + $0x1fd8] sm:$0xff]
    %v1108 = vld [vmem:[#allocation2 + $0x1fe0] sm:$0xff]
    %v1109 = vld [vmem:[#allocation2 + $0x1fe8] sm:$0xff]
    %v1110 = vld [vmem:[#allocation2 + $0x1ff0] sm:$0xff]
    %v1111 = vld [vmem:[#allocation2 + $0x1ff8] sm:$0xff]
    %v1112 = vld [vmem:[#allocation5] sm:$0x1]
    %v1114 = vlaneseq
    %v1115 = vshrl.u32 %v1114, 7
    %v1116 = vsub.s32 0, %v1115
    %v1117 = vrot.slane %v1112, %v1116
    %v1135 = vcombine.high %v72, %v72
    %v1137 = vunpack.c.l.s4 1983009808
    %v1138 = vunpack.c.0.s8 %v1137
    %v1139 = vlaneseq
    %v1140 = vshrl.u32 %v1139, 7
    %v1141 = vsub.s32 %v1138, %v1140
    %v1142 = vrot.slane %v72, %v1141
    %v1144 = vunpack.c.l.s4 1983009808
    %v1145 = vunpack.c.0.s8 %v1144
    %v1146 = vlaneseq
    %v1147 = vshrl.u32 %v1146, 7
    %v1148 = vsub.s32 %v1145, %v1147
    %v1149 = vrot.slane %v1135, %v1148
    %v1150 = vcombine.high %v1142, %v1142
    %v1151 = vcombine.high %v1149, %v1149
    %v1152 = vcombine.high %v73, %v73
    %v1154 = vunpack.c.l.s4 1983009808
    %v1155 = vunpack.c.0.s8 %v1154
    %v1156 = vlaneseq
    %v1157 = vshrl.u32 %v1156, 7
    %v1158 = vsub.s32 %v1155, %v1157
    %v1159 = vrot.slane %v73, %v1158
    %v1161 = vunpack.c.l.s4 1983009808
    %v1162 = vunpack.c.0.s8 %v1161
    %v1163 = vlaneseq
    %v1164 = vshrl.u32 %v1163, 7
    %v1165 = vsub.s32 %v1162, %v1164
    %v1166 = vrot.slane %v1152, %v1165
    %v1167 = vcombine.high %v1159, %v1159
    %v1168 = vcombine.high %v1166, %v1166
    %v1169 = vcombine.high %v74, %v74
    %v1171 = vunpack.c.l.s4 1983009808
    %v1172 = vunpack.c.0.s8 %v1171
    %v1173 = vlaneseq
    %v1174 = vshrl.u32 %v1173, 7
    %v1175 = vsub.s32 %v1172, %v1174
    %v1176 = vrot.slane %v74, %v1175
    %v1178 = vunpack.c.l.s4 1983009808
    %v1179 = vunpack.c.0.s8 %v1178
    %v1180 = vlaneseq
    %v1181 = vshrl.u32 %v1180, 7
    %v1182 = vsub.s32 %v1179, %v1181
    %v1183 = vrot.slane %v1169, %v1182
    %v1184 = vcombine.high %v1176, %v1176
    %v1185 = vcombine.high %v1183, %v1183
    %v1186 = vcombine.high %v75, %v75
    %v1188 = vunpack.c.l.s4 1983009808
    %v1189 = vunpack.c.0.s8 %v1188
    %v1190 = vlaneseq
    %v1191 = vshrl.u32 %v1190, 7
    %v1192 = vsub.s32 %v1189, %v1191
    %v1193 = vrot.slane %v75, %v1192
    %v1195 = vunpack.c.l.s4 1983009808
    %v1196 = vunpack.c.0.s8 %v1195
    %v1197 = vlaneseq
    %v1198 = vshrl.u32 %v1197, 7
    %v1199 = vsub.s32 %v1196, %v1198
    %v1200 = vrot.slane %v1186, %v1199
    %v1201 = vcombine.high %v1193, %v1193
    %v1202 = vcombine.high %v1200, %v1200
    %v1203 = vcombine.high %v76, %v76
    %v1205 = vunpack.c.l.s4 1983009808
    %v1206 = vunpack.c.0.s8 %v1205
    %v1207 = vlaneseq
    %v1208 = vshrl.u32 %v1207, 7
    %v1209 = vsub.s32 %v1206, %v1208
    %v1210 = vrot.slane %v76, %v1209
    %v1212 = vunpack.c.l.s4 1983009808
    %v1213 = vunpack.c.0.s8 %v1212
    %v1214 = vlaneseq
    %v1215 = vshrl.u32 %v1214, 7
    %v1216 = vsub.s32 %v1213, %v1215
    %v1217 = vrot.slane %v1203, %v1216
    %v1218 = vcombine.high %v1210, %v1210
    %v1219 = vcombine.high %v1217, %v1217
    %v1220 = vcombine.high %v77, %v77
    %v1222 = vunpack.c.l.s4 1983009808
    %v1223 = vunpack.c.0.s8 %v1222
    %v1224 = vlaneseq
    %v1225 = vshrl.u32 %v1224, 7
    %v1226 = vsub.s32 %v1223, %v1225
    %v1227 = vrot.slane %v77, %v1226
    %v1229 = vunpack.c.l.s4 1983009808
    %v1230 = vunpack.c.0.s8 %v1229
    %v1231 = vlaneseq
    %v1232 = vshrl.u32 %v1231, 7
    %v1233 = vsub.s32 %v1230, %v1232
    %v1234 = vrot.slane %v1220, %v1233
    %v1235 = vcombine.high %v1227, %v1227
    %v1236 = vcombine.high %v1234, %v1234
    %v1237 = vcombine.high %v78, %v78
    %v1239 = vunpack.c.l.s4 1983009808
    %v1240 = vunpack.c.0.s8 %v1239
    %v1241 = vlaneseq
    %v1242 = vshrl.u32 %v1241, 7
    %v1243 = vsub.s32 %v1240, %v1242
    %v1244 = vrot.slane %v78, %v1243
    %v1246 = vunpack.c.l.s4 1983009808
    %v1247 = vunpack.c.0.s8 %v1246
    %v1248 = vlaneseq
    %v1249 = vshrl.u32 %v1248, 7
    %v1250 = vsub.s32 %v1247, %v1249
    %v1251 = vrot.slane %v1237, %v1250
    %v1252 = vcombine.high %v1244, %v1244
    %v1253 = vcombine.high %v1251, %v1251
    %v1254 = vcombine.high %v79, %v79
    %v1256 = vunpack.c.l.s4 1983009808
    %v1257 = vunpack.c.0.s8 %v1256
    %v1258 = vlaneseq
    %v1259 = vshrl.u32 %v1258, 7
    %v1260 = vsub.s32 %v1257, %v1259
    %v1261 = vrot.slane %v79, %v1260
    %v1263 = vunpack.c.l.s4 1983009808
    %v1264 = vunpack.c.0.s8 %v1263
    %v1265 = vlaneseq
    %v1266 = vshrl.u32 %v1265, 7
    %v1267 = vsub.s32 %v1264, %v1266
    %v1268 = vrot.slane %v1254, %v1267
    %v1269 = vcombine.high %v1261, %v1261
    %v1270 = vcombine.high %v1268, %v1268
    %v1271 = vcombine.high %v80, %v80
    %v1273 = vunpack.c.l.s4 1983009808
    %v1274 = vunpack.c.0.s8 %v1273
    %v1275 = vlaneseq
    %v1276 = vshrl.u32 %v1275, 7
    %v1277 = vsub.s32 %v1274, %v1276
    %v1278 = vrot.slane %v80, %v1277
    %v1280 = vunpack.c.l.s4 1983009808
    %v1281 = vunpack.c.0.s8 %v1280
    %v1282 = vlaneseq
    %v1283 = vshrl.u32 %v1282, 7
    %v1284 = vsub.s32 %v1281, %v1283
    %v1285 = vrot.slane %v1271, %v1284
    %v1286 = vcombine.high %v1278, %v1278
    %v1287 = vcombine.high %v1285, %v1285
    %v1288 = vcombine.high %v81, %v81
    %v1290 = vunpack.c.l.s4 1983009808
    %v1291 = vunpack.c.0.s8 %v1290
    %v1292 = vlaneseq
    %v1293 = vshrl.u32 %v1292, 7
    %v1294 = vsub.s32 %v1291, %v1293
    %v1295 = vrot.slane %v81, %v1294
    %v1297 = vunpack.c.l.s4 1983009808
    %v1298 = vunpack.c.0.s8 %v1297
    %v1299 = vlaneseq
    %v1300 = vshrl.u32 %v1299, 7
    %v1301 = vsub.s32 %v1298, %v1300
    %v1302 = vrot.slane %v1288, %v1301
    %v1303 = vcombine.high %v1295, %v1295
    %v1304 = vcombine.high %v1302, %v1302
    %v1305 = vcombine.high %v82, %v82
    %v1307 = vunpack.c.l.s4 1983009808
    %v1308 = vunpack.c.0.s8 %v1307
    %v1309 = vlaneseq
    %v1310 = vshrl.u32 %v1309, 7
    %v1311 = vsub.s32 %v1308, %v1310
    %v1312 = vrot.slane %v82, %v1311
    %v1314 = vunpack.c.l.s4 1983009808
    %v1315 = vunpack.c.0.s8 %v1314
    %v1316 = vlaneseq
    %v1317 = vshrl.u32 %v1316, 7
    %v1318 = vsub.s32 %v1315, %v1317
    %v1319 = vrot.slane %v1305, %v1318
    %v1320 = vcombine.high %v1312, %v1312
    %v1321 = vcombine.high %v1319, %v1319
    %v1322 = vcombine.high %v83, %v83
    %v1324 = vunpack.c.l.s4 1983009808
    %v1325 = vunpack.c.0.s8 %v1324
    %v1326 = vlaneseq
    %v1327 = vshrl.u32 %v1326, 7
    %v1328 = vsub.s32 %v1325, %v1327
    %v1329 = vrot.slane %v83, %v1328
    %v1331 = vunpack.c.l.s4 1983009808
    %v1332 = vunpack.c.0.s8 %v1331
    %v1333 = vlaneseq
    %v1334 = vshrl.u32 %v1333, 7
    %v1335 = vsub.s32 %v1332, %v1334
    %v1336 = vrot.slane %v1322, %v1335
    %v1337 = vcombine.high %v1329, %v1329
    %v1338 = vcombine.high %v1336, %v1336
    %v1339 = vcombine.high %v84, %v84
    %v1341 = vunpack.c.l.s4 1983009808
    %v1342 = vunpack.c.0.s8 %v1341
    %v1343 = vlaneseq
    %v1344 = vshrl.u32 %v1343, 7
    %v1345 = vsub.s32 %v1342, %v1344
    %v1346 = vrot.slane %v84, %v1345
    %v1348 = vunpack.c.l.s4 1983009808
    %v1349 = vunpack.c.0.s8 %v1348
    %v1350 = vlaneseq
    %v1351 = vshrl.u32 %v1350, 7
    %v1352 = vsub.s32 %v1349, %v1351
    %v1353 = vrot.slane %v1339, %v1352
    %v1354 = vcombine.high %v1346, %v1346
    %v1355 = vcombine.high %v1353, %v1353
    %v1356 = vcombine.high %v85, %v85
    %v1358 = vunpack.c.l.s4 1983009808
    %v1359 = vunpack.c.0.s8 %v1358
    %v1360 = vlaneseq
    %v1361 = vshrl.u32 %v1360, 7
    %v1362 = vsub.s32 %v1359, %v1361
    %v1363 = vrot.slane %v85, %v1362
    %v1365 = vunpack.c.l.s4 1983009808
    %v1366 = vunpack.c.0.s8 %v1365
    %v1367 = vlaneseq
    %v1368 = vshrl.u32 %v1367, 7
    %v1369 = vsub.s32 %v1366, %v1368
    %v1370 = vrot.slane %v1356, %v1369
    %v1371 = vcombine.high %v1363, %v1363
    %v1372 = vcombine.high %v1370, %v1370
    %v1373 = vcombine.high %v86, %v86
    %v1375 = vunpack.c.l.s4 1983009808
    %v1376 = vunpack.c.0.s8 %v1375
    %v1377 = vlaneseq
    %v1378 = vshrl.u32 %v1377, 7
    %v1379 = vsub.s32 %v1376, %v1378
    %v1380 = vrot.slane %v86, %v1379
    %v1382 = vunpack.c.l.s4 1983009808
    %v1383 = vunpack.c.0.s8 %v1382
    %v1384 = vlaneseq
    %v1385 = vshrl.u32 %v1384, 7
    %v1386 = vsub.s32 %v1383, %v1385
    %v1387 = vrot.slane %v1373, %v1386
    %v1388 = vcombine.high %v1380, %v1380
    %v1389 = vcombine.high %v1387, %v1387
    %v1390 = vcombine.high %v87, %v87
    %v1392 = vunpack.c.l.s4 1983009808
    %v1393 = vunpack.c.0.s8 %v1392
    %v1394 = vlaneseq
    %v1395 = vshrl.u32 %v1394, 7
    %v1396 = vsub.s32 %v1393, %v1395
    %v1397 = vrot.slane %v87, %v1396
    %v1399 = vunpack.c.l.s4 1983009808
    %v1400 = vunpack.c.0.s8 %v1399
    %v1401 = vlaneseq
    %v1402 = vshrl.u32 %v1401, 7
    %v1403 = vsub.s32 %v1400, %v1402
    %v1404 = vrot.slane %v1390, %v1403
    %v1405 = vcombine.high %v1397, %v1397
    %v1406 = vcombine.high %v1404, %v1404
    %1471 = vmatprep.subr.mxu0 0.0
    %1472 = vmatpush1.msra.mxu0 %v103
    %1473 = vmatprep.subr.mxu0 0.0
    %1474 = vmatpush1.msra.mxu0 %v102
    %1475 = vmatprep.subr.mxu0 0.0
    %1476 = vmatpush1.msra.mxu0 %v101
    %1477 = vmatprep.subr.mxu0 0.0
    %1478 = vmatpush1.msra.mxu0 %v100
    %1479 = vmatprep.subr.mxu0 0.0
    %1480 = vmatpush1.msra.mxu0 %v99
    %1481 = vmatprep.subr.mxu0 0.0
    %1482 = vmatpush1.msra.mxu0 %v98
    %1483 = vmatprep.subr.mxu0 0.0
    %1484 = vmatpush1.msra.mxu0 %v97
    %1485 = vmatprep.subr.mxu0 0.0
    %1486 = vmatpush1.msra.mxu0 %v96
    %1487 = vmatprep.subr.mxu0 0.0
    %1488 = vmatpush1.msra.mxu0 %v95
    %1489 = vmatprep.subr.mxu0 0.0
    %1490 = vmatpush1.msra.mxu0 %v94
    %1491 = vmatprep.subr.mxu0 0.0
    %1492 = vmatpush1.msra.mxu0 %v93
    %1493 = vmatprep.subr.mxu0 0.0
    %1494 = vmatpush1.msra.mxu0 %v92
    %1495 = vmatprep.subr.mxu0 0.0
    %1496 = vmatpush1.msra.mxu0 %v91
    %1497 = vmatprep.subr.mxu0 0.0
    %1498 = vmatpush1.msra.mxu0 %v90
    %1499 = vmatprep.subr.mxu0 0.0
    %1500 = vmatpush1.msra.mxu0 %v89
    %1501 = vmatprep.subr.mxu0 0.0
    %1502 = vmatpush1.msra.mxu0 %v88
    %1503 = vmatprep.subr.mxu0 0.0
    %1504 = vmatpush2.msra.mxu0 %v119
    %1505 = vmatprep.subr.mxu0 0.0
    %1506 = vmatpush2.msra.mxu0 %v118
    %1507 = vmatprep.subr.mxu0 0.0
    %1508 = vmatpush2.msra.mxu0 %v117
    %1509 = vmatprep.subr.mxu0 0.0
    %1510 = vmatpush2.msra.mxu0 %v116
    %1511 = vmatprep.subr.mxu0 0.0
    %1512 = vmatpush2.msra.mxu0 %v115
    %1513 = vmatprep.subr.mxu0 0.0
    %1514 = vmatpush2.msra.mxu0 %v114
    %1515 = vmatprep.subr.mxu0 0.0
    %1516 = vmatpush2.msra.mxu0 %v113
    %1517 = vmatprep.subr.mxu0 0.0
    %1518 = vmatpush2.msra.mxu0 %v112
    %1519 = vmatprep.subr.mxu0 0.0
    %1520 = vmatpush2.msra.mxu0 %v111
    %1521 = vmatprep.subr.mxu0 0.0
    %1522 = vmatpush2.msra.mxu0 %v110
    %1523 = vmatprep.subr.mxu0 0.0
    %1524 = vmatpush2.msra.mxu0 %v109
    %1525 = vmatprep.subr.mxu0 0.0
    %1526 = vmatpush2.msra.mxu0 %v108
    %1527 = vmatprep.subr.mxu0 0.0
    %1528 = vmatpush2.msra.mxu0 %v107
    %1529 = vmatprep.subr.mxu0 0.0
    %1530 = vmatpush2.msra.mxu0 %v106
    %1531 = vmatprep.subr.mxu0 0.0
    %1532 = vmatpush2.msra.mxu0 %v105
    %1533 = vmatprep.subr.mxu0 0.0
    %1534 = vmatpush2.msra.mxu0 %v104
    %1535 = vmatprep.mubr.f32.mxu0 %v1150
    %1536 = vmatmul.mubr.f32.gmra.mxu0 %v1142
    %v1537 = vpop.f32.mrf.mxu0
    %v1538 = vadd.f32 %v1117, %v1537
    %v1539 = vpop.f32.mrf.mxu0
    %1540 = vdwg.mxu0
    %1541 = vmatprep.subr.mxu0 0.0
    %1542 = vmatpush1.msra.mxu0 %v135
    %1543 = vmatprep.subr.mxu0 0.0
    %1544 = vmatpush1.msra.mxu0 %v134
    %1545 = vmatprep.subr.mxu0 0.0
    %1546 = vmatpush1.msra.mxu0 %v133
    %1547 = vmatprep.subr.mxu0 0.0
    %1548 = vmatpush1.msra.mxu0 %v132
    %1549 = vmatprep.subr.mxu0 0.0
    %1550 = vmatpush1.msra.mxu0 %v131
    %1551 = vmatprep.subr.mxu0 0.0
    %1552 = vmatpush1.msra.mxu0 %v130
    %1553 = vmatprep.subr.mxu0 0.0
    %1554 = vmatpush1.msra.mxu0 %v129
    %1555 = vmatprep.subr.mxu0 0.0
    %1556 = vmatpush1.msra.mxu0 %v128
    %1557 = vmatprep.subr.mxu0 0.0
    %1558 = vmatpush1.msra.mxu0 %v127
    %1559 = vmatprep.subr.mxu0 0.0
    %1560 = vmatpush1.msra.mxu0 %v126
    %1561 = vmatprep.subr.mxu0 0.0
    %1562 = vmatpush1.msra.mxu0 %v125
    %1563 = vmatprep.subr.mxu0 0.0
    %1564 = vmatpush1.msra.mxu0 %v124
    %1565 = vmatprep.subr.mxu0 0.0
    %1566 = vmatpush1.msra.mxu0 %v123
    %1567 = vmatprep.subr.mxu0 0.0
    %1568 = vmatpush1.msra.mxu0 %v122
    %1569 = vmatprep.subr.mxu0 0.0
    %1570 = vmatpush1.msra.mxu0 %v121
    %1571 = vmatprep.subr.mxu0 0.0
    %1572 = vmatpush1.msra.mxu0 %v120
    %1573 = vmatprep.subr.mxu0 0.0
    %1574 = vmatpush2.msra.mxu0 %v151
    %1575 = vmatprep.subr.mxu0 0.0
    %1576 = vmatpush2.msra.mxu0 %v150
    %1577 = vmatprep.subr.mxu0 0.0
    %1578 = vmatpush2.msra.mxu0 %v149
    %1579 = vmatprep.subr.mxu0 0.0
    %1580 = vmatpush2.msra.mxu0 %v148
    %1581 = vmatprep.subr.mxu0 0.0
    %1582 = vmatpush2.msra.mxu0 %v147
    %1583 = vmatprep.subr.mxu0 0.0
    %1584 = vmatpush2.msra.mxu0 %v146
    %1585 = vmatprep.subr.mxu0 0.0
    %1586 = vmatpush2.msra.mxu0 %v145
    %1587 = vmatprep.subr.mxu0 0.0
    %1588 = vmatpush2.msra.mxu0 %v144
    %1589 = vmatprep.subr.mxu0 0.0
    %1590 = vmatpush2.msra.mxu0 %v143
    %1591 = vmatprep.subr.mxu0 0.0
    %1592 = vmatpush2.msra.mxu0 %v142
    %1593 = vmatprep.subr.mxu0 0.0
    %1594 = vmatpush2.msra.mxu0 %v141
    %1595 = vmatprep.subr.mxu0 0.0
    %1596 = vmatpush2.msra.mxu0 %v140
    %1597 = vmatprep.subr.mxu0 0.0
    %1598 = vmatpush2.msra.mxu0 %v139
    %1599 = vmatprep.subr.mxu0 0.0
    %1600 = vmatpush2.msra.mxu0 %v138
    %1601 = vmatprep.subr.mxu0 0.0
    %1602 = vmatpush2.msra.mxu0 %v137
    %1603 = vmatprep.subr.mxu0 0.0
    %1604 = vmatpush2.msra.mxu0 %v136
    %1605 = vmatprep.mubr.f32.mxu0 %v1151
    %1606 = vmatmul.mubr.f32.gmra.mxu0 %v1149
    %v1607 = vpop.f32.mrf.mxu0
    %v1608 = vadd.f32 %v1538, %v1607
    %v1609 = vpop.f32.mrf.mxu0
    %1610 = vdwg.mxu0
    %1611 = vmatprep.subr.mxu0 0.0
    %1612 = vmatpush1.msra.mxu0 %v167
    %1613 = vmatprep.subr.mxu0 0.0
    %1614 = vmatpush1.msra.mxu0 %v166
    %1615 = vmatprep.subr.mxu0 0.0
    %1616 = vmatpush1.msra.mxu0 %v165
    %1617 = vmatprep.subr.mxu0 0.0
    %1618 = vmatpush1.msra.mxu0 %v164
    %1619 = vmatprep.subr.mxu0 0.0
    %1620 = vmatpush1.msra.mxu0 %v163
    %1621 = vmatprep.subr.mxu0 0.0
    %1622 = vmatpush1.msra.mxu0 %v162
    %1623 = vmatprep.subr.mxu0 0.0
    %1624 = vmatpush1.msra.mxu0 %v161
    %1625 = vmatprep.subr.mxu0 0.0
    %1626 = vmatpush1.msra.mxu0 %v160
    %1627 = vmatprep.subr.mxu0 0.0
    %1628 = vmatpush1.msra.mxu0 %v159
    %1629 = vmatprep.subr.mxu0 0.0
    %1630 = vmatpush1.msra.mxu0 %v158
    %1631 = vmatprep.subr.mxu0 0.0
    %1632 = vmatpush1.msra.mxu0 %v157
    %1633 = vmatprep.subr.mxu0 0.0
    %1634 = vmatpush1.msra.mxu0 %v156
    %1635 = vmatprep.subr.mxu0 0.0
    %1636 = vmatpush1.msra.mxu0 %v155
    %1637 = vmatprep.subr.mxu0 0.0
    %1638 = vmatpush1.msra.mxu0 %v154
    %1639 = vmatprep.subr.mxu0 0.0
    %1640 = vmatpush1.msra.mxu0 %v153
    %1641 = vmatprep.subr.mxu0 0.0
    %1642 = vmatpush1.msra.mxu0 %v152
    %1643 = vmatprep.subr.mxu0 0.0
    %1644 = vmatpush2.msra.mxu0 %v183
    %1645 = vmatprep.subr.mxu0 0.0
    %1646 = vmatpush2.msra.mxu0 %v182
    %1647 = vmatprep.subr.mxu0 0.0
    %1648 = vmatpush2.msra.mxu0 %v181
    %1649 = vmatprep.subr.mxu0 0.0
    %1650 = vmatpush2.msra.mxu0 %v180
    %1651 = vmatprep.subr.mxu0 0.0
    %1652 = vmatpush2.msra.mxu0 %v179
    %1653 = vmatprep.subr.mxu0 0.0
    %1654 = vmatpush2.msra.mxu0 %v178
    %1655 = vmatprep.subr.mxu0 0.0
    %1656 = vmatpush2.msra.mxu0 %v177
    %1657 = vmatprep.subr.mxu0 0.0
    %1658 = vmatpush2.msra.mxu0 %v176
    %1659 = vmatprep.subr.mxu0 0.0
    %1660 = vmatpush2.msra.mxu0 %v175
    %1661 = vmatprep.subr.mxu0 0.0
    %1662 = vmatpush2.msra.mxu0 %v174
    %1663 = vmatprep.subr.mxu0 0.0
    %1664 = vmatpush2.msra.mxu0 %v173
    %1665 = vmatprep.subr.mxu0 0.0
    %1666 = vmatpush2.msra.mxu0 %v172
    %1667 = vmatprep.subr.mxu0 0.0
    %1668 = vmatpush2.msra.mxu0 %v171
    %1669 = vmatprep.subr.mxu0 0.0
    %1670 = vmatpush2.msra.mxu0 %v170
    %1671 = vmatprep.subr.mxu0 0.0
    %1672 = vmatpush2.msra.mxu0 %v169
    %1673 = vmatprep.subr.mxu0 0.0
    %1674 = vmatpush2.msra.mxu0 %v168
    %1675 = vmatprep.mubr.f32.mxu0 %v1167
    %1676 = vmatmul.mubr.f32.gmra.mxu0 %v1159
    %v1677 = vpop.f32.mrf.mxu0
    %v1678 = vadd.f32 %v1608, %v1677
    %v1679 = vpop.f32.mrf.mxu0
    %1680 = vdwg.mxu0
    %1681 = vmatprep.subr.mxu0 0.0
    %1682 = vmatpush1.msra.mxu0 %v199
    %1683 = vmatprep.subr.mxu0 0.0
    %1684 = vmatpush1.msra.mxu0 %v198
    %1685 = vmatprep.subr.mxu0 0.0
    %1686 = vmatpush1.msra.mxu0 %v197
    %1687 = vmatprep.subr.mxu0 0.0
    %1688 = vmatpush1.msra.mxu0 %v196
    %1689 = vmatprep.subr.mxu0 0.0
    %1690 = vmatpush1.msra.mxu0 %v195
    %1691 = vmatprep.subr.mxu0 0.0
    %1692 = vmatpush1.msra.mxu0 %v194
    %1693 = vmatprep.subr.mxu0 0.0
    %1694 = vmatpush1.msra.mxu0 %v193
    %1695 = vmatprep.subr.mxu0 0.0
    %1696 = vmatpush1.msra.mxu0 %v192
    %1697 = vmatprep.subr.mxu0 0.0
    %1698 = vmatpush1.msra.mxu0 %v191
    %1699 = vmatprep.subr.mxu0 0.0
    %1700 = vmatpush1.msra.mxu0 %v190
    %1701 = vmatprep.subr.mxu0 0.0
    %1702 = vmatpush1.msra.mxu0 %v189
    %1703 = vmatprep.subr.mxu0 0.0
    %1704 = vmatpush1.msra.mxu0 %v188
    %1705 = vmatprep.subr.mxu0 0.0
    %1706 = vmatpush1.msra.mxu0 %v187
    %1707 = vmatprep.subr.mxu0 0.0
    %1708 = vmatpush1.msra.mxu0 %v186
    %1709 = vmatprep.subr.mxu0 0.0
    %1710 = vmatpush1.msra.mxu0 %v185
    %1711 = vmatprep.subr.mxu0 0.0
    %1712 = vmatpush1.msra.mxu0 %v184
    %1713 = vmatprep.subr.mxu0 0.0
    %1714 = vmatpush2.msra.mxu0 %v215
    %1715 = vmatprep.subr.mxu0 0.0
    %1716 = vmatpush2.msra.mxu0 %v214
    %1717 = vmatprep.subr.mxu0 0.0
    %1718 = vmatpush2.msra.mxu0 %v213
    %1719 = vmatprep.subr.mxu0 0.0
    %1720 = vmatpush2.msra.mxu0 %v212
    %1721 = vmatprep.subr.mxu0 0.0
    %1722 = vmatpush2.msra.mxu0 %v211
    %1723 = vmatprep.subr.mxu0 0.0
    %1724 = vmatpush2.msra.mxu0 %v210
    %1725 = vmatprep.subr.mxu0 0.0
    %1726 = vmatpush2.msra.mxu0 %v209
    %1727 = vmatprep.subr.mxu0 0.0
    %1728 = vmatpush2.msra.mxu0 %v208
    %1729 = vmatprep.subr.mxu0 0.0
    %1730 = vmatpush2.msra.mxu0 %v207
    %1731 = vmatprep.subr.mxu0 0.0
    %1732 = vmatpush2.msra.mxu0 %v206
    %1733 = vmatprep.subr.mxu0 0.0
    %1734 = vmatpush2.msra.mxu0 %v205
    %1735 = vmatprep.subr.mxu0 0.0
    %1736 = vmatpush2.msra.mxu0 %v204
    %1737 = vmatprep.subr.mxu0 0.0
    %1738 = vmatpush2.msra.mxu0 %v203
    %1739 = vmatprep.subr.mxu0 0.0
    %1740 = vmatpush2.msra.mxu0 %v202
    %1741 = vmatprep.subr.mxu0 0.0
    %1742 = vmatpush2.msra.mxu0 %v201
    %1743 = vmatprep.subr.mxu0 0.0
    %1744 = vmatpush2.msra.mxu0 %v200
    %1745 = vmatprep.mubr.f32.mxu0 %v1168
    %1746 = vmatmul.mubr.f32.gmra.mxu0 %v1166
    %v1747 = vpop.f32.mrf.mxu0
    %v1748 = vadd.f32 %v1678, %v1747
    %v1749 = vpop.f32.mrf.mxu0
    %1750 = vdwg.mxu0
    %1751 = vmatprep.subr.mxu0 0.0
    %1752 = vmatpush1.msra.mxu0 %v231
    %1753 = vmatprep.subr.mxu0 0.0
    %1754 = vmatpush1.msra.mxu0 %v230
    %1755 = vmatprep.subr.mxu0 0.0
    %1756 = vmatpush1.msra.mxu0 %v229
    %1757 = vmatprep.subr.mxu0 0.0
    %1758 = vmatpush1.msra.mxu0 %v228
    %1759 = vmatprep.subr.mxu0 0.0
    %1760 = vmatpush1.msra.mxu0 %v227
    %1761 = vmatprep.subr.mxu0 0.0
    %1762 = vmatpush1.msra.mxu0 %v226
    %1763 = vmatprep.subr.mxu0 0.0
    %1764 = vmatpush1.msra.mxu0 %v225
    %1765 = vmatprep.subr.mxu0 0.0
    %1766 = vmatpush1.msra.mxu0 %v224
    %1767 = vmatprep.subr.mxu0 0.0
    %1768 = vmatpush1.msra.mxu0 %v223
    %1769 = vmatprep.subr.mxu0 0.0
    %1770 = vmatpush1.msra.mxu0 %v222
    %1771 = vmatprep.subr.mxu0 0.0
    %1772 = vmatpush1.msra.mxu0 %v221
    %1773 = vmatprep.subr.mxu0 0.0
    %1774 = vmatpush1.msra.mxu0 %v220
    %1775 = vmatprep.subr.mxu0 0.0
    %1776 = vmatpush1.msra.mxu0 %v219
    %1777 = vmatprep.subr.mxu0 0.0
    %1778 = vmatpush1.msra.mxu0 %v218
    %1779 = vmatprep.subr.mxu0 0.0
    %1780 = vmatpush1.msra.mxu0 %v217
    %1781 = vmatprep.subr.mxu0 0.0
    %1782 = vmatpush1.msra.mxu0 %v216
    %1783 = vmatprep.subr.mxu0 0.0
    %1784 = vmatpush2.msra.mxu0 %v247
    %1785 = vmatprep.subr.mxu0 0.0
    %1786 = vmatpush2.msra.mxu0 %v246
    %1787 = vmatprep.subr.mxu0 0.0
    %1788 = vmatpush2.msra.mxu0 %v245
    %1789 = vmatprep.subr.mxu0 0.0
    %1790 = vmatpush2.msra.mxu0 %v244
    %1791 = vmatprep.subr.mxu0 0.0
    %1792 = vmatpush2.msra.mxu0 %v243
    %1793 = vmatprep.subr.mxu0 0.0
    %1794 = vmatpush2.msra.mxu0 %v242
    %1795 = vmatprep.subr.mxu0 0.0
    %1796 = vmatpush2.msra.mxu0 %v241
    %1797 = vmatprep.subr.mxu0 0.0
    %1798 = vmatpush2.msra.mxu0 %v240
    %1799 = vmatprep.subr.mxu0 0.0
    %1800 = vmatpush2.msra.mxu0 %v239
    %1801 = vmatprep.subr.mxu0 0.0
    %1802 = vmatpush2.msra.mxu0 %v238
    %1803 = vmatprep.subr.mxu0 0.0
    %1804 = vmatpush2.msra.mxu0 %v237
    %1805 = vmatprep.subr.mxu0 0.0
    %1806 = vmatpush2.msra.mxu0 %v236
    %1807 = vmatprep.subr.mxu0 0.0
    %1808 = vmatpush2.msra.mxu0 %v235
    %1809 = vmatprep.subr.mxu0 0.0
    %1810 = vmatpush2.msra.mxu0 %v234
    %1811 = vmatprep.subr.mxu0 0.0
    %1812 = vmatpush2.msra.mxu0 %v233
    %1813 = vmatprep.subr.mxu0 0.0
    %1814 = vmatpush2.msra.mxu0 %v232
    %1815 = vmatprep.mubr.f32.mxu0 %v1184
    %1816 = vmatmul.mubr.f32.gmra.mxu0 %v1176
    %v1817 = vpop.f32.mrf.mxu0
    %v1818 = vadd.f32 %v1748, %v1817
    %v1819 = vpop.f32.mrf.mxu0
    %1820 = vdwg.mxu0
    %1821 = vmatprep.subr.mxu0 0.0
    %1822 = vmatpush1.msra.mxu0 %v263
    %1823 = vmatprep.subr.mxu0 0.0
    %1824 = vmatpush1.msra.mxu0 %v262
    %1825 = vmatprep.subr.mxu0 0.0
    %1826 = vmatpush1.msra.mxu0 %v261
    %1827 = vmatprep.subr.mxu0 0.0
    %1828 = vmatpush1.msra.mxu0 %v260
    %1829 = vmatprep.subr.mxu0 0.0
    %1830 = vmatpush1.msra.mxu0 %v259
    %1831 = vmatprep.subr.mxu0 0.0
    %1832 = vmatpush1.msra.mxu0 %v258
    %1833 = vmatprep.subr.mxu0 0.0
    %1834 = vmatpush1.msra.mxu0 %v257
    %1835 = vmatprep.subr.mxu0 0.0
    %1836 = vmatpush1.msra.mxu0 %v256
    %1837 = vmatprep.subr.mxu0 0.0
    %1838 = vmatpush1.msra.mxu0 %v255
    %1839 = vmatprep.subr.mxu0 0.0
    %1840 = vmatpush1.msra.mxu0 %v254
    %1841 = vmatprep.subr.mxu0 0.0
    %1842 = vmatpush1.msra.mxu0 %v253
    %1843 = vmatprep.subr.mxu0 0.0
    %1844 = vmatpush1.msra.mxu0 %v252
    %1845 = vmatprep.subr.mxu0 0.0
    %1846 = vmatpush1.msra.mxu0 %v251
    %1847 = vmatprep.subr.mxu0 0.0
    %1848 = vmatpush1.msra.mxu0 %v250
    %1849 = vmatprep.subr.mxu0 0.0
    %1850 = vmatpush1.msra.mxu0 %v249
    %1851 = vmatprep.subr.mxu0 0.0
    %1852 = vmatpush1.msra.mxu0 %v248
    %1853 = vmatprep.subr.mxu0 0.0
    %1854 = vmatpush2.msra.mxu0 %v279
    %1855 = vmatprep.subr.mxu0 0.0
    %1856 = vmatpush2.msra.mxu0 %v278
    %1857 = vmatprep.subr.mxu0 0.0
    %1858 = vmatpush2.msra.mxu0 %v277
    %1859 = vmatprep.subr.mxu0 0.0
    %1860 = vmatpush2.msra.mxu0 %v276
    %1861 = vmatprep.subr.mxu0 0.0
    %1862 = vmatpush2.msra.mxu0 %v275
    %1863 = vmatprep.subr.mxu0 0.0
    %1864 = vmatpush2.msra.mxu0 %v274
    %1865 = vmatprep.subr.mxu0 0.0
    %1866 = vmatpush2.msra.mxu0 %v273
    %1867 = vmatprep.subr.mxu0 0.0
    %1868 = vmatpush2.msra.mxu0 %v272
    %1869 = vmatprep.subr.mxu0 0.0
    %1870 = vmatpush2.msra.mxu0 %v271
    %1871 = vmatprep.subr.mxu0 0.0
    %1872 = vmatpush2.msra.mxu0 %v270
    %1873 = vmatprep.subr.mxu0 0.0
    %1874 = vmatpush2.msra.mxu0 %v269
    %1875 = vmatprep.subr.mxu0 0.0
    %1876 = vmatpush2.msra.mxu0 %v268
    %1877 = vmatprep.subr.mxu0 0.0
    %1878 = vmatpush2.msra.mxu0 %v267
    %1879 = vmatprep.subr.mxu0 0.0
    %1880 = vmatpush2.msra.mxu0 %v266
    %1881 = vmatprep.subr.mxu0 0.0
    %1882 = vmatpush2.msra.mxu0 %v265
    %1883 = vmatprep.subr.mxu0 0.0
    %1884 = vmatpush2.msra.mxu0 %v264
    %1885 = vmatprep.mubr.f32.mxu0 %v1185
    %1886 = vmatmul.mubr.f32.gmra.mxu0 %v1183
    %v1887 = vpop.f32.mrf.mxu0
    %v1888 = vadd.f32 %v1818, %v1887
    %v1889 = vpop.f32.mrf.mxu0
    %1890 = vdwg.mxu0
    %1891 = vmatprep.subr.mxu0 0.0
    %1892 = vmatpush1.msra.mxu0 %v295
    %1893 = vmatprep.subr.mxu0 0.0
    %1894 = vmatpush1.msra.mxu0 %v294
    %1895 = vmatprep.subr.mxu0 0.0
    %1896 = vmatpush1.msra.mxu0 %v293
    %1897 = vmatprep.subr.mxu0 0.0
    %1898 = vmatpush1.msra.mxu0 %v292
    %1899 = vmatprep.subr.mxu0 0.0
    %1900 = vmatpush1.msra.mxu0 %v291
    %1901 = vmatprep.subr.mxu0 0.0
    %1902 = vmatpush1.msra.mxu0 %v290
    %1903 = vmatprep.subr.mxu0 0.0
    %1904 = vmatpush1.msra.mxu0 %v289
    %1905 = vmatprep.subr.mxu0 0.0
    %1906 = vmatpush1.msra.mxu0 %v288
    %1907 = vmatprep.subr.mxu0 0.0
    %1908 = vmatpush1.msra.mxu0 %v287
    %1909 = vmatprep.subr.mxu0 0.0
    %1910 = vmatpush1.msra.mxu0 %v286
    %1911 = vmatprep.subr.mxu0 0.0
    %1912 = vmatpush1.msra.mxu0 %v285
    %1913 = vmatprep.subr.mxu0 0.0
    %1914 = vmatpush1.msra.mxu0 %v284
    %1915 = vmatprep.subr.mxu0 0.0
    %1916 = vmatpush1.msra.mxu0 %v283
    %1917 = vmatprep.subr.mxu0 0.0
    %1918 = vmatpush1.msra.mxu0 %v282
    %1919 = vmatprep.subr.mxu0 0.0
    %1920 = vmatpush1.msra.mxu0 %v281
    %1921 = vmatprep.subr.mxu0 0.0
    %1922 = vmatpush1.msra.mxu0 %v280
    %1923 = vmatprep.subr.mxu0 0.0
    %1924 = vmatpush2.msra.mxu0 %v311
    %1925 = vmatprep.subr.mxu0 0.0
    %1926 = vmatpush2.msra.mxu0 %v310
    %1927 = vmatprep.subr.mxu0 0.0
    %1928 = vmatpush2.msra.mxu0 %v309
    %1929 = vmatprep.subr.mxu0 0.0
    %1930 = vmatpush2.msra.mxu0 %v308
    %1931 = vmatprep.subr.mxu0 0.0
    %1932 = vmatpush2.msra.mxu0 %v307
    %1933 = vmatprep.subr.mxu0 0.0
    %1934 = vmatpush2.msra.mxu0 %v306
    %1935 = vmatprep.subr.mxu0 0.0
    %1936 = vmatpush2.msra.mxu0 %v305
    %1937 = vmatprep.subr.mxu0 0.0
    %1938 = vmatpush2.msra.mxu0 %v304
    %1939 = vmatprep.subr.mxu0 0.0
    %1940 = vmatpush2.msra.mxu0 %v303
    %1941 = vmatprep.subr.mxu0 0.0
    %1942 = vmatpush2.msra.mxu0 %v302
    %1943 = vmatprep.subr.mxu0 0.0
    %1944 = vmatpush2.msra.mxu0 %v301
    %1945 = vmatprep.subr.mxu0 0.0
    %1946 = vmatpush2.msra.mxu0 %v300
    %1947 = vmatprep.subr.mxu0 0.0
    %1948 = vmatpush2.msra.mxu0 %v299
    %1949 = vmatprep.subr.mxu0 0.0
    %1950 = vmatpush2.msra.mxu0 %v298
    %1951 = vmatprep.subr.mxu0 0.0
    %1952 = vmatpush2.msra.mxu0 %v297
    %1953 = vmatprep.subr.mxu0 0.0
    %1954 = vmatpush2.msra.mxu0 %v296
    %1955 = vmatprep.mubr.f32.mxu0 %v1201
    %1956 = vmatmul.mubr.f32.gmra.mxu0 %v1193
    %v1957 = vpop.f32.mrf.mxu0
    %v1958 = vadd.f32 %v1888, %v1957
    %v1959 = vpop.f32.mrf.mxu0
    %1960 = vdwg.mxu0
    %1961 = vmatprep.subr.mxu0 0.0
    %1962 = vmatpush1.msra.mxu0 %v327
    %1963 = vmatprep.subr.mxu0 0.0
    %1964 = vmatpush1.msra.mxu0 %v326
    %1965 = vmatprep.subr.mxu0 0.0
    %1966 = vmatpush1.msra.mxu0 %v325
    %1967 = vmatprep.subr.mxu0 0.0
    %1968 = vmatpush1.msra.mxu0 %v324
    %1969 = vmatprep.subr.mxu0 0.0
    %1970 = vmatpush1.msra.mxu0 %v323
    %1971 = vmatprep.subr.mxu0 0.0
    %1972 = vmatpush1.msra.mxu0 %v322
    %1973 = vmatprep.subr.mxu0 0.0
    %1974 = vmatpush1.msra.mxu0 %v321
    %1975 = vmatprep.subr.mxu0 0.0
    %1976 = vmatpush1.msra.mxu0 %v320
    %1977 = vmatprep.subr.mxu0 0.0
    %1978 = vmatpush1.msra.mxu0 %v319
    %1979 = vmatprep.subr.mxu0 0.0
    %1980 = vmatpush1.msra.mxu0 %v318
    %1981 = vmatprep.subr.mxu0 0.0
    %1982 = vmatpush1.msra.mxu0 %v317
    %1983 = vmatprep.subr.mxu0 0.0
    %1984 = vmatpush1.msra.mxu0 %v316
    %1985 = vmatprep.subr.mxu0 0.0
    %1986 = vmatpush1.msra.mxu0 %v315
    %1987 = vmatprep.subr.mxu0 0.0
    %1988 = vmatpush1.msra.mxu0 %v314
    %1989 = vmatprep.subr.mxu0 0.0
    %1990 = vmatpush1.msra.mxu0 %v313
    %1991 = vmatprep.subr.mxu0 0.0
    %1992 = vmatpush1.msra.mxu0 %v312
    %1993 = vmatprep.subr.mxu0 0.0
    %1994 = vmatpush2.msra.mxu0 %v343
    %1995 = vmatprep.subr.mxu0 0.0
    %1996 = vmatpush2.msra.mxu0 %v342
    %1997 = vmatprep.subr.mxu0 0.0
    %1998 = vmatpush2.msra.mxu0 %v341
    %1999 = vmatprep.subr.mxu0 0.0
    %2000 = vmatpush2.msra.mxu0 %v340
    %2001 = vmatprep.subr.mxu0 0.0
    %2002 = vmatpush2.msra.mxu0 %v339
    %2003 = vmatprep.subr.mxu0 0.0
    %2004 = vmatpush2.msra.mxu0 %v338
    %2005 = vmatprep.subr.mxu0 0.0
    %2006 = vmatpush2.msra.mxu0 %v337
    %2007 = vmatprep.subr.mxu0 0.0
    %2008 = vmatpush2.msra.mxu0 %v336
    %2009 = vmatprep.subr.mxu0 0.0
    %2010 = vmatpush2.msra.mxu0 %v335
    %2011 = vmatprep.subr.mxu0 0.0
    %2012 = vmatpush2.msra.mxu0 %v334
    %2013 = vmatprep.subr.mxu0 0.0
    %2014 = vmatpush2.msra.mxu0 %v333
    %2015 = vmatprep.subr.mxu0 0.0
    %2016 = vmatpush2.msra.mxu0 %v332
    %2017 = vmatprep.subr.mxu0 0.0
    %2018 = vmatpush2.msra.mxu0 %v331
    %2019 = vmatprep.subr.mxu0 0.0
    %2020 = vmatpush2.msra.mxu0 %v330
    %2021 = vmatprep.subr.mxu0 0.0
    %2022 = vmatpush2.msra.mxu0 %v329
    %2023 = vmatprep.subr.mxu0 0.0
    %2024 = vmatpush2.msra.mxu0 %v328
    %2025 = vmatprep.mubr.f32.mxu0 %v1202
    %2026 = vmatmul.mubr.f32.gmra.mxu0 %v1200
    %v2027 = vpop.f32.mrf.mxu0
    %v2028 = vadd.f32 %v1958, %v2027
    %v2029 = vpop.f32.mrf.mxu0
    %2030 = vdwg.mxu0
    %2031 = vmatprep.subr.mxu0 0.0
    %2032 = vmatpush1.msra.mxu0 %v359
    %2033 = vmatprep.subr.mxu0 0.0
    %2034 = vmatpush1.msra.mxu0 %v358
    %2035 = vmatprep.subr.mxu0 0.0
    %2036 = vmatpush1.msra.mxu0 %v357
    %2037 = vmatprep.subr.mxu0 0.0
    %2038 = vmatpush1.msra.mxu0 %v356
    %2039 = vmatprep.subr.mxu0 0.0
    %2040 = vmatpush1.msra.mxu0 %v355
    %2041 = vmatprep.subr.mxu0 0.0
    %2042 = vmatpush1.msra.mxu0 %v354
    %2043 = vmatprep.subr.mxu0 0.0
    %2044 = vmatpush1.msra.mxu0 %v353
    %2045 = vmatprep.subr.mxu0 0.0
    %2046 = vmatpush1.msra.mxu0 %v352
    %2047 = vmatprep.subr.mxu0 0.0
    %2048 = vmatpush1.msra.mxu0 %v351
    %2049 = vmatprep.subr.mxu0 0.0
    %2050 = vmatpush1.msra.mxu0 %v350
    %2051 = vmatprep.subr.mxu0 0.0
    %2052 = vmatpush1.msra.mxu0 %v349
    %2053 = vmatprep.subr.mxu0 0.0
    %2054 = vmatpush1.msra.mxu0 %v348
    %2055 = vmatprep.subr.mxu0 0.0
    %2056 = vmatpush1.msra.mxu0 %v347
    %2057 = vmatprep.subr.mxu0 0.0
    %2058 = vmatpush1.msra.mxu0 %v346
    %2059 = vmatprep.subr.mxu0 0.0
    %2060 = vmatpush1.msra.mxu0 %v345
    %2061 = vmatprep.subr.mxu0 0.0
    %2062 = vmatpush1.msra.mxu0 %v344
    %2063 = vmatprep.subr.mxu0 0.0
    %2064 = vmatpush2.msra.mxu0 %v375
    %2065 = vmatprep.subr.mxu0 0.0
    %2066 = vmatpush2.msra.mxu0 %v374
    %2067 = vmatprep.subr.mxu0 0.0
    %2068 = vmatpush2.msra.mxu0 %v373
    %2069 = vmatprep.subr.mxu0 0.0
    %2070 = vmatpush2.msra.mxu0 %v372
    %2071 = vmatprep.subr.mxu0 0.0
    %2072 = vmatpush2.msra.mxu0 %v371
    %2073 = vmatprep.subr.mxu0 0.0
    %2074 = vmatpush2.msra.mxu0 %v370
    %2075 = vmatprep.subr.mxu0 0.0
    %2076 = vmatpush2.msra.mxu0 %v369
    %2077 = vmatprep.subr.mxu0 0.0
    %2078 = vmatpush2.msra.mxu0 %v368
    %2079 = vmatprep.subr.mxu0 0.0
    %2080 = vmatpush2.msra.mxu0 %v367
    %2081 = vmatprep.subr.mxu0 0.0
    %2082 = vmatpush2.msra.mxu0 %v366
    %2083 = vmatprep.subr.mxu0 0.0
    %2084 = vmatpush2.msra.mxu0 %v365
    %2085 = vmatprep.subr.mxu0 0.0
    %2086 = vmatpush2.msra.mxu0 %v364
    %2087 = vmatprep.subr.mxu0 0.0
    %2088 = vmatpush2.msra.mxu0 %v363
    %2089 = vmatprep.subr.mxu0 0.0
    %2090 = vmatpush2.msra.mxu0 %v362
    %2091 = vmatprep.subr.mxu0 0.0
    %2092 = vmatpush2.msra.mxu0 %v361
    %2093 = vmatprep.subr.mxu0 0.0
    %2094 = vmatpush2.msra.mxu0 %v360
    %2095 = vmatprep.mubr.f32.mxu0 %v1218
    %2096 = vmatmul.mubr.f32.gmra.mxu0 %v1210
    %v2097 = vpop.f32.mrf.mxu0
    %v2098 = vadd.f32 %v2028, %v2097
    %v2099 = vpop.f32.mrf.mxu0
    %2100 = vdwg.mxu0
    %2101 = vmatprep.subr.mxu0 0.0
    %2102 = vmatpush1.msra.mxu0 %v391
    %2103 = vmatprep.subr.mxu0 0.0
    %2104 = vmatpush1.msra.mxu0 %v390
    %2105 = vmatprep.subr.mxu0 0.0
    %2106 = vmatpush1.msra.mxu0 %v389
    %2107 = vmatprep.subr.mxu0 0.0
    %2108 = vmatpush1.msra.mxu0 %v388
    %2109 = vmatprep.subr.mxu0 0.0
    %2110 = vmatpush1.msra.mxu0 %v387
    %2111 = vmatprep.subr.mxu0 0.0
    %2112 = vmatpush1.msra.mxu0 %v386
    %2113 = vmatprep.subr.mxu0 0.0
    %2114 = vmatpush1.msra.mxu0 %v385
    %2115 = vmatprep.subr.mxu0 0.0
    %2116 = vmatpush1.msra.mxu0 %v384
    %2117 = vmatprep.subr.mxu0 0.0
    %2118 = vmatpush1.msra.mxu0 %v383
    %2119 = vmatprep.subr.mxu0 0.0
    %2120 = vmatpush1.msra.mxu0 %v382
    %2121 = vmatprep.subr.mxu0 0.0
    %2122 = vmatpush1.msra.mxu0 %v381
    %2123 = vmatprep.subr.mxu0 0.0
    %2124 = vmatpush1.msra.mxu0 %v380
    %2125 = vmatprep.subr.mxu0 0.0
    %2126 = vmatpush1.msra.mxu0 %v379
    %2127 = vmatprep.subr.mxu0 0.0
    %2128 = vmatpush1.msra.mxu0 %v378
    %2129 = vmatprep.subr.mxu0 0.0
    %2130 = vmatpush1.msra.mxu0 %v377
    %2131 = vmatprep.subr.mxu0 0.0
    %2132 = vmatpush1.msra.mxu0 %v376
    %2133 = vmatprep.subr.mxu0 0.0
    %2134 = vmatpush2.msra.mxu0 %v407
    %2135 = vmatprep.subr.mxu0 0.0
    %2136 = vmatpush2.msra.mxu0 %v406
    %2137 = vmatprep.subr.mxu0 0.0
    %2138 = vmatpush2.msra.mxu0 %v405
    %2139 = vmatprep.subr.mxu0 0.0
    %2140 = vmatpush2.msra.mxu0 %v404
    %2141 = vmatprep.subr.mxu0 0.0
    %2142 = vmatpush2.msra.mxu0 %v403
    %2143 = vmatprep.subr.mxu0 0.0
    %2144 = vmatpush2.msra.mxu0 %v402
    %2145 = vmatprep.subr.mxu0 0.0
    %2146 = vmatpush2.msra.mxu0 %v401
    %2147 = vmatprep.subr.mxu0 0.0
    %2148 = vmatpush2.msra.mxu0 %v400
    %2149 = vmatprep.subr.mxu0 0.0
    %2150 = vmatpush2.msra.mxu0 %v399
    %2151 = vmatprep.subr.mxu0 0.0
    %2152 = vmatpush2.msra.mxu0 %v398
    %2153 = vmatprep.subr.mxu0 0.0
    %2154 = vmatpush2.msra.mxu0 %v397
    %2155 = vmatprep.subr.mxu0 0.0
    %2156 = vmatpush2.msra.mxu0 %v396
    %2157 = vmatprep.subr.mxu0 0.0
    %2158 = vmatpush2.msra.mxu0 %v395
    %2159 = vmatprep.subr.mxu0 0.0
    %2160 = vmatpush2.msra.mxu0 %v394
    %2161 = vmatprep.subr.mxu0 0.0
    %2162 = vmatpush2.msra.mxu0 %v393
    %2163 = vmatprep.subr.mxu0 0.0
    %2164 = vmatpush2.msra.mxu0 %v392
    %2165 = vmatprep.mubr.f32.mxu0 %v1219
    %2166 = vmatmul.mubr.f32.gmra.mxu0 %v1217
    %v2167 = vpop.f32.mrf.mxu0
    %v2168 = vadd.f32 %v2098, %v2167
    %v2169 = vpop.f32.mrf.mxu0
    %2170 = vdwg.mxu0
    %2171 = vmatprep.subr.mxu0 0.0
    %2172 = vmatpush1.msra.mxu0 %v423
    %2173 = vmatprep.subr.mxu0 0.0
    %2174 = vmatpush1.msra.mxu0 %v422
    %2175 = vmatprep.subr.mxu0 0.0
    %2176 = vmatpush1.msra.mxu0 %v421
    %2177 = vmatprep.subr.mxu0 0.0
    %2178 = vmatpush1.msra.mxu0 %v420
    %2179 = vmatprep.subr.mxu0 0.0
    %2180 = vmatpush1.msra.mxu0 %v419
    %2181 = vmatprep.subr.mxu0 0.0
    %2182 = vmatpush1.msra.mxu0 %v418
    %2183 = vmatprep.subr.mxu0 0.0
    %2184 = vmatpush1.msra.mxu0 %v417
    %2185 = vmatprep.subr.mxu0 0.0
    %2186 = vmatpush1.msra.mxu0 %v416
    %2187 = vmatprep.subr.mxu0 0.0
    %2188 = vmatpush1.msra.mxu0 %v415
    %2189 = vmatprep.subr.mxu0 0.0
    %2190 = vmatpush1.msra.mxu0 %v414
    %2191 = vmatprep.subr.mxu0 0.0
    %2192 = vmatpush1.msra.mxu0 %v413
    %2193 = vmatprep.subr.mxu0 0.0
    %2194 = vmatpush1.msra.mxu0 %v412
    %2195 = vmatprep.subr.mxu0 0.0
    %2196 = vmatpush1.msra.mxu0 %v411
    %2197 = vmatprep.subr.mxu0 0.0
    %2198 = vmatpush1.msra.mxu0 %v410
    %2199 = vmatprep.subr.mxu0 0.0
    %2200 = vmatpush1.msra.mxu0 %v409
    %2201 = vmatprep.subr.mxu0 0.0
    %2202 = vmatpush1.msra.mxu0 %v408
    %2203 = vmatprep.subr.mxu0 0.0
    %2204 = vmatpush2.msra.mxu0 %v439
    %2205 = vmatprep.subr.mxu0 0.0
    %2206 = vmatpush2.msra.mxu0 %v438
    %2207 = vmatprep.subr.mxu0 0.0
    %2208 = vmatpush2.msra.mxu0 %v437
    %2209 = vmatprep.subr.mxu0 0.0
    %2210 = vmatpush2.msra.mxu0 %v436
    %2211 = vmatprep.subr.mxu0 0.0
    %2212 = vmatpush2.msra.mxu0 %v435
    %2213 = vmatprep.subr.mxu0 0.0
    %2214 = vmatpush2.msra.mxu0 %v434
    %2215 = vmatprep.subr.mxu0 0.0
    %2216 = vmatpush2.msra.mxu0 %v433
    %2217 = vmatprep.subr.mxu0 0.0
    %2218 = vmatpush2.msra.mxu0 %v432
    %2219 = vmatprep.subr.mxu0 0.0
    %2220 = vmatpush2.msra.mxu0 %v431
    %2221 = vmatprep.subr.mxu0 0.0
    %2222 = vmatpush2.msra.mxu0 %v430
    %2223 = vmatprep.subr.mxu0 0.0
    %2224 = vmatpush2.msra.mxu0 %v429
    %2225 = vmatprep.subr.mxu0 0.0
    %2226 = vmatpush2.msra.mxu0 %v428
    %2227 = vmatprep.subr.mxu0 0.0
    %2228 = vmatpush2.msra.mxu0 %v427
    %2229 = vmatprep.subr.mxu0 0.0
    %2230 = vmatpush2.msra.mxu0 %v426
    %2231 = vmatprep.subr.mxu0 0.0
    %2232 = vmatpush2.msra.mxu0 %v425
    %2233 = vmatprep.subr.mxu0 0.0
    %2234 = vmatpush2.msra.mxu0 %v424
    %2235 = vmatprep.mubr.f32.mxu0 %v1235
    %2236 = vmatmul.mubr.f32.gmra.mxu0 %v1227
    %v2237 = vpop.f32.mrf.mxu0
    %v2238 = vadd.f32 %v2168, %v2237
    %v2239 = vpop.f32.mrf.mxu0
    %2240 = vdwg.mxu0
    %2241 = vmatprep.subr.mxu0 0.0
    %2242 = vmatpush1.msra.mxu0 %v455
    %2243 = vmatprep.subr.mxu0 0.0
    %2244 = vmatpush1.msra.mxu0 %v454
    %2245 = vmatprep.subr.mxu0 0.0
    %2246 = vmatpush1.msra.mxu0 %v453
    %2247 = vmatprep.subr.mxu0 0.0
    %2248 = vmatpush1.msra.mxu0 %v452
    %2249 = vmatprep.subr.mxu0 0.0
    %2250 = vmatpush1.msra.mxu0 %v451
    %2251 = vmatprep.subr.mxu0 0.0
    %2252 = vmatpush1.msra.mxu0 %v450
    %2253 = vmatprep.subr.mxu0 0.0
    %2254 = vmatpush1.msra.mxu0 %v449
    %2255 = vmatprep.subr.mxu0 0.0
    %2256 = vmatpush1.msra.mxu0 %v448
    %2257 = vmatprep.subr.mxu0 0.0
    %2258 = vmatpush1.msra.mxu0 %v447
    %2259 = vmatprep.subr.mxu0 0.0
    %2260 = vmatpush1.msra.mxu0 %v446
    %2261 = vmatprep.subr.mxu0 0.0
    %2262 = vmatpush1.msra.mxu0 %v445
    %2263 = vmatprep.subr.mxu0 0.0
    %2264 = vmatpush1.msra.mxu0 %v444
    %2265 = vmatprep.subr.mxu0 0.0
    %2266 = vmatpush1.msra.mxu0 %v443
    %2267 = vmatprep.subr.mxu0 0.0
    %2268 = vmatpush1.msra.mxu0 %v442
    %2269 = vmatprep.subr.mxu0 0.0
    %2270 = vmatpush1.msra.mxu0 %v441
    %2271 = vmatprep.subr.mxu0 0.0
    %2272 = vmatpush1.msra.mxu0 %v440
    %2273 = vmatprep.subr.mxu0 0.0
    %2274 = vmatpush2.msra.mxu0 %v471
    %2275 = vmatprep.subr.mxu0 0.0
    %2276 = vmatpush2.msra.mxu0 %v470
    %2277 = vmatprep.subr.mxu0 0.0
    %2278 = vmatpush2.msra.mxu0 %v469
    %2279 = vmatprep.subr.mxu0 0.0
    %2280 = vmatpush2.msra.mxu0 %v468
    %2281 = vmatprep.subr.mxu0 0.0
    %2282 = vmatpush2.msra.mxu0 %v467
    %2283 = vmatprep.subr.mxu0 0.0
    %2284 = vmatpush2.msra.mxu0 %v466
    %2285 = vmatprep.subr.mxu0 0.0
    %2286 = vmatpush2.msra.mxu0 %v465
    %2287 = vmatprep.subr.mxu0 0.0
    %2288 = vmatpush2.msra.mxu0 %v464
    %2289 = vmatprep.subr.mxu0 0.0
    %2290 = vmatpush2.msra.mxu0 %v463
    %2291 = vmatprep.subr.mxu0 0.0
    %2292 = vmatpush2.msra.mxu0 %v462
    %2293 = vmatprep.subr.mxu0 0.0
    %2294 = vmatpush2.msra.mxu0 %v461
    %2295 = vmatprep.subr.mxu0 0.0
    %2296 = vmatpush2.msra.mxu0 %v460
    %2297 = vmatprep.subr.mxu0 0.0
    %2298 = vmatpush2.msra.mxu0 %v459
    %2299 = vmatprep.subr.mxu0 0.0
    %2300 = vmatpush2.msra.mxu0 %v458
    %2301 = vmatprep.subr.mxu0 0.0
    %2302 = vmatpush2.msra.mxu0 %v457
    %2303 = vmatprep.subr.mxu0 0.0
    %2304 = vmatpush2.msra.mxu0 %v456
    %2305 = vmatprep.mubr.f32.mxu0 %v1236
    %2306 = vmatmul.mubr.f32.gmra.mxu0 %v1234
    %v2307 = vpop.f32.mrf.mxu0
    %v2308 = vadd.f32 %v2238, %v2307
    %v2309 = vpop.f32.mrf.mxu0
    %2310 = vdwg.mxu0
    %2311 = vmatprep.subr.mxu0 0.0
    %2312 = vmatpush1.msra.mxu0 %v487
    %2313 = vmatprep.subr.mxu0 0.0
    %2314 = vmatpush1.msra.mxu0 %v486
    %2315 = vmatprep.subr.mxu0 0.0
    %2316 = vmatpush1.msra.mxu0 %v485
    %2317 = vmatprep.subr.mxu0 0.0
    %2318 = vmatpush1.msra.mxu0 %v484
    %2319 = vmatprep.subr.mxu0 0.0
    %2320 = vmatpush1.msra.mxu0 %v483
    %2321 = vmatprep.subr.mxu0 0.0
    %2322 = vmatpush1.msra.mxu0 %v482
    %2323 = vmatprep.subr.mxu0 0.0
    %2324 = vmatpush1.msra.mxu0 %v481
    %2325 = vmatprep.subr.mxu0 0.0
    %2326 = vmatpush1.msra.mxu0 %v480
    %2327 = vmatprep.subr.mxu0 0.0
    %2328 = vmatpush1.msra.mxu0 %v479
    %2329 = vmatprep.subr.mxu0 0.0
    %2330 = vmatpush1.msra.mxu0 %v478
    %2331 = vmatprep.subr.mxu0 0.0
    %2332 = vmatpush1.msra.mxu0 %v477
    %2333 = vmatprep.subr.mxu0 0.0
    %2334 = vmatpush1.msra.mxu0 %v476
    %2335 = vmatprep.subr.mxu0 0.0
    %2336 = vmatpush1.msra.mxu0 %v475
    %2337 = vmatprep.subr.mxu0 0.0
    %2338 = vmatpush1.msra.mxu0 %v474
    %2339 = vmatprep.subr.mxu0 0.0
    %2340 = vmatpush1.msra.mxu0 %v473
    %2341 = vmatprep.subr.mxu0 0.0
    %2342 = vmatpush1.msra.mxu0 %v472
    %2343 = vmatprep.subr.mxu0 0.0
    %2344 = vmatpush2.msra.mxu0 %v503
    %2345 = vmatprep.subr.mxu0 0.0
    %2346 = vmatpush2.msra.mxu0 %v502
    %2347 = vmatprep.subr.mxu0 0.0
    %2348 = vmatpush2.msra.mxu0 %v501
    %2349 = vmatprep.subr.mxu0 0.0
    %2350 = vmatpush2.msra.mxu0 %v500
    %2351 = vmatprep.subr.mxu0 0.0
    %2352 = vmatpush2.msra.mxu0 %v499
    %2353 = vmatprep.subr.mxu0 0.0
    %2354 = vmatpush2.msra.mxu0 %v498
    %2355 = vmatprep.subr.mxu0 0.0
    %2356 = vmatpush2.msra.mxu0 %v497
    %2357 = vmatprep.subr.mxu0 0.0
    %2358 = vmatpush2.msra.mxu0 %v496
    %2359 = vmatprep.subr.mxu0 0.0
    %2360 = vmatpush2.msra.mxu0 %v495
    %2361 = vmatprep.subr.mxu0 0.0
    %2362 = vmatpush2.msra.mxu0 %v494
    %2363 = vmatprep.subr.mxu0 0.0
    %2364 = vmatpush2.msra.mxu0 %v493
    %2365 = vmatprep.subr.mxu0 0.0
    %2366 = vmatpush2.msra.mxu0 %v492
    %2367 = vmatprep.subr.mxu0 0.0
    %2368 = vmatpush2.msra.mxu0 %v491
    %2369 = vmatprep.subr.mxu0 0.0
    %2370 = vmatpush2.msra.mxu0 %v490
    %2371 = vmatprep.subr.mxu0 0.0
    %2372 = vmatpush2.msra.mxu0 %v489
    %2373 = vmatprep.subr.mxu0 0.0
    %2374 = vmatpush2.msra.mxu0 %v488
    %2375 = vmatprep.mubr.f32.mxu0 %v1252
    %2376 = vmatmul.mubr.f32.gmra.mxu0 %v1244
    %v2377 = vpop.f32.mrf.mxu0
    %v2378 = vadd.f32 %v2308, %v2377
    %v2379 = vpop.f32.mrf.mxu0
    %2380 = vdwg.mxu0
    %2381 = vmatprep.subr.mxu0 0.0
    %2382 = vmatpush1.msra.mxu0 %v519
    %2383 = vmatprep.subr.mxu0 0.0
    %2384 = vmatpush1.msra.mxu0 %v518
    %2385 = vmatprep.subr.mxu0 0.0
    %2386 = vmatpush1.msra.mxu0 %v517
    %2387 = vmatprep.subr.mxu0 0.0
    %2388 = vmatpush1.msra.mxu0 %v516
    %2389 = vmatprep.subr.mxu0 0.0
    %2390 = vmatpush1.msra.mxu0 %v515
    %2391 = vmatprep.subr.mxu0 0.0
    %2392 = vmatpush1.msra.mxu0 %v514
    %2393 = vmatprep.subr.mxu0 0.0
    %2394 = vmatpush1.msra.mxu0 %v513
    %2395 = vmatprep.subr.mxu0 0.0
    %2396 = vmatpush1.msra.mxu0 %v512
    %2397 = vmatprep.subr.mxu0 0.0
    %2398 = vmatpush1.msra.mxu0 %v511
    %2399 = vmatprep.subr.mxu0 0.0
    %2400 = vmatpush1.msra.mxu0 %v510
    %2401 = vmatprep.subr.mxu0 0.0
    %2402 = vmatpush1.msra.mxu0 %v509
    %2403 = vmatprep.subr.mxu0 0.0
    %2404 = vmatpush1.msra.mxu0 %v508
    %2405 = vmatprep.subr.mxu0 0.0
    %2406 = vmatpush1.msra.mxu0 %v507
    %2407 = vmatprep.subr.mxu0 0.0
    %2408 = vmatpush1.msra.mxu0 %v506
    %2409 = vmatprep.subr.mxu0 0.0
    %2410 = vmatpush1.msra.mxu0 %v505
    %2411 = vmatprep.subr.mxu0 0.0
    %2412 = vmatpush1.msra.mxu0 %v504
    %2413 = vmatprep.subr.mxu0 0.0
    %2414 = vmatpush2.msra.mxu0 %v535
    %2415 = vmatprep.subr.mxu0 0.0
    %2416 = vmatpush2.msra.mxu0 %v534
    %2417 = vmatprep.subr.mxu0 0.0
    %2418 = vmatpush2.msra.mxu0 %v533
    %2419 = vmatprep.subr.mxu0 0.0
    %2420 = vmatpush2.msra.mxu0 %v532
    %2421 = vmatprep.subr.mxu0 0.0
    %2422 = vmatpush2.msra.mxu0 %v531
    %2423 = vmatprep.subr.mxu0 0.0
    %2424 = vmatpush2.msra.mxu0 %v530
    %2425 = vmatprep.subr.mxu0 0.0
    %2426 = vmatpush2.msra.mxu0 %v529
    %2427 = vmatprep.subr.mxu0 0.0
    %2428 = vmatpush2.msra.mxu0 %v528
    %2429 = vmatprep.subr.mxu0 0.0
    %2430 = vmatpush2.msra.mxu0 %v527
    %2431 = vmatprep.subr.mxu0 0.0
    %2432 = vmatpush2.msra.mxu0 %v526
    %2433 = vmatprep.subr.mxu0 0.0
    %2434 = vmatpush2.msra.mxu0 %v525
    %2435 = vmatprep.subr.mxu0 0.0
    %2436 = vmatpush2.msra.mxu0 %v524
    %2437 = vmatprep.subr.mxu0 0.0
    %2438 = vmatpush2.msra.mxu0 %v523
    %2439 = vmatprep.subr.mxu0 0.0
    %2440 = vmatpush2.msra.mxu0 %v522
    %2441 = vmatprep.subr.mxu0 0.0
    %2442 = vmatpush2.msra.mxu0 %v521
    %2443 = vmatprep.subr.mxu0 0.0
    %2444 = vmatpush2.msra.mxu0 %v520
    %2445 = vmatprep.mubr.f32.mxu0 %v1253
    %2446 = vmatmul.mubr.f32.gmra.mxu0 %v1251
    %v2447 = vpop.f32.mrf.mxu0
    %v2448 = vadd.f32 %v2378, %v2447
    %v2449 = vpop.f32.mrf.mxu0
    %2450 = vdwg.mxu0
    %2451 = vmatprep.subr.mxu0 0.0
    %2452 = vmatpush1.msra.mxu0 %v551
    %2453 = vmatprep.subr.mxu0 0.0
    %2454 = vmatpush1.msra.mxu0 %v550
    %2455 = vmatprep.subr.mxu0 0.0
    %2456 = vmatpush1.msra.mxu0 %v549
    %2457 = vmatprep.subr.mxu0 0.0
    %2458 = vmatpush1.msra.mxu0 %v548
    %2459 = vmatprep.subr.mxu0 0.0
    %2460 = vmatpush1.msra.mxu0 %v547
    %2461 = vmatprep.subr.mxu0 0.0
    %2462 = vmatpush1.msra.mxu0 %v546
    %2463 = vmatprep.subr.mxu0 0.0
    %2464 = vmatpush1.msra.mxu0 %v545
    %2465 = vmatprep.subr.mxu0 0.0
    %2466 = vmatpush1.msra.mxu0 %v544
    %2467 = vmatprep.subr.mxu0 0.0
    %2468 = vmatpush1.msra.mxu0 %v543
    %2469 = vmatprep.subr.mxu0 0.0
    %2470 = vmatpush1.msra.mxu0 %v542
    %2471 = vmatprep.subr.mxu0 0.0
    %2472 = vmatpush1.msra.mxu0 %v541
    %2473 = vmatprep.subr.mxu0 0.0
    %2474 = vmatpush1.msra.mxu0 %v540
    %2475 = vmatprep.subr.mxu0 0.0
    %2476 = vmatpush1.msra.mxu0 %v539
    %2477 = vmatprep.subr.mxu0 0.0
    %2478 = vmatpush1.msra.mxu0 %v538
    %2479 = vmatprep.subr.mxu0 0.0
    %2480 = vmatpush1.msra.mxu0 %v537
    %2481 = vmatprep.subr.mxu0 0.0
    %2482 = vmatpush1.msra.mxu0 %v536
    %2483 = vmatprep.subr.mxu0 0.0
    %2484 = vmatpush2.msra.mxu0 %v567
    %2485 = vmatprep.subr.mxu0 0.0
    %2486 = vmatpush2.msra.mxu0 %v566
    %2487 = vmatprep.subr.mxu0 0.0
    %2488 = vmatpush2.msra.mxu0 %v565
    %2489 = vmatprep.subr.mxu0 0.0
    %2490 = vmatpush2.msra.mxu0 %v564
    %2491 = vmatprep.subr.mxu0 0.0
    %2492 = vmatpush2.msra.mxu0 %v563
    %2493 = vmatprep.subr.mxu0 0.0
    %2494 = vmatpush2.msra.mxu0 %v562
    %2495 = vmatprep.subr.mxu0 0.0
    %2496 = vmatpush2.msra.mxu0 %v561
    %2497 = vmatprep.subr.mxu0 0.0
    %2498 = vmatpush2.msra.mxu0 %v560
    %2499 = vmatprep.subr.mxu0 0.0
    %2500 = vmatpush2.msra.mxu0 %v559
    %2501 = vmatprep.subr.mxu0 0.0
    %2502 = vmatpush2.msra.mxu0 %v558
    %2503 = vmatprep.subr.mxu0 0.0
    %2504 = vmatpush2.msra.mxu0 %v557
    %2505 = vmatprep.subr.mxu0 0.0
    %2506 = vmatpush2.msra.mxu0 %v556
    %2507 = vmatprep.subr.mxu0 0.0
    %2508 = vmatpush2.msra.mxu0 %v555
    %2509 = vmatprep.subr.mxu0 0.0
    %2510 = vmatpush2.msra.mxu0 %v554
    %2511 = vmatprep.subr.mxu0 0.0
    %2512 = vmatpush2.msra.mxu0 %v553
    %2513 = vmatprep.subr.mxu0 0.0
    %2514 = vmatpush2.msra.mxu0 %v552
    %2515 = vmatprep.mubr.f32.mxu0 %v1269
    %2516 = vmatmul.mubr.f32.gmra.mxu0 %v1261
    %v2517 = vpop.f32.mrf.mxu0
    %v2518 = vadd.f32 %v2448, %v2517
    %v2519 = vpop.f32.mrf.mxu0
    %2520 = vdwg.mxu0
    %2521 = vmatprep.subr.mxu0 0.0
    %2522 = vmatpush1.msra.mxu0 %v583
    %2523 = vmatprep.subr.mxu0 0.0
    %2524 = vmatpush1.msra.mxu0 %v582
    %2525 = vmatprep.subr.mxu0 0.0
    %2526 = vmatpush1.msra.mxu0 %v581
    %2527 = vmatprep.subr.mxu0 0.0
    %2528 = vmatpush1.msra.mxu0 %v580
    %2529 = vmatprep.subr.mxu0 0.0
    %2530 = vmatpush1.msra.mxu0 %v579
    %2531 = vmatprep.subr.mxu0 0.0
    %2532 = vmatpush1.msra.mxu0 %v578
    %2533 = vmatprep.subr.mxu0 0.0
    %2534 = vmatpush1.msra.mxu0 %v577
    %2535 = vmatprep.subr.mxu0 0.0
    %2536 = vmatpush1.msra.mxu0 %v576
    %2537 = vmatprep.subr.mxu0 0.0
    %2538 = vmatpush1.msra.mxu0 %v575
    %2539 = vmatprep.subr.mxu0 0.0
    %2540 = vmatpush1.msra.mxu0 %v574
    %2541 = vmatprep.subr.mxu0 0.0
    %2542 = vmatpush1.msra.mxu0 %v573
    %2543 = vmatprep.subr.mxu0 0.0
    %2544 = vmatpush1.msra.mxu0 %v572
    %2545 = vmatprep.subr.mxu0 0.0
    %2546 = vmatpush1.msra.mxu0 %v571
    %2547 = vmatprep.subr.mxu0 0.0
    %2548 = vmatpush1.msra.mxu0 %v570
    %2549 = vmatprep.subr.mxu0 0.0
    %2550 = vmatpush1.msra.mxu0 %v569
    %2551 = vmatprep.subr.mxu0 0.0
    %2552 = vmatpush1.msra.mxu0 %v568
    %2553 = vmatprep.subr.mxu0 0.0
    %2554 = vmatpush2.msra.mxu0 %v599
    %2555 = vmatprep.subr.mxu0 0.0
    %2556 = vmatpush2.msra.mxu0 %v598
    %2557 = vmatprep.subr.mxu0 0.0
    %2558 = vmatpush2.msra.mxu0 %v597
    %2559 = vmatprep.subr.mxu0 0.0
    %2560 = vmatpush2.msra.mxu0 %v596
    %2561 = vmatprep.subr.mxu0 0.0
    %2562 = vmatpush2.msra.mxu0 %v595
    %2563 = vmatprep.subr.mxu0 0.0
    %2564 = vmatpush2.msra.mxu0 %v594
    %2565 = vmatprep.subr.mxu0 0.0
    %2566 = vmatpush2.msra.mxu0 %v593
    %2567 = vmatprep.subr.mxu0 0.0
    %2568 = vmatpush2.msra.mxu0 %v592
    %2569 = vmatprep.subr.mxu0 0.0
    %2570 = vmatpush2.msra.mxu0 %v591
    %2571 = vmatprep.subr.mxu0 0.0
    %2572 = vmatpush2.msra.mxu0 %v590
    %2573 = vmatprep.subr.mxu0 0.0
    %2574 = vmatpush2.msra.mxu0 %v589
    %2575 = vmatprep.subr.mxu0 0.0
    %2576 = vmatpush2.msra.mxu0 %v588
    %2577 = vmatprep.subr.mxu0 0.0
    %2578 = vmatpush2.msra.mxu0 %v587
    %2579 = vmatprep.subr.mxu0 0.0
    %2580 = vmatpush2.msra.mxu0 %v586
    %2581 = vmatprep.subr.mxu0 0.0
    %2582 = vmatpush2.msra.mxu0 %v585
    %2583 = vmatprep.subr.mxu0 0.0
    %2584 = vmatpush2.msra.mxu0 %v584
    %2585 = vmatprep.mubr.f32.mxu0 %v1270
    %2586 = vmatmul.mubr.f32.gmra.mxu0 %v1268
    %v2587 = vpop.f32.mrf.mxu0
    %v2588 = vadd.f32 %v2518, %v2587
    %v2589 = vpop.f32.mrf.mxu0
    %2590 = vdwg.mxu0
    %2591 = vmatprep.subr.mxu0 0.0
    %2592 = vmatpush1.msra.mxu0 %v615
    %2593 = vmatprep.subr.mxu0 0.0
    %2594 = vmatpush1.msra.mxu0 %v614
    %2595 = vmatprep.subr.mxu0 0.0
    %2596 = vmatpush1.msra.mxu0 %v613
    %2597 = vmatprep.subr.mxu0 0.0
    %2598 = vmatpush1.msra.mxu0 %v612
    %2599 = vmatprep.subr.mxu0 0.0
    %2600 = vmatpush1.msra.mxu0 %v611
    %2601 = vmatprep.subr.mxu0 0.0
    %2602 = vmatpush1.msra.mxu0 %v610
    %2603 = vmatprep.subr.mxu0 0.0
    %2604 = vmatpush1.msra.mxu0 %v609
    %2605 = vmatprep.subr.mxu0 0.0
    %2606 = vmatpush1.msra.mxu0 %v608
    %2607 = vmatprep.subr.mxu0 0.0
    %2608 = vmatpush1.msra.mxu0 %v607
    %2609 = vmatprep.subr.mxu0 0.0
    %2610 = vmatpush1.msra.mxu0 %v606
    %2611 = vmatprep.subr.mxu0 0.0
    %2612 = vmatpush1.msra.mxu0 %v605
    %2613 = vmatprep.subr.mxu0 0.0
    %2614 = vmatpush1.msra.mxu0 %v604
    %2615 = vmatprep.subr.mxu0 0.0
    %2616 = vmatpush1.msra.mxu0 %v603
    %2617 = vmatprep.subr.mxu0 0.0
    %2618 = vmatpush1.msra.mxu0 %v602
    %2619 = vmatprep.subr.mxu0 0.0
    %2620 = vmatpush1.msra.mxu0 %v601
    %2621 = vmatprep.subr.mxu0 0.0
    %2622 = vmatpush1.msra.mxu0 %v600
    %2623 = vmatprep.subr.mxu0 0.0
    %2624 = vmatpush2.msra.mxu0 %v631
    %2625 = vmatprep.subr.mxu0 0.0
    %2626 = vmatpush2.msra.mxu0 %v630
    %2627 = vmatprep.subr.mxu0 0.0
    %2628 = vmatpush2.msra.mxu0 %v629
    %2629 = vmatprep.subr.mxu0 0.0
    %2630 = vmatpush2.msra.mxu0 %v628
    %2631 = vmatprep.subr.mxu0 0.0
    %2632 = vmatpush2.msra.mxu0 %v627
    %2633 = vmatprep.subr.mxu0 0.0
    %2634 = vmatpush2.msra.mxu0 %v626
    %2635 = vmatprep.subr.mxu0 0.0
    %2636 = vmatpush2.msra.mxu0 %v625
    %2637 = vmatprep.subr.mxu0 0.0
    %2638 = vmatpush2.msra.mxu0 %v624
    %2639 = vmatprep.subr.mxu0 0.0
    %2640 = vmatpush2.msra.mxu0 %v623
    %2641 = vmatprep.subr.mxu0 0.0
    %2642 = vmatpush2.msra.mxu0 %v622
    %2643 = vmatprep.subr.mxu0 0.0
    %2644 = vmatpush2.msra.mxu0 %v621
    %2645 = vmatprep.subr.mxu0 0.0
    %2646 = vmatpush2.msra.mxu0 %v620
    %2647 = vmatprep.subr.mxu0 0.0
    %2648 = vmatpush2.msra.mxu0 %v619
    %2649 = vmatprep.subr.mxu0 0.0
    %2650 = vmatpush2.msra.mxu0 %v618
    %2651 = vmatprep.subr.mxu0 0.0
    %2652 = vmatpush2.msra.mxu0 %v617
    %2653 = vmatprep.subr.mxu0 0.0
    %2654 = vmatpush2.msra.mxu0 %v616
    %2655 = vmatprep.mubr.f32.mxu0 %v1286
    %2656 = vmatmul.mubr.f32.gmra.mxu0 %v1278
    %v2657 = vpop.f32.mrf.mxu0
    %v2658 = vadd.f32 %v2588, %v2657
    %v2659 = vpop.f32.mrf.mxu0
    %2660 = vdwg.mxu0
    %2661 = vmatprep.subr.mxu0 0.0
    %2662 = vmatpush1.msra.mxu0 %v647
    %2663 = vmatprep.subr.mxu0 0.0
    %2664 = vmatpush1.msra.mxu0 %v646
    %2665 = vmatprep.subr.mxu0 0.0
    %2666 = vmatpush1.msra.mxu0 %v645
    %2667 = vmatprep.subr.mxu0 0.0
    %2668 = vmatpush1.msra.mxu0 %v644
    %2669 = vmatprep.subr.mxu0 0.0
    %2670 = vmatpush1.msra.mxu0 %v643
    %2671 = vmatprep.subr.mxu0 0.0
    %2672 = vmatpush1.msra.mxu0 %v642
    %2673 = vmatprep.subr.mxu0 0.0
    %2674 = vmatpush1.msra.mxu0 %v641
    %2675 = vmatprep.subr.mxu0 0.0
    %2676 = vmatpush1.msra.mxu0 %v640
    %2677 = vmatprep.subr.mxu0 0.0
    %2678 = vmatpush1.msra.mxu0 %v639
    %2679 = vmatprep.subr.mxu0 0.0
    %2680 = vmatpush1.msra.mxu0 %v638
    %2681 = vmatprep.subr.mxu0 0.0
    %2682 = vmatpush1.msra.mxu0 %v637
    %2683 = vmatprep.subr.mxu0 0.0
    %2684 = vmatpush1.msra.mxu0 %v636
    %2685 = vmatprep.subr.mxu0 0.0
    %2686 = vmatpush1.msra.mxu0 %v635
    %2687 = vmatprep.subr.mxu0 0.0
    %2688 = vmatpush1.msra.mxu0 %v634
    %2689 = vmatprep.subr.mxu0 0.0
    %2690 = vmatpush1.msra.mxu0 %v633
    %2691 = vmatprep.subr.mxu0 0.0
    %2692 = vmatpush1.msra.mxu0 %v632
    %2693 = vmatprep.subr.mxu0 0.0
    %2694 = vmatpush2.msra.mxu0 %v663
    %2695 = vmatprep.subr.mxu0 0.0
    %2696 = vmatpush2.msra.mxu0 %v662
    %2697 = vmatprep.subr.mxu0 0.0
    %2698 = vmatpush2.msra.mxu0 %v661
    %2699 = vmatprep.subr.mxu0 0.0
    %2700 = vmatpush2.msra.mxu0 %v660
    %2701 = vmatprep.subr.mxu0 0.0
    %2702 = vmatpush2.msra.mxu0 %v659
    %2703 = vmatprep.subr.mxu0 0.0
    %2704 = vmatpush2.msra.mxu0 %v658
    %2705 = vmatprep.subr.mxu0 0.0
    %2706 = vmatpush2.msra.mxu0 %v657
    %2707 = vmatprep.subr.mxu0 0.0
    %2708 = vmatpush2.msra.mxu0 %v656
    %2709 = vmatprep.subr.mxu0 0.0
    %2710 = vmatpush2.msra.mxu0 %v655
    %2711 = vmatprep.subr.mxu0 0.0
    %2712 = vmatpush2.msra.mxu0 %v654
    %2713 = vmatprep.subr.mxu0 0.0
    %2714 = vmatpush2.msra.mxu0 %v653
    %2715 = vmatprep.subr.mxu0 0.0
    %2716 = vmatpush2.msra.mxu0 %v652
    %2717 = vmatprep.subr.mxu0 0.0
    %2718 = vmatpush2.msra.mxu0 %v651
    %2719 = vmatprep.subr.mxu0 0.0
    %2720 = vmatpush2.msra.mxu0 %v650
    %2721 = vmatprep.subr.mxu0 0.0
    %2722 = vmatpush2.msra.mxu0 %v649
    %2723 = vmatprep.subr.mxu0 0.0
    %2724 = vmatpush2.msra.mxu0 %v648
    %2725 = vmatprep.mubr.f32.mxu0 %v1287
    %2726 = vmatmul.mubr.f32.gmra.mxu0 %v1285
    %v2727 = vpop.f32.mrf.mxu0
    %v2728 = vadd.f32 %v2658, %v2727
    %v2729 = vpop.f32.mrf.mxu0
    %2730 = vdwg.mxu0
    %2731 = vmatprep.subr.mxu0 0.0
    %2732 = vmatpush1.msra.mxu0 %v679
    %2733 = vmatprep.subr.mxu0 0.0
    %2734 = vmatpush1.msra.mxu0 %v678
    %2735 = vmatprep.subr.mxu0 0.0
    %2736 = vmatpush1.msra.mxu0 %v677
    %2737 = vmatprep.subr.mxu0 0.0
    %2738 = vmatpush1.msra.mxu0 %v676
    %2739 = vmatprep.subr.mxu0 0.0
    %2740 = vmatpush1.msra.mxu0 %v675
    %2741 = vmatprep.subr.mxu0 0.0
    %2742 = vmatpush1.msra.mxu0 %v674
    %2743 = vmatprep.subr.mxu0 0.0
    %2744 = vmatpush1.msra.mxu0 %v673
    %2745 = vmatprep.subr.mxu0 0.0
    %2746 = vmatpush1.msra.mxu0 %v672
    %2747 = vmatprep.subr.mxu0 0.0
    %2748 = vmatpush1.msra.mxu0 %v671
    %2749 = vmatprep.subr.mxu0 0.0
    %2750 = vmatpush1.msra.mxu0 %v670
    %2751 = vmatprep.subr.mxu0 0.0
    %2752 = vmatpush1.msra.mxu0 %v669
    %2753 = vmatprep.subr.mxu0 0.0
    %2754 = vmatpush1.msra.mxu0 %v668
    %2755 = vmatprep.subr.mxu0 0.0
    %2756 = vmatpush1.msra.mxu0 %v667
    %2757 = vmatprep.subr.mxu0 0.0
    %2758 = vmatpush1.msra.mxu0 %v666
    %2759 = vmatprep.subr.mxu0 0.0
    %2760 = vmatpush1.msra.mxu0 %v665
    %2761 = vmatprep.subr.mxu0 0.0
    %2762 = vmatpush1.msra.mxu0 %v664
    %2763 = vmatprep.subr.mxu0 0.0
    %2764 = vmatpush2.msra.mxu0 %v695
    %2765 = vmatprep.subr.mxu0 0.0
    %2766 = vmatpush2.msra.mxu0 %v694
    %2767 = vmatprep.subr.mxu0 0.0
    %2768 = vmatpush2.msra.mxu0 %v693
    %2769 = vmatprep.subr.mxu0 0.0
    %2770 = vmatpush2.msra.mxu0 %v692
    %2771 = vmatprep.subr.mxu0 0.0
    %2772 = vmatpush2.msra.mxu0 %v691
    %2773 = vmatprep.subr.mxu0 0.0
    %2774 = vmatpush2.msra.mxu0 %v690
    %2775 = vmatprep.subr.mxu0 0.0
    %2776 = vmatpush2.msra.mxu0 %v689
    %2777 = vmatprep.subr.mxu0 0.0
    %2778 = vmatpush2.msra.mxu0 %v688
    %2779 = vmatprep.subr.mxu0 0.0
    %2780 = vmatpush2.msra.mxu0 %v687
    %2781 = vmatprep.subr.mxu0 0.0
    %2782 = vmatpush2.msra.mxu0 %v686
    %2783 = vmatprep.subr.mxu0 0.0
    %2784 = vmatpush2.msra.mxu0 %v685
    %2785 = vmatprep.subr.mxu0 0.0
    %2786 = vmatpush2.msra.mxu0 %v684
    %2787 = vmatprep.subr.mxu0 0.0
    %2788 = vmatpush2.msra.mxu0 %v683
    %2789 = vmatprep.subr.mxu0 0.0
    %2790 = vmatpush2.msra.mxu0 %v682
    %2791 = vmatprep.subr.mxu0 0.0
    %2792 = vmatpush2.msra.mxu0 %v681
    %2793 = vmatprep.subr.mxu0 0.0
    %2794 = vmatpush2.msra.mxu0 %v680
    %2795 = vmatprep.mubr.f32.mxu0 %v1303
    %2796 = vmatmul.mubr.f32.gmra.mxu0 %v1295
    %v2797 = vpop.f32.mrf.mxu0
    %v2798 = vadd.f32 %v2728, %v2797
    %v2799 = vpop.f32.mrf.mxu0
    %2800 = vdwg.mxu0
    %2801 = vmatprep.subr.mxu0 0.0
    %2802 = vmatpush1.msra.mxu0 %v711
    %2803 = vmatprep.subr.mxu0 0.0
    %2804 = vmatpush1.msra.mxu0 %v710
    %2805 = vmatprep.subr.mxu0 0.0
    %2806 = vmatpush1.msra.mxu0 %v709
    %2807 = vmatprep.subr.mxu0 0.0
    %2808 = vmatpush1.msra.mxu0 %v708
    %2809 = vmatprep.subr.mxu0 0.0
    %2810 = vmatpush1.msra.mxu0 %v707
    %2811 = vmatprep.subr.mxu0 0.0
    %2812 = vmatpush1.msra.mxu0 %v706
    %2813 = vmatprep.subr.mxu0 0.0
    %2814 = vmatpush1.msra.mxu0 %v705
    %2815 = vmatprep.subr.mxu0 0.0
    %2816 = vmatpush1.msra.mxu0 %v704
    %2817 = vmatprep.subr.mxu0 0.0
    %2818 = vmatpush1.msra.mxu0 %v703
    %2819 = vmatprep.subr.mxu0 0.0
    %2820 = vmatpush1.msra.mxu0 %v702
    %2821 = vmatprep.subr.mxu0 0.0
    %2822 = vmatpush1.msra.mxu0 %v701
    %2823 = vmatprep.subr.mxu0 0.0
    %2824 = vmatpush1.msra.mxu0 %v700
    %2825 = vmatprep.subr.mxu0 0.0
    %2826 = vmatpush1.msra.mxu0 %v699
    %2827 = vmatprep.subr.mxu0 0.0
    %2828 = vmatpush1.msra.mxu0 %v698
    %2829 = vmatprep.subr.mxu0 0.0
    %2830 = vmatpush1.msra.mxu0 %v697
    %2831 = vmatprep.subr.mxu0 0.0
    %2832 = vmatpush1.msra.mxu0 %v696
    %2833 = vmatprep.subr.mxu0 0.0
    %2834 = vmatpush2.msra.mxu0 %v727
    %2835 = vmatprep.subr.mxu0 0.0
    %2836 = vmatpush2.msra.mxu0 %v726
    %2837 = vmatprep.subr.mxu0 0.0
    %2838 = vmatpush2.msra.mxu0 %v725
    %2839 = vmatprep.subr.mxu0 0.0
    %2840 = vmatpush2.msra.mxu0 %v724
    %2841 = vmatprep.subr.mxu0 0.0
    %2842 = vmatpush2.msra.mxu0 %v723
    %2843 = vmatprep.subr.mxu0 0.0
    %2844 = vmatpush2.msra.mxu0 %v722
    %2845 = vmatprep.subr.mxu0 0.0
    %2846 = vmatpush2.msra.mxu0 %v721
    %2847 = vmatprep.subr.mxu0 0.0
    %2848 = vmatpush2.msra.mxu0 %v720
    %2849 = vmatprep.subr.mxu0 0.0
    %2850 = vmatpush2.msra.mxu0 %v719
    %2851 = vmatprep.subr.mxu0 0.0
    %2852 = vmatpush2.msra.mxu0 %v718
    %2853 = vmatprep.subr.mxu0 0.0
    %2854 = vmatpush2.msra.mxu0 %v717
    %2855 = vmatprep.subr.mxu0 0.0
    %2856 = vmatpush2.msra.mxu0 %v716
    %2857 = vmatprep.subr.mxu0 0.0
    %2858 = vmatpush2.msra.mxu0 %v715
    %2859 = vmatprep.subr.mxu0 0.0
    %2860 = vmatpush2.msra.mxu0 %v714
    %2861 = vmatprep.subr.mxu0 0.0
    %2862 = vmatpush2.msra.mxu0 %v713
    %2863 = vmatprep.subr.mxu0 0.0
    %2864 = vmatpush2.msra.mxu0 %v712
    %2865 = vmatprep.mubr.f32.mxu0 %v1304
    %2866 = vmatmul.mubr.f32.gmra.mxu0 %v1302
    %v2867 = vpop.f32.mrf.mxu0
    %v2868 = vadd.f32 %v2798, %v2867
    %v2869 = vpop.f32.mrf.mxu0
    %2870 = vdwg.mxu0
    %2871 = vmatprep.subr.mxu0 0.0
    %2872 = vmatpush1.msra.mxu0 %v743
    %2873 = vmatprep.subr.mxu0 0.0
    %2874 = vmatpush1.msra.mxu0 %v742
    %2875 = vmatprep.subr.mxu0 0.0
    %2876 = vmatpush1.msra.mxu0 %v741
    %2877 = vmatprep.subr.mxu0 0.0
    %2878 = vmatpush1.msra.mxu0 %v740
    %2879 = vmatprep.subr.mxu0 0.0
    %2880 = vmatpush1.msra.mxu0 %v739
    %2881 = vmatprep.subr.mxu0 0.0
    %2882 = vmatpush1.msra.mxu0 %v738
    %2883 = vmatprep.subr.mxu0 0.0
    %2884 = vmatpush1.msra.mxu0 %v737
    %2885 = vmatprep.subr.mxu0 0.0
    %2886 = vmatpush1.msra.mxu0 %v736
    %2887 = vmatprep.subr.mxu0 0.0
    %2888 = vmatpush1.msra.mxu0 %v735
    %2889 = vmatprep.subr.mxu0 0.0
    %2890 = vmatpush1.msra.mxu0 %v734
    %2891 = vmatprep.subr.mxu0 0.0
    %2892 = vmatpush1.msra.mxu0 %v733
    %2893 = vmatprep.subr.mxu0 0.0
    %2894 = vmatpush1.msra.mxu0 %v732
    %2895 = vmatprep.subr.mxu0 0.0
    %2896 = vmatpush1.msra.mxu0 %v731
    %2897 = vmatprep.subr.mxu0 0.0
    %2898 = vmatpush1.msra.mxu0 %v730
    %2899 = vmatprep.subr.mxu0 0.0
    %2900 = vmatpush1.msra.mxu0 %v729
    %2901 = vmatprep.subr.mxu0 0.0
    %2902 = vmatpush1.msra.mxu0 %v728
    %2903 = vmatprep.subr.mxu0 0.0
    %2904 = vmatpush2.msra.mxu0 %v759
    %2905 = vmatprep.subr.mxu0 0.0
    %2906 = vmatpush2.msra.mxu0 %v758
    %2907 = vmatprep.subr.mxu0 0.0
    %2908 = vmatpush2.msra.mxu0 %v757
    %2909 = vmatprep.subr.mxu0 0.0
    %2910 = vmatpush2.msra.mxu0 %v756
    %2911 = vmatprep.subr.mxu0 0.0
    %2912 = vmatpush2.msra.mxu0 %v755
    %2913 = vmatprep.subr.mxu0 0.0
    %2914 = vmatpush2.msra.mxu0 %v754
    %2915 = vmatprep.subr.mxu0 0.0
    %2916 = vmatpush2.msra.mxu0 %v753
    %2917 = vmatprep.subr.mxu0 0.0
    %2918 = vmatpush2.msra.mxu0 %v752
    %2919 = vmatprep.subr.mxu0 0.0
    %2920 = vmatpush2.msra.mxu0 %v751
    %2921 = vmatprep.subr.mxu0 0.0
    %2922 = vmatpush2.msra.mxu0 %v750
    %2923 = vmatprep.subr.mxu0 0.0
    %2924 = vmatpush2.msra.mxu0 %v749
    %2925 = vmatprep.subr.mxu0 0.0
    %2926 = vmatpush2.msra.mxu0 %v748
    %2927 = vmatprep.subr.mxu0 0.0
    %2928 = vmatpush2.msra.mxu0 %v747
    %2929 = vmatprep.subr.mxu0 0.0
    %2930 = vmatpush2.msra.mxu0 %v746
    %2931 = vmatprep.subr.mxu0 0.0
    %2932 = vmatpush2.msra.mxu0 %v745
    %2933 = vmatprep.subr.mxu0 0.0
    %2934 = vmatpush2.msra.mxu0 %v744
    %2935 = vmatprep.mubr.f32.mxu0 %v1320
    %2936 = vmatmul.mubr.f32.gmra.mxu0 %v1312
    %v2937 = vpop.f32.mrf.mxu0
    %v2938 = vadd.f32 %v2868, %v2937
    %v2939 = vpop.f32.mrf.mxu0
    %2940 = vdwg.mxu0
    %2941 = vmatprep.subr.mxu0 0.0
    %2942 = vmatpush1.msra.mxu0 %v775
    %2943 = vmatprep.subr.mxu0 0.0
    %2944 = vmatpush1.msra.mxu0 %v774
    %2945 = vmatprep.subr.mxu0 0.0
    %2946 = vmatpush1.msra.mxu0 %v773
    %2947 = vmatprep.subr.mxu0 0.0
    %2948 = vmatpush1.msra.mxu0 %v772
    %2949 = vmatprep.subr.mxu0 0.0
    %2950 = vmatpush1.msra.mxu0 %v771
    %2951 = vmatprep.subr.mxu0 0.0
    %2952 = vmatpush1.msra.mxu0 %v770
    %2953 = vmatprep.subr.mxu0 0.0
    %2954 = vmatpush1.msra.mxu0 %v769
    %2955 = vmatprep.subr.mxu0 0.0
    %2956 = vmatpush1.msra.mxu0 %v768
    %2957 = vmatprep.subr.mxu0 0.0
    %2958 = vmatpush1.msra.mxu0 %v767
    %2959 = vmatprep.subr.mxu0 0.0
    %2960 = vmatpush1.msra.mxu0 %v766
    %2961 = vmatprep.subr.mxu0 0.0
    %2962 = vmatpush1.msra.mxu0 %v765
    %2963 = vmatprep.subr.mxu0 0.0
    %2964 = vmatpush1.msra.mxu0 %v764
    %2965 = vmatprep.subr.mxu0 0.0
    %2966 = vmatpush1.msra.mxu0 %v763
    %2967 = vmatprep.subr.mxu0 0.0
    %2968 = vmatpush1.msra.mxu0 %v762
    %2969 = vmatprep.subr.mxu0 0.0
    %2970 = vmatpush1.msra.mxu0 %v761
    %2971 = vmatprep.subr.mxu0 0.0
    %2972 = vmatpush1.msra.mxu0 %v760
    %2973 = vmatprep.subr.mxu0 0.0
    %2974 = vmatpush2.msra.mxu0 %v791
    %2975 = vmatprep.subr.mxu0 0.0
    %2976 = vmatpush2.msra.mxu0 %v790
    %2977 = vmatprep.subr.mxu0 0.0
    %2978 = vmatpush2.msra.mxu0 %v789
    %2979 = vmatprep.subr.mxu0 0.0
    %2980 = vmatpush2.msra.mxu0 %v788
    %2981 = vmatprep.subr.mxu0 0.0
    %2982 = vmatpush2.msra.mxu0 %v787
    %2983 = vmatprep.subr.mxu0 0.0
    %2984 = vmatpush2.msra.mxu0 %v786
    %2985 = vmatprep.subr.mxu0 0.0
    %2986 = vmatpush2.msra.mxu0 %v785
    %2987 = vmatprep.subr.mxu0 0.0
    %2988 = vmatpush2.msra.mxu0 %v784
    %2989 = vmatprep.subr.mxu0 0.0
    %2990 = vmatpush2.msra.mxu0 %v783
    %2991 = vmatprep.subr.mxu0 0.0
    %2992 = vmatpush2.msra.mxu0 %v782
    %2993 = vmatprep.subr.mxu0 0.0
    %2994 = vmatpush2.msra.mxu0 %v781
    %2995 = vmatprep.subr.mxu0 0.0
    %2996 = vmatpush2.msra.mxu0 %v780
    %2997 = vmatprep.subr.mxu0 0.0
    %2998 = vmatpush2.msra.mxu0 %v779
    %2999 = vmatprep.subr.mxu0 0.0
    %3000 = vmatpush2.msra.mxu0 %v778
    %3001 = vmatprep.subr.mxu0 0.0
    %3002 = vmatpush2.msra.mxu0 %v777
    %3003 = vmatprep.subr.mxu0 0.0
    %3004 = vmatpush2.msra.mxu0 %v776
    %3005 = vmatprep.mubr.f32.mxu0 %v1321
    %3006 = vmatmul.mubr.f32.gmra.mxu0 %v1319
    %v3007 = vpop.f32.mrf.mxu0
    %v3008 = vadd.f32 %v2938, %v3007
    %v3009 = vpop.f32.mrf.mxu0
    %3010 = vdwg.mxu0
    %3011 = vmatprep.subr.mxu0 0.0
    %3012 = vmatpush1.msra.mxu0 %v807
    %3013 = vmatprep.subr.mxu0 0.0
    %3014 = vmatpush1.msra.mxu0 %v806
    %3015 = vmatprep.subr.mxu0 0.0
    %3016 = vmatpush1.msra.mxu0 %v805
    %3017 = vmatprep.subr.mxu0 0.0
    %3018 = vmatpush1.msra.mxu0 %v804
    %3019 = vmatprep.subr.mxu0 0.0
    %3020 = vmatpush1.msra.mxu0 %v803
    %3021 = vmatprep.subr.mxu0 0.0
    %3022 = vmatpush1.msra.mxu0 %v802
    %3023 = vmatprep.subr.mxu0 0.0
    %3024 = vmatpush1.msra.mxu0 %v801
    %3025 = vmatprep.subr.mxu0 0.0
    %3026 = vmatpush1.msra.mxu0 %v800
    %3027 = vmatprep.subr.mxu0 0.0
    %3028 = vmatpush1.msra.mxu0 %v799
    %3029 = vmatprep.subr.mxu0 0.0
    %3030 = vmatpush1.msra.mxu0 %v798
    %3031 = vmatprep.subr.mxu0 0.0
    %3032 = vmatpush1.msra.mxu0 %v797
    %3033 = vmatprep.subr.mxu0 0.0
    %3034 = vmatpush1.msra.mxu0 %v796
    %3035 = vmatprep.subr.mxu0 0.0
    %3036 = vmatpush1.msra.mxu0 %v795
    %3037 = vmatprep.subr.mxu0 0.0
    %3038 = vmatpush1.msra.mxu0 %v794
    %3039 = vmatprep.subr.mxu0 0.0
    %3040 = vmatpush1.msra.mxu0 %v793
    %3041 = vmatprep.subr.mxu0 0.0
    %3042 = vmatpush1.msra.mxu0 %v792
    %3043 = vmatprep.subr.mxu0 0.0
    %3044 = vmatpush2.msra.mxu0 %v823
    %3045 = vmatprep.subr.mxu0 0.0
    %3046 = vmatpush2.msra.mxu0 %v822
    %3047 = vmatprep.subr.mxu0 0.0
    %3048 = vmatpush2.msra.mxu0 %v821
    %3049 = vmatprep.subr.mxu0 0.0
    %3050 = vmatpush2.msra.mxu0 %v820
    %3051 = vmatprep.subr.mxu0 0.0
    %3052 = vmatpush2.msra.mxu0 %v819
    %3053 = vmatprep.subr.mxu0 0.0
    %3054 = vmatpush2.msra.mxu0 %v818
    %3055 = vmatprep.subr.mxu0 0.0
    %3056 = vmatpush2.msra.mxu0 %v817
    %3057 = vmatprep.subr.mxu0 0.0
    %3058 = vmatpush2.msra.mxu0 %v816
    %3059 = vmatprep.subr.mxu0 0.0
    %3060 = vmatpush2.msra.mxu0 %v815
    %3061 = vmatprep.subr.mxu0 0.0
    %3062 = vmatpush2.msra.mxu0 %v814
    %3063 = vmatprep.subr.mxu0 0.0
    %3064 = vmatpush2.msra.mxu0 %v813
    %3065 = vmatprep.subr.mxu0 0.0
    %3066 = vmatpush2.msra.mxu0 %v812
    %3067 = vmatprep.subr.mxu0 0.0
    %3068 = vmatpush2.msra.mxu0 %v811
    %3069 = vmatprep.subr.mxu0 0.0
    %3070 = vmatpush2.msra.mxu0 %v810
    %3071 = vmatprep.subr.mxu0 0.0
    %3072 = vmatpush2.msra.mxu0 %v809
    %3073 = vmatprep.subr.mxu0 0.0
    %3074 = vmatpush2.msra.mxu0 %v808
    %3075 = vmatprep.mubr.f32.mxu0 %v1337
    %3076 = vmatmul.mubr.f32.gmra.mxu0 %v1329
    %v3077 = vpop.f32.mrf.mxu0
    %v3078 = vadd.f32 %v3008, %v3077
    %v3079 = vpop.f32.mrf.mxu0
    %3080 = vdwg.mxu0
    %3081 = vmatprep.subr.mxu0 0.0
    %3082 = vmatpush1.msra.mxu0 %v839
    %3083 = vmatprep.subr.mxu0 0.0
    %3084 = vmatpush1.msra.mxu0 %v838
    %3085 = vmatprep.subr.mxu0 0.0
    %3086 = vmatpush1.msra.mxu0 %v837
    %3087 = vmatprep.subr.mxu0 0.0
    %3088 = vmatpush1.msra.mxu0 %v836
    %3089 = vmatprep.subr.mxu0 0.0
    %3090 = vmatpush1.msra.mxu0 %v835
    %3091 = vmatprep.subr.mxu0 0.0
    %3092 = vmatpush1.msra.mxu0 %v834
    %3093 = vmatprep.subr.mxu0 0.0
    %3094 = vmatpush1.msra.mxu0 %v833
    %3095 = vmatprep.subr.mxu0 0.0
    %3096 = vmatpush1.msra.mxu0 %v832
    %3097 = vmatprep.subr.mxu0 0.0
    %3098 = vmatpush1.msra.mxu0 %v831
    %3099 = vmatprep.subr.mxu0 0.0
    %3100 = vmatpush1.msra.mxu0 %v830
    %3101 = vmatprep.subr.mxu0 0.0
    %3102 = vmatpush1.msra.mxu0 %v829
    %3103 = vmatprep.subr.mxu0 0.0
    %3104 = vmatpush1.msra.mxu0 %v828
    %3105 = vmatprep.subr.mxu0 0.0
    %3106 = vmatpush1.msra.mxu0 %v827
    %3107 = vmatprep.subr.mxu0 0.0
    %3108 = vmatpush1.msra.mxu0 %v826
    %3109 = vmatprep.subr.mxu0 0.0
    %3110 = vmatpush1.msra.mxu0 %v825
    %3111 = vmatprep.subr.mxu0 0.0
    %3112 = vmatpush1.msra.mxu0 %v824
    %3113 = vmatprep.subr.mxu0 0.0
    %3114 = vmatpush2.msra.mxu0 %v855
    %3115 = vmatprep.subr.mxu0 0.0
    %3116 = vmatpush2.msra.mxu0 %v854
    %3117 = vmatprep.subr.mxu0 0.0
    %3118 = vmatpush2.msra.mxu0 %v853
    %3119 = vmatprep.subr.mxu0 0.0
    %3120 = vmatpush2.msra.mxu0 %v852
    %3121 = vmatprep.subr.mxu0 0.0
    %3122 = vmatpush2.msra.mxu0 %v851
    %3123 = vmatprep.subr.mxu0 0.0
    %3124 = vmatpush2.msra.mxu0 %v850
    %3125 = vmatprep.subr.mxu0 0.0
    %3126 = vmatpush2.msra.mxu0 %v849
    %3127 = vmatprep.subr.mxu0 0.0
    %3128 = vmatpush2.msra.mxu0 %v848
    %3129 = vmatprep.subr.mxu0 0.0
    %3130 = vmatpush2.msra.mxu0 %v847
    %3131 = vmatprep.subr.mxu0 0.0
    %3132 = vmatpush2.msra.mxu0 %v846
    %3133 = vmatprep.subr.mxu0 0.0
    %3134 = vmatpush2.msra.mxu0 %v845
    %3135 = vmatprep.subr.mxu0 0.0
    %3136 = vmatpush2.msra.mxu0 %v844
    %3137 = vmatprep.subr.mxu0 0.0
    %3138 = vmatpush2.msra.mxu0 %v843
    %3139 = vmatprep.subr.mxu0 0.0
    %3140 = vmatpush2.msra.mxu0 %v842
    %3141 = vmatprep.subr.mxu0 0.0
    %3142 = vmatpush2.msra.mxu0 %v841
    %3143 = vmatprep.subr.mxu0 0.0
    %3144 = vmatpush2.msra.mxu0 %v840
    %3145 = vmatprep.mubr.f32.mxu0 %v1338
    %3146 = vmatmul.mubr.f32.gmra.mxu0 %v1336
    %v3147 = vpop.f32.mrf.mxu0
    %v3148 = vadd.f32 %v3078, %v3147
    %v3149 = vpop.f32.mrf.mxu0
    %3150 = vdwg.mxu0
    %3151 = vmatprep.subr.mxu0 0.0
    %3152 = vmatpush1.msra.mxu0 %v871
    %3153 = vmatprep.subr.mxu0 0.0
    %3154 = vmatpush1.msra.mxu0 %v870
    %3155 = vmatprep.subr.mxu0 0.0
    %3156 = vmatpush1.msra.mxu0 %v869
    %3157 = vmatprep.subr.mxu0 0.0
    %3158 = vmatpush1.msra.mxu0 %v868
    %3159 = vmatprep.subr.mxu0 0.0
    %3160 = vmatpush1.msra.mxu0 %v867
    %3161 = vmatprep.subr.mxu0 0.0
    %3162 = vmatpush1.msra.mxu0 %v866
    %3163 = vmatprep.subr.mxu0 0.0
    %3164 = vmatpush1.msra.mxu0 %v865
    %3165 = vmatprep.subr.mxu0 0.0
    %3166 = vmatpush1.msra.mxu0 %v864
    %3167 = vmatprep.subr.mxu0 0.0
    %3168 = vmatpush1.msra.mxu0 %v863
    %3169 = vmatprep.subr.mxu0 0.0
    %3170 = vmatpush1.msra.mxu0 %v862
    %3171 = vmatprep.subr.mxu0 0.0
    %3172 = vmatpush1.msra.mxu0 %v861
    %3173 = vmatprep.subr.mxu0 0.0
    %3174 = vmatpush1.msra.mxu0 %v860
    %3175 = vmatprep.subr.mxu0 0.0
    %3176 = vmatpush1.msra.mxu0 %v859
    %3177 = vmatprep.subr.mxu0 0.0
    %3178 = vmatpush1.msra.mxu0 %v858
    %3179 = vmatprep.subr.mxu0 0.0
    %3180 = vmatpush1.msra.mxu0 %v857
    %3181 = vmatprep.subr.mxu0 0.0
    %3182 = vmatpush1.msra.mxu0 %v856
    %3183 = vmatprep.subr.mxu0 0.0
    %3184 = vmatpush2.msra.mxu0 %v887
    %3185 = vmatprep.subr.mxu0 0.0
    %3186 = vmatpush2.msra.mxu0 %v886
    %3187 = vmatprep.subr.mxu0 0.0
    %3188 = vmatpush2.msra.mxu0 %v885
    %3189 = vmatprep.subr.mxu0 0.0
    %3190 = vmatpush2.msra.mxu0 %v884
    %3191 = vmatprep.subr.mxu0 0.0
    %3192 = vmatpush2.msra.mxu0 %v883
    %3193 = vmatprep.subr.mxu0 0.0
    %3194 = vmatpush2.msra.mxu0 %v882
    %3195 = vmatprep.subr.mxu0 0.0
    %3196 = vmatpush2.msra.mxu0 %v881
    %3197 = vmatprep.subr.mxu0 0.0
    %3198 = vmatpush2.msra.mxu0 %v880
    %3199 = vmatprep.subr.mxu0 0.0
    %3200 = vmatpush2.msra.mxu0 %v879
    %3201 = vmatprep.subr.mxu0 0.0
    %3202 = vmatpush2.msra.mxu0 %v878
    %3203 = vmatprep.subr.mxu0 0.0
    %3204 = vmatpush2.msra.mxu0 %v877
    %3205 = vmatprep.subr.mxu0 0.0
    %3206 = vmatpush2.msra.mxu0 %v876
    %3207 = vmatprep.subr.mxu0 0.0
    %3208 = vmatpush2.msra.mxu0 %v875
    %3209 = vmatprep.subr.mxu0 0.0
    %3210 = vmatpush2.msra.mxu0 %v874
    %3211 = vmatprep.subr.mxu0 0.0
    %3212 = vmatpush2.msra.mxu0 %v873
    %3213 = vmatprep.subr.mxu0 0.0
    %3214 = vmatpush2.msra.mxu0 %v872
    %3215 = vmatprep.mubr.f32.mxu0 %v1354
    %3216 = vmatmul.mubr.f32.gmra.mxu0 %v1346
    %v3217 = vpop.f32.mrf.mxu0
    %v3218 = vadd.f32 %v3148, %v3217
    %v3219 = vpop.f32.mrf.mxu0
    %3220 = vdwg.mxu0
    %3221 = vmatprep.subr.mxu0 0.0
    %3222 = vmatpush1.msra.mxu0 %v903
    %3223 = vmatprep.subr.mxu0 0.0
    %3224 = vmatpush1.msra.mxu0 %v902
    %3225 = vmatprep.subr.mxu0 0.0
    %3226 = vmatpush1.msra.mxu0 %v901
    %3227 = vmatprep.subr.mxu0 0.0
    %3228 = vmatpush1.msra.mxu0 %v900
    %3229 = vmatprep.subr.mxu0 0.0
    %3230 = vmatpush1.msra.mxu0 %v899
    %3231 = vmatprep.subr.mxu0 0.0
    %3232 = vmatpush1.msra.mxu0 %v898
    %3233 = vmatprep.subr.mxu0 0.0
    %3234 = vmatpush1.msra.mxu0 %v897
    %3235 = vmatprep.subr.mxu0 0.0
    %3236 = vmatpush1.msra.mxu0 %v896
    %3237 = vmatprep.subr.mxu0 0.0
    %3238 = vmatpush1.msra.mxu0 %v895
    %3239 = vmatprep.subr.mxu0 0.0
    %3240 = vmatpush1.msra.mxu0 %v894
    %3241 = vmatprep.subr.mxu0 0.0
    %3242 = vmatpush1.msra.mxu0 %v893
    %3243 = vmatprep.subr.mxu0 0.0
    %3244 = vmatpush1.msra.mxu0 %v892
    %3245 = vmatprep.subr.mxu0 0.0
    %3246 = vmatpush1.msra.mxu0 %v891
    %3247 = vmatprep.subr.mxu0 0.0
    %3248 = vmatpush1.msra.mxu0 %v890
    %3249 = vmatprep.subr.mxu0 0.0
    %3250 = vmatpush1.msra.mxu0 %v889
    %3251 = vmatprep.subr.mxu0 0.0
    %3252 = vmatpush1.msra.mxu0 %v888
    %3253 = vmatprep.subr.mxu0 0.0
    %3254 = vmatpush2.msra.mxu0 %v919
    %3255 = vmatprep.subr.mxu0 0.0
    %3256 = vmatpush2.msra.mxu0 %v918
    %3257 = vmatprep.subr.mxu0 0.0
    %3258 = vmatpush2.msra.mxu0 %v917
    %3259 = vmatprep.subr.mxu0 0.0
    %3260 = vmatpush2.msra.mxu0 %v916
    %3261 = vmatprep.subr.mxu0 0.0
    %3262 = vmatpush2.msra.mxu0 %v915
    %3263 = vmatprep.subr.mxu0 0.0
    %3264 = vmatpush2.msra.mxu0 %v914
    %3265 = vmatprep.subr.mxu0 0.0
    %3266 = vmatpush2.msra.mxu0 %v913
    %3267 = vmatprep.subr.mxu0 0.0
    %3268 = vmatpush2.msra.mxu0 %v912
    %3269 = vmatprep.subr.mxu0 0.0
    %3270 = vmatpush2.msra.mxu0 %v911
    %3271 = vmatprep.subr.mxu0 0.0
    %3272 = vmatpush2.msra.mxu0 %v910
    %3273 = vmatprep.subr.mxu0 0.0
    %3274 = vmatpush2.msra.mxu0 %v909
    %3275 = vmatprep.subr.mxu0 0.0
    %3276 = vmatpush2.msra.mxu0 %v908
    %3277 = vmatprep.subr.mxu0 0.0
    %3278 = vmatpush2.msra.mxu0 %v907
    %3279 = vmatprep.subr.mxu0 0.0
    %3280 = vmatpush2.msra.mxu0 %v906
    %3281 = vmatprep.subr.mxu0 0.0
    %3282 = vmatpush2.msra.mxu0 %v905
    %3283 = vmatprep.subr.mxu0 0.0
    %3284 = vmatpush2.msra.mxu0 %v904
    %3285 = vmatprep.mubr.f32.mxu0 %v1355
    %3286 = vmatmul.mubr.f32.gmra.mxu0 %v1353
    %v3287 = vpop.f32.mrf.mxu0
    %v3288 = vadd.f32 %v3218, %v3287
    %v3289 = vpop.f32.mrf.mxu0
    %3290 = vdwg.mxu0
    %3291 = vmatprep.subr.mxu0 0.0
    %3292 = vmatpush1.msra.mxu0 %v935
    %3293 = vmatprep.subr.mxu0 0.0
    %3294 = vmatpush1.msra.mxu0 %v934
    %3295 = vmatprep.subr.mxu0 0.0
    %3296 = vmatpush1.msra.mxu0 %v933
    %3297 = vmatprep.subr.mxu0 0.0
    %3298 = vmatpush1.msra.mxu0 %v932
    %3299 = vmatprep.subr.mxu0 0.0
    %3300 = vmatpush1.msra.mxu0 %v931
    %3301 = vmatprep.subr.mxu0 0.0
    %3302 = vmatpush1.msra.mxu0 %v930
    %3303 = vmatprep.subr.mxu0 0.0
    %3304 = vmatpush1.msra.mxu0 %v929
    %3305 = vmatprep.subr.mxu0 0.0
    %3306 = vmatpush1.msra.mxu0 %v928
    %3307 = vmatprep.subr.mxu0 0.0
    %3308 = vmatpush1.msra.mxu0 %v927
    %3309 = vmatprep.subr.mxu0 0.0
    %3310 = vmatpush1.msra.mxu0 %v926
    %3311 = vmatprep.subr.mxu0 0.0
    %3312 = vmatpush1.msra.mxu0 %v925
    %3313 = vmatprep.subr.mxu0 0.0
    %3314 = vmatpush1.msra.mxu0 %v924
    %3315 = vmatprep.subr.mxu0 0.0
    %3316 = vmatpush1.msra.mxu0 %v923
    %3317 = vmatprep.subr.mxu0 0.0
    %3318 = vmatpush1.msra.mxu0 %v922
    %3319 = vmatprep.subr.mxu0 0.0
    %3320 = vmatpush1.msra.mxu0 %v921
    %3321 = vmatprep.subr.mxu0 0.0
    %3322 = vmatpush1.msra.mxu0 %v920
    %3323 = vmatprep.subr.mxu0 0.0
    %3324 = vmatpush2.msra.mxu0 %v951
    %3325 = vmatprep.subr.mxu0 0.0
    %3326 = vmatpush2.msra.mxu0 %v950
    %3327 = vmatprep.subr.mxu0 0.0
    %3328 = vmatpush2.msra.mxu0 %v949
    %3329 = vmatprep.subr.mxu0 0.0
    %3330 = vmatpush2.msra.mxu0 %v948
    %3331 = vmatprep.subr.mxu0 0.0
    %3332 = vmatpush2.msra.mxu0 %v947
    %3333 = vmatprep.subr.mxu0 0.0
    %3334 = vmatpush2.msra.mxu0 %v946
    %3335 = vmatprep.subr.mxu0 0.0
    %3336 = vmatpush2.msra.mxu0 %v945
    %3337 = vmatprep.subr.mxu0 0.0
    %3338 = vmatpush2.msra.mxu0 %v944
    %3339 = vmatprep.subr.mxu0 0.0
    %3340 = vmatpush2.msra.mxu0 %v943
    %3341 = vmatprep.subr.mxu0 0.0
    %3342 = vmatpush2.msra.mxu0 %v942
    %3343 = vmatprep.subr.mxu0 0.0
    %3344 = vmatpush2.msra.mxu0 %v941
    %3345 = vmatprep.subr.mxu0 0.0
    %3346 = vmatpush2.msra.mxu0 %v940
    %3347 = vmatprep.subr.mxu0 0.0
    %3348 = vmatpush2.msra.mxu0 %v939
    %3349 = vmatprep.subr.mxu0 0.0
    %3350 = vmatpush2.msra.mxu0 %v938
    %3351 = vmatprep.subr.mxu0 0.0
    %3352 = vmatpush2.msra.mxu0 %v937
    %3353 = vmatprep.subr.mxu0 0.0
    %3354 = vmatpush2.msra.mxu0 %v936
    %3355 = vmatprep.mubr.f32.mxu0 %v1371
    %3356 = vmatmul.mubr.f32.gmra.mxu0 %v1363
    %v3357 = vpop.f32.mrf.mxu0
    %v3358 = vadd.f32 %v3288, %v3357
    %v3359 = vpop.f32.mrf.mxu0
    %3360 = vdwg.mxu0
    %3361 = vmatprep.subr.mxu0 0.0
    %3362 = vmatpush1.msra.mxu0 %v967
    %3363 = vmatprep.subr.mxu0 0.0
    %3364 = vmatpush1.msra.mxu0 %v966
    %3365 = vmatprep.subr.mxu0 0.0
    %3366 = vmatpush1.msra.mxu0 %v965
    %3367 = vmatprep.subr.mxu0 0.0
    %3368 = vmatpush1.msra.mxu0 %v964
    %3369 = vmatprep.subr.mxu0 0.0
    %3370 = vmatpush1.msra.mxu0 %v963
    %3371 = vmatprep.subr.mxu0 0.0
    %3372 = vmatpush1.msra.mxu0 %v962
    %3373 = vmatprep.subr.mxu0 0.0
    %3374 = vmatpush1.msra.mxu0 %v961
    %3375 = vmatprep.subr.mxu0 0.0
    %3376 = vmatpush1.msra.mxu0 %v960
    %3377 = vmatprep.subr.mxu0 0.0
    %3378 = vmatpush1.msra.mxu0 %v959
    %3379 = vmatprep.subr.mxu0 0.0
    %3380 = vmatpush1.msra.mxu0 %v958
    %3381 = vmatprep.subr.mxu0 0.0
    %3382 = vmatpush1.msra.mxu0 %v957
    %3383 = vmatprep.subr.mxu0 0.0
    %3384 = vmatpush1.msra.mxu0 %v956
    %3385 = vmatprep.subr.mxu0 0.0
    %3386 = vmatpush1.msra.mxu0 %v955
    %3387 = vmatprep.subr.mxu0 0.0
    %3388 = vmatpush1.msra.mxu0 %v954
    %3389 = vmatprep.subr.mxu0 0.0
    %3390 = vmatpush1.msra.mxu0 %v953
    %3391 = vmatprep.subr.mxu0 0.0
    %3392 = vmatpush1.msra.mxu0 %v952
    %3393 = vmatprep.subr.mxu0 0.0
    %3394 = vmatpush2.msra.mxu0 %v983
    %3395 = vmatprep.subr.mxu0 0.0
    %3396 = vmatpush2.msra.mxu0 %v982
    %3397 = vmatprep.subr.mxu0 0.0
    %3398 = vmatpush2.msra.mxu0 %v981
    %3399 = vmatprep.subr.mxu0 0.0
    %3400 = vmatpush2.msra.mxu0 %v980
    %3401 = vmatprep.subr.mxu0 0.0
    %3402 = vmatpush2.msra.mxu0 %v979
    %3403 = vmatprep.subr.mxu0 0.0
    %3404 = vmatpush2.msra.mxu0 %v978
    %3405 = vmatprep.subr.mxu0 0.0
    %3406 = vmatpush2.msra.mxu0 %v977
    %3407 = vmatprep.subr.mxu0 0.0
    %3408 = vmatpush2.msra.mxu0 %v976
    %3409 = vmatprep.subr.mxu0 0.0
    %3410 = vmatpush2.msra.mxu0 %v975
    %3411 = vmatprep.subr.mxu0 0.0
    %3412 = vmatpush2.msra.mxu0 %v974
    %3413 = vmatprep.subr.mxu0 0.0
    %3414 = vmatpush2.msra.mxu0 %v973
    %3415 = vmatprep.subr.mxu0 0.0
    %3416 = vmatpush2.msra.mxu0 %v972
    %3417 = vmatprep.subr.mxu0 0.0
    %3418 = vmatpush2.msra.mxu0 %v971
    %3419 = vmatprep.subr.mxu0 0.0
    %3420 = vmatpush2.msra.mxu0 %v970
    %3421 = vmatprep.subr.mxu0 0.0
    %3422 = vmatpush2.msra.mxu0 %v969
    %3423 = vmatprep.subr.mxu0 0.0
    %3424 = vmatpush2.msra.mxu0 %v968
    %3425 = vmatprep.mubr.f32.mxu0 %v1372
    %3426 = vmatmul.mubr.f32.gmra.mxu0 %v1370
    %v3427 = vpop.f32.mrf.mxu0
    %v3428 = vadd.f32 %v3358, %v3427
    %v3429 = vpop.f32.mrf.mxu0
    %3430 = vdwg.mxu0
    %3431 = vmatprep.subr.mxu0 0.0
    %3432 = vmatpush1.msra.mxu0 %v999
    %3433 = vmatprep.subr.mxu0 0.0
    %3434 = vmatpush1.msra.mxu0 %v998
    %3435 = vmatprep.subr.mxu0 0.0
    %3436 = vmatpush1.msra.mxu0 %v997
    %3437 = vmatprep.subr.mxu0 0.0
    %3438 = vmatpush1.msra.mxu0 %v996
    %3439 = vmatprep.subr.mxu0 0.0
    %3440 = vmatpush1.msra.mxu0 %v995
    %3441 = vmatprep.subr.mxu0 0.0
    %3442 = vmatpush1.msra.mxu0 %v994
    %3443 = vmatprep.subr.mxu0 0.0
    %3444 = vmatpush1.msra.mxu0 %v993
    %3445 = vmatprep.subr.mxu0 0.0
    %3446 = vmatpush1.msra.mxu0 %v992
    %3447 = vmatprep.subr.mxu0 0.0
    %3448 = vmatpush1.msra.mxu0 %v991
    %3449 = vmatprep.subr.mxu0 0.0
    %3450 = vmatpush1.msra.mxu0 %v990
    %3451 = vmatprep.subr.mxu0 0.0
    %3452 = vmatpush1.msra.mxu0 %v989
    %3453 = vmatprep.subr.mxu0 0.0
    %3454 = vmatpush1.msra.mxu0 %v988
    %3455 = vmatprep.subr.mxu0 0.0
    %3456 = vmatpush1.msra.mxu0 %v987
    %3457 = vmatprep.subr.mxu0 0.0
    %3458 = vmatpush1.msra.mxu0 %v986
    %3459 = vmatprep.subr.mxu0 0.0
    %3460 = vmatpush1.msra.mxu0 %v985
    %3461 = vmatprep.subr.mxu0 0.0
    %3462 = vmatpush1.msra.mxu0 %v984
    %3463 = vmatprep.subr.mxu0 0.0
    %3464 = vmatpush2.msra.mxu0 %v1015
    %3465 = vmatprep.subr.mxu0 0.0
    %3466 = vmatpush2.msra.mxu0 %v1014
    %3467 = vmatprep.subr.mxu0 0.0
    %3468 = vmatpush2.msra.mxu0 %v1013
    %3469 = vmatprep.subr.mxu0 0.0
    %3470 = vmatpush2.msra.mxu0 %v1012
    %3471 = vmatprep.subr.mxu0 0.0
    %3472 = vmatpush2.msra.mxu0 %v1011
    %3473 = vmatprep.subr.mxu0 0.0
    %3474 = vmatpush2.msra.mxu0 %v1010
    %3475 = vmatprep.subr.mxu0 0.0
    %3476 = vmatpush2.msra.mxu0 %v1009
    %3477 = vmatprep.subr.mxu0 0.0
    %3478 = vmatpush2.msra.mxu0 %v1008
    %3479 = vmatprep.subr.mxu0 0.0
    %3480 = vmatpush2.msra.mxu0 %v1007
    %3481 = vmatprep.subr.mxu0 0.0
    %3482 = vmatpush2.msra.mxu0 %v1006
    %3483 = vmatprep.subr.mxu0 0.0
    %3484 = vmatpush2.msra.mxu0 %v1005
    %3485 = vmatprep.subr.mxu0 0.0
    %3486 = vmatpush2.msra.mxu0 %v1004
    %3487 = vmatprep.subr.mxu0 0.0
    %3488 = vmatpush2.msra.mxu0 %v1003
    %3489 = vmatprep.subr.mxu0 0.0
    %3490 = vmatpush2.msra.mxu0 %v1002
    %3491 = vmatprep.subr.mxu0 0.0
    %3492 = vmatpush2.msra.mxu0 %v1001
    %3493 = vmatprep.subr.mxu0 0.0
    %3494 = vmatpush2.msra.mxu0 %v1000
    %3495 = vmatprep.mubr.f32.mxu0 %v1388
    %3496 = vmatmul.mubr.f32.gmra.mxu0 %v1380
    %v3497 = vpop.f32.mrf.mxu0
    %v3498 = vadd.f32 %v3428, %v3497
    %v3499 = vpop.f32.mrf.mxu0
    %3500 = vdwg.mxu0
    %3501 = vmatprep.subr.mxu0 0.0
    %3502 = vmatpush1.msra.mxu0 %v1031
    %3503 = vmatprep.subr.mxu0 0.0
    %3504 = vmatpush1.msra.mxu0 %v1030
    %3505 = vmatprep.subr.mxu0 0.0
    %3506 = vmatpush1.msra.mxu0 %v1029
    %3507 = vmatprep.subr.mxu0 0.0
    %3508 = vmatpush1.msra.mxu0 %v1028
    %3509 = vmatprep.subr.mxu0 0.0
    %3510 = vmatpush1.msra.mxu0 %v1027
    %3511 = vmatprep.subr.mxu0 0.0
    %3512 = vmatpush1.msra.mxu0 %v1026
    %3513 = vmatprep.subr.mxu0 0.0
    %3514 = vmatpush1.msra.mxu0 %v1025
    %3515 = vmatprep.subr.mxu0 0.0
    %3516 = vmatpush1.msra.mxu0 %v1024
    %3517 = vmatprep.subr.mxu0 0.0
    %3518 = vmatpush1.msra.mxu0 %v1023
    %3519 = vmatprep.subr.mxu0 0.0
    %3520 = vmatpush1.msra.mxu0 %v1022
    %3521 = vmatprep.subr.mxu0 0.0
    %3522 = vmatpush1.msra.mxu0 %v1021
    %3523 = vmatprep.subr.mxu0 0.0
    %3524 = vmatpush1.msra.mxu0 %v1020
    %3525 = vmatprep.subr.mxu0 0.0
    %3526 = vmatpush1.msra.mxu0 %v1019
    %3527 = vmatprep.subr.mxu0 0.0
    %3528 = vmatpush1.msra.mxu0 %v1018
    %3529 = vmatprep.subr.mxu0 0.0
    %3530 = vmatpush1.msra.mxu0 %v1017
    %3531 = vmatprep.subr.mxu0 0.0
    %3532 = vmatpush1.msra.mxu0 %v1016
    %3533 = vmatprep.subr.mxu0 0.0
    %3534 = vmatpush2.msra.mxu0 %v1047
    %3535 = vmatprep.subr.mxu0 0.0
    %3536 = vmatpush2.msra.mxu0 %v1046
    %3537 = vmatprep.subr.mxu0 0.0
    %3538 = vmatpush2.msra.mxu0 %v1045
    %3539 = vmatprep.subr.mxu0 0.0
    %3540 = vmatpush2.msra.mxu0 %v1044
    %3541 = vmatprep.subr.mxu0 0.0
    %3542 = vmatpush2.msra.mxu0 %v1043
    %3543 = vmatprep.subr.mxu0 0.0
    %3544 = vmatpush2.msra.mxu0 %v1042
    %3545 = vmatprep.subr.mxu0 0.0
    %3546 = vmatpush2.msra.mxu0 %v1041
    %3547 = vmatprep.subr.mxu0 0.0
    %3548 = vmatpush2.msra.mxu0 %v1040
    %3549 = vmatprep.subr.mxu0 0.0
    %3550 = vmatpush2.msra.mxu0 %v1039
    %3551 = vmatprep.subr.mxu0 0.0
    %3552 = vmatpush2.msra.mxu0 %v1038
    %3553 = vmatprep.subr.mxu0 0.0
    %3554 = vmatpush2.msra.mxu0 %v1037
    %3555 = vmatprep.subr.mxu0 0.0
    %3556 = vmatpush2.msra.mxu0 %v1036
    %3557 = vmatprep.subr.mxu0 0.0
    %3558 = vmatpush2.msra.mxu0 %v1035
    %3559 = vmatprep.subr.mxu0 0.0
    %3560 = vmatpush2.msra.mxu0 %v1034
    %3561 = vmatprep.subr.mxu0 0.0
    %3562 = vmatpush2.msra.mxu0 %v1033
    %3563 = vmatprep.subr.mxu0 0.0
    %3564 = vmatpush2.msra.mxu0 %v1032
    %3565 = vmatprep.mubr.f32.mxu0 %v1389
    %3566 = vmatmul.mubr.f32.gmra.mxu0 %v1387
    %v3567 = vpop.f32.mrf.mxu0
    %v3568 = vadd.f32 %v3498, %v3567
    %v3569 = vpop.f32.mrf.mxu0
    %3570 = vdwg.mxu0
    %3571 = vmatprep.subr.mxu0 0.0
    %3572 = vmatpush1.msra.mxu0 %v1063
    %3573 = vmatprep.subr.mxu0 0.0
    %3574 = vmatpush1.msra.mxu0 %v1062
    %3575 = vmatprep.subr.mxu0 0.0
    %3576 = vmatpush1.msra.mxu0 %v1061
    %3577 = vmatprep.subr.mxu0 0.0
    %3578 = vmatpush1.msra.mxu0 %v1060
    %3579 = vmatprep.subr.mxu0 0.0
    %3580 = vmatpush1.msra.mxu0 %v1059
    %3581 = vmatprep.subr.mxu0 0.0
    %3582 = vmatpush1.msra.mxu0 %v1058
    %3583 = vmatprep.subr.mxu0 0.0
    %3584 = vmatpush1.msra.mxu0 %v1057
    %3585 = vmatprep.subr.mxu0 0.0
    %3586 = vmatpush1.msra.mxu0 %v1056
    %3587 = vmatprep.subr.mxu0 0.0
    %3588 = vmatpush1.msra.mxu0 %v1055
    %3589 = vmatprep.subr.mxu0 0.0
    %3590 = vmatpush1.msra.mxu0 %v1054
    %3591 = vmatprep.subr.mxu0 0.0
    %3592 = vmatpush1.msra.mxu0 %v1053
    %3593 = vmatprep.subr.mxu0 0.0
    %3594 = vmatpush1.msra.mxu0 %v1052
    %3595 = vmatprep.subr.mxu0 0.0
    %3596 = vmatpush1.msra.mxu0 %v1051
    %3597 = vmatprep.subr.mxu0 0.0
    %3598 = vmatpush1.msra.mxu0 %v1050
    %3599 = vmatprep.subr.mxu0 0.0
    %3600 = vmatpush1.msra.mxu0 %v1049
    %3601 = vmatprep.subr.mxu0 0.0
    %3602 = vmatpush1.msra.mxu0 %v1048
    %3603 = vmatprep.subr.mxu0 0.0
    %3604 = vmatpush2.msra.mxu0 %v1079
    %3605 = vmatprep.subr.mxu0 0.0
    %3606 = vmatpush2.msra.mxu0 %v1078
    %3607 = vmatprep.subr.mxu0 0.0
    %3608 = vmatpush2.msra.mxu0 %v1077
    %3609 = vmatprep.subr.mxu0 0.0
    %3610 = vmatpush2.msra.mxu0 %v1076
    %3611 = vmatprep.subr.mxu0 0.0
    %3612 = vmatpush2.msra.mxu0 %v1075
    %3613 = vmatprep.subr.mxu0 0.0
    %3614 = vmatpush2.msra.mxu0 %v1074
    %3615 = vmatprep.subr.mxu0 0.0
    %3616 = vmatpush2.msra.mxu0 %v1073
    %3617 = vmatprep.subr.mxu0 0.0
    %3618 = vmatpush2.msra.mxu0 %v1072
    %3619 = vmatprep.subr.mxu0 0.0
    %3620 = vmatpush2.msra.mxu0 %v1071
    %3621 = vmatprep.subr.mxu0 0.0
    %3622 = vmatpush2.msra.mxu0 %v1070
    %3623 = vmatprep.subr.mxu0 0.0
    %3624 = vmatpush2.msra.mxu0 %v1069
    %3625 = vmatprep.subr.mxu0 0.0
    %3626 = vmatpush2.msra.mxu0 %v1068
    %3627 = vmatprep.subr.mxu0 0.0
    %3628 = vmatpush2.msra.mxu0 %v1067
    %3629 = vmatprep.subr.mxu0 0.0
    %3630 = vmatpush2.msra.mxu0 %v1066
    %3631 = vmatprep.subr.mxu0 0.0
    %3632 = vmatpush2.msra.mxu0 %v1065
    %3633 = vmatprep.subr.mxu0 0.0
    %3634 = vmatpush2.msra.mxu0 %v1064
    %3635 = vmatprep.mubr.f32.mxu0 %v1405
    %3636 = vmatmul.mubr.f32.gmra.mxu0 %v1397
    %v3637 = vpop.f32.mrf.mxu0
    %v3638 = vadd.f32 %v3568, %v3637
    %v3639 = vpop.f32.mrf.mxu0
    %3640 = vdwg.mxu0
    %3641 = vmatprep.subr.mxu0 0.0
    %3642 = vmatpush1.msra.mxu0 %v1095
    %3643 = vmatprep.subr.mxu0 0.0
    %3644 = vmatpush1.msra.mxu0 %v1094
    %3645 = vmatprep.subr.mxu0 0.0
    %3646 = vmatpush1.msra.mxu0 %v1093
    %3647 = vmatprep.subr.mxu0 0.0
    %3648 = vmatpush1.msra.mxu0 %v1092
    %3649 = vmatprep.subr.mxu0 0.0
    %3650 = vmatpush1.msra.mxu0 %v1091
    %3651 = vmatprep.subr.mxu0 0.0
    %3652 = vmatpush1.msra.mxu0 %v1090
    %3653 = vmatprep.subr.mxu0 0.0
    %3654 = vmatpush1.msra.mxu0 %v1089
    %3655 = vmatprep.subr.mxu0 0.0
    %3656 = vmatpush1.msra.mxu0 %v1088
    %3657 = vmatprep.subr.mxu0 0.0
    %3658 = vmatpush1.msra.mxu0 %v1087
    %3659 = vmatprep.subr.mxu0 0.0
    %3660 = vmatpush1.msra.mxu0 %v1086
    %3661 = vmatprep.subr.mxu0 0.0
    %3662 = vmatpush1.msra.mxu0 %v1085
    %3663 = vmatprep.subr.mxu0 0.0
    %3664 = vmatpush1.msra.mxu0 %v1084
    %3665 = vmatprep.subr.mxu0 0.0
    %3666 = vmatpush1.msra.mxu0 %v1083
    %3667 = vmatprep.subr.mxu0 0.0
    %3668 = vmatpush1.msra.mxu0 %v1082
    %3669 = vmatprep.subr.mxu0 0.0
    %3670 = vmatpush1.msra.mxu0 %v1081
    %3671 = vmatprep.subr.mxu0 0.0
    %3672 = vmatpush1.msra.mxu0 %v1080
    %3673 = vmatprep.subr.mxu0 0.0
    %3674 = vmatpush2.msra.mxu0 %v1111
    %3675 = vmatprep.subr.mxu0 0.0
    %3676 = vmatpush2.msra.mxu0 %v1110
    %3677 = vmatprep.subr.mxu0 0.0
    %3678 = vmatpush2.msra.mxu0 %v1109
    %3679 = vmatprep.subr.mxu0 0.0
    %3680 = vmatpush2.msra.mxu0 %v1108
    %3681 = vmatprep.subr.mxu0 0.0
    %3682 = vmatpush2.msra.mxu0 %v1107
    %3683 = vmatprep.subr.mxu0 0.0
    %3684 = vmatpush2.msra.mxu0 %v1106
    %3685 = vmatprep.subr.mxu0 0.0
    %3686 = vmatpush2.msra.mxu0 %v1105
    %3687 = vmatprep.subr.mxu0 0.0
    %3688 = vmatpush2.msra.mxu0 %v1104
    %3689 = vmatprep.subr.mxu0 0.0
    %3690 = vmatpush2.msra.mxu0 %v1103
    %3691 = vmatprep.subr.mxu0 0.0
    %3692 = vmatpush2.msra.mxu0 %v1102
    %3693 = vmatprep.subr.mxu0 0.0
    %3694 = vmatpush2.msra.mxu0 %v1101
    %3695 = vmatprep.subr.mxu0 0.0
    %3696 = vmatpush2.msra.mxu0 %v1100
    %3697 = vmatprep.subr.mxu0 0.0
    %3698 = vmatpush2.msra.mxu0 %v1099
    %3699 = vmatprep.subr.mxu0 0.0
    %3700 = vmatpush2.msra.mxu0 %v1098
    %3701 = vmatprep.subr.mxu0 0.0
    %3702 = vmatpush2.msra.mxu0 %v1097
    %3703 = vmatprep.subr.mxu0 0.0
    %3704 = vmatpush2.msra.mxu0 %v1096
    %3705 = vmatprep.mubr.f32.mxu0 %v1406
    %3706 = vmatmul.mubr.f32.gmra.mxu0 %v1404
    %v3707 = vpop.f32.mrf.mxu0
    %v3708 = vadd.f32 %v3638, %v3707
    %v3709 = vpop.f32.mrf.mxu0
    %3710 = vdwg.mxu0
    %v3711 = vmax.f32 %v3708, 0.0
    %v3712 = vld [vmem:[#allocation7] sm:$0xff]
    %v3713 = vld [vmem:[#allocation7 + $0x8] sm:$0xff]
    %v3714 = vld [vmem:[#allocation7 + $0x10] sm:$0xff]
    %v3715 = vld [vmem:[#allocation7 + $0x18] sm:$0xff]
    %v3716 = vld [vmem:[#allocation7 + $0x20] sm:$0xff]
    %v3717 = vld [vmem:[#allocation7 + $0x28] sm:$0xff]
    %v3718 = vld [vmem:[#allocation7 + $0x30] sm:$0xff]
    %v3719 = vld [vmem:[#allocation7 + $0x38] sm:$0xff]
    %v3720 = vld [vmem:[#allocation7 + $0x40] sm:$0xff]
    %v3721 = vld [vmem:[#allocation7 + $0x48] sm:$0xff]
    %v3722 = vld [vmem:[#allocation7 + $0x50] sm:$0xff]
    %v3723 = vld [vmem:[#allocation7 + $0x58] sm:$0xff]
    %v3724 = vld [vmem:[#allocation7 + $0x60] sm:$0xff]
    %v3725 = vld [vmem:[#allocation7 + $0x68] sm:$0xff]
    %v3726 = vld [vmem:[#allocation7 + $0x70] sm:$0xff]
    %v3727 = vld [vmem:[#allocation7 + $0x78] sm:$0xff]
    %v3728 = vld [vmem:[#allocation8] sm:$0x1]
    %v3730 = vlaneseq
    %v3731 = vshrl.u32 %v3730, 7
    %v3732 = vsub.s32 0, %v3731
    %v3733 = vrot.slane %v3728, %v3732
    %3735 = vmatprep.subr.mxu0 0.0
    %3736 = vmatpush1.msra.mxu0 %v3727
    %3737 = vmatprep.subr.mxu0 0.0
    %3738 = vmatpush1.msra.mxu0 %v3726
    %3739 = vmatprep.subr.mxu0 0.0
    %3740 = vmatpush1.msra.mxu0 %v3725
    %3741 = vmatprep.subr.mxu0 0.0
    %3742 = vmatpush1.msra.mxu0 %v3724
    %3743 = vmatprep.subr.mxu0 0.0
    %3744 = vmatpush1.msra.mxu0 %v3723
    %3745 = vmatprep.subr.mxu0 0.0
    %3746 = vmatpush1.msra.mxu0 %v3722
    %3747 = vmatprep.subr.mxu0 0.0
    %3748 = vmatpush1.msra.mxu0 %v3721
    %3749 = vmatprep.subr.mxu0 0.0
    %3750 = vmatpush1.msra.mxu0 %v3720
    %3751 = vmatprep.subr.mxu0 0.0
    %3752 = vmatpush1.msra.mxu0 %v3719
    %3753 = vmatprep.subr.mxu0 0.0
    %3754 = vmatpush1.msra.mxu0 %v3718
    %3755 = vmatprep.subr.mxu0 0.0
    %3756 = vmatpush1.msra.mxu0 %v3717
    %3757 = vmatprep.subr.mxu0 0.0
    %3758 = vmatpush1.msra.mxu0 %v3716
    %3759 = vmatprep.subr.mxu0 0.0
    %3760 = vmatpush1.msra.mxu0 %v3715
    %3761 = vmatprep.subr.mxu0 0.0
    %3762 = vmatpush1.msra.mxu0 %v3714
    %3763 = vmatprep.subr.mxu0 0.0
    %3764 = vmatpush1.msra.mxu0 %v3713
    %3765 = vmatprep.subr.mxu0 0.0
    %3766 = vmatpush1.msra.mxu0 %v3712
    %3767 = vmatprep.subr.mxu0 0.0
    %3768 = vmatpush2.msra.mxu0 0.0
    %3769 = vmatprep.subr.mxu0 0.0
    %3770 = vmatpush2.msra.mxu0 0.0
    %3771 = vmatprep.subr.mxu0 0.0
    %3772 = vmatpush2.msra.mxu0 0.0
    %3773 = vmatprep.subr.mxu0 0.0
    %3774 = vmatpush2.msra.mxu0 0.0
    %3775 = vmatprep.subr.mxu0 0.0
    %3776 = vmatpush2.msra.mxu0 0.0
    %3777 = vmatprep.subr.mxu0 0.0
    %3778 = vmatpush2.msra.mxu0 0.0
    %3779 = vmatprep.subr.mxu0 0.0
    %3780 = vmatpush2.msra.mxu0 0.0
    %3781 = vmatprep.subr.mxu0 0.0
    %3782 = vmatpush2.msra.mxu0 0.0
    %3783 = vmatprep.subr.mxu0 0.0
    %3784 = vmatpush2.msra.mxu0 0.0
    %3785 = vmatprep.subr.mxu0 0.0
    %3786 = vmatpush2.msra.mxu0 0.0
    %3787 = vmatprep.subr.mxu0 0.0
    %3788 = vmatpush2.msra.mxu0 0.0
    %3789 = vmatprep.subr.mxu0 0.0
    %3790 = vmatpush2.msra.mxu0 0.0
    %3791 = vmatprep.subr.mxu0 0.0
    %3792 = vmatpush2.msra.mxu0 0.0
    %3793 = vmatprep.subr.mxu0 0.0
    %3794 = vmatpush2.msra.mxu0 0.0
    %3795 = vmatprep.subr.mxu0 0.0
    %3796 = vmatpush2.msra.mxu0 0.0
    %3797 = vmatprep.subr.mxu0 0.0
    %3798 = vmatpush2.msra.mxu0 0.0
    %3799 = vmatprep.mubr.f32.mxu0 0.0
    %3800 = vmatmul.mubr.f32.gmra.mxu0 %v3711
    %v3801 = vpop.f32.mrf.mxu0
    %v3802 = vadd.f32 %v3733, %v3801
    %v3803 = vpop.f32.mrf.mxu0
    %3804 = vdwg.mxu0
    %3805 = vst [vmem:[#allocation10] sm:$0x3] %v3802
    // Predicated region
    $region38: #{my_model_forward.3} parent=1 // pred_check
      _
    $region39: #{my_model_forward.3} parent=1 // pred_check_branch
      %3807 = sbr.rel (0) target = $region41
    $region40: #{my_model_forward.3} parent=1 // pred_region
      %s3809 = ssub.s32 32, 32
      %3810 = vsyncadd [#allocation4], %s3809
      %s3812 = sshll.u32 [#allocation10], 4
      %s3813 = int_to_ptr.vmem [resolvable:$true] %s3812
      %3815 = dma.vmem_to_hbm [thread:$0]  %s3813, 32, %s5, [#allocation4]
    $region41: #{my_model_forward.3} parent=1 // pred_fallthru
      _
    // Predicated region
    $region42: #{my_model_forward.3} parent=1 // pred_check
      _
    $region43: #{my_model_forward.3} parent=1 // pred_check_branch
      %3817 = sbr.rel (0) target = $region45
    $region44: #{my_model_forward.3} parent=1 // pred_region
      %3818 = dma.done [#allocation4], 32
    $region45: #{my_model_forward.3} parent=1 // pred_fallthru
      _
    %3819 = vsyncpa [#allocation3], 1
    %3820 = vsyncpa [#allocation6], 1
    %3821 = vsyncpa [#allocation9], 1
    %3822 = vsyncpa [#allocation4], 1

// kernel: my_model_forward.2
$region0: #{my_model_forward.2}
  #allocation0 [shape = 'u32[]', space=smem, size = 0x4, offset = 0x4, fixed_abs, tag = 'smem constant byte address 0x4 - core index']
  #allocation1 [shape = 'u32[144,128]{1,0:T(1,128)}', space=vmem, size = 0x12000, scoped, tag = 'internal scratch']
  #allocation2 [shape = 'f32[18,32,32]{2,1,0:T(8,128)}', space=vmem, size = 0x48000, scoped, tag = 'scratch operand']
  #allocation3 [shape = 'f32[256,288]{1,0:T(8,128)}', space=vmem, size = 0x60000, scoped, tag = 'scratch operand']
  %s0 = inlined_call_operand.vmem [shape: f32[2,16,16,1], index: 0, kind: input, shape index: {}]
  %s1 = inlined_call_operand.vmem [shape: f32[288,32], index: 1, kind: input, shape index: {}]
  %s2 = inlined_call_operand.hbm [shape: f32[1,32], index: 2, kind: input, shape index: {}]
  %s3 = inlined_call_operand.vmem [shape: f32[288,32], index: 3, kind: input, shape index: {}]
  %s4 = inlined_call_operand.hbm [shape: f32[1,32], index: 4, kind: input, shape index: {}]
  %s5 = inlined_call_operand.vmem [shape: f32[288,32], index: 5, kind: input, shape index: {}]
  %s6 = inlined_call_operand.hbm [shape: f32[1,32], index: 6, kind: input, shape index: {}]
  %s7 = inlined_call_operand.vmem [shape: f32[2,256,32], index: 7, kind: output, shape index: {}]
  %s8 = sld [smem:[#allocation0]]
  $region73: #{my_model_forward.2} parent=0
    _
  %s10 = ssub.s32 1, %s8
  %s11 = scalar_select 0, %s10, %s8
  $region1: #{my_model_forward.2} parent=0
    #allocation4 [shape = 'u8[512]{0}', space=vmem, size = 0x400, scoped, tag = 'input window, operand 2, single buffered']
    #allocation5 [shape = 's32[2]{0}', space=sflag, size = 0x8, scoped, tag = 'scoped memory for my_model_forward.2']
    #allocation6 [shape = 'u8[512]{0}', space=vmem, size = 0x400, scoped, tag = 'input window, operand 4, single buffered']
    #allocation7 [shape = 's32[1]{0}', space=sflag, size = 0x4, scoped, tag = 'scoped memory for my_model_forward.2']
    #allocation8 [shape = 'u8[512]{0}', space=vmem, size = 0x400, scoped, tag = 'input window, operand 6, single buffered']
    %12 = vsyncpa [#allocation5], 0
    %13 = vsyncpa [#allocation7], 0
    loop: start=0, step=1, limit=4
    $region2: #{my_model_forward.2} parent=1 // loop_pre_header
      _
    $region3: #{my_model_forward.2} parent=1 // loop_header
      %s15 = sphi 0, %s19
      %p16 = scmp.ge.s32.totalorder %s15, 4
      %s25 = sphi 0, %s27
      %s28 = sphi 0, %s25
      %s29 = sphi 0, %s28
      %s45 = sphi 0, %s29
      %s49 = sphi 0, %s49
      %s51 = sphi 0, %s49
      %s52 = sphi 0, %s51
      %s66 = sphi 0, %s52
      %s70 = sphi 0, %s70
      %s72 = sphi 0, %s70
      %s73 = sphi 0, %s72
      %s87 = sphi 0, %s73
      %s91 = sphi 0, %s91
      %s93 = sphi 0, %s91
      %s94 = sphi 0, %s93
      %s108 = sphi 0, %s94
      %s112 = sphi 0, %s112
      %s114 = sphi 0, %s112
      %s115 = sphi 0, %s114
      %s129 = sphi 0, %s115
      %s133 = sphi 0, %s133
      %s135 = sphi 0, %s133
      %s136 = sphi 0, %s135
      %s150 = sphi 0, %s136
      %s154 = sphi 0, %s154
      %s156 = sphi 0, %s154
      %s157 = sphi 0, %s156
      %s171 = sphi 0, %s157
      %s177 = sphi 0, %s179
      %s180 = sphi 0, %s177
      %s181 = sphi 0, %s180
      %s197 = sphi 0, %s181
    $region4: #{my_model_forward.2} parent=1 // loop_header_branch
      %18 = sbr.rel (%p16) target = $region8
    $region5: #{my_model_forward.2} parent=1 // loop_body
      %s20 = ssub.s32 %s15, 1
      %s21 = ssub.s32 %s15, 2
      %s22 = sadd.s32 %s15, 1
      %s23 = ssub.s32 %s15, %s22
      %p24 = scmp.eq.s32.totalorder %s23, 0
      %s26 = sadd.s32 %s25, 1
      %s27 = scalar_select %p24, %s25, %s26
      %p30 = pneg %p24
      %p31 = scmp.eq.s32.totalorder %s15, 1
      %p32 = por %p30, %p31
      %p33 = scmp.ne.s32.totalorder %s25, %s28
      %p34 = scmp.eq.s32.totalorder %s15, 0
      %p35 = por %p33, %p34
      %p36 = scmp.ne.s32.totalorder %s25, %s28
      %p37 = scmp.eq.s32.totalorder %s20, 1
      %p38 = por %p36, %p37
      %p39 = scmp.ne.s32.totalorder %s28, %s29
      %p40 = scmp.eq.s32.totalorder %s20, 0
      %p41 = por %p39, %p40
      %p42 = scmp.ne.s32.totalorder %s28, %s29
      %p43 = scmp.eq.s32.totalorder %s21, 1
      %p44 = por %p42, %p43
      %p46 = scmp.ne.s32.totalorder %s29, %s45
      %p47 = scmp.eq.s32.totalorder %s21, 0
      %p48 = por %p46, %p47
      %s50 = sadd.s32 %s49, 1
      %p53 = scmp.eq.s32.totalorder %s15, 1
      %p54 = scmp.ne.s32.totalorder %s49, %s51
      %p55 = scmp.eq.s32.totalorder %s15, 0
      %p56 = por %p54, %p55
      %p57 = scmp.ne.s32.totalorder %s49, %s51
      %p58 = scmp.eq.s32.totalorder %s20, 1
      %p59 = por %p57, %p58
      %p60 = scmp.ne.s32.totalorder %s51, %s52
      %p61 = scmp.eq.s32.totalorder %s20, 0
      %p62 = por %p60, %p61
      %p63 = scmp.ne.s32.totalorder %s51, %s52
      %p64 = scmp.eq.s32.totalorder %s21, 1
      %p65 = por %p63, %p64
      %p67 = scmp.ne.s32.totalorder %s52, %s66
      %p68 = scmp.eq.s32.totalorder %s21, 0
      %p69 = por %p67, %p68
      %s71 = sadd.s32 %s70, 1
      %p74 = scmp.eq.s32.totalorder %s15, 1
      %p75 = scmp.ne.s32.totalorder %s70, %s72
      %p76 = scmp.eq.s32.totalorder %s15, 0
      %p77 = por %p75, %p76
      %p78 = scmp.ne.s32.totalorder %s70, %s72
      %p79 = scmp.eq.s32.totalorder %s20, 1
      %p80 = por %p78, %p79
      %p81 = scmp.ne.s32.totalorder %s72, %s73
      %p82 = scmp.eq.s32.totalorder %s20, 0
      %p83 = por %p81, %p82
      %p84 = scmp.ne.s32.totalorder %s72, %s73
      %p85 = scmp.eq.s32.totalorder %s21, 1
      %p86 = por %p84, %p85
      %p88 = scmp.ne.s32.totalorder %s73, %s87
      %p89 = scmp.eq.s32.totalorder %s21, 0
      %p90 = por %p88, %p89
      %s92 = sadd.s32 %s91, 1
      %p95 = scmp.eq.s32.totalorder %s15, 1
      %p96 = scmp.ne.s32.totalorder %s91, %s93
      %p97 = scmp.eq.s32.totalorder %s15, 0
      %p98 = por %p96, %p97
      %p99 = scmp.ne.s32.totalorder %s91, %s93
      %p100 = scmp.eq.s32.totalorder %s20, 1
      %p101 = por %p99, %p100
      %p102 = scmp.ne.s32.totalorder %s93, %s94
      %p103 = scmp.eq.s32.totalorder %s20, 0
      %p104 = por %p102, %p103
      %p105 = scmp.ne.s32.totalorder %s93, %s94
      %p106 = scmp.eq.s32.totalorder %s21, 1
      %p107 = por %p105, %p106
      %p109 = scmp.ne.s32.totalorder %s94, %s108
      %p110 = scmp.eq.s32.totalorder %s21, 0
      %p111 = por %p109, %p110
      %s113 = sadd.s32 %s112, 1
      %p116 = scmp.eq.s32.totalorder %s15, 1
      %p117 = scmp.ne.s32.totalorder %s112, %s114
      %p118 = scmp.eq.s32.totalorder %s15, 0
      %p119 = por %p117, %p118
      %p120 = scmp.ne.s32.totalorder %s112, %s114
      %p121 = scmp.eq.s32.totalorder %s20, 1
      %p122 = por %p120, %p121
      %p123 = scmp.ne.s32.totalorder %s114, %s115
      %p124 = scmp.eq.s32.totalorder %s20, 0
      %p125 = por %p123, %p124
      %p126 = scmp.ne.s32.totalorder %s114, %s115
      %p127 = scmp.eq.s32.totalorder %s21, 1
      %p128 = por %p126, %p127
      %p130 = scmp.ne.s32.totalorder %s115, %s129
      %p131 = scmp.eq.s32.totalorder %s21, 0
      %p132 = por %p130, %p131
      %s134 = sadd.s32 %s133, 1
      %p137 = scmp.eq.s32.totalorder %s15, 1
      %p138 = scmp.ne.s32.totalorder %s133, %s135
      %p139 = scmp.eq.s32.totalorder %s15, 0
      %p140 = por %p138, %p139
      %p141 = scmp.ne.s32.totalorder %s133, %s135
      %p142 = scmp.eq.s32.totalorder %s20, 1
      %p143 = por %p141, %p142
      %p144 = scmp.ne.s32.totalorder %s135, %s136
      %p145 = scmp.eq.s32.totalorder %s20, 0
      %p146 = por %p144, %p145
      %p147 = scmp.ne.s32.totalorder %s135, %s136
      %p148 = scmp.eq.s32.totalorder %s21, 1
      %p149 = por %p147, %p148
      %p151 = scmp.ne.s32.totalorder %s136, %s150
      %p152 = scmp.eq.s32.totalorder %s21, 0
      %p153 = por %p151, %p152
      %s155 = sadd.s32 %s154, 1
      %p158 = scmp.eq.s32.totalorder %s15, 1
      %p159 = scmp.ne.s32.totalorder %s154, %s156
      %p160 = scmp.eq.s32.totalorder %s15, 0
      %p161 = por %p159, %p160
      %p162 = scmp.ne.s32.totalorder %s154, %s156
      %p163 = scmp.eq.s32.totalorder %s20, 1
      %p164 = por %p162, %p163
      %p165 = scmp.ne.s32.totalorder %s156, %s157
      %p166 = scmp.eq.s32.totalorder %s20, 0
      %p167 = por %p165, %p166
      %p168 = scmp.ne.s32.totalorder %s156, %s157
      %p169 = scmp.eq.s32.totalorder %s21, 1
      %p170 = por %p168, %p169
      %p172 = scmp.ne.s32.totalorder %s157, %s171
      %p173 = scmp.eq.s32.totalorder %s21, 0
      %p174 = por %p172, %p173
      %s175 = ssub.s32 %s15, %s22
      %p176 = scmp.eq.s32.totalorder %s175, 0
      %s178 = sadd.s32 %s177, 1
      %s179 = scalar_select %p176, %s177, %s178
      %p182 = pneg %p176
      %p183 = scmp.eq.s32.totalorder %s15, 1
      %p184 = por %p182, %p183
      %p185 = scmp.ne.s32.totalorder %s177, %s180
      %p186 = scmp.eq.s32.totalorder %s15, 0
      %p187 = por %p185, %p186
      %p188 = scmp.ne.s32.totalorder %s177, %s180
      %p189 = scmp.eq.s32.totalorder %s20, 1
      %p190 = por %p188, %p189
      %p191 = scmp.ne.s32.totalorder %s180, %s181
      %p192 = scmp.eq.s32.totalorder %s20, 0
      %p193 = por %p191, %p192
      %p194 = scmp.ne.s32.totalorder %s180, %s181
      %p195 = scmp.eq.s32.totalorder %s21, 1
      %p196 = por %p194, %p195
      %p198 = scmp.ne.s32.totalorder %s181, %s197
      %p199 = scmp.eq.s32.totalorder %s21, 0
      %p200 = por %p198, %p199
      %p201 = scmp.le.s32.totalorder 1, %s15
      %p202 = scmp.lt.s32.totalorder %s15, 3
      %p203 = pnand %p201, %p202
      %p204 = pneg %p203
      // Predicated region
      $region9: #{my_model_forward.2} parent=5 // pred_check
        _
      $region10: #{my_model_forward.2} parent=5 // pred_check_branch
        %206 = sbr.rel (%p203) target = $region12
      $region11: #{my_model_forward.2} parent=5 // pred_region
        %s207 = ssub.s32 %s15, 1
        // Predicated region
        $region13: #{my_model_forward.2} parent=11 // pred_check
          %p208 = pneg %p62
        $region14: #{my_model_forward.2} parent=11 // pred_check_branch
          %210 = sbr.rel (%p208) target = $region16
        $region15: #{my_model_forward.2} parent=11 // pred_region
          _
        $region16: #{my_model_forward.2} parent=11 // pred_fallthru
          _
        // Predicated region
        $region17: #{my_model_forward.2} parent=11 // pred_check
          %p211 = pneg %p83
        $region18: #{my_model_forward.2} parent=11 // pred_check_branch
          %213 = sbr.rel (%p211) target = $region20
        $region19: #{my_model_forward.2} parent=11 // pred_region
          %s215 = ssub.s32 16, 16
          %216 = vsyncadd [#allocation5], %s215
          %s218 = sshll.u32 [#allocation4], 4
          %s219 = int_to_ptr.vmem [resolvable:$true] %s218
          %221 = dma.hbm_to_vmem [thread:$0]  %s2, 16, %s219, [#allocation5]
        $region20: #{my_model_forward.2} parent=11 // pred_fallthru
          _
        // Predicated region
        $region21: #{my_model_forward.2} parent=11 // pred_check
          %p222 = pneg %p104
        $region22: #{my_model_forward.2} parent=11 // pred_check_branch
          %224 = sbr.rel (%p222) target = $region24
        $region23: #{my_model_forward.2} parent=11 // pred_region
          _
        $region24: #{my_model_forward.2} parent=11 // pred_fallthru
          _
        // Predicated region
        $region25: #{my_model_forward.2} parent=11 // pred_check
          %p225 = pneg %p125
        $region26: #{my_model_forward.2} parent=11 // pred_check_branch
          %227 = sbr.rel (%p225) target = $region28
        $region27: #{my_model_forward.2} parent=11 // pred_region
          %s229 = ssub.s32 16, 16
          %230 = vsyncadd [#allocation7], %s229
          %s232 = sshll.u32 [#allocation6], 4
          %s233 = int_to_ptr.vmem [resolvable:$true] %s232
          %235 = dma.hbm_to_vmem [thread:$0]  %s4, 16, %s233, [#allocation7]
        $region28: #{my_model_forward.2} parent=11 // pred_fallthru
          _
        // Predicated region
        $region29: #{my_model_forward.2} parent=11 // pred_check
          %p236 = pneg %p146
        $region30: #{my_model_forward.2} parent=11 // pred_check_branch
          %238 = sbr.rel (%p236) target = $region32
        $region31: #{my_model_forward.2} parent=11 // pred_region
          _
        $region32: #{my_model_forward.2} parent=11 // pred_fallthru
          _
        // Predicated region
        $region33: #{my_model_forward.2} parent=11 // pred_check
          %p239 = pneg %p167
        $region34: #{my_model_forward.2} parent=11 // pred_check_branch
          %241 = sbr.rel (%p239) target = $region36
        $region35: #{my_model_forward.2} parent=11 // pred_region
          %s243 = ssub.s32 16, 16
          %244 = vsyncadd [#allocation7], %s243
          %s246 = sshll.u32 [#allocation8], 4
          %s247 = int_to_ptr.vmem [resolvable:$true] %s246
          %249 = dma.hbm_to_vmem [thread:$0]  %s6, 16, %s247, [#allocation7]
        $region36: #{my_model_forward.2} parent=11 // pred_fallthru
          _
      $region12: #{my_model_forward.2} parent=5 // pred_fallthru
        _
      %p250 = scmp.lt.s32.totalorder %s15, 2
      // Predicated region
      $region37: #{my_model_forward.2} parent=5 // pred_check
        %p251 = pneg %p250
      $region38: #{my_model_forward.2} parent=5 // pred_check_branch
        %253 = sbr.rel (%p251) target = $region40
      $region39: #{my_model_forward.2} parent=5 // pred_region
        // Predicated region
        $region41: #{my_model_forward.2} parent=39 // pred_check
          %p254 = pneg %p35
        $region42: #{my_model_forward.2} parent=39 // pred_check_branch
          %256 = sbr.rel (%p254) target = $region44
        $region43: #{my_model_forward.2} parent=39 // pred_region
          %p257 = scmp.lt.s32.totalorder %s15, 1
          %s258 = scalar_select %p257, %s15, 1
          %s259 = smul.addr %s258, 32
          %s260 = smul.addr %s259, 8
          %s261 = scalar_lea.vmem %s0, %s260
        $region44: #{my_model_forward.2} parent=39 // pred_fallthru
          _
      $region40: #{my_model_forward.2} parent=5 // pred_fallthru
        _
      %p262 = scmp.le.s32.totalorder 1, %s15
      %p263 = scmp.lt.s32.totalorder %s15, 3
      %p264 = pnand %p262, %p263
      %p265 = pneg %p264
      // Predicated region
      $region45: #{my_model_forward.2} parent=5 // pred_check
        _
      $region46: #{my_model_forward.2} parent=5 // pred_check_branch
        %267 = sbr.rel (%p264) target = $region48
      $region47: #{my_model_forward.2} parent=5 // pred_region
        %s268 = ssub.s32 %s15, 1
        // Predicated region
        $region49: #{my_model_forward.2} parent=47 // pred_check
          %p269 = pneg %p83
        $region50: #{my_model_forward.2} parent=47 // pred_check_branch
          %271 = sbr.rel (%p269) target = $region52
        $region51: #{my_model_forward.2} parent=47 // pred_region
          %272 = dma.done [#allocation5], 16
        $region52: #{my_model_forward.2} parent=47 // pred_fallthru
          _
        // Predicated region
        $region53: #{my_model_forward.2} parent=47 // pred_check
          %p273 = pneg %p125
        $region54: #{my_model_forward.2} parent=47 // pred_check_branch
          %275 = sbr.rel (%p273) target = $region56
        $region55: #{my_model_forward.2} parent=47 // pred_region
          %276 = dma.done [#allocation7], 16
        $region56: #{my_model_forward.2} parent=47 // pred_fallthru
          _
        // Predicated region
        $region57: #{my_model_forward.2} parent=47 // pred_check
          %p277 = pneg %p167
        $region58: #{my_model_forward.2} parent=47 // pred_check_branch
          %279 = sbr.rel (%p277) target = $region60
        $region59: #{my_model_forward.2} parent=47 // pred_region
          %280 = dma.done [#allocation7], 16
        $region60: #{my_model_forward.2} parent=47 // pred_fallthru
          _
        %p281 = scmp.lt.s32.totalorder %s20, 1
        %s282 = scalar_select %p281, %s20, 1
        %s283 = smul.addr %s282, 32
        %s284 = smul.addr %s283, 8
        %s285 = scalar_lea.vmem %s0, %s284
        %p286 = pneg %p41
        %p287 = pneg %p38
        %p288 = pneg %p62
        %p289 = pneg %p59
        %p290 = pneg %p83
        %p291 = pneg %p80
        %p292 = pneg %p104
        %p293 = pneg %p101
        %p294 = pneg %p125
        %p295 = pneg %p122
        %p296 = pneg %p146
        %p297 = pneg %p143
        %p298 = pneg %p167
        %p299 = pneg %p164
        %p300 = pneg %p193
        %p301 = pneg %p190
        %p302 = scmp.lt.s32.totalorder %s20, 1
        %s303 = scalar_select %p302, %s20, 1
        %s304 = smul.addr %s303, 32
        %s305 = smul.addr %s304, 8
        %s306 = scalar_lea.vmem %s7, %s305
        %p307 = scmp.lt.s32.totalorder %s20, 1
        %s308 = scalar_select %p307, %s20, 1
        %s309 = smul.addr %s308, 32
        %s310 = smul.addr %s309, 8
        %s311 = scalar_lea.vmem %s0, %s310
        %p312 = scmp.lt.s32.totalorder %s20, 1
        %s313 = scalar_select %p312, %s20, 1
        %s314 = smul.addr %s313, 32
        %s315 = smul.addr %s314, 8
        %s316 = scalar_lea.vmem %s7, %s315
        %vm317 = vcmask 261120
        %318 = vst.msk [vmem:[#allocation2] sm:$0xff] %vm317, 0.0
        %319 = vst.msk [vmem:[#allocation2 + $0x8] sm:$0xff] %vm317, 0.0
        %320 = vst.msk [vmem:[#allocation2 + $0x10] sm:$0xff] %vm317, 0.0
        %321 = vst.msk [vmem:[#allocation2 + $0x18] sm:$0xff] %vm317, 0.0
        %322 = vst.msk [vmem:[#allocation2 + $0x20] sm:$0xff] %vm317, 0.0
        %323 = vst.msk [vmem:[#allocation2 + $0x28] sm:$0xff] %vm317, 0.0
        %324 = vst.msk [vmem:[#allocation2 + $0x30] sm:$0xff] %vm317, 0.0
        %325 = vst.msk [vmem:[#allocation2 + $0x38] sm:$0xff] %vm317, 0.0
        %326 = vst.msk [vmem:[#allocation2 + $0x40] sm:$0xff] %vm317, 0.0
        %327 = vst.msk [vmem:[#allocation2 + $0x48] sm:$0xff] %vm317, 0.0
        %328 = vst.msk [vmem:[#allocation2 + $0x50] sm:$0xff] %vm317, 0.0
        %329 = vst.msk [vmem:[#allocation2 + $0x58] sm:$0xff] %vm317, 0.0
        %330 = vst.msk [vmem:[#allocation2 + $0x60] sm:$0xff] %vm317, 0.0
        %331 = vst.msk [vmem:[#allocation2 + $0x68] sm:$0xff] %vm317, 0.0
        %332 = vst.msk [vmem:[#allocation2 + $0x70] sm:$0xff] %vm317, 0.0
        %333 = vst.msk [vmem:[#allocation2 + $0x78] sm:$0xff] %vm317, 0.0
        %334 = vst.msk [vmem:[#allocation2 + $0x80] sm:$0xff] %vm317, 0.0
        %335 = vst.msk [vmem:[#allocation2 + $0x88] sm:$0xff] %vm317, 0.0
        %336 = vst.msk [vmem:[#allocation2 + $0x90] sm:$0xff] %vm317, 0.0
        %337 = vst.msk [vmem:[#allocation2 + $0x98] sm:$0xff] %vm317, 0.0
        %338 = vst.msk [vmem:[#allocation2 + $0xa0] sm:$0xff] %vm317, 0.0
        %339 = vst.msk [vmem:[#allocation2 + $0xa8] sm:$0xff] %vm317, 0.0
        %340 = vst.msk [vmem:[#allocation2 + $0xb0] sm:$0xff] %vm317, 0.0
        %341 = vst.msk [vmem:[#allocation2 + $0xb8] sm:$0xff] %vm317, 0.0
        %342 = vst.msk [vmem:[#allocation2 + $0xc0] sm:$0xff] %vm317, 0.0
        %343 = vst.msk [vmem:[#allocation2 + $0xc8] sm:$0xff] %vm317, 0.0
        %344 = vst.msk [vmem:[#allocation2 + $0xd0] sm:$0xff] %vm317, 0.0
        %345 = vst.msk [vmem:[#allocation2 + $0xd8] sm:$0xff] %vm317, 0.0
        %346 = vst.msk [vmem:[#allocation2 + $0xe0] sm:$0xff] %vm317, 0.0
        %347 = vst.msk [vmem:[#allocation2 + $0xe8] sm:$0xff] %vm317, 0.0
        %348 = vst.msk [vmem:[#allocation2 + $0xf0] sm:$0xff] %vm317, 0.0
        %349 = vst.msk [vmem:[#allocation2 + $0xf8] sm:$0xff] %vm317, 0.0
        %350 = vst.msk [vmem:[#allocation2 + $0x100] sm:$0xff] %vm317, 0.0
        %351 = vst.msk [vmem:[#allocation2 + $0x108] sm:$0xff] %vm317, 0.0
        %352 = vst.msk [vmem:[#allocation2 + $0x110] sm:$0xff] %vm317, 0.0
        %353 = vst.msk [vmem:[#allocation2 + $0x118] sm:$0xff] %vm317, 0.0
        %354 = vst.msk [vmem:[#allocation2 + $0x120] sm:$0xff] %vm317, 0.0
        %355 = vst.msk [vmem:[#allocation2 + $0x128] sm:$0xff] %vm317, 0.0
        %356 = vst.msk [vmem:[#allocation2 + $0x130] sm:$0xff] %vm317, 0.0
        %357 = vst.msk [vmem:[#allocation2 + $0x138] sm:$0xff] %vm317, 0.0
        %358 = vst.msk [vmem:[#allocation2 + $0x140] sm:$0xff] %vm317, 0.0
        %359 = vst.msk [vmem:[#allocation2 + $0x148] sm:$0xff] %vm317, 0.0
        %360 = vst.msk [vmem:[#allocation2 + $0x150] sm:$0xff] %vm317, 0.0
        %361 = vst.msk [vmem:[#allocation2 + $0x158] sm:$0xff] %vm317, 0.0
        %362 = vst.msk [vmem:[#allocation2 + $0x160] sm:$0xff] %vm317, 0.0
        %363 = vst.msk [vmem:[#allocation2 + $0x168] sm:$0xff] %vm317, 0.0
        %364 = vst.msk [vmem:[#allocation2 + $0x170] sm:$0xff] %vm317, 0.0
        %365 = vst.msk [vmem:[#allocation2 + $0x178] sm:$0xff] %vm317, 0.0
        %366 = vst.msk [vmem:[#allocation2 + $0x180] sm:$0xff] %vm317, 0.0
        %367 = vst.msk [vmem:[#allocation2 + $0x188] sm:$0xff] %vm317, 0.0
        %368 = vst.msk [vmem:[#allocation2 + $0x190] sm:$0xff] %vm317, 0.0
        %369 = vst.msk [vmem:[#allocation2 + $0x198] sm:$0xff] %vm317, 0.0
        %370 = vst.msk [vmem:[#allocation2 + $0x1a0] sm:$0xff] %vm317, 0.0
        %371 = vst.msk [vmem:[#allocation2 + $0x1a8] sm:$0xff] %vm317, 0.0
        %372 = vst.msk [vmem:[#allocation2 + $0x1b0] sm:$0xff] %vm317, 0.0
        %373 = vst.msk [vmem:[#allocation2 + $0x1b8] sm:$0xff] %vm317, 0.0
        %374 = vst.msk [vmem:[#allocation2 + $0x1c0] sm:$0xff] %vm317, 0.0
        %375 = vst.msk [vmem:[#allocation2 + $0x1c8] sm:$0xff] %vm317, 0.0
        %376 = vst.msk [vmem:[#allocation2 + $0x1d0] sm:$0xff] %vm317, 0.0
        %377 = vst.msk [vmem:[#allocation2 + $0x1d8] sm:$0xff] %vm317, 0.0
        %378 = vst.msk [vmem:[#allocation2 + $0x1e0] sm:$0xff] %vm317, 0.0
        %379 = vst.msk [vmem:[#allocation2 + $0x1e8] sm:$0xff] %vm317, 0.0
        %380 = vst.msk [vmem:[#allocation2 + $0x1f0] sm:$0xff] %vm317, 0.0
        %381 = vst.msk [vmem:[#allocation2 + $0x1f8] sm:$0xff] %vm317, 0.0
        %382 = vst.msk [vmem:[#allocation2 + $0x200] sm:$0xff] %vm317, 0.0
        %383 = vst.msk [vmem:[#allocation2 + $0x208] sm:$0xff] %vm317, 0.0
        %384 = vst.msk [vmem:[#allocation2 + $0x210] sm:$0xff] %vm317, 0.0
        %385 = vst.msk [vmem:[#allocation2 + $0x218] sm:$0xff] %vm317, 0.0
        %386 = vst.msk [vmem:[#allocation2 + $0x220] sm:$0xff] %vm317, 0.0
        %387 = vst.msk [vmem:[#allocation2 + $0x228] sm:$0xff] %vm317, 0.0
        %388 = vst.msk [vmem:[#allocation2 + $0x230] sm:$0xff] %vm317, 0.0
        %389 = vst.msk [vmem:[#allocation2 + $0x238] sm:$0xff] %vm317, 0.0
        %v390 = vld [vmem:[%s311] sm:$0xff]
        %v391 = vld [vmem:[%s311 + $0x8] sm:$0xff]
        %v392 = vld [vmem:[%s311 + $0x10] sm:$0xff]
        %v393 = vld [vmem:[%s311 + $0x18] sm:$0xff]
        %v394 = vld [vmem:[%s311 + $0x20] sm:$0xff]
        %v395 = vld [vmem:[%s311 + $0x28] sm:$0xff]
        %v396 = vld [vmem:[%s311 + $0x30] sm:$0xff]
        %v397 = vld [vmem:[%s311 + $0x38] sm:$0xff]
        %v398 = vld [vmem:[%s311 + $0x40] sm:$0xff]
        %v399 = vld [vmem:[%s311 + $0x48] sm:$0xff]
        %v400 = vld [vmem:[%s311 + $0x50] sm:$0xff]
        %v401 = vld [vmem:[%s311 + $0x58] sm:$0xff]
        %v402 = vld [vmem:[%s311 + $0x60] sm:$0xff]
        %v403 = vld [vmem:[%s311 + $0x68] sm:$0xff]
        %v404 = vld [vmem:[%s311 + $0x70] sm:$0xff]
        %v405 = vld [vmem:[%s311 + $0x78] sm:$0xff]
        %v406 = vld [vmem:[%s311 + $0x80] sm:$0xff]
        %v407 = vld [vmem:[%s311 + $0x88] sm:$0xff]
        %v408 = vld [vmem:[%s311 + $0x90] sm:$0xff]
        %v409 = vld [vmem:[%s311 + $0x98] sm:$0xff]
        %v410 = vld [vmem:[%s311 + $0xa0] sm:$0xff]
        %v411 = vld [vmem:[%s311 + $0xa8] sm:$0xff]
        %v412 = vld [vmem:[%s311 + $0xb0] sm:$0xff]
        %v413 = vld [vmem:[%s311 + $0xb8] sm:$0xff]
        %v414 = vld [vmem:[%s311 + $0xc0] sm:$0xff]
        %v415 = vld [vmem:[%s311 + $0xc8] sm:$0xff]
        %v416 = vld [vmem:[%s311 + $0xd0] sm:$0xff]
        %v417 = vld [vmem:[%s311 + $0xd8] sm:$0xff]
        %v418 = vld [vmem:[%s311 + $0xe0] sm:$0xff]
        %v419 = vld [vmem:[%s311 + $0xe8] sm:$0xff]
        %v420 = vld [vmem:[%s311 + $0xf0] sm:$0xff]
        %v421 = vld [vmem:[%s311 + $0xf8] sm:$0xff]
        %s422 = scalar_lea.vmem [#allocation2], 32
        %vm423 = vcmask 7168
        %424 = vst.msk [vmem:[%s422 + $0x8] sm:$0xff] %vm423, %v390
        %425 = vst.msk [vmem:[%s422 + $0x10] sm:$0xff] %vm423, %v391
        %426 = vst.msk [vmem:[%s422 + $0x28] sm:$0xff] %vm423, %v392
        %427 = vst.msk [vmem:[%s422 + $0x30] sm:$0xff] %vm423, %v393
        %428 = vst.msk [vmem:[%s422 + $0x48] sm:$0xff] %vm423, %v394
        %429 = vst.msk [vmem:[%s422 + $0x50] sm:$0xff] %vm423, %v395
        %430 = vst.msk [vmem:[%s422 + $0x68] sm:$0xff] %vm423, %v396
        %431 = vst.msk [vmem:[%s422 + $0x70] sm:$0xff] %vm423, %v397
        %432 = vst.msk [vmem:[%s422 + $0x88] sm:$0xff] %vm423, %v398
        %433 = vst.msk [vmem:[%s422 + $0x90] sm:$0xff] %vm423, %v399
        %434 = vst.msk [vmem:[%s422 + $0xa8] sm:$0xff] %vm423, %v400
        %435 = vst.msk [vmem:[%s422 + $0xb0] sm:$0xff] %vm423, %v401
        %436 = vst.msk [vmem:[%s422 + $0xc8] sm:$0xff] %vm423, %v402
        %437 = vst.msk [vmem:[%s422 + $0xd0] sm:$0xff] %vm423, %v403
        %438 = vst.msk [vmem:[%s422 + $0xe8] sm:$0xff] %vm423, %v404
        %439 = vst.msk [vmem:[%s422 + $0xf0] sm:$0xff] %vm423, %v405
        %440 = vst.msk [vmem:[%s422 + $0x108] sm:$0xff] %vm423, %v406
        %441 = vst.msk [vmem:[%s422 + $0x110] sm:$0xff] %vm423, %v407
        %442 = vst.msk [vmem:[%s422 + $0x128] sm:$0xff] %vm423, %v408
        %443 = vst.msk [vmem:[%s422 + $0x130] sm:$0xff] %vm423, %v409
        %444 = vst.msk [vmem:[%s422 + $0x148] sm:$0xff] %vm423, %v410
        %445 = vst.msk [vmem:[%s422 + $0x150] sm:$0xff] %vm423, %v411
        %446 = vst.msk [vmem:[%s422 + $0x168] sm:$0xff] %vm423, %v412
        %447 = vst.msk [vmem:[%s422 + $0x170] sm:$0xff] %vm423, %v413
        %448 = vst.msk [vmem:[%s422 + $0x188] sm:$0xff] %vm423, %v414
        %449 = vst.msk [vmem:[%s422 + $0x190] sm:$0xff] %vm423, %v415
        %450 = vst.msk [vmem:[%s422 + $0x1a8] sm:$0xff] %vm423, %v416
        %451 = vst.msk [vmem:[%s422 + $0x1b0] sm:$0xff] %vm423, %v417
        %452 = vst.msk [vmem:[%s422 + $0x1c8] sm:$0xff] %vm423, %v418
        %453 = vst.msk [vmem:[%s422 + $0x1d0] sm:$0xff] %vm423, %v419
        %454 = vst.msk [vmem:[%s422 + $0x1e8] sm:$0xff] %vm423, %v420
        %455 = vst.msk [vmem:[%s422 + $0x1f0] sm:$0xff] %vm423, %v421
        %v456 = vld [vmem:[#allocation2 + $0x7] sm:$0xff]
        %v457 = vld [vmem:[#allocation2 + $0xf] sm:$0xff]
        %v458 = vld [vmem:[#allocation2 + $0x27] sm:$0xff]
        %v459 = vld [vmem:[#allocation2 + $0x2f] sm:$0xff]
        %v460 = vld [vmem:[#allocation2 + $0x47] sm:$0xff]
        %v461 = vld [vmem:[#allocation2 + $0x4f] sm:$0xff]
        %v462 = vld [vmem:[#allocation2 + $0x67] sm:$0xff]
        %v463 = vld [vmem:[#allocation2 + $0x6f] sm:$0xff]
        %v464 = vld [vmem:[#allocation2 + $0x87] sm:$0xff]
        %v465 = vld [vmem:[#allocation2 + $0x8f] sm:$0xff]
        %v466 = vld [vmem:[#allocation2 + $0xa7] sm:$0xff]
        %v467 = vld [vmem:[#allocation2 + $0xaf] sm:$0xff]
        %v468 = vld [vmem:[#allocation2 + $0xc7] sm:$0xff]
        %v469 = vld [vmem:[#allocation2 + $0xcf] sm:$0xff]
        %v470 = vld [vmem:[#allocation2 + $0xe7] sm:$0xff]
        %v471 = vld [vmem:[#allocation2 + $0xef] sm:$0xff]
        %v472 = vld [vmem:[#allocation2 + $0x107] sm:$0xff]
        %v473 = vld [vmem:[#allocation2 + $0x10f] sm:$0xff]
        %v474 = vld [vmem:[#allocation2 + $0x127] sm:$0xff]
        %v475 = vld [vmem:[#allocation2 + $0x12f] sm:$0xff]
        %v476 = vld [vmem:[#allocation2 + $0x147] sm:$0xff]
        %v477 = vld [vmem:[#allocation2 + $0x14f] sm:$0xff]
        %v478 = vld [vmem:[#allocation2 + $0x167] sm:$0xff]
        %v479 = vld [vmem:[#allocation2 + $0x16f] sm:$0xff]
        %v480 = vld [vmem:[#allocation2 + $0x187] sm:$0xff]
        %v481 = vld [vmem:[#allocation2 + $0x18f] sm:$0xff]
        %v482 = vld [vmem:[#allocation2 + $0x1a7] sm:$0xff]
        %v483 = vld [vmem:[#allocation2 + $0x1af] sm:$0xff]
        %v484 = vld [vmem:[#allocation2 + $0x1c7] sm:$0xff]
        %v485 = vld [vmem:[#allocation2 + $0x1cf] sm:$0xff]
        %v486 = vld [vmem:[#allocation2 + $0x1e7] sm:$0xff]
        %v487 = vld [vmem:[#allocation2 + $0x1ef] sm:$0xff]
        %v488 = vld [vmem:[#allocation2 + $0x207] sm:$0xff]
        %v489 = vld [vmem:[#allocation2 + $0x20f] sm:$0xff]
        %v490 = vld [vmem:[#allocation2 + $0x227] sm:$0xff]
        %v491 = vld [vmem:[#allocation2 + $0x22f] sm:$0xff]
        %492 = vst.msk [vmem:[#allocation3] sm:$0xff] %vm317, %v456
        %493 = vst.msk [vmem:[#allocation3 + $0x18] sm:$0xff] %vm317, %v457
        %494 = vst.msk [vmem:[#allocation3 + $0x30] sm:$0xff] %vm317, %v458
        %495 = vst.msk [vmem:[#allocation3 + $0x48] sm:$0xff] %vm317, %v459
        %496 = vst.msk [vmem:[#allocation3 + $0x60] sm:$0xff] %vm317, %v460
        %497 = vst.msk [vmem:[#allocation3 + $0x78] sm:$0xff] %vm317, %v461
        %498 = vst.msk [vmem:[#allocation3 + $0x90] sm:$0xff] %vm317, %v462
        %499 = vst.msk [vmem:[#allocation3 + $0xa8] sm:$0xff] %vm317, %v463
        %500 = vst.msk [vmem:[#allocation3 + $0xc0] sm:$0xff] %vm317, %v464
        %501 = vst.msk [vmem:[#allocation3 + $0xd8] sm:$0xff] %vm317, %v465
        %502 = vst.msk [vmem:[#allocation3 + $0xf0] sm:$0xff] %vm317, %v466
        %503 = vst.msk [vmem:[#allocation3 + $0x108] sm:$0xff] %vm317, %v467
        %504 = vst.msk [vmem:[#allocation3 + $0x120] sm:$0xff] %vm317, %v468
        %505 = vst.msk [vmem:[#allocation3 + $0x138] sm:$0xff] %vm317, %v469
        %506 = vst.msk [vmem:[#allocation3 + $0x150] sm:$0xff] %vm317, %v470
        %507 = vst.msk [vmem:[#allocation3 + $0x168] sm:$0xff] %vm317, %v471
        %508 = vst.msk [vmem:[#allocation3 + $0x180] sm:$0xff] %vm317, %v472
        %509 = vst.msk [vmem:[#allocation3 + $0x198] sm:$0xff] %vm317, %v473
        %510 = vst.msk [vmem:[#allocation3 + $0x1b0] sm:$0xff] %vm317, %v474
        %511 = vst.msk [vmem:[#allocation3 + $0x1c8] sm:$0xff] %vm317, %v475
        %512 = vst.msk [vmem:[#allocation3 + $0x1e0] sm:$0xff] %vm317, %v476
        %513 = vst.msk [vmem:[#allocation3 + $0x1f8] sm:$0xff] %vm317, %v477
        %514 = vst.msk [vmem:[#allocation3 + $0x210] sm:$0xff] %vm317, %v478
        %515 = vst.msk [vmem:[#allocation3 + $0x228] sm:$0xff] %vm317, %v479
        %516 = vst.msk [vmem:[#allocation3 + $0x240] sm:$0xff] %vm317, %v480
        %517 = vst.msk [vmem:[#allocation3 + $0x258] sm:$0xff] %vm317, %v481
        %518 = vst.msk [vmem:[#allocation3 + $0x270] sm:$0xff] %vm317, %v482
        %519 = vst.msk [vmem:[#allocation3 + $0x288] sm:$0xff] %vm317, %v483
        %520 = vst.msk [vmem:[#allocation3 + $0x2a0] sm:$0xff] %vm317, %v484
        %521 = vst.msk [vmem:[#allocation3 + $0x2b8] sm:$0xff] %vm317, %v485
        %522 = vst.msk [vmem:[#allocation3 + $0x2d0] sm:$0xff] %vm317, %v486
        %523 = vst.msk [vmem:[#allocation3 + $0x2e8] sm:$0xff] %vm317, %v487
        %556 = vrot.lane.b32.xlu0 %v458, 96
        %v557 = vpop.permute.xlu0 %556
        %558 = vrot.lane.b32.xlu0 %v459, 96
        %v559 = vpop.permute.xlu0 %558
        %560 = vrot.lane.b32.xlu0 %v460, 96
        %v561 = vpop.permute.xlu0 %560
        %562 = vrot.lane.b32.xlu0 %v461, 96
        %v563 = vpop.permute.xlu0 %562
        %564 = vrot.lane.b32.xlu0 %v462, 96
        %v565 = vpop.permute.xlu0 %564
        %566 = vrot.lane.b32.xlu0 %v463, 96
        %v567 = vpop.permute.xlu0 %566
        %568 = vrot.lane.b32.xlu0 %v464, 96
        %v569 = vpop.permute.xlu0 %568
        %570 = vrot.lane.b32.xlu0 %v465, 96
        %v571 = vpop.permute.xlu0 %570
        %572 = vrot.lane.b32.xlu0 %v466, 96
        %v573 = vpop.permute.xlu0 %572
        %574 = vrot.lane.b32.xlu0 %v467, 96
        %v575 = vpop.permute.xlu0 %574
        %576 = vrot.lane.b32.xlu0 %v468, 96
        %v577 = vpop.permute.xlu0 %576
        %578 = vrot.lane.b32.xlu0 %v469, 96
        %v579 = vpop.permute.xlu0 %578
        %580 = vrot.lane.b32.xlu0 %v470, 96
        %v581 = vpop.permute.xlu0 %580
        %582 = vrot.lane.b32.xlu0 %v471, 96
        %v583 = vpop.permute.xlu0 %582
        %584 = vrot.lane.b32.xlu0 %v472, 96
        %v585 = vpop.permute.xlu0 %584
        %586 = vrot.lane.b32.xlu0 %v473, 96
        %v587 = vpop.permute.xlu0 %586
        %588 = vrot.lane.b32.xlu0 %v474, 96
        %v589 = vpop.permute.xlu0 %588
        %590 = vrot.lane.b32.xlu0 %v475, 96
        %v591 = vpop.permute.xlu0 %590
        %592 = vrot.lane.b32.xlu0 %v476, 96
        %v593 = vpop.permute.xlu0 %592
        %594 = vrot.lane.b32.xlu0 %v477, 96
        %v595 = vpop.permute.xlu0 %594
        %596 = vrot.lane.b32.xlu0 %v478, 96
        %v597 = vpop.permute.xlu0 %596
        %598 = vrot.lane.b32.xlu0 %v479, 96
        %v599 = vpop.permute.xlu0 %598
        %600 = vrot.lane.b32.xlu0 %v480, 96
        %v601 = vpop.permute.xlu0 %600
        %602 = vrot.lane.b32.xlu0 %v481, 96
        %v603 = vpop.permute.xlu0 %602
        %604 = vrot.lane.b32.xlu0 %v482, 96
        %v605 = vpop.permute.xlu0 %604
        %606 = vrot.lane.b32.xlu0 %v483, 96
        %v607 = vpop.permute.xlu0 %606
        %608 = vrot.lane.b32.xlu0 %v484, 96
        %v609 = vpop.permute.xlu0 %608
        %610 = vrot.lane.b32.xlu0 %v485, 96
        %v611 = vpop.permute.xlu0 %610
        %612 = vrot.lane.b32.xlu0 %v486, 96
        %v613 = vpop.permute.xlu0 %612
        %614 = vrot.lane.b32.xlu0 %v487, 96
        %v615 = vpop.permute.xlu0 %614
        %616 = vrot.lane.b32.xlu0 %v488, 96
        %v617 = vpop.permute.xlu0 %616
        %618 = vrot.lane.b32.xlu0 %v489, 96
        %v619 = vpop.permute.xlu0 %618
        %vm652 = vcmask 1048320
        %653 = vst.msk [vmem:[#allocation3] sm:$0xff] %vm652, %v557
        %654 = vst.msk [vmem:[#allocation3 + $0x18] sm:$0xff] %vm652, %v559
        %655 = vst.msk [vmem:[#allocation3 + $0x30] sm:$0xff] %vm652, %v561
        %656 = vst.msk [vmem:[#allocation3 + $0x48] sm:$0xff] %vm652, %v563
        %657 = vst.msk [vmem:[#allocation3 + $0x60] sm:$0xff] %vm652, %v565
        %658 = vst.msk [vmem:[#allocation3 + $0x78] sm:$0xff] %vm652, %v567
        %659 = vst.msk [vmem:[#allocation3 + $0x90] sm:$0xff] %vm652, %v569
        %660 = vst.msk [vmem:[#allocation3 + $0xa8] sm:$0xff] %vm652, %v571
        %661 = vst.msk [vmem:[#allocation3 + $0xc0] sm:$0xff] %vm652, %v573
        %662 = vst.msk [vmem:[#allocation3 + $0xd8] sm:$0xff] %vm652, %v575
        %663 = vst.msk [vmem:[#allocation3 + $0xf0] sm:$0xff] %vm652, %v577
        %664 = vst.msk [vmem:[#allocation3 + $0x108] sm:$0xff] %vm652, %v579
        %665 = vst.msk [vmem:[#allocation3 + $0x120] sm:$0xff] %vm652, %v581
        %666 = vst.msk [vmem:[#allocation3 + $0x138] sm:$0xff] %vm652, %v583
        %667 = vst.msk [vmem:[#allocation3 + $0x150] sm:$0xff] %vm652, %v585
        %668 = vst.msk [vmem:[#allocation3 + $0x168] sm:$0xff] %vm652, %v587
        %669 = vst.msk [vmem:[#allocation3 + $0x180] sm:$0xff] %vm652, %v589
        %670 = vst.msk [vmem:[#allocation3 + $0x198] sm:$0xff] %vm652, %v591
        %671 = vst.msk [vmem:[#allocation3 + $0x1b0] sm:$0xff] %vm652, %v593
        %672 = vst.msk [vmem:[#allocation3 + $0x1c8] sm:$0xff] %vm652, %v595
        %673 = vst.msk [vmem:[#allocation3 + $0x1e0] sm:$0xff] %vm652, %v597
        %674 = vst.msk [vmem:[#allocation3 + $0x1f8] sm:$0xff] %vm652, %v599
        %675 = vst.msk [vmem:[#allocation3 + $0x210] sm:$0xff] %vm652, %v601
        %676 = vst.msk [vmem:[#allocation3 + $0x228] sm:$0xff] %vm652, %v603
        %677 = vst.msk [vmem:[#allocation3 + $0x240] sm:$0xff] %vm652, %v605
        %678 = vst.msk [vmem:[#allocation3 + $0x258] sm:$0xff] %vm652, %v607
        %679 = vst.msk [vmem:[#allocation3 + $0x270] sm:$0xff] %vm652, %v609
        %680 = vst.msk [vmem:[#allocation3 + $0x288] sm:$0xff] %vm652, %v611
        %681 = vst.msk [vmem:[#allocation3 + $0x2a0] sm:$0xff] %vm652, %v613
        %682 = vst.msk [vmem:[#allocation3 + $0x2b8] sm:$0xff] %vm652, %v615
        %683 = vst.msk [vmem:[#allocation3 + $0x2d0] sm:$0xff] %vm652, %v617
        %684 = vst.msk [vmem:[#allocation3 + $0x2e8] sm:$0xff] %vm652, %v619
        %687 = vrot.lane.b32.xlu0 %v460, 64
        %v688 = vpop.permute.xlu0 %687
        %689 = vrot.lane.b32.xlu0 %v461, 64
        %v690 = vpop.permute.xlu0 %689
        %691 = vrot.lane.b32.xlu0 %v462, 64
        %v692 = vpop.permute.xlu0 %691
        %693 = vrot.lane.b32.xlu0 %v463, 64
        %v694 = vpop.permute.xlu0 %693
        %695 = vrot.lane.b32.xlu0 %v464, 64
        %v696 = vpop.permute.xlu0 %695
        %697 = vrot.lane.b32.xlu0 %v465, 64
        %v698 = vpop.permute.xlu0 %697
        %699 = vrot.lane.b32.xlu0 %v466, 64
        %v700 = vpop.permute.xlu0 %699
        %701 = vrot.lane.b32.xlu0 %v467, 64
        %v702 = vpop.permute.xlu0 %701
        %703 = vrot.lane.b32.xlu0 %v468, 64
        %v704 = vpop.permute.xlu0 %703
        %705 = vrot.lane.b32.xlu0 %v469, 64
        %v706 = vpop.permute.xlu0 %705
        %707 = vrot.lane.b32.xlu0 %v470, 64
        %v708 = vpop.permute.xlu0 %707
        %709 = vrot.lane.b32.xlu0 %v471, 64
        %v710 = vpop.permute.xlu0 %709
        %711 = vrot.lane.b32.xlu0 %v472, 64
        %v712 = vpop.permute.xlu0 %711
        %713 = vrot.lane.b32.xlu0 %v473, 64
        %v714 = vpop.permute.xlu0 %713
        %715 = vrot.lane.b32.xlu0 %v474, 64
        %v716 = vpop.permute.xlu0 %715
        %717 = vrot.lane.b32.xlu0 %v475, 64
        %v718 = vpop.permute.xlu0 %717
        %719 = vrot.lane.b32.xlu0 %v476, 64
        %v720 = vpop.permute.xlu0 %719
        %721 = vrot.lane.b32.xlu0 %v477, 64
        %v722 = vpop.permute.xlu0 %721
        %723 = vrot.lane.b32.xlu0 %v478, 64
        %v724 = vpop.permute.xlu0 %723
        %725 = vrot.lane.b32.xlu0 %v479, 64
        %v726 = vpop.permute.xlu0 %725
        %727 = vrot.lane.b32.xlu0 %v480, 64
        %v728 = vpop.permute.xlu0 %727
        %729 = vrot.lane.b32.xlu0 %v481, 64
        %v730 = vpop.permute.xlu0 %729
        %731 = vrot.lane.b32.xlu0 %v482, 64
        %v732 = vpop.permute.xlu0 %731
        %733 = vrot.lane.b32.xlu0 %v483, 64
        %v734 = vpop.permute.xlu0 %733
        %735 = vrot.lane.b32.xlu0 %v484, 64
        %v736 = vpop.permute.xlu0 %735
        %737 = vrot.lane.b32.xlu0 %v485, 64
        %v738 = vpop.permute.xlu0 %737
        %739 = vrot.lane.b32.xlu0 %v486, 64
        %v740 = vpop.permute.xlu0 %739
        %741 = vrot.lane.b32.xlu0 %v487, 64
        %v742 = vpop.permute.xlu0 %741
        %743 = vrot.lane.b32.xlu0 %v488, 64
        %v744 = vpop.permute.xlu0 %743
        %745 = vrot.lane.b32.xlu0 %v489, 64
        %v746 = vpop.permute.xlu0 %745
        %747 = vrot.lane.b32.xlu0 %v490, 64
        %v748 = vpop.permute.xlu0 %747
        %749 = vrot.lane.b32.xlu0 %v491, 64
        %v750 = vpop.permute.xlu0 %749
        %vm783 = vcmask 785920
        %784 = vst.msk [vmem:[#allocation3 + $0x8] sm:$0xff] %vm783, %v688
        %785 = vst.msk [vmem:[#allocation3 + $0x20] sm:$0xff] %vm783, %v690
        %786 = vst.msk [vmem:[#allocation3 + $0x38] sm:$0xff] %vm783, %v692
        %787 = vst.msk [vmem:[#allocation3 + $0x50] sm:$0xff] %vm783, %v694
        %788 = vst.msk [vmem:[#allocation3 + $0x68] sm:$0xff] %vm783, %v696
        %789 = vst.msk [vmem:[#allocation3 + $0x80] sm:$0xff] %vm783, %v698
        %790 = vst.msk [vmem:[#allocation3 + $0x98] sm:$0xff] %vm783, %v700
        %791 = vst.msk [vmem:[#allocation3 + $0xb0] sm:$0xff] %vm783, %v702
        %792 = vst.msk [vmem:[#allocation3 + $0xc8] sm:$0xff] %vm783, %v704
        %793 = vst.msk [vmem:[#allocation3 + $0xe0] sm:$0xff] %vm783, %v706
        %794 = vst.msk [vmem:[#allocation3 + $0xf8] sm:$0xff] %vm783, %v708
        %795 = vst.msk [vmem:[#allocation3 + $0x110] sm:$0xff] %vm783, %v710
        %796 = vst.msk [vmem:[#allocation3 + $0x128] sm:$0xff] %vm783, %v712
        %797 = vst.msk [vmem:[#allocation3 + $0x140] sm:$0xff] %vm783, %v714
        %798 = vst.msk [vmem:[#allocation3 + $0x158] sm:$0xff] %vm783, %v716
        %799 = vst.msk [vmem:[#allocation3 + $0x170] sm:$0xff] %vm783, %v718
        %800 = vst.msk [vmem:[#allocation3 + $0x188] sm:$0xff] %vm783, %v720
        %801 = vst.msk [vmem:[#allocation3 + $0x1a0] sm:$0xff] %vm783, %v722
        %802 = vst.msk [vmem:[#allocation3 + $0x1b8] sm:$0xff] %vm783, %v724
        %803 = vst.msk [vmem:[#allocation3 + $0x1d0] sm:$0xff] %vm783, %v726
        %804 = vst.msk [vmem:[#allocation3 + $0x1e8] sm:$0xff] %vm783, %v728
        %805 = vst.msk [vmem:[#allocation3 + $0x200] sm:$0xff] %vm783, %v730
        %806 = vst.msk [vmem:[#allocation3 + $0x218] sm:$0xff] %vm783, %v732
        %807 = vst.msk [vmem:[#allocation3 + $0x230] sm:$0xff] %vm783, %v734
        %808 = vst.msk [vmem:[#allocation3 + $0x248] sm:$0xff] %vm783, %v736
        %809 = vst.msk [vmem:[#allocation3 + $0x260] sm:$0xff] %vm783, %v738
        %810 = vst.msk [vmem:[#allocation3 + $0x278] sm:$0xff] %vm783, %v740
        %811 = vst.msk [vmem:[#allocation3 + $0x290] sm:$0xff] %vm783, %v742
        %812 = vst.msk [vmem:[#allocation3 + $0x2a8] sm:$0xff] %vm783, %v744
        %813 = vst.msk [vmem:[#allocation3 + $0x2c0] sm:$0xff] %vm783, %v746
        %814 = vst.msk [vmem:[#allocation3 + $0x2d8] sm:$0xff] %vm783, %v748
        %815 = vst.msk [vmem:[#allocation3 + $0x2f0] sm:$0xff] %vm783, %v750
        %v816 = vld [vmem:[#allocation2 + $0x8] sm:$0xff]
        %v817 = vld [vmem:[#allocation2 + $0x10] sm:$0xff]
        %v818 = vld [vmem:[#allocation2 + $0x28] sm:$0xff]
        %v819 = vld [vmem:[#allocation2 + $0x30] sm:$0xff]
        %v820 = vld [vmem:[#allocation2 + $0x48] sm:$0xff]
        %v821 = vld [vmem:[#allocation2 + $0x50] sm:$0xff]
        %v822 = vld [vmem:[#allocation2 + $0x68] sm:$0xff]
        %v823 = vld [vmem:[#allocation2 + $0x70] sm:$0xff]
        %v824 = vld [vmem:[#allocation2 + $0x88] sm:$0xff]
        %v825 = vld [vmem:[#allocation2 + $0x90] sm:$0xff]
        %v826 = vld [vmem:[#allocation2 + $0xa8] sm:$0xff]
        %v827 = vld [vmem:[#allocation2 + $0xb0] sm:$0xff]
        %v828 = vld [vmem:[#allocation2 + $0xc8] sm:$0xff]
        %v829 = vld [vmem:[#allocation2 + $0xd0] sm:$0xff]
        %v830 = vld [vmem:[#allocation2 + $0xe8] sm:$0xff]
        %v831 = vld [vmem:[#allocation2 + $0xf0] sm:$0xff]
        %v832 = vld [vmem:[#allocation2 + $0x108] sm:$0xff]
        %v833 = vld [vmem:[#allocation2 + $0x110] sm:$0xff]
        %v834 = vld [vmem:[#allocation2 + $0x128] sm:$0xff]
        %v835 = vld [vmem:[#allocation2 + $0x130] sm:$0xff]
        %v836 = vld [vmem:[#allocation2 + $0x148] sm:$0xff]
        %v837 = vld [vmem:[#allocation2 + $0x150] sm:$0xff]
        %v838 = vld [vmem:[#allocation2 + $0x168] sm:$0xff]
        %v839 = vld [vmem:[#allocation2 + $0x170] sm:$0xff]
        %v840 = vld [vmem:[#allocation2 + $0x188] sm:$0xff]
        %v841 = vld [vmem:[#allocation2 + $0x190] sm:$0xff]
        %v842 = vld [vmem:[#allocation2 + $0x1a8] sm:$0xff]
        %v843 = vld [vmem:[#allocation2 + $0x1b0] sm:$0xff]
        %v844 = vld [vmem:[#allocation2 + $0x1c8] sm:$0xff]
        %v845 = vld [vmem:[#allocation2 + $0x1d0] sm:$0xff]
        %v846 = vld [vmem:[#allocation2 + $0x1e8] sm:$0xff]
        %v847 = vld [vmem:[#allocation2 + $0x1f0] sm:$0xff]
        %v848 = vld [vmem:[#allocation2 + $0x208] sm:$0xff]
        %v849 = vld [vmem:[#allocation2 + $0x210] sm:$0xff]
        %v850 = vld [vmem:[#allocation2 + $0x228] sm:$0xff]
        %v851 = vld [vmem:[#allocation2 + $0x230] sm:$0xff]
        %884 = vrot.lane.b32.xlu0 %v816, 32
        %v885 = vpop.permute.xlu0 %884
        %886 = vrot.lane.b32.xlu0 %v817, 32
        %v887 = vpop.permute.xlu0 %886
        %888 = vrot.lane.b32.xlu0 %v818, 32
        %v889 = vpop.permute.xlu0 %888
        %890 = vrot.lane.b32.xlu0 %v819, 32
        %v891 = vpop.permute.xlu0 %890
        %892 = vrot.lane.b32.xlu0 %v820, 32
        %v893 = vpop.permute.xlu0 %892
        %894 = vrot.lane.b32.xlu0 %v821, 32
        %v895 = vpop.permute.xlu0 %894
        %896 = vrot.lane.b32.xlu0 %v822, 32
        %v897 = vpop.permute.xlu0 %896
        %898 = vrot.lane.b32.xlu0 %v823, 32
        %v899 = vpop.permute.xlu0 %898
        %900 = vrot.lane.b32.xlu0 %v824, 32
        %v901 = vpop.permute.xlu0 %900
        %902 = vrot.lane.b32.xlu0 %v825, 32
        %v903 = vpop.permute.xlu0 %902
        %904 = vrot.lane.b32.xlu0 %v826, 32
        %v905 = vpop.permute.xlu0 %904
        %906 = vrot.lane.b32.xlu0 %v827, 32
        %v907 = vpop.permute.xlu0 %906
        %908 = vrot.lane.b32.xlu0 %v828, 32
        %v909 = vpop.permute.xlu0 %908
        %910 = vrot.lane.b32.xlu0 %v829, 32
        %v911 = vpop.permute.xlu0 %910
        %912 = vrot.lane.b32.xlu0 %v830, 32
        %v913 = vpop.permute.xlu0 %912
        %914 = vrot.lane.b32.xlu0 %v831, 32
        %v915 = vpop.permute.xlu0 %914
        %916 = vrot.lane.b32.xlu0 %v832, 32
        %v917 = vpop.permute.xlu0 %916
        %918 = vrot.lane.b32.xlu0 %v833, 32
        %v919 = vpop.permute.xlu0 %918
        %920 = vrot.lane.b32.xlu0 %v834, 32
        %v921 = vpop.permute.xlu0 %920
        %922 = vrot.lane.b32.xlu0 %v835, 32
        %v923 = vpop.permute.xlu0 %922
        %924 = vrot.lane.b32.xlu0 %v836, 32
        %v925 = vpop.permute.xlu0 %924
        %926 = vrot.lane.b32.xlu0 %v837, 32
        %v927 = vpop.permute.xlu0 %926
        %928 = vrot.lane.b32.xlu0 %v838, 32
        %v929 = vpop.permute.xlu0 %928
        %930 = vrot.lane.b32.xlu0 %v839, 32
        %v931 = vpop.permute.xlu0 %930
        %932 = vrot.lane.b32.xlu0 %v840, 32
        %v933 = vpop.permute.xlu0 %932
        %934 = vrot.lane.b32.xlu0 %v841, 32
        %v935 = vpop.permute.xlu0 %934
        %936 = vrot.lane.b32.xlu0 %v842, 32
        %v937 = vpop.permute.xlu0 %936
        %938 = vrot.lane.b32.xlu0 %v843, 32
        %v939 = vpop.permute.xlu0 %938
        %940 = vrot.lane.b32.xlu0 %v844, 32
        %v941 = vpop.permute.xlu0 %940
        %942 = vrot.lane.b32.xlu0 %v845, 32
        %v943 = vpop.permute.xlu0 %942
        %944 = vrot.lane.b32.xlu0 %v846, 32
        %v945 = vpop.permute.xlu0 %944
        %946 = vrot.lane.b32.xlu0 %v847, 32
        %v947 = vpop.permute.xlu0 %946
        %vm980 = vcmask 523520
        %981 = vst.msk [vmem:[#allocation3] sm:$0xff] %vm980, %v885
        %982 = vst.msk [vmem:[#allocation3 + $0x18] sm:$0xff] %vm980, %v887
        %983 = vst.msk [vmem:[#allocation3 + $0x30] sm:$0xff] %vm980, %v889
        %984 = vst.msk [vmem:[#allocation3 + $0x48] sm:$0xff] %vm980, %v891
        %985 = vst.msk [vmem:[#allocation3 + $0x60] sm:$0xff] %vm980, %v893
        %986 = vst.msk [vmem:[#allocation3 + $0x78] sm:$0xff] %vm980, %v895
        %987 = vst.msk [vmem:[#allocation3 + $0x90] sm:$0xff] %vm980, %v897
        %988 = vst.msk [vmem:[#allocation3 + $0xa8] sm:$0xff] %vm980, %v899
        %989 = vst.msk [vmem:[#allocation3 + $0xc0] sm:$0xff] %vm980, %v901
        %990 = vst.msk [vmem:[#allocation3 + $0xd8] sm:$0xff] %vm980, %v903
        %991 = vst.msk [vmem:[#allocation3 + $0xf0] sm:$0xff] %vm980, %v905
        %992 = vst.msk [vmem:[#allocation3 + $0x108] sm:$0xff] %vm980, %v907
        %993 = vst.msk [vmem:[#allocation3 + $0x120] sm:$0xff] %vm980, %v909
        %994 = vst.msk [vmem:[#allocation3 + $0x138] sm:$0xff] %vm980, %v911
        %995 = vst.msk [vmem:[#allocation3 + $0x150] sm:$0xff] %vm980, %v913
        %996 = vst.msk [vmem:[#allocation3 + $0x168] sm:$0xff] %vm980, %v915
        %997 = vst.msk [vmem:[#allocation3 + $0x180] sm:$0xff] %vm980, %v917
        %998 = vst.msk [vmem:[#allocation3 + $0x198] sm:$0xff] %vm980, %v919
        %999 = vst.msk [vmem:[#allocation3 + $0x1b0] sm:$0xff] %vm980, %v921
        %1000 = vst.msk [vmem:[#allocation3 + $0x1c8] sm:$0xff] %vm980, %v923
        %1001 = vst.msk [vmem:[#allocation3 + $0x1e0] sm:$0xff] %vm980, %v925
        %1002 = vst.msk [vmem:[#allocation3 + $0x1f8] sm:$0xff] %vm980, %v927
        %1003 = vst.msk [vmem:[#allocation3 + $0x210] sm:$0xff] %vm980, %v929
        %1004 = vst.msk [vmem:[#allocation3 + $0x228] sm:$0xff] %vm980, %v931
        %1005 = vst.msk [vmem:[#allocation3 + $0x240] sm:$0xff] %vm980, %v933
        %1006 = vst.msk [vmem:[#allocation3 + $0x258] sm:$0xff] %vm980, %v935
        %1007 = vst.msk [vmem:[#allocation3 + $0x270] sm:$0xff] %vm980, %v937
        %1008 = vst.msk [vmem:[#allocation3 + $0x288] sm:$0xff] %vm980, %v939
        %1009 = vst.msk [vmem:[#allocation3 + $0x2a0] sm:$0xff] %vm980, %v941
        %1010 = vst.msk [vmem:[#allocation3 + $0x2b8] sm:$0xff] %vm980, %v943
        %1011 = vst.msk [vmem:[#allocation3 + $0x2d0] sm:$0xff] %vm980, %v945
        %1012 = vst.msk [vmem:[#allocation3 + $0x2e8] sm:$0xff] %vm980, %v947
        %1013 = vst.msk [vmem:[#allocation3 + $0x8] sm:$0xff] %vm317, %v818
        %1014 = vst.msk [vmem:[#allocation3 + $0x20] sm:$0xff] %vm317, %v819
        %1015 = vst.msk [vmem:[#allocation3 + $0x38] sm:$0xff] %vm317, %v820
        %1016 = vst.msk [vmem:[#allocation3 + $0x50] sm:$0xff] %vm317, %v821
        %1017 = vst.msk [vmem:[#allocation3 + $0x68] sm:$0xff] %vm317, %v822
        %1018 = vst.msk [vmem:[#allocation3 + $0x80] sm:$0xff] %vm317, %v823
        %1019 = vst.msk [vmem:[#allocation3 + $0x98] sm:$0xff] %vm317, %v824
        %1020 = vst.msk [vmem:[#allocation3 + $0xb0] sm:$0xff] %vm317, %v825
        %1021 = vst.msk [vmem:[#allocation3 + $0xc8] sm:$0xff] %vm317, %v826
        %1022 = vst.msk [vmem:[#allocation3 + $0xe0] sm:$0xff] %vm317, %v827
        %1023 = vst.msk [vmem:[#allocation3 + $0xf8] sm:$0xff] %vm317, %v828
        %1024 = vst.msk [vmem:[#allocation3 + $0x110] sm:$0xff] %vm317, %v829
        %1025 = vst.msk [vmem:[#allocation3 + $0x128] sm:$0xff] %vm317, %v830
        %1026 = vst.msk [vmem:[#allocation3 + $0x140] sm:$0xff] %vm317, %v831
        %1027 = vst.msk [vmem:[#allocation3 + $0x158] sm:$0xff] %vm317, %v832
        %1028 = vst.msk [vmem:[#allocation3 + $0x170] sm:$0xff] %vm317, %v833
        %1029 = vst.msk [vmem:[#allocation3 + $0x188] sm:$0xff] %vm317, %v834
        %1030 = vst.msk [vmem:[#allocation3 + $0x1a0] sm:$0xff] %vm317, %v835
        %1031 = vst.msk [vmem:[#allocation3 + $0x1b8] sm:$0xff] %vm317, %v836
        %1032 = vst.msk [vmem:[#allocation3 + $0x1d0] sm:$0xff] %vm317, %v837
        %1033 = vst.msk [vmem:[#allocation3 + $0x1e8] sm:$0xff] %vm317, %v838
        %1034 = vst.msk [vmem:[#allocation3 + $0x200] sm:$0xff] %vm317, %v839
        %1035 = vst.msk [vmem:[#allocation3 + $0x218] sm:$0xff] %vm317, %v840
        %1036 = vst.msk [vmem:[#allocation3 + $0x230] sm:$0xff] %vm317, %v841
        %1037 = vst.msk [vmem:[#allocation3 + $0x248] sm:$0xff] %vm317, %v842
        %1038 = vst.msk [vmem:[#allocation3 + $0x260] sm:$0xff] %vm317, %v843
        %1039 = vst.msk [vmem:[#allocation3 + $0x278] sm:$0xff] %vm317, %v844
        %1040 = vst.msk [vmem:[#allocation3 + $0x290] sm:$0xff] %vm317, %v845
        %1041 = vst.msk [vmem:[#allocation3 + $0x2a8] sm:$0xff] %vm317, %v846
        %1042 = vst.msk [vmem:[#allocation3 + $0x2c0] sm:$0xff] %vm317, %v847
        %1043 = vst.msk [vmem:[#allocation3 + $0x2d8] sm:$0xff] %vm317, %v848
        %1044 = vst.msk [vmem:[#allocation3 + $0x2f0] sm:$0xff] %vm317, %v849
        %1049 = vrot.lane.b32.xlu0 %v820, 96
        %v1050 = vpop.permute.xlu0 %1049
        %1051 = vrot.lane.b32.xlu0 %v821, 96
        %v1052 = vpop.permute.xlu0 %1051
        %1053 = vrot.lane.b32.xlu0 %v822, 96
        %v1054 = vpop.permute.xlu0 %1053
        %1055 = vrot.lane.b32.xlu0 %v823, 96
        %v1056 = vpop.permute.xlu0 %1055
        %1057 = vrot.lane.b32.xlu0 %v824, 96
        %v1058 = vpop.permute.xlu0 %1057
        %1059 = vrot.lane.b32.xlu0 %v825, 96
        %v1060 = vpop.permute.xlu0 %1059
        %1061 = vrot.lane.b32.xlu0 %v826, 96
        %v1062 = vpop.permute.xlu0 %1061
        %1063 = vrot.lane.b32.xlu0 %v827, 96
        %v1064 = vpop.permute.xlu0 %1063
        %1065 = vrot.lane.b32.xlu0 %v828, 96
        %v1066 = vpop.permute.xlu0 %1065
        %1067 = vrot.lane.b32.xlu0 %v829, 96
        %v1068 = vpop.permute.xlu0 %1067
        %1069 = vrot.lane.b32.xlu0 %v830, 96
        %v1070 = vpop.permute.xlu0 %1069
        %1071 = vrot.lane.b32.xlu0 %v831, 96
        %v1072 = vpop.permute.xlu0 %1071
        %1073 = vrot.lane.b32.xlu0 %v832, 96
        %v1074 = vpop.permute.xlu0 %1073
        %1075 = vrot.lane.b32.xlu0 %v833, 96
        %v1076 = vpop.permute.xlu0 %1075
        %1077 = vrot.lane.b32.xlu0 %v834, 96
        %v1078 = vpop.permute.xlu0 %1077
        %1079 = vrot.lane.b32.xlu0 %v835, 96
        %v1080 = vpop.permute.xlu0 %1079
        %1081 = vrot.lane.b32.xlu0 %v836, 96
        %v1082 = vpop.permute.xlu0 %1081
        %1083 = vrot.lane.b32.xlu0 %v837, 96
        %v1084 = vpop.permute.xlu0 %1083
        %1085 = vrot.lane.b32.xlu0 %v838, 96
        %v1086 = vpop.permute.xlu0 %1085
        %1087 = vrot.lane.b32.xlu0 %v839, 96
        %v1088 = vpop.permute.xlu0 %1087
        %1089 = vrot.lane.b32.xlu0 %v840, 96
        %v1090 = vpop.permute.xlu0 %1089
        %1091 = vrot.lane.b32.xlu0 %v841, 96
        %v1092 = vpop.permute.xlu0 %1091
        %1093 = vrot.lane.b32.xlu0 %v842, 96
        %v1094 = vpop.permute.xlu0 %1093
        %1095 = vrot.lane.b32.xlu0 %v843, 96
        %v1096 = vpop.permute.xlu0 %1095
        %1097 = vrot.lane.b32.xlu0 %v844, 96
        %v1098 = vpop.permute.xlu0 %1097
        %1099 = vrot.lane.b32.xlu0 %v845, 96
        %v1100 = vpop.permute.xlu0 %1099
        %1101 = vrot.lane.b32.xlu0 %v846, 96
        %v1102 = vpop.permute.xlu0 %1101
        %1103 = vrot.lane.b32.xlu0 %v847, 96
        %v1104 = vpop.permute.xlu0 %1103
        %1105 = vrot.lane.b32.xlu0 %v848, 96
        %v1106 = vpop.permute.xlu0 %1105
        %1107 = vrot.lane.b32.xlu0 %v849, 96
        %v1108 = vpop.permute.xlu0 %1107
        %1109 = vrot.lane.b32.xlu0 %v850, 96
        %v1110 = vpop.permute.xlu0 %1109
        %1111 = vrot.lane.b32.xlu0 %v851, 96
        %v1112 = vpop.permute.xlu0 %1111
        %1145 = vst.msk [vmem:[#allocation3 + $0x8] sm:$0xff] %vm652, %v1050
        %1146 = vst.msk [vmem:[#allocation3 + $0x20] sm:$0xff] %vm652, %v1052
        %1147 = vst.msk [vmem:[#allocation3 + $0x38] sm:$0xff] %vm652, %v1054
        %1148 = vst.msk [vmem:[#allocation3 + $0x50] sm:$0xff] %vm652, %v1056
        %1149 = vst.msk [vmem:[#allocation3 + $0x68] sm:$0xff] %vm652, %v1058
        %1150 = vst.msk [vmem:[#allocation3 + $0x80] sm:$0xff] %vm652, %v1060
        %1151 = vst.msk [vmem:[#allocation3 + $0x98] sm:$0xff] %vm652, %v1062
        %1152 = vst.msk [vmem:[#allocation3 + $0xb0] sm:$0xff] %vm652, %v1064
        %1153 = vst.msk [vmem:[#allocation3 + $0xc8] sm:$0xff] %vm652, %v1066
        %1154 = vst.msk [vmem:[#allocation3 + $0xe0] sm:$0xff] %vm652, %v1068
        %1155 = vst.msk [vmem:[#allocation3 + $0xf8] sm:$0xff] %vm652, %v1070
        %1156 = vst.msk [vmem:[#allocation3 + $0x110] sm:$0xff] %vm652, %v1072
        %1157 = vst.msk [vmem:[#allocation3 + $0x128] sm:$0xff] %vm652, %v1074
        %1158 = vst.msk [vmem:[#allocation3 + $0x140] sm:$0xff] %vm652, %v1076
        %1159 = vst.msk [vmem:[#allocation3 + $0x158] sm:$0xff] %vm652, %v1078
        %1160 = vst.msk [vmem:[#allocation3 + $0x170] sm:$0xff] %vm652, %v1080
        %1161 = vst.msk [vmem:[#allocation3 + $0x188] sm:$0xff] %vm652, %v1082
        %1162 = vst.msk [vmem:[#allocation3 + $0x1a0] sm:$0xff] %vm652, %v1084
        %1163 = vst.msk [vmem:[#allocation3 + $0x1b8] sm:$0xff] %vm652, %v1086
        %1164 = vst.msk [vmem:[#allocation3 + $0x1d0] sm:$0xff] %vm652, %v1088
        %1165 = vst.msk [vmem:[#allocation3 + $0x1e8] sm:$0xff] %vm652, %v1090
        %1166 = vst.msk [vmem:[#allocation3 + $0x200] sm:$0xff] %vm652, %v1092
        %1167 = vst.msk [vmem:[#allocation3 + $0x218] sm:$0xff] %vm652, %v1094
        %1168 = vst.msk [vmem:[#allocation3 + $0x230] sm:$0xff] %vm652, %v1096
        %1169 = vst.msk [vmem:[#allocation3 + $0x248] sm:$0xff] %vm652, %v1098
        %1170 = vst.msk [vmem:[#allocation3 + $0x260] sm:$0xff] %vm652, %v1100
        %1171 = vst.msk [vmem:[#allocation3 + $0x278] sm:$0xff] %vm652, %v1102
        %1172 = vst.msk [vmem:[#allocation3 + $0x290] sm:$0xff] %vm652, %v1104
        %1173 = vst.msk [vmem:[#allocation3 + $0x2a8] sm:$0xff] %vm652, %v1106
        %1174 = vst.msk [vmem:[#allocation3 + $0x2c0] sm:$0xff] %vm652, %v1108
        %1175 = vst.msk [vmem:[#allocation3 + $0x2d8] sm:$0xff] %vm652, %v1110
        %1176 = vst.msk [vmem:[#allocation3 + $0x2f0] sm:$0xff] %vm652, %v1112
        %v1177 = vld [vmem:[#allocation2 + $0x9] sm:$0xff]
        %v1178 = vld [vmem:[#allocation2 + $0x11] sm:$0xff]
        %v1179 = vld [vmem:[#allocation2 + $0x29] sm:$0xff]
        %v1180 = vld [vmem:[#allocation2 + $0x31] sm:$0xff]
        %v1181 = vld [vmem:[#allocation2 + $0x49] sm:$0xff]
        %v1182 = vld [vmem:[#allocation2 + $0x51] sm:$0xff]
        %v1183 = vld [vmem:[#allocation2 + $0x69] sm:$0xff]
        %v1184 = vld [vmem:[#allocation2 + $0x71] sm:$0xff]
        %v1185 = vld [vmem:[#allocation2 + $0x89] sm:$0xff]
        %v1186 = vld [vmem:[#allocation2 + $0x91] sm:$0xff]
        %v1187 = vld [vmem:[#allocation2 + $0xa9] sm:$0xff]
        %v1188 = vld [vmem:[#allocation2 + $0xb1] sm:$0xff]
        %v1189 = vld [vmem:[#allocation2 + $0xc9] sm:$0xff]
        %v1190 = vld [vmem:[#allocation2 + $0xd1] sm:$0xff]
        %v1191 = vld [vmem:[#allocation2 + $0xe9] sm:$0xff]
        %v1192 = vld [vmem:[#allocation2 + $0xf1] sm:$0xff]
        %v1193 = vld [vmem:[#allocation2 + $0x109] sm:$0xff]
        %v1194 = vld [vmem:[#allocation2 + $0x111] sm:$0xff]
        %v1195 = vld [vmem:[#allocation2 + $0x129] sm:$0xff]
        %v1196 = vld [vmem:[#allocation2 + $0x131] sm:$0xff]
        %v1197 = vld [vmem:[#allocation2 + $0x149] sm:$0xff]
        %v1198 = vld [vmem:[#allocation2 + $0x151] sm:$0xff]
        %v1199 = vld [vmem:[#allocation2 + $0x169] sm:$0xff]
        %v1200 = vld [vmem:[#allocation2 + $0x171] sm:$0xff]
        %v1201 = vld [vmem:[#allocation2 + $0x189] sm:$0xff]
        %v1202 = vld [vmem:[#allocation2 + $0x191] sm:$0xff]
        %v1203 = vld [vmem:[#allocation2 + $0x1a9] sm:$0xff]
        %v1204 = vld [vmem:[#allocation2 + $0x1b1] sm:$0xff]
        %v1205 = vld [vmem:[#allocation2 + $0x1c9] sm:$0xff]
        %v1206 = vld [vmem:[#allocation2 + $0x1d1] sm:$0xff]
        %v1207 = vld [vmem:[#allocation2 + $0x1e9] sm:$0xff]
        %v1208 = vld [vmem:[#allocation2 + $0x1f1] sm:$0xff]
        %v1209 = vld [vmem:[#allocation2 + $0x209] sm:$0xff]
        %v1210 = vld [vmem:[#allocation2 + $0x211] sm:$0xff]
        %v1211 = vld [vmem:[#allocation2 + $0x229] sm:$0xff]
        %v1212 = vld [vmem:[#allocation2 + $0x231] sm:$0xff]
        %1245 = vrot.lane.b32.xlu0 %v1177, 64
        %v1246 = vpop.permute.xlu0 %1245
        %1247 = vrot.lane.b32.xlu0 %v1178, 64
        %v1248 = vpop.permute.xlu0 %1247
        %1249 = vrot.lane.b32.xlu0 %v1179, 64
        %v1250 = vpop.permute.xlu0 %1249
        %1251 = vrot.lane.b32.xlu0 %v1180, 64
        %v1252 = vpop.permute.xlu0 %1251
        %1253 = vrot.lane.b32.xlu0 %v1181, 64
        %v1254 = vpop.permute.xlu0 %1253
        %1255 = vrot.lane.b32.xlu0 %v1182, 64
        %v1256 = vpop.permute.xlu0 %1255
        %1257 = vrot.lane.b32.xlu0 %v1183, 64
        %v1258 = vpop.permute.xlu0 %1257
        %1259 = vrot.lane.b32.xlu0 %v1184, 64
        %v1260 = vpop.permute.xlu0 %1259
        %1261 = vrot.lane.b32.xlu0 %v1185, 64
        %v1262 = vpop.permute.xlu0 %1261
        %1263 = vrot.lane.b32.xlu0 %v1186, 64
        %v1264 = vpop.permute.xlu0 %1263
        %1265 = vrot.lane.b32.xlu0 %v1187, 64
        %v1266 = vpop.permute.xlu0 %1265
        %1267 = vrot.lane.b32.xlu0 %v1188, 64
        %v1268 = vpop.permute.xlu0 %1267
        %1269 = vrot.lane.b32.xlu0 %v1189, 64
        %v1270 = vpop.permute.xlu0 %1269
        %1271 = vrot.lane.b32.xlu0 %v1190, 64
        %v1272 = vpop.permute.xlu0 %1271
        %1273 = vrot.lane.b32.xlu0 %v1191, 64
        %v1274 = vpop.permute.xlu0 %1273
        %1275 = vrot.lane.b32.xlu0 %v1192, 64
        %v1276 = vpop.permute.xlu0 %1275
        %1277 = vrot.lane.b32.xlu0 %v1193, 64
        %v1278 = vpop.permute.xlu0 %1277
        %1279 = vrot.lane.b32.xlu0 %v1194, 64
        %v1280 = vpop.permute.xlu0 %1279
        %1281 = vrot.lane.b32.xlu0 %v1195, 64
        %v1282 = vpop.permute.xlu0 %1281
        %1283 = vrot.lane.b32.xlu0 %v1196, 64
        %v1284 = vpop.permute.xlu0 %1283
        %1285 = vrot.lane.b32.xlu0 %v1197, 64
        %v1286 = vpop.permute.xlu0 %1285
        %1287 = vrot.lane.b32.xlu0 %v1198, 64
        %v1288 = vpop.permute.xlu0 %1287
        %1289 = vrot.lane.b32.xlu0 %v1199, 64
        %v1290 = vpop.permute.xlu0 %1289
        %1291 = vrot.lane.b32.xlu0 %v1200, 64
        %v1292 = vpop.permute.xlu0 %1291
        %1293 = vrot.lane.b32.xlu0 %v1201, 64
        %v1294 = vpop.permute.xlu0 %1293
        %1295 = vrot.lane.b32.xlu0 %v1202, 64
        %v1296 = vpop.permute.xlu0 %1295
        %1297 = vrot.lane.b32.xlu0 %v1203, 64
        %v1298 = vpop.permute.xlu0 %1297
        %1299 = vrot.lane.b32.xlu0 %v1204, 64
        %v1300 = vpop.permute.xlu0 %1299
        %1301 = vrot.lane.b32.xlu0 %v1205, 64
        %v1302 = vpop.permute.xlu0 %1301
        %1303 = vrot.lane.b32.xlu0 %v1206, 64
        %v1304 = vpop.permute.xlu0 %1303
        %1305 = vrot.lane.b32.xlu0 %v1207, 64
        %v1306 = vpop.permute.xlu0 %1305
        %1307 = vrot.lane.b32.xlu0 %v1208, 64
        %v1308 = vpop.permute.xlu0 %1307
        %1341 = vst.msk [vmem:[#allocation3] sm:$0xff] %vm783, %v1246
        %1342 = vst.msk [vmem:[#allocation3 + $0x18] sm:$0xff] %vm783, %v1248
        %1343 = vst.msk [vmem:[#allocation3 + $0x30] sm:$0xff] %vm783, %v1250
        %1344 = vst.msk [vmem:[#allocation3 + $0x48] sm:$0xff] %vm783, %v1252
        %1345 = vst.msk [vmem:[#allocation3 + $0x60] sm:$0xff] %vm783, %v1254
        %1346 = vst.msk [vmem:[#allocation3 + $0x78] sm:$0xff] %vm783, %v1256
        %1347 = vst.msk [vmem:[#allocation3 + $0x90] sm:$0xff] %vm783, %v1258
        %1348 = vst.msk [vmem:[#allocation3 + $0xa8] sm:$0xff] %vm783, %v1260
        %1349 = vst.msk [vmem:[#allocation3 + $0xc0] sm:$0xff] %vm783, %v1262
        %1350 = vst.msk [vmem:[#allocation3 + $0xd8] sm:$0xff] %vm783, %v1264
        %1351 = vst.msk [vmem:[#allocation3 + $0xf0] sm:$0xff] %vm783, %v1266
        %1352 = vst.msk [vmem:[#allocation3 + $0x108] sm:$0xff] %vm783, %v1268
        %1353 = vst.msk [vmem:[#allocation3 + $0x120] sm:$0xff] %vm783, %v1270
        %1354 = vst.msk [vmem:[#allocation3 + $0x138] sm:$0xff] %vm783, %v1272
        %1355 = vst.msk [vmem:[#allocation3 + $0x150] sm:$0xff] %vm783, %v1274
        %1356 = vst.msk [vmem:[#allocation3 + $0x168] sm:$0xff] %vm783, %v1276
        %1357 = vst.msk [vmem:[#allocation3 + $0x180] sm:$0xff] %vm783, %v1278
        %1358 = vst.msk [vmem:[#allocation3 + $0x198] sm:$0xff] %vm783, %v1280
        %1359 = vst.msk [vmem:[#allocation3 + $0x1b0] sm:$0xff] %vm783, %v1282
        %1360 = vst.msk [vmem:[#allocation3 + $0x1c8] sm:$0xff] %vm783, %v1284
        %1361 = vst.msk [vmem:[#allocation3 + $0x1e0] sm:$0xff] %vm783, %v1286
        %1362 = vst.msk [vmem:[#allocation3 + $0x1f8] sm:$0xff] %vm783, %v1288
        %1363 = vst.msk [vmem:[#allocation3 + $0x210] sm:$0xff] %vm783, %v1290
        %1364 = vst.msk [vmem:[#allocation3 + $0x228] sm:$0xff] %vm783, %v1292
        %1365 = vst.msk [vmem:[#allocation3 + $0x240] sm:$0xff] %vm783, %v1294
        %1366 = vst.msk [vmem:[#allocation3 + $0x258] sm:$0xff] %vm783, %v1296
        %1367 = vst.msk [vmem:[#allocation3 + $0x270] sm:$0xff] %vm783, %v1298
        %1368 = vst.msk [vmem:[#allocation3 + $0x288] sm:$0xff] %vm783, %v1300
        %1369 = vst.msk [vmem:[#allocation3 + $0x2a0] sm:$0xff] %vm783, %v1302
        %1370 = vst.msk [vmem:[#allocation3 + $0x2b8] sm:$0xff] %vm783, %v1304
        %1371 = vst.msk [vmem:[#allocation3 + $0x2d0] sm:$0xff] %vm783, %v1306
        %1372 = vst.msk [vmem:[#allocation3 + $0x2e8] sm:$0xff] %vm783, %v1308
        %1375 = vrot.lane.b32.xlu0 %v1179, 32
        %v1376 = vpop.permute.xlu0 %1375
        %1377 = vrot.lane.b32.xlu0 %v1180, 32
        %v1378 = vpop.permute.xlu0 %1377
        %1379 = vrot.lane.b32.xlu0 %v1181, 32
        %v1380 = vpop.permute.xlu0 %1379
        %1381 = vrot.lane.b32.xlu0 %v1182, 32
        %v1382 = vpop.permute.xlu0 %1381
        %1383 = vrot.lane.b32.xlu0 %v1183, 32
        %v1384 = vpop.permute.xlu0 %1383
        %1385 = vrot.lane.b32.xlu0 %v1184, 32
        %v1386 = vpop.permute.xlu0 %1385
        %1387 = vrot.lane.b32.xlu0 %v1185, 32
        %v1388 = vpop.permute.xlu0 %1387
        %1389 = vrot.lane.b32.xlu0 %v1186, 32
        %v1390 = vpop.permute.xlu0 %1389
        %1391 = vrot.lane.b32.xlu0 %v1187, 32
        %v1392 = vpop.permute.xlu0 %1391
        %1393 = vrot.lane.b32.xlu0 %v1188, 32
        %v1394 = vpop.permute.xlu0 %1393
        %1395 = vrot.lane.b32.xlu0 %v1189, 32
        %v1396 = vpop.permute.xlu0 %1395
        %1397 = vrot.lane.b32.xlu0 %v1190, 32
        %v1398 = vpop.permute.xlu0 %1397
        %1399 = vrot.lane.b32.xlu0 %v1191, 32
        %v1400 = vpop.permute.xlu0 %1399
        %1401 = vrot.lane.b32.xlu0 %v1192, 32
        %v1402 = vpop.permute.xlu0 %1401
        %1403 = vrot.lane.b32.xlu0 %v1193, 32
        %v1404 = vpop.permute.xlu0 %1403
        %1405 = vrot.lane.b32.xlu0 %v1194, 32
        %v1406 = vpop.permute.xlu0 %1405
        %1407 = vrot.lane.b32.xlu0 %v1195, 32
        %v1408 = vpop.permute.xlu0 %1407
        %1409 = vrot.lane.b32.xlu0 %v1196, 32
        %v1410 = vpop.permute.xlu0 %1409
        %1411 = vrot.lane.b32.xlu0 %v1197, 32
        %v1412 = vpop.permute.xlu0 %1411
        %1413 = vrot.lane.b32.xlu0 %v1198, 32
        %v1414 = vpop.permute.xlu0 %1413
        %1415 = vrot.lane.b32.xlu0 %v1199, 32
        %v1416 = vpop.permute.xlu0 %1415
        %1417 = vrot.lane.b32.xlu0 %v1200, 32
        %v1418 = vpop.permute.xlu0 %1417
        %1419 = vrot.lane.b32.xlu0 %v1201, 32
        %v1420 = vpop.permute.xlu0 %1419
        %1421 = vrot.lane.b32.xlu0 %v1202, 32
        %v1422 = vpop.permute.xlu0 %1421
        %1423 = vrot.lane.b32.xlu0 %v1203, 32
        %v1424 = vpop.permute.xlu0 %1423
        %1425 = vrot.lane.b32.xlu0 %v1204, 32
        %v1426 = vpop.permute.xlu0 %1425
        %1427 = vrot.lane.b32.xlu0 %v1205, 32
        %v1428 = vpop.permute.xlu0 %1427
        %1429 = vrot.lane.b32.xlu0 %v1206, 32
        %v1430 = vpop.permute.xlu0 %1429
        %1431 = vrot.lane.b32.xlu0 %v1207, 32
        %v1432 = vpop.permute.xlu0 %1431
        %1433 = vrot.lane.b32.xlu0 %v1208, 32
        %v1434 = vpop.permute.xlu0 %1433
        %1435 = vrot.lane.b32.xlu0 %v1209, 32
        %v1436 = vpop.permute.xlu0 %1435
        %1437 = vrot.lane.b32.xlu0 %v1210, 32
        %v1438 = vpop.permute.xlu0 %1437
        %1471 = vst.msk [vmem:[#allocation3 + $0x8] sm:$0xff] %vm980, %v1376
        %1472 = vst.msk [vmem:[#allocation3 + $0x20] sm:$0xff] %vm980, %v1378
        %1473 = vst.msk [vmem:[#allocation3 + $0x38] sm:$0xff] %vm980, %v1380
        %1474 = vst.msk [vmem:[#allocation3 + $0x50] sm:$0xff] %vm980, %v1382
        %1475 = vst.msk [vmem:[#allocation3 + $0x68] sm:$0xff] %vm980, %v1384
        %1476 = vst.msk [vmem:[#allocation3 + $0x80] sm:$0xff] %vm980, %v1386
        %1477 = vst.msk [vmem:[#allocation3 + $0x98] sm:$0xff] %vm980, %v1388
        %1478 = vst.msk [vmem:[#allocation3 + $0xb0] sm:$0xff] %vm980, %v1390
        %1479 = vst.msk [vmem:[#allocation3 + $0xc8] sm:$0xff] %vm980, %v1392
        %1480 = vst.msk [vmem:[#allocation3 + $0xe0] sm:$0xff] %vm980, %v1394
        %1481 = vst.msk [vmem:[#allocation3 + $0xf8] sm:$0xff] %vm980, %v1396
        %1482 = vst.msk [vmem:[#allocation3 + $0x110] sm:$0xff] %vm980, %v1398
        %1483 = vst.msk [vmem:[#allocation3 + $0x128] sm:$0xff] %vm980, %v1400
        %1484 = vst.msk [vmem:[#allocation3 + $0x140] sm:$0xff] %vm980, %v1402
        %1485 = vst.msk [vmem:[#allocation3 + $0x158] sm:$0xff] %vm980, %v1404
        %1486 = vst.msk [vmem:[#allocation3 + $0x170] sm:$0xff] %vm980, %v1406
        %1487 = vst.msk [vmem:[#allocation3 + $0x188] sm:$0xff] %vm980, %v1408
        %1488 = vst.msk [vmem:[#allocation3 + $0x1a0] sm:$0xff] %vm980, %v1410
        %1489 = vst.msk [vmem:[#allocation3 + $0x1b8] sm:$0xff] %vm980, %v1412
        %1490 = vst.msk [vmem:[#allocation3 + $0x1d0] sm:$0xff] %vm980, %v1414
        %1491 = vst.msk [vmem:[#allocation3 + $0x1e8] sm:$0xff] %vm980, %v1416
        %1492 = vst.msk [vmem:[#allocation3 + $0x200] sm:$0xff] %vm980, %v1418
        %1493 = vst.msk [vmem:[#allocation3 + $0x218] sm:$0xff] %vm980, %v1420
        %1494 = vst.msk [vmem:[#allocation3 + $0x230] sm:$0xff] %vm980, %v1422
        %1495 = vst.msk [vmem:[#allocation3 + $0x248] sm:$0xff] %vm980, %v1424
        %1496 = vst.msk [vmem:[#allocation3 + $0x260] sm:$0xff] %vm980, %v1426
        %1497 = vst.msk [vmem:[#allocation3 + $0x278] sm:$0xff] %vm980, %v1428
        %1498 = vst.msk [vmem:[#allocation3 + $0x290] sm:$0xff] %vm980, %v1430
        %1499 = vst.msk [vmem:[#allocation3 + $0x2a8] sm:$0xff] %vm980, %v1432
        %1500 = vst.msk [vmem:[#allocation3 + $0x2c0] sm:$0xff] %vm980, %v1434
        %1501 = vst.msk [vmem:[#allocation3 + $0x2d8] sm:$0xff] %vm980, %v1436
        %1502 = vst.msk [vmem:[#allocation3 + $0x2f0] sm:$0xff] %vm980, %v1438
        %1503 = vst.msk [vmem:[#allocation3 + $0x10] sm:$0xff] %vm317, %v1181
        %1504 = vst.msk [vmem:[#allocation3 + $0x28] sm:$0xff] %vm317, %v1182
        %1505 = vst.msk [vmem:[#allocation3 + $0x40] sm:$0xff] %vm317, %v1183
        %1506 = vst.msk [vmem:[#allocation3 + $0x58] sm:$0xff] %vm317, %v1184
        %1507 = vst.msk [vmem:[#allocation3 + $0x70] sm:$0xff] %vm317, %v1185
        %1508 = vst.msk [vmem:[#allocation3 + $0x88] sm:$0xff] %vm317, %v1186
        %1509 = vst.msk [vmem:[#allocation3 + $0xa0] sm:$0xff] %vm317, %v1187
        %1510 = vst.msk [vmem:[#allocation3 + $0xb8] sm:$0xff] %vm317, %v1188
        %1511 = vst.msk [vmem:[#allocation3 + $0xd0] sm:$0xff] %vm317, %v1189
        %1512 = vst.msk [vmem:[#allocation3 + $0xe8] sm:$0xff] %vm317, %v1190
        %1513 = vst.msk [vmem:[#allocation3 + $0x100] sm:$0xff] %vm317, %v1191
        %1514 = vst.msk [vmem:[#allocation3 + $0x118] sm:$0xff] %vm317, %v1192
        %1515 = vst.msk [vmem:[#allocation3 + $0x130] sm:$0xff] %vm317, %v1193
        %1516 = vst.msk [vmem:[#allocation3 + $0x148] sm:$0xff] %vm317, %v1194
        %1517 = vst.msk [vmem:[#allocation3 + $0x160] sm:$0xff] %vm317, %v1195
        %1518 = vst.msk [vmem:[#allocation3 + $0x178] sm:$0xff] %vm317, %v1196
        %1519 = vst.msk [vmem:[#allocation3 + $0x190] sm:$0xff] %vm317, %v1197
        %1520 = vst.msk [vmem:[#allocation3 + $0x1a8] sm:$0xff] %vm317, %v1198
        %1521 = vst.msk [vmem:[#allocation3 + $0x1c0] sm:$0xff] %vm317, %v1199
        %1522 = vst.msk [vmem:[#allocation3 + $0x1d8] sm:$0xff] %vm317, %v1200
        %1523 = vst.msk [vmem:[#allocation3 + $0x1f0] sm:$0xff] %vm317, %v1201
        %1524 = vst.msk [vmem:[#allocation3 + $0x208] sm:$0xff] %vm317, %v1202
        %1525 = vst.msk [vmem:[#allocation3 + $0x220] sm:$0xff] %vm317, %v1203
        %1526 = vst.msk [vmem:[#allocation3 + $0x238] sm:$0xff] %vm317, %v1204
        %1527 = vst.msk [vmem:[#allocation3 + $0x250] sm:$0xff] %vm317, %v1205
        %1528 = vst.msk [vmem:[#allocation3 + $0x268] sm:$0xff] %vm317, %v1206
        %1529 = vst.msk [vmem:[#allocation3 + $0x280] sm:$0xff] %vm317, %v1207
        %1530 = vst.msk [vmem:[#allocation3 + $0x298] sm:$0xff] %vm317, %v1208
        %1531 = vst.msk [vmem:[#allocation3 + $0x2b0] sm:$0xff] %vm317, %v1209
        %1532 = vst.msk [vmem:[#allocation3 + $0x2c8] sm:$0xff] %vm317, %v1210
        %1533 = vst.msk [vmem:[#allocation3 + $0x2e0] sm:$0xff] %vm317, %v1211
        %1534 = vst.msk [vmem:[#allocation3 + $0x2f8] sm:$0xff] %vm317, %v1212
        %v1535 = vld [vmem:[#allocation3] sm:$0xff]
        %v1536 = vld [vmem:[#allocation3 + $0x8] sm:$0xff]
        %v1537 = vld [vmem:[#allocation3 + $0x10] sm:$0xff]
        %v1538 = vld [vmem:[#allocation3 + $0x18] sm:$0xff]
        %v1539 = vld [vmem:[#allocation3 + $0x20] sm:$0xff]
        %v1540 = vld [vmem:[#allocation3 + $0x28] sm:$0xff]
        %v1541 = vld [vmem:[#allocation3 + $0x30] sm:$0xff]
        %v1542 = vld [vmem:[#allocation3 + $0x38] sm:$0xff]
        %v1543 = vld [vmem:[#allocation3 + $0x40] sm:$0xff]
        %v1544 = vld [vmem:[#allocation3 + $0x48] sm:$0xff]
        %v1545 = vld [vmem:[#allocation3 + $0x50] sm:$0xff]
        %v1546 = vld [vmem:[#allocation3 + $0x58] sm:$0xff]
        %v1547 = vld [vmem:[#allocation3 + $0x60] sm:$0xff]
        %v1548 = vld [vmem:[#allocation3 + $0x68] sm:$0xff]
        %v1549 = vld [vmem:[#allocation3 + $0x70] sm:$0xff]
        %v1550 = vld [vmem:[#allocation3 + $0x78] sm:$0xff]
        %v1551 = vld [vmem:[#allocation3 + $0x80] sm:$0xff]
        %v1552 = vld [vmem:[#allocation3 + $0x88] sm:$0xff]
        %v1553 = vld [vmem:[#allocation3 + $0x90] sm:$0xff]
        %v1554 = vld [vmem:[#allocation3 + $0x98] sm:$0xff]
        %v1555 = vld [vmem:[#allocation3 + $0xa0] sm:$0xff]
        %v1556 = vld [vmem:[#allocation3 + $0xa8] sm:$0xff]
        %v1557 = vld [vmem:[#allocation3 + $0xb0] sm:$0xff]
        %v1558 = vld [vmem:[#allocation3 + $0xb8] sm:$0xff]
        %v1559 = vld [vmem:[#allocation3 + $0xc0] sm:$0xff]
        %v1560 = vld [vmem:[#allocation3 + $0xc8] sm:$0xff]
        %v1561 = vld [vmem:[#allocation3 + $0xd0] sm:$0xff]
        %v1562 = vld [vmem:[#allocation3 + $0xd8] sm:$0xff]
        %v1563 = vld [vmem:[#allocation3 + $0xe0] sm:$0xff]
        %v1564 = vld [vmem:[#allocation3 + $0xe8] sm:$0xff]
        %v1565 = vld [vmem:[#allocation3 + $0xf0] sm:$0xff]
        %v1566 = vld [vmem:[#allocation3 + $0xf8] sm:$0xff]
        %v1567 = vld [vmem:[#allocation3 + $0x100] sm:$0xff]
        %v1568 = vld [vmem:[#allocation3 + $0x108] sm:$0xff]
        %v1569 = vld [vmem:[#allocation3 + $0x110] sm:$0xff]
        %v1570 = vld [vmem:[#allocation3 + $0x118] sm:$0xff]
        %v1571 = vld [vmem:[#allocation3 + $0x120] sm:$0xff]
        %v1572 = vld [vmem:[#allocation3 + $0x128] sm:$0xff]
        %v1573 = vld [vmem:[#allocation3 + $0x130] sm:$0xff]
        %v1574 = vld [vmem:[#allocation3 + $0x138] sm:$0xff]
        %v1575 = vld [vmem:[#allocation3 + $0x140] sm:$0xff]
        %v1576 = vld [vmem:[#allocation3 + $0x148] sm:$0xff]
        %v1577 = vld [vmem:[#allocation3 + $0x150] sm:$0xff]
        %v1578 = vld [vmem:[#allocation3 + $0x158] sm:$0xff]
        %v1579 = vld [vmem:[#allocation3 + $0x160] sm:$0xff]
        %v1580 = vld [vmem:[#allocation3 + $0x168] sm:$0xff]
        %v1581 = vld [vmem:[#allocation3 + $0x170] sm:$0xff]
        %v1582 = vld [vmem:[#allocation3 + $0x178] sm:$0xff]
        %v1583 = vld [vmem:[#allocation3 + $0x180] sm:$0xff]
        %v1584 = vld [vmem:[#allocation3 + $0x188] sm:$0xff]
        %v1585 = vld [vmem:[#allocation3 + $0x190] sm:$0xff]
        %v1586 = vld [vmem:[#allocation3 + $0x198] sm:$0xff]
        %v1587 = vld [vmem:[#allocation3 + $0x1a0] sm:$0xff]
        %v1588 = vld [vmem:[#allocation3 + $0x1a8] sm:$0xff]
        %v1589 = vld [vmem:[#allocation3 + $0x1b0] sm:$0xff]
        %v1590 = vld [vmem:[#allocation3 + $0x1b8] sm:$0xff]
        %v1591 = vld [vmem:[#allocation3 + $0x1c0] sm:$0xff]
        %v1592 = vld [vmem:[#allocation3 + $0x1c8] sm:$0xff]
        %v1593 = vld [vmem:[#allocation3 + $0x1d0] sm:$0xff]
        %v1594 = vld [vmem:[#allocation3 + $0x1d8] sm:$0xff]
        %v1595 = vld [vmem:[#allocation3 + $0x1e0] sm:$0xff]
        %v1596 = vld [vmem:[#allocation3 + $0x1e8] sm:$0xff]
        %v1597 = vld [vmem:[#allocation3 + $0x1f0] sm:$0xff]
        %v1598 = vld [vmem:[#allocation3 + $0x1f8] sm:$0xff]
        %v1599 = vld [vmem:[#allocation3 + $0x200] sm:$0xff]
        %v1600 = vld [vmem:[#allocation3 + $0x208] sm:$0xff]
        %v1601 = vld [vmem:[#allocation3 + $0x210] sm:$0xff]
        %v1602 = vld [vmem:[#allocation3 + $0x218] sm:$0xff]
        %v1603 = vld [vmem:[#allocation3 + $0x220] sm:$0xff]
        %v1604 = vld [vmem:[#allocation3 + $0x228] sm:$0xff]
        %v1605 = vld [vmem:[#allocation3 + $0x230] sm:$0xff]
        %v1606 = vld [vmem:[#allocation3 + $0x238] sm:$0xff]
        %v1607 = vld [vmem:[#allocation3 + $0x240] sm:$0xff]
        %v1608 = vld [vmem:[#allocation3 + $0x248] sm:$0xff]
        %v1609 = vld [vmem:[#allocation3 + $0x250] sm:$0xff]
        %v1610 = vld [vmem:[#allocation3 + $0x258] sm:$0xff]
        %v1611 = vld [vmem:[#allocation3 + $0x260] sm:$0xff]
        %v1612 = vld [vmem:[#allocation3 + $0x268] sm:$0xff]
        %v1613 = vld [vmem:[#allocation3 + $0x270] sm:$0xff]
        %v1614 = vld [vmem:[#allocation3 + $0x278] sm:$0xff]
        %v1615 = vld [vmem:[#allocation3 + $0x280] sm:$0xff]
        %v1616 = vld [vmem:[#allocation3 + $0x288] sm:$0xff]
        %v1617 = vld [vmem:[#allocation3 + $0x290] sm:$0xff]
        %v1618 = vld [vmem:[#allocation3 + $0x298] sm:$0xff]
        %v1619 = vld [vmem:[#allocation3 + $0x2a0] sm:$0xff]
        %v1620 = vld [vmem:[#allocation3 + $0x2a8] sm:$0xff]
        %v1621 = vld [vmem:[#allocation3 + $0x2b0] sm:$0xff]
        %v1622 = vld [vmem:[#allocation3 + $0x2b8] sm:$0xff]
        %v1623 = vld [vmem:[#allocation3 + $0x2c0] sm:$0xff]
        %v1624 = vld [vmem:[#allocation3 + $0x2c8] sm:$0xff]
        %v1625 = vld [vmem:[#allocation3 + $0x2d0] sm:$0xff]
        %v1626 = vld [vmem:[#allocation3 + $0x2d8] sm:$0xff]
        %v1627 = vld [vmem:[#allocation3 + $0x2e0] sm:$0xff]
        %v1628 = vld [vmem:[#allocation3 + $0x2e8] sm:$0xff]
        %v1629 = vld [vmem:[#allocation3 + $0x2f0] sm:$0xff]
        %v1630 = vld [vmem:[#allocation3 + $0x2f8] sm:$0xff]
        %v1631 = vld [vmem:[%s1] sm:$0xff]
        %v1632 = vld [vmem:[%s1 + $0x8] sm:$0xff]
        %v1633 = vld [vmem:[%s1 + $0x10] sm:$0xff]
        %v1634 = vld [vmem:[%s1 + $0x18] sm:$0xff]
        %v1635 = vld [vmem:[%s1 + $0x20] sm:$0xff]
        %v1636 = vld [vmem:[%s1 + $0x28] sm:$0xff]
        %v1637 = vld [vmem:[%s1 + $0x30] sm:$0xff]
        %v1638 = vld [vmem:[%s1 + $0x38] sm:$0xff]
        %v1639 = vld [vmem:[%s1 + $0x40] sm:$0xff]
        %v1640 = vld [vmem:[%s1 + $0x48] sm:$0xff]
        %v1641 = vld [vmem:[%s1 + $0x50] sm:$0xff]
        %v1642 = vld [vmem:[%s1 + $0x58] sm:$0xff]
        %v1643 = vld [vmem:[%s1 + $0x60] sm:$0xff]
        %v1644 = vld [vmem:[%s1 + $0x68] sm:$0xff]
        %v1645 = vld [vmem:[%s1 + $0x70] sm:$0xff]
        %v1646 = vld [vmem:[%s1 + $0x78] sm:$0xff]
        %v1647 = vld [vmem:[%s1 + $0x80] sm:$0xff]
        %v1648 = vld [vmem:[%s1 + $0x88] sm:$0xff]
        %v1649 = vld [vmem:[%s1 + $0x90] sm:$0xff]
        %v1650 = vld [vmem:[%s1 + $0x98] sm:$0xff]
        %v1651 = vld [vmem:[%s1 + $0xa0] sm:$0xff]
        %v1652 = vld [vmem:[%s1 + $0xa8] sm:$0xff]
        %v1653 = vld [vmem:[%s1 + $0xb0] sm:$0xff]
        %v1654 = vld [vmem:[%s1 + $0xb8] sm:$0xff]
        %v1655 = vld [vmem:[%s1 + $0xc0] sm:$0xff]
        %v1656 = vld [vmem:[%s1 + $0xc8] sm:$0xff]
        %v1657 = vld [vmem:[%s1 + $0xd0] sm:$0xff]
        %v1658 = vld [vmem:[%s1 + $0xd8] sm:$0xff]
        %v1659 = vld [vmem:[%s1 + $0xe0] sm:$0xff]
        %v1660 = vld [vmem:[%s1 + $0xe8] sm:$0xff]
        %v1661 = vld [vmem:[%s1 + $0xf0] sm:$0xff]
        %v1662 = vld [vmem:[%s1 + $0xf8] sm:$0xff]
        %v1663 = vld [vmem:[%s1 + $0x100] sm:$0xff]
        %v1664 = vld [vmem:[%s1 + $0x108] sm:$0xff]
        %v1665 = vld [vmem:[%s1 + $0x110] sm:$0xff]
        %v1666 = vld [vmem:[%s1 + $0x118] sm:$0xff]
        %v1667 = vld [vmem:[#allocation4] sm:$0x1]
        %v1669 = vlaneseq
        %v1670 = vshrl.u32 %v1669, 7
        %v1671 = vsub.s32 0, %v1670
        %v1672 = vrot.slane %v1667, %v1671
        %v1675 = vsel %vm317, %v1537, 0
        %v1678 = vsel %vm317, %v1540, 0
        %v1681 = vsel %vm317, %v1543, 0
        %v1684 = vsel %vm317, %v1546, 0
        %v1687 = vsel %vm317, %v1549, 0
        %v1690 = vsel %vm317, %v1552, 0
        %v1693 = vsel %vm317, %v1555, 0
        %v1696 = vsel %vm317, %v1558, 0
        %v1699 = vsel %vm317, %v1561, 0
        %v1702 = vsel %vm317, %v1564, 0
        %v1705 = vsel %vm317, %v1567, 0
        %v1708 = vsel %vm317, %v1570, 0
        %v1711 = vsel %vm317, %v1573, 0
        %v1714 = vsel %vm317, %v1576, 0
        %v1717 = vsel %vm317, %v1579, 0
        %v1720 = vsel %vm317, %v1582, 0
        %v1723 = vsel %vm317, %v1585, 0
        %v1726 = vsel %vm317, %v1588, 0
        %v1729 = vsel %vm317, %v1591, 0
        %v1732 = vsel %vm317, %v1594, 0
        %v1735 = vsel %vm317, %v1597, 0
        %v1738 = vsel %vm317, %v1600, 0
        %v1741 = vsel %vm317, %v1603, 0
        %v1744 = vsel %vm317, %v1606, 0
        %v1747 = vsel %vm317, %v1609, 0
        %v1750 = vsel %vm317, %v1612, 0
        %v1753 = vsel %vm317, %v1615, 0
        %v1756 = vsel %vm317, %v1618, 0
        %v1759 = vsel %vm317, %v1621, 0
        %v1762 = vsel %vm317, %v1624, 0
        %v1765 = vsel %vm317, %v1627, 0
        %v1768 = vsel %vm317, %v1630, 0
        %1770 = vmatprep.subr.mxu0 0.0
        %1771 = vmatpush1.msra.mxu0 %v1646
        %1772 = vmatprep.subr.mxu0 0.0
        %1773 = vmatpush1.msra.mxu0 %v1645
        %1774 = vmatprep.subr.mxu0 0.0
        %1775 = vmatpush1.msra.mxu0 %v1644
        %1776 = vmatprep.subr.mxu0 0.0
        %1777 = vmatpush1.msra.mxu0 %v1643
        %1778 = vmatprep.subr.mxu0 0.0
        %1779 = vmatpush1.msra.mxu0 %v1642
        %1780 = vmatprep.subr.mxu0 0.0
        %1781 = vmatpush1.msra.mxu0 %v1641
        %1782 = vmatprep.subr.mxu0 0.0
        %1783 = vmatpush1.msra.mxu0 %v1640
        %1784 = vmatprep.subr.mxu0 0.0
        %1785 = vmatpush1.msra.mxu0 %v1639
        %1786 = vmatprep.subr.mxu0 0.0
        %1787 = vmatpush1.msra.mxu0 %v1638
        %1788 = vmatprep.subr.mxu0 0.0
        %1789 = vmatpush1.msra.mxu0 %v1637
        %1790 = vmatprep.subr.mxu0 0.0
        %1791 = vmatpush1.msra.mxu0 %v1636
        %1792 = vmatprep.subr.mxu0 0.0
        %1793 = vmatpush1.msra.mxu0 %v1635
        %1794 = vmatprep.subr.mxu0 0.0
        %1795 = vmatpush1.msra.mxu0 %v1634
        %1796 = vmatprep.subr.mxu0 0.0
        %1797 = vmatpush1.msra.mxu0 %v1633
        %1798 = vmatprep.subr.mxu0 0.0
        %1799 = vmatpush1.msra.mxu0 %v1632
        %1800 = vmatprep.subr.mxu0 0.0
        %1801 = vmatpush1.msra.mxu0 %v1631
        %1802 = vmatprep.subr.mxu0 0.0
        %1803 = vmatpush2.msra.mxu0 %v1662
        %1804 = vmatprep.subr.mxu0 0.0
        %1805 = vmatpush2.msra.mxu0 %v1661
        %1806 = vmatprep.subr.mxu0 0.0
        %1807 = vmatpush2.msra.mxu0 %v1660
        %1808 = vmatprep.subr.mxu0 0.0
        %1809 = vmatpush2.msra.mxu0 %v1659
        %1810 = vmatprep.subr.mxu0 0.0
        %1811 = vmatpush2.msra.mxu0 %v1658
        %1812 = vmatprep.subr.mxu0 0.0
        %1813 = vmatpush2.msra.mxu0 %v1657
        %1814 = vmatprep.subr.mxu0 0.0
        %1815 = vmatpush2.msra.mxu0 %v1656
        %1816 = vmatprep.subr.mxu0 0.0
        %1817 = vmatpush2.msra.mxu0 %v1655
        %1818 = vmatprep.subr.mxu0 0.0
        %1819 = vmatpush2.msra.mxu0 %v1654
        %1820 = vmatprep.subr.mxu0 0.0
        %1821 = vmatpush2.msra.mxu0 %v1653
        %1822 = vmatprep.subr.mxu0 0.0
        %1823 = vmatpush2.msra.mxu0 %v1652
        %1824 = vmatprep.subr.mxu0 0.0
        %1825 = vmatpush2.msra.mxu0 %v1651
        %1826 = vmatprep.subr.mxu0 0.0
        %1827 = vmatpush2.msra.mxu0 %v1650
        %1828 = vmatprep.subr.mxu0 0.0
        %1829 = vmatpush2.msra.mxu0 %v1649
        %1830 = vmatprep.subr.mxu0 0.0
        %1831 = vmatpush2.msra.mxu0 %v1648
        %1832 = vmatprep.subr.mxu0 0.0
        %1833 = vmatpush2.msra.mxu0 %v1647
        %1834 = vmatprep.mubr.f32.mxu0 %v1536
        %1835 = vmatmul.mubr.f32.gmra.mxu0 %v1535
        %v1836 = vpop.f32.mrf.mxu0
        %v1837 = vadd.f32 %v1672, %v1836
        %v1838 = vpop.f32.mrf.mxu0
        %1839 = vmatprep.mubr.f32.mxu0 %v1539
        %1840 = vmatmul.mubr.f32.gmra.mxu0 %v1538
        %v1841 = vpop.f32.mrf.mxu0
        %v1842 = vadd.f32 %v1672, %v1841
        %v1843 = vpop.f32.mrf.mxu0
        %1844 = vmatprep.mubr.f32.mxu0 %v1542
        %1845 = vmatmul.mubr.f32.gmra.mxu0 %v1541
        %v1846 = vpop.f32.mrf.mxu0
        %v1847 = vadd.f32 %v1672, %v1846
        %v1848 = vpop.f32.mrf.mxu0
        %1849 = vmatprep.mubr.f32.mxu0 %v1545
        %1850 = vmatmul.mubr.f32.gmra.mxu0 %v1544
        %v1851 = vpop.f32.mrf.mxu0
        %v1852 = vadd.f32 %v1672, %v1851
        %v1853 = vpop.f32.mrf.mxu0
        %1854 = vmatprep.mubr.f32.mxu0 %v1548
        %1855 = vmatmul.mubr.f32.gmra.mxu0 %v1547
        %v1856 = vpop.f32.mrf.mxu0
        %v1857 = vadd.f32 %v1672, %v1856
        %v1858 = vpop.f32.mrf.mxu0
        %1859 = vmatprep.mubr.f32.mxu0 %v1551
        %1860 = vmatmul.mubr.f32.gmra.mxu0 %v1550
        %v1861 = vpop.f32.mrf.mxu0
        %v1862 = vadd.f32 %v1672, %v1861
        %v1863 = vpop.f32.mrf.mxu0
        %1864 = vmatprep.mubr.f32.mxu0 %v1554
        %1865 = vmatmul.mubr.f32.gmra.mxu0 %v1553
        %v1866 = vpop.f32.mrf.mxu0
        %v1867 = vadd.f32 %v1672, %v1866
        %v1868 = vpop.f32.mrf.mxu0
        %1869 = vmatprep.mubr.f32.mxu0 %v1557
        %1870 = vmatmul.mubr.f32.gmra.mxu0 %v1556
        %v1871 = vpop.f32.mrf.mxu0
        %v1872 = vadd.f32 %v1672, %v1871
        %v1873 = vpop.f32.mrf.mxu0
        %1874 = vmatprep.mubr.f32.mxu0 %v1560
        %1875 = vmatmul.mubr.f32.gmra.mxu0 %v1559
        %v1876 = vpop.f32.mrf.mxu0
        %v1877 = vadd.f32 %v1672, %v1876
        %v1878 = vpop.f32.mrf.mxu0
        %1879 = vmatprep.mubr.f32.mxu0 %v1563
        %1880 = vmatmul.mubr.f32.gmra.mxu0 %v1562
        %v1881 = vpop.f32.mrf.mxu0
        %v1882 = vadd.f32 %v1672, %v1881
        %v1883 = vpop.f32.mrf.mxu0
        %1884 = vmatprep.mubr.f32.mxu0 %v1566
        %1885 = vmatmul.mubr.f32.gmra.mxu0 %v1565
        %v1886 = vpop.f32.mrf.mxu0
        %v1887 = vadd.f32 %v1672, %v1886
        %v1888 = vpop.f32.mrf.mxu0
        %1889 = vmatprep.mubr.f32.mxu0 %v1569
        %1890 = vmatmul.mubr.f32.gmra.mxu0 %v1568
        %v1891 = vpop.f32.mrf.mxu0
        %v1892 = vadd.f32 %v1672, %v1891
        %v1893 = vpop.f32.mrf.mxu0
        %1894 = vmatprep.mubr.f32.mxu0 %v1572
        %1895 = vmatmul.mubr.f32.gmra.mxu0 %v1571
        %v1896 = vpop.f32.mrf.mxu0
        %v1897 = vadd.f32 %v1672, %v1896
        %v1898 = vpop.f32.mrf.mxu0
        %1899 = vmatprep.mubr.f32.mxu0 %v1575
        %1900 = vmatmul.mubr.f32.gmra.mxu0 %v1574
        %v1901 = vpop.f32.mrf.mxu0
        %v1902 = vadd.f32 %v1672, %v1901
        %v1903 = vpop.f32.mrf.mxu0
        %1904 = vmatprep.mubr.f32.mxu0 %v1578
        %1905 = vmatmul.mubr.f32.gmra.mxu0 %v1577
        %v1906 = vpop.f32.mrf.mxu0
        %v1907 = vadd.f32 %v1672, %v1906
        %v1908 = vpop.f32.mrf.mxu0
        %1909 = vmatprep.mubr.f32.mxu0 %v1581
        %1910 = vmatmul.mubr.f32.gmra.mxu0 %v1580
        %v1911 = vpop.f32.mrf.mxu0
        %v1912 = vadd.f32 %v1672, %v1911
        %v1913 = vpop.f32.mrf.mxu0
        %1914 = vmatprep.mubr.f32.mxu0 %v1584
        %1915 = vmatmul.mubr.f32.gmra.mxu0 %v1583
        %v1916 = vpop.f32.mrf.mxu0
        %v1917 = vadd.f32 %v1672, %v1916
        %v1918 = vpop.f32.mrf.mxu0
        %1919 = vmatprep.mubr.f32.mxu0 %v1587
        %1920 = vmatmul.mubr.f32.gmra.mxu0 %v1586
        %v1921 = vpop.f32.mrf.mxu0
        %v1922 = vadd.f32 %v1672, %v1921
        %v1923 = vpop.f32.mrf.mxu0
        %1924 = vmatprep.mubr.f32.mxu0 %v1590
        %1925 = vmatmul.mubr.f32.gmra.mxu0 %v1589
        %v1926 = vpop.f32.mrf.mxu0
        %v1927 = vadd.f32 %v1672, %v1926
        %v1928 = vpop.f32.mrf.mxu0
        %1929 = vmatprep.mubr.f32.mxu0 %v1593
        %1930 = vmatmul.mubr.f32.gmra.mxu0 %v1592
        %v1931 = vpop.f32.mrf.mxu0
        %v1932 = vadd.f32 %v1672, %v1931
        %v1933 = vpop.f32.mrf.mxu0
        %1934 = vmatprep.mubr.f32.mxu0 %v1596
        %1935 = vmatmul.mubr.f32.gmra.mxu0 %v1595
        %v1936 = vpop.f32.mrf.mxu0
        %v1937 = vadd.f32 %v1672, %v1936
        %v1938 = vpop.f32.mrf.mxu0
        %1939 = vmatprep.mubr.f32.mxu0 %v1599
        %1940 = vmatmul.mubr.f32.gmra.mxu0 %v1598
        %v1941 = vpop.f32.mrf.mxu0
        %v1942 = vadd.f32 %v1672, %v1941
        %v1943 = vpop.f32.mrf.mxu0
        %1944 = vmatprep.mubr.f32.mxu0 %v1602
        %1945 = vmatmul.mubr.f32.gmra.mxu0 %v1601
        %v1946 = vpop.f32.mrf.mxu0
        %v1947 = vadd.f32 %v1672, %v1946
        %v1948 = vpop.f32.mrf.mxu0
        %1949 = vmatprep.mubr.f32.mxu0 %v1605
        %1950 = vmatmul.mubr.f32.gmra.mxu0 %v1604
        %v1951 = vpop.f32.mrf.mxu0
        %v1952 = vadd.f32 %v1672, %v1951
        %v1953 = vpop.f32.mrf.mxu0
        %1954 = vmatprep.mubr.f32.mxu0 %v1608
        %1955 = vmatmul.mubr.f32.gmra.mxu0 %v1607
        %v1956 = vpop.f32.mrf.mxu0
        %v1957 = vadd.f32 %v1672, %v1956
        %v1958 = vpop.f32.mrf.mxu0
        %1959 = vmatprep.mubr.f32.mxu0 %v1611
        %1960 = vmatmul.mubr.f32.gmra.mxu0 %v1610
        %v1961 = vpop.f32.mrf.mxu0
        %v1962 = vadd.f32 %v1672, %v1961
        %v1963 = vpop.f32.mrf.mxu0
        %1964 = vmatprep.mubr.f32.mxu0 %v1614
        %1965 = vmatmul.mubr.f32.gmra.mxu0 %v1613
        %v1966 = vpop.f32.mrf.mxu0
        %v1967 = vadd.f32 %v1672, %v1966
        %v1968 = vpop.f32.mrf.mxu0
        %1969 = vmatprep.mubr.f32.mxu0 %v1617
        %1970 = vmatmul.mubr.f32.gmra.mxu0 %v1616
        %v1971 = vpop.f32.mrf.mxu0
        %v1972 = vadd.f32 %v1672, %v1971
        %v1973 = vpop.f32.mrf.mxu0
        %1974 = vmatprep.mubr.f32.mxu0 %v1620
        %1975 = vmatmul.mubr.f32.gmra.mxu0 %v1619
        %v1976 = vpop.f32.mrf.mxu0
        %v1977 = vadd.f32 %v1672, %v1976
        %v1978 = vpop.f32.mrf.mxu0
        %1979 = vmatprep.mubr.f32.mxu0 %v1623
        %1980 = vmatmul.mubr.f32.gmra.mxu0 %v1622
        %v1981 = vpop.f32.mrf.mxu0
        %v1982 = vadd.f32 %v1672, %v1981
        %v1983 = vpop.f32.mrf.mxu0
        %1984 = vmatprep.mubr.f32.mxu0 %v1626
        %1985 = vmatmul.mubr.f32.gmra.mxu0 %v1625
        %v1986 = vpop.f32.mrf.mxu0
        %v1987 = vadd.f32 %v1672, %v1986
        %v1988 = vpop.f32.mrf.mxu0
        %1989 = vmatprep.mubr.f32.mxu0 %v1629
        %1990 = vmatmul.mubr.f32.gmra.mxu0 %v1628
        %v1991 = vpop.f32.mrf.mxu0
        %v1992 = vadd.f32 %v1672, %v1991
        %v1993 = vpop.f32.mrf.mxu0
        %1994 = vdwg.mxu0
        %1995 = vmatprep.subr.mxu0 0.0
        %1996 = vmatpush1.msra.mxu0 0.0
        %1997 = vmatprep.subr.mxu0 0.0
        %1998 = vmatpush1.msra.mxu0 0.0
        %1999 = vmatprep.subr.mxu0 0.0
        %2000 = vmatpush1.msra.mxu0 0.0
        %2001 = vmatprep.subr.mxu0 0.0
        %2002 = vmatpush1.msra.mxu0 0.0
        %2003 = vmatprep.subr.mxu0 0.0
        %2004 = vmatpush1.msra.mxu0 0.0
        %2005 = vmatprep.subr.mxu0 0.0
        %2006 = vmatpush1.msra.mxu0 0.0
        %2007 = vmatprep.subr.mxu0 0.0
        %2008 = vmatpush1.msra.mxu0 0.0
        %2009 = vmatprep.subr.mxu0 0.0
        %2010 = vmatpush1.msra.mxu0 0.0
        %2011 = vmatprep.subr.mxu0 0.0
        %2012 = vmatpush1.msra.mxu0 0.0
        %2013 = vmatprep.subr.mxu0 0.0
        %2014 = vmatpush1.msra.mxu0 0.0
        %2015 = vmatprep.subr.mxu0 0.0
        %2016 = vmatpush1.msra.mxu0 0.0
        %2017 = vmatprep.subr.mxu0 0.0
        %2018 = vmatpush1.msra.mxu0 0.0
        %2019 = vmatprep.subr.mxu0 0.0
        %2020 = vmatpush1.msra.mxu0 %v1666
        %2021 = vmatprep.subr.mxu0 0.0
        %2022 = vmatpush1.msra.mxu0 %v1665
        %2023 = vmatprep.subr.mxu0 0.0
        %2024 = vmatpush1.msra.mxu0 %v1664
        %2025 = vmatprep.subr.mxu0 0.0
        %2026 = vmatpush1.msra.mxu0 %v1663
        %2027 = vmatprep.subr.mxu0 0.0
        %2028 = vmatpush2.msra.mxu0 0.0
        %2029 = vmatprep.subr.mxu0 0.0
        %2030 = vmatpush2.msra.mxu0 0.0
        %2031 = vmatprep.subr.mxu0 0.0
        %2032 = vmatpush2.msra.mxu0 0.0
        %2033 = vmatprep.subr.mxu0 0.0
        %2034 = vmatpush2.msra.mxu0 0.0
        %2035 = vmatprep.subr.mxu0 0.0
        %2036 = vmatpush2.msra.mxu0 0.0
        %2037 = vmatprep.subr.mxu0 0.0
        %2038 = vmatpush2.msra.mxu0 0.0
        %2039 = vmatprep.subr.mxu0 0.0
        %2040 = vmatpush2.msra.mxu0 0.0
        %2041 = vmatprep.subr.mxu0 0.0
        %2042 = vmatpush2.msra.mxu0 0.0
        %2043 = vmatprep.subr.mxu0 0.0
        %2044 = vmatpush2.msra.mxu0 0.0
        %2045 = vmatprep.subr.mxu0 0.0
        %2046 = vmatpush2.msra.mxu0 0.0
        %2047 = vmatprep.subr.mxu0 0.0
        %2048 = vmatpush2.msra.mxu0 0.0
        %2049 = vmatprep.subr.mxu0 0.0
        %2050 = vmatpush2.msra.mxu0 0.0
        %2051 = vmatprep.subr.mxu0 0.0
        %2052 = vmatpush2.msra.mxu0 0.0
        %2053 = vmatprep.subr.mxu0 0.0
        %2054 = vmatpush2.msra.mxu0 0.0
        %2055 = vmatprep.subr.mxu0 0.0
        %2056 = vmatpush2.msra.mxu0 0.0
        %2057 = vmatprep.subr.mxu0 0.0
        %2058 = vmatpush2.msra.mxu0 0.0
        %2059 = vmatprep.mubr.f32.mxu0 0.0
        %2060 = vmatmul.mubr.f32.gmra.mxu0 %v1675
        %v2061 = vpop.f32.mrf.mxu0
        %v2062 = vadd.f32 %v1837, %v2061
        %v2063 = vpop.f32.mrf.mxu0
        %2064 = vmatprep.mubr.f32.mxu0 0.0
        %2065 = vmatmul.mubr.f32.gmra.mxu0 %v1678
        %v2066 = vpop.f32.mrf.mxu0
        %v2067 = vadd.f32 %v1842, %v2066
        %v2068 = vpop.f32.mrf.mxu0
        %2069 = vmatprep.mubr.f32.mxu0 0.0
        %2070 = vmatmul.mubr.f32.gmra.mxu0 %v1681
        %v2071 = vpop.f32.mrf.mxu0
        %v2072 = vadd.f32 %v1847, %v2071
        %v2073 = vpop.f32.mrf.mxu0
        %2074 = vmatprep.mubr.f32.mxu0 0.0
        %2075 = vmatmul.mubr.f32.gmra.mxu0 %v1684
        %v2076 = vpop.f32.mrf.mxu0
        %v2077 = vadd.f32 %v1852, %v2076
        %v2078 = vpop.f32.mrf.mxu0
        %2079 = vmatprep.mubr.f32.mxu0 0.0
        %2080 = vmatmul.mubr.f32.gmra.mxu0 %v1687
        %v2081 = vpop.f32.mrf.mxu0
        %v2082 = vadd.f32 %v1857, %v2081
        %v2083 = vpop.f32.mrf.mxu0
        %2084 = vmatprep.mubr.f32.mxu0 0.0
        %2085 = vmatmul.mubr.f32.gmra.mxu0 %v1690
        %v2086 = vpop.f32.mrf.mxu0
        %v2087 = vadd.f32 %v1862, %v2086
        %v2088 = vpop.f32.mrf.mxu0
        %2089 = vmatprep.mubr.f32.mxu0 0.0
        %2090 = vmatmul.mubr.f32.gmra.mxu0 %v1693
        %v2091 = vpop.f32.mrf.mxu0
        %v2092 = vadd.f32 %v1867, %v2091
        %v2093 = vpop.f32.mrf.mxu0
        %2094 = vmatprep.mubr.f32.mxu0 0.0
        %2095 = vmatmul.mubr.f32.gmra.mxu0 %v1696
        %v2096 = vpop.f32.mrf.mxu0
        %v2097 = vadd.f32 %v1872, %v2096
        %v2098 = vpop.f32.mrf.mxu0
        %2099 = vmatprep.mubr.f32.mxu0 0.0
        %2100 = vmatmul.mubr.f32.gmra.mxu0 %v1699
        %v2101 = vpop.f32.mrf.mxu0
        %v2102 = vadd.f32 %v1877, %v2101
        %v2103 = vpop.f32.mrf.mxu0
        %2104 = vmatprep.mubr.f32.mxu0 0.0
        %2105 = vmatmul.mubr.f32.gmra.mxu0 %v1702
        %v2106 = vpop.f32.mrf.mxu0
        %v2107 = vadd.f32 %v1882, %v2106
        %v2108 = vpop.f32.mrf.mxu0
        %2109 = vmatprep.mubr.f32.mxu0 0.0
        %2110 = vmatmul.mubr.f32.gmra.mxu0 %v1705
        %v2111 = vpop.f32.mrf.mxu0
        %v2112 = vadd.f32 %v1887, %v2111
        %v2113 = vpop.f32.mrf.mxu0
        %2114 = vmatprep.mubr.f32.mxu0 0.0
        %2115 = vmatmul.mubr.f32.gmra.mxu0 %v1708
        %v2116 = vpop.f32.mrf.mxu0
        %v2117 = vadd.f32 %v1892, %v2116
        %v2118 = vpop.f32.mrf.mxu0
        %2119 = vmatprep.mubr.f32.mxu0 0.0
        %2120 = vmatmul.mubr.f32.gmra.mxu0 %v1711
        %v2121 = vpop.f32.mrf.mxu0
        %v2122 = vadd.f32 %v1897, %v2121
        %v2123 = vpop.f32.mrf.mxu0
        %2124 = vmatprep.mubr.f32.mxu0 0.0
        %2125 = vmatmul.mubr.f32.gmra.mxu0 %v1714
        %v2126 = vpop.f32.mrf.mxu0
        %v2127 = vadd.f32 %v1902, %v2126
        %v2128 = vpop.f32.mrf.mxu0
        %2129 = vmatprep.mubr.f32.mxu0 0.0
        %2130 = vmatmul.mubr.f32.gmra.mxu0 %v1717
        %v2131 = vpop.f32.mrf.mxu0
        %v2132 = vadd.f32 %v1907, %v2131
        %v2133 = vpop.f32.mrf.mxu0
        %2134 = vmatprep.mubr.f32.mxu0 0.0
        %2135 = vmatmul.mubr.f32.gmra.mxu0 %v1720
        %v2136 = vpop.f32.mrf.mxu0
        %v2137 = vadd.f32 %v1912, %v2136
        %v2138 = vpop.f32.mrf.mxu0
        %2139 = vmatprep.mubr.f32.mxu0 0.0
        %2140 = vmatmul.mubr.f32.gmra.mxu0 %v1723
        %v2141 = vpop.f32.mrf.mxu0
        %v2142 = vadd.f32 %v1917, %v2141
        %v2143 = vpop.f32.mrf.mxu0
        %2144 = vmatprep.mubr.f32.mxu0 0.0
        %2145 = vmatmul.mubr.f32.gmra.mxu0 %v1726
        %v2146 = vpop.f32.mrf.mxu0
        %v2147 = vadd.f32 %v1922, %v2146
        %v2148 = vpop.f32.mrf.mxu0
        %2149 = vmatprep.mubr.f32.mxu0 0.0
        %2150 = vmatmul.mubr.f32.gmra.mxu0 %v1729
        %v2151 = vpop.f32.mrf.mxu0
        %v2152 = vadd.f32 %v1927, %v2151
        %v2153 = vpop.f32.mrf.mxu0
        %2154 = vmatprep.mubr.f32.mxu0 0.0
        %2155 = vmatmul.mubr.f32.gmra.mxu0 %v1732
        %v2156 = vpop.f32.mrf.mxu0
        %v2157 = vadd.f32 %v1932, %v2156
        %v2158 = vpop.f32.mrf.mxu0
        %2159 = vmatprep.mubr.f32.mxu0 0.0
        %2160 = vmatmul.mubr.f32.gmra.mxu0 %v1735
        %v2161 = vpop.f32.mrf.mxu0
        %v2162 = vadd.f32 %v1937, %v2161
        %v2163 = vpop.f32.mrf.mxu0
        %2164 = vmatprep.mubr.f32.mxu0 0.0
        %2165 = vmatmul.mubr.f32.gmra.mxu0 %v1738
        %v2166 = vpop.f32.mrf.mxu0
        %v2167 = vadd.f32 %v1942, %v2166
        %v2168 = vpop.f32.mrf.mxu0
        %2169 = vmatprep.mubr.f32.mxu0 0.0
        %2170 = vmatmul.mubr.f32.gmra.mxu0 %v1741
        %v2171 = vpop.f32.mrf.mxu0
        %v2172 = vadd.f32 %v1947, %v2171
        %v2173 = vpop.f32.mrf.mxu0
        %2174 = vmatprep.mubr.f32.mxu0 0.0
        %2175 = vmatmul.mubr.f32.gmra.mxu0 %v1744
        %v2176 = vpop.f32.mrf.mxu0
        %v2177 = vadd.f32 %v1952, %v2176
        %v2178 = vpop.f32.mrf.mxu0
        %2179 = vmatprep.mubr.f32.mxu0 0.0
        %2180 = vmatmul.mubr.f32.gmra.mxu0 %v1747
        %v2181 = vpop.f32.mrf.mxu0
        %v2182 = vadd.f32 %v1957, %v2181
        %v2183 = vpop.f32.mrf.mxu0
        %2184 = vmatprep.mubr.f32.mxu0 0.0
        %2185 = vmatmul.mubr.f32.gmra.mxu0 %v1750
        %v2186 = vpop.f32.mrf.mxu0
        %v2187 = vadd.f32 %v1962, %v2186
        %v2188 = vpop.f32.mrf.mxu0
        %2189 = vmatprep.mubr.f32.mxu0 0.0
        %2190 = vmatmul.mubr.f32.gmra.mxu0 %v1753
        %v2191 = vpop.f32.mrf.mxu0
        %v2192 = vadd.f32 %v1967, %v2191
        %v2193 = vpop.f32.mrf.mxu0
        %2194 = vmatprep.mubr.f32.mxu0 0.0
        %2195 = vmatmul.mubr.f32.gmra.mxu0 %v1756
        %v2196 = vpop.f32.mrf.mxu0
        %v2197 = vadd.f32 %v1972, %v2196
        %v2198 = vpop.f32.mrf.mxu0
        %2199 = vmatprep.mubr.f32.mxu0 0.0
        %2200 = vmatmul.mubr.f32.gmra.mxu0 %v1759
        %v2201 = vpop.f32.mrf.mxu0
        %v2202 = vadd.f32 %v1977, %v2201
        %v2203 = vpop.f32.mrf.mxu0
        %2204 = vmatprep.mubr.f32.mxu0 0.0
        %2205 = vmatmul.mubr.f32.gmra.mxu0 %v1762
        %v2206 = vpop.f32.mrf.mxu0
        %v2207 = vadd.f32 %v1982, %v2206
        %v2208 = vpop.f32.mrf.mxu0
        %2209 = vmatprep.mubr.f32.mxu0 0.0
        %2210 = vmatmul.mubr.f32.gmra.mxu0 %v1765
        %v2211 = vpop.f32.mrf.mxu0
        %v2212 = vadd.f32 %v1987, %v2211
        %v2213 = vpop.f32.mrf.mxu0
        %2214 = vmatprep.mubr.f32.mxu0 0.0
        %2215 = vmatmul.mubr.f32.gmra.mxu0 %v1768
        %v2216 = vpop.f32.mrf.mxu0
        %v2217 = vadd.f32 %v1992, %v2216
        %v2218 = vpop.f32.mrf.mxu0
        %2219 = vdwg.mxu0
        %v2220 = vmax.f32 %v2062, 0.0
        %v2221 = vmax.f32 %v2067, 0.0
        %v2222 = vmax.f32 %v2072, 0.0
        %v2223 = vmax.f32 %v2077, 0.0
        %v2224 = vmax.f32 %v2082, 0.0
        %v2225 = vmax.f32 %v2087, 0.0
        %v2226 = vmax.f32 %v2092, 0.0
        %v2227 = vmax.f32 %v2097, 0.0
        %v2228 = vmax.f32 %v2102, 0.0
        %v2229 = vmax.f32 %v2107, 0.0
        %v2230 = vmax.f32 %v2112, 0.0
        %v2231 = vmax.f32 %v2117, 0.0
        %v2232 = vmax.f32 %v2122, 0.0
        %v2233 = vmax.f32 %v2127, 0.0
        %v2234 = vmax.f32 %v2132, 0.0
        %v2235 = vmax.f32 %v2137, 0.0
        %v2236 = vmax.f32 %v2142, 0.0
        %v2237 = vmax.f32 %v2147, 0.0
        %v2238 = vmax.f32 %v2152, 0.0
        %v2239 = vmax.f32 %v2157, 0.0
        %v2240 = vmax.f32 %v2162, 0.0
        %v2241 = vmax.f32 %v2167, 0.0
        %v2242 = vmax.f32 %v2172, 0.0
        %v2243 = vmax.f32 %v2177, 0.0
        %v2244 = vmax.f32 %v2182, 0.0
        %v2245 = vmax.f32 %v2187, 0.0
        %v2246 = vmax.f32 %v2192, 0.0
        %v2247 = vmax.f32 %v2197, 0.0
        %v2248 = vmax.f32 %v2202, 0.0
        %v2249 = vmax.f32 %v2207, 0.0
        %v2250 = vmax.f32 %v2212, 0.0
        %v2251 = vmax.f32 %v2217, 0.0
        %2252 = vst.msk [vmem:[%s422 + $0x8] sm:$0xff] %vm317, %v2220
        %2253 = vst.msk [vmem:[%s422 + $0x10] sm:$0xff] %vm317, %v2221
        %2254 = vst.msk [vmem:[%s422 + $0x28] sm:$0xff] %vm317, %v2222
        %2255 = vst.msk [vmem:[%s422 + $0x30] sm:$0xff] %vm317, %v2223
        %2256 = vst.msk [vmem:[%s422 + $0x48] sm:$0xff] %vm317, %v2224
        %2257 = vst.msk [vmem:[%s422 + $0x50] sm:$0xff] %vm317, %v2225
        %2258 = vst.msk [vmem:[%s422 + $0x68] sm:$0xff] %vm317, %v2226
        %2259 = vst.msk [vmem:[%s422 + $0x70] sm:$0xff] %vm317, %v2227
        %2260 = vst.msk [vmem:[%s422 + $0x88] sm:$0xff] %vm317, %v2228
        %2261 = vst.msk [vmem:[%s422 + $0x90] sm:$0xff] %vm317, %v2229
        %2262 = vst.msk [vmem:[%s422 + $0xa8] sm:$0xff] %vm317, %v2230
        %2263 = vst.msk [vmem:[%s422 + $0xb0] sm:$0xff] %vm317, %v2231
        %2264 = vst.msk [vmem:[%s422 + $0xc8] sm:$0xff] %vm317, %v2232
        %2265 = vst.msk [vmem:[%s422 + $0xd0] sm:$0xff] %vm317, %v2233
        %2266 = vst.msk [vmem:[%s422 + $0xe8] sm:$0xff] %vm317, %v2234
        %2267 = vst.msk [vmem:[%s422 + $0xf0] sm:$0xff] %vm317, %v2235
        %2268 = vst.msk [vmem:[%s422 + $0x108] sm:$0xff] %vm317, %v2236
        %2269 = vst.msk [vmem:[%s422 + $0x110] sm:$0xff] %vm317, %v2237
        %2270 = vst.msk [vmem:[%s422 + $0x128] sm:$0xff] %vm317, %v2238
        %2271 = vst.msk [vmem:[%s422 + $0x130] sm:$0xff] %vm317, %v2239
        %2272 = vst.msk [vmem:[%s422 + $0x148] sm:$0xff] %vm317, %v2240
        %2273 = vst.msk [vmem:[%s422 + $0x150] sm:$0xff] %vm317, %v2241
        %2274 = vst.msk [vmem:[%s422 + $0x168] sm:$0xff] %vm317, %v2242
        %2275 = vst.msk [vmem:[%s422 + $0x170] sm:$0xff] %vm317, %v2243
        %2276 = vst.msk [vmem:[%s422 + $0x188] sm:$0xff] %vm317, %v2244
        %2277 = vst.msk [vmem:[%s422 + $0x190] sm:$0xff] %vm317, %v2245
        %2278 = vst.msk [vmem:[%s422 + $0x1a8] sm:$0xff] %vm317, %v2246
        %2279 = vst.msk [vmem:[%s422 + $0x1b0] sm:$0xff] %vm317, %v2247
        %2280 = vst.msk [vmem:[%s422 + $0x1c8] sm:$0xff] %vm317, %v2248
        %2281 = vst.msk [vmem:[%s422 + $0x1d0] sm:$0xff] %vm317, %v2249
        %2282 = vst.msk [vmem:[%s422 + $0x1e8] sm:$0xff] %vm317, %v2250
        %2283 = vst.msk [vmem:[%s422 + $0x1f0] sm:$0xff] %vm317, %v2251
        %v2284 = vld [vmem:[#allocation2 + $0x7] sm:$0xff]
        %v2285 = vld [vmem:[#allocation2 + $0xf] sm:$0xff]
        %v2286 = vld [vmem:[#allocation2 + $0x27] sm:$0xff]
        %v2287 = vld [vmem:[#allocation2 + $0x2f] sm:$0xff]
        %v2288 = vld [vmem:[#allocation2 + $0x47] sm:$0xff]
        %v2289 = vld [vmem:[#allocation2 + $0x4f] sm:$0xff]
        %v2290 = vld [vmem:[#allocation2 + $0x67] sm:$0xff]
        %v2291 = vld [vmem:[#allocation2 + $0x6f] sm:$0xff]
        %v2292 = vld [vmem:[#allocation2 + $0x87] sm:$0xff]
        %v2293 = vld [vmem:[#allocation2 + $0x8f] sm:$0xff]
        %v2294 = vld [vmem:[#allocation2 + $0xa7] sm:$0xff]
        %v2295 = vld [vmem:[#allocation2 + $0xaf] sm:$0xff]
        %v2296 = vld [vmem:[#allocation2 + $0xc7] sm:$0xff]
        %v2297 = vld [vmem:[#allocation2 + $0xcf] sm:$0xff]
        %v2298 = vld [vmem:[#allocation2 + $0xe7] sm:$0xff]
        %v2299 = vld [vmem:[#allocation2 + $0xef] sm:$0xff]
        %v2300 = vld [vmem:[#allocation2 + $0x107] sm:$0xff]
        %v2301 = vld [vmem:[#allocation2 + $0x10f] sm:$0xff]
        %v2302 = vld [vmem:[#allocation2 + $0x127] sm:$0xff]
        %v2303 = vld [vmem:[#allocation2 + $0x12f] sm:$0xff]
        %v2304 = vld [vmem:[#allocation2 + $0x147] sm:$0xff]
        %v2305 = vld [vmem:[#allocation2 + $0x14f] sm:$0xff]
        %v2306 = vld [vmem:[#allocation2 + $0x167] sm:$0xff]
        %v2307 = vld [vmem:[#allocation2 + $0x16f] sm:$0xff]
        %v2308 = vld [vmem:[#allocation2 + $0x187] sm:$0xff]
        %v2309 = vld [vmem:[#allocation2 + $0x18f] sm:$0xff]
        %v2310 = vld [vmem:[#allocation2 + $0x1a7] sm:$0xff]
        %v2311 = vld [vmem:[#allocation2 + $0x1af] sm:$0xff]
        %v2312 = vld [vmem:[#allocation2 + $0x1c7] sm:$0xff]
        %v2313 = vld [vmem:[#allocation2 + $0x1cf] sm:$0xff]
        %v2314 = vld [vmem:[#allocation2 + $0x1e7] sm:$0xff]
        %v2315 = vld [vmem:[#allocation2 + $0x1ef] sm:$0xff]
        %v2316 = vld [vmem:[#allocation2 + $0x207] sm:$0xff]
        %v2317 = vld [vmem:[#allocation2 + $0x20f] sm:$0xff]
        %v2318 = vld [vmem:[#allocation2 + $0x227] sm:$0xff]
        %v2319 = vld [vmem:[#allocation2 + $0x22f] sm:$0xff]
        %2320 = vst.msk [vmem:[#allocation3] sm:$0xff] %vm317, %v2284
        %2321 = vst.msk [vmem:[#allocation3 + $0x18] sm:$0xff] %vm317, %v2285
        %2322 = vst.msk [vmem:[#allocation3 + $0x30] sm:$0xff] %vm317, %v2286
        %2323 = vst.msk [vmem:[#allocation3 + $0x48] sm:$0xff] %vm317, %v2287
        %2324 = vst.msk [vmem:[#allocation3 + $0x60] sm:$0xff] %vm317, %v2288
        %2325 = vst.msk [vmem:[#allocation3 + $0x78] sm:$0xff] %vm317, %v2289
        %2326 = vst.msk [vmem:[#allocation3 + $0x90] sm:$0xff] %vm317, %v2290
        %2327 = vst.msk [vmem:[#allocation3 + $0xa8] sm:$0xff] %vm317, %v2291
        %2328 = vst.msk [vmem:[#allocation3 + $0xc0] sm:$0xff] %vm317, %v2292
        %2329 = vst.msk [vmem:[#allocation3 + $0xd8] sm:$0xff] %vm317, %v2293
        %2330 = vst.msk [vmem:[#allocation3 + $0xf0] sm:$0xff] %vm317, %v2294
        %2331 = vst.msk [vmem:[#allocation3 + $0x108] sm:$0xff] %vm317, %v2295
        %2332 = vst.msk [vmem:[#allocation3 + $0x120] sm:$0xff] %vm317, %v2296
        %2333 = vst.msk [vmem:[#allocation3 + $0x138] sm:$0xff] %vm317, %v2297
        %2334 = vst.msk [vmem:[#allocation3 + $0x150] sm:$0xff] %vm317, %v2298
        %2335 = vst.msk [vmem:[#allocation3 + $0x168] sm:$0xff] %vm317, %v2299
        %2336 = vst.msk [vmem:[#allocation3 + $0x180] sm:$0xff] %vm317, %v2300
        %2337 = vst.msk [vmem:[#allocation3 + $0x198] sm:$0xff] %vm317, %v2301
        %2338 = vst.msk [vmem:[#allocation3 + $0x1b0] sm:$0xff] %vm317, %v2302
        %2339 = vst.msk [vmem:[#allocation3 + $0x1c8] sm:$0xff] %vm317, %v2303
        %2340 = vst.msk [vmem:[#allocation3 + $0x1e0] sm:$0xff] %vm317, %v2304
        %2341 = vst.msk [vmem:[#allocation3 + $0x1f8] sm:$0xff] %vm317, %v2305
        %2342 = vst.msk [vmem:[#allocation3 + $0x210] sm:$0xff] %vm317, %v2306
        %2343 = vst.msk [vmem:[#allocation3 + $0x228] sm:$0xff] %vm317, %v2307
        %2344 = vst.msk [vmem:[#allocation3 + $0x240] sm:$0xff] %vm317, %v2308
        %2345 = vst.msk [vmem:[#allocation3 + $0x258] sm:$0xff] %vm317, %v2309
        %2346 = vst.msk [vmem:[#allocation3 + $0x270] sm:$0xff] %vm317, %v2310
        %2347 = vst.msk [vmem:[#allocation3 + $0x288] sm:$0xff] %vm317, %v2311
        %2348 = vst.msk [vmem:[#allocation3 + $0x2a0] sm:$0xff] %vm317, %v2312
        %2349 = vst.msk [vmem:[#allocation3 + $0x2b8] sm:$0xff] %vm317, %v2313
        %2350 = vst.msk [vmem:[#allocation3 + $0x2d0] sm:$0xff] %vm317, %v2314
        %2351 = vst.msk [vmem:[#allocation3 + $0x2e8] sm:$0xff] %vm317, %v2315
        %2384 = vrot.lane.b32.xlu0 %v2286, 96
        %v2385 = vpop.permute.xlu0 %2384
        %2386 = vrot.lane.b32.xlu0 %v2287, 96
        %v2387 = vpop.permute.xlu0 %2386
        %2388 = vrot.lane.b32.xlu0 %v2288, 96
        %v2389 = vpop.permute.xlu0 %2388
        %2390 = vrot.lane.b32.xlu0 %v2289, 96
        %v2391 = vpop.permute.xlu0 %2390
        %2392 = vrot.lane.b32.xlu0 %v2290, 96
        %v2393 = vpop.permute.xlu0 %2392
        %2394 = vrot.lane.b32.xlu0 %v2291, 96
        %v2395 = vpop.permute.xlu0 %2394
        %2396 = vrot.lane.b32.xlu0 %v2292, 96
        %v2397 = vpop.permute.xlu0 %2396
        %2398 = vrot.lane.b32.xlu0 %v2293, 96
        %v2399 = vpop.permute.xlu0 %2398
        %2400 = vrot.lane.b32.xlu0 %v2294, 96
        %v2401 = vpop.permute.xlu0 %2400
        %2402 = vrot.lane.b32.xlu0 %v2295, 96
        %v2403 = vpop.permute.xlu0 %2402
        %2404 = vrot.lane.b32.xlu0 %v2296, 96
        %v2405 = vpop.permute.xlu0 %2404
        %2406 = vrot.lane.b32.xlu0 %v2297, 96
        %v2407 = vpop.permute.xlu0 %2406
        %2408 = vrot.lane.b32.xlu0 %v2298, 96
        %v2409 = vpop.permute.xlu0 %2408
        %2410 = vrot.lane.b32.xlu0 %v2299, 96
        %v2411 = vpop.permute.xlu0 %2410
        %2412 = vrot.lane.b32.xlu0 %v2300, 96
        %v2413 = vpop.permute.xlu0 %2412
        %2414 = vrot.lane.b32.xlu0 %v2301, 96
        %v2415 = vpop.permute.xlu0 %2414
        %2416 = vrot.lane.b32.xlu0 %v2302, 96
        %v2417 = vpop.permute.xlu0 %2416
        %2418 = vrot.lane.b32.xlu0 %v2303, 96
        %v2419 = vpop.permute.xlu0 %2418
        %2420 = vrot.lane.b32.xlu0 %v2304, 96
        %v2421 = vpop.permute.xlu0 %2420
        %2422 = vrot.lane.b32.xlu0 %v2305, 96
        %v2423 = vpop.permute.xlu0 %2422
        %2424 = vrot.lane.b32.xlu0 %v2306, 96
        %v2425 = vpop.permute.xlu0 %2424
        %2426 = vrot.lane.b32.xlu0 %v2307, 96
        %v2427 = vpop.permute.xlu0 %2426
        %2428 = vrot.lane.b32.xlu0 %v2308, 96
        %v2429 = vpop.permute.xlu0 %2428
        %2430 = vrot.lane.b32.xlu0 %v2309, 96
        %v2431 = vpop.permute.xlu0 %2430
        %2432 = vrot.lane.b32.xlu0 %v2310, 96
        %v2433 = vpop.permute.xlu0 %2432
        %2434 = vrot.lane.b32.xlu0 %v2311, 96
        %v2435 = vpop.permute.xlu0 %2434
        %2436 = vrot.lane.b32.xlu0 %v2312, 96
        %v2437 = vpop.permute.xlu0 %2436
        %2438 = vrot.lane.b32.xlu0 %v2313, 96
        %v2439 = vpop.permute.xlu0 %2438
        %2440 = vrot.lane.b32.xlu0 %v2314, 96
        %v2441 = vpop.permute.xlu0 %2440
        %2442 = vrot.lane.b32.xlu0 %v2315, 96
        %v2443 = vpop.permute.xlu0 %2442
        %2444 = vrot.lane.b32.xlu0 %v2316, 96
        %v2445 = vpop.permute.xlu0 %2444
        %2446 = vrot.lane.b32.xlu0 %v2317, 96
        %v2447 = vpop.permute.xlu0 %2446
        %2480 = vst.msk [vmem:[#allocation3] sm:$0xff] %vm652, %v2385
        %2481 = vst.msk [vmem:[#allocation3 + $0x18] sm:$0xff] %vm652, %v2387
        %2482 = vst.msk [vmem:[#allocation3 + $0x30] sm:$0xff] %vm652, %v2389
        %2483 = vst.msk [vmem:[#allocation3 + $0x48] sm:$0xff] %vm652, %v2391
        %2484 = vst.msk [vmem:[#allocation3 + $0x60] sm:$0xff] %vm652, %v2393
        %2485 = vst.msk [vmem:[#allocation3 + $0x78] sm:$0xff] %vm652, %v2395
        %2486 = vst.msk [vmem:[#allocation3 + $0x90] sm:$0xff] %vm652, %v2397
        %2487 = vst.msk [vmem:[#allocation3 + $0xa8] sm:$0xff] %vm652, %v2399
        %2488 = vst.msk [vmem:[#allocation3 + $0xc0] sm:$0xff] %vm652, %v2401
        %2489 = vst.msk [vmem:[#allocation3 + $0xd8] sm:$0xff] %vm652, %v2403
        %2490 = vst.msk [vmem:[#allocation3 + $0xf0] sm:$0xff] %vm652, %v2405
        %2491 = vst.msk [vmem:[#allocation3 + $0x108] sm:$0xff] %vm652, %v2407
        %2492 = vst.msk [vmem:[#allocation3 + $0x120] sm:$0xff] %vm652, %v2409
        %2493 = vst.msk [vmem:[#allocation3 + $0x138] sm:$0xff] %vm652, %v2411
        %2494 = vst.msk [vmem:[#allocation3 + $0x150] sm:$0xff] %vm652, %v2413
        %2495 = vst.msk [vmem:[#allocation3 + $0x168] sm:$0xff] %vm652, %v2415
        %2496 = vst.msk [vmem:[#allocation3 + $0x180] sm:$0xff] %vm652, %v2417
        %2497 = vst.msk [vmem:[#allocation3 + $0x198] sm:$0xff] %vm652, %v2419
        %2498 = vst.msk [vmem:[#allocation3 + $0x1b0] sm:$0xff] %vm652, %v2421
        %2499 = vst.msk [vmem:[#allocation3 + $0x1c8] sm:$0xff] %vm652, %v2423
        %2500 = vst.msk [vmem:[#allocation3 + $0x1e0] sm:$0xff] %vm652, %v2425
        %2501 = vst.msk [vmem:[#allocation3 + $0x1f8] sm:$0xff] %vm652, %v2427
        %2502 = vst.msk [vmem:[#allocation3 + $0x210] sm:$0xff] %vm652, %v2429
        %2503 = vst.msk [vmem:[#allocation3 + $0x228] sm:$0xff] %vm652, %v2431
        %2504 = vst.msk [vmem:[#allocation3 + $0x240] sm:$0xff] %vm652, %v2433
        %2505 = vst.msk [vmem:[#allocation3 + $0x258] sm:$0xff] %vm652, %v2435
        %2506 = vst.msk [vmem:[#allocation3 + $0x270] sm:$0xff] %vm652, %v2437
        %2507 = vst.msk [vmem:[#allocation3 + $0x288] sm:$0xff] %vm652, %v2439
        %2508 = vst.msk [vmem:[#allocation3 + $0x2a0] sm:$0xff] %vm652, %v2441
        %2509 = vst.msk [vmem:[#allocation3 + $0x2b8] sm:$0xff] %vm652, %v2443
        %2510 = vst.msk [vmem:[#allocation3 + $0x2d0] sm:$0xff] %vm652, %v2445
        %2511 = vst.msk [vmem:[#allocation3 + $0x2e8] sm:$0xff] %vm652, %v2447
        %2514 = vrot.lane.b32.xlu0 %v2288, 64
        %v2515 = vpop.permute.xlu0 %2514
        %2516 = vrot.lane.b32.xlu0 %v2289, 64
        %v2517 = vpop.permute.xlu0 %2516
        %2518 = vrot.lane.b32.xlu0 %v2290, 64
        %v2519 = vpop.permute.xlu0 %2518
        %2520 = vrot.lane.b32.xlu0 %v2291, 64
        %v2521 = vpop.permute.xlu0 %2520
        %2522 = vrot.lane.b32.xlu0 %v2292, 64
        %v2523 = vpop.permute.xlu0 %2522
        %2524 = vrot.lane.b32.xlu0 %v2293, 64
        %v2525 = vpop.permute.xlu0 %2524
        %2526 = vrot.lane.b32.xlu0 %v2294, 64
        %v2527 = vpop.permute.xlu0 %2526
        %2528 = vrot.lane.b32.xlu0 %v2295, 64
        %v2529 = vpop.permute.xlu0 %2528
        %2530 = vrot.lane.b32.xlu0 %v2296, 64
        %v2531 = vpop.permute.xlu0 %2530
        %2532 = vrot.lane.b32.xlu0 %v2297, 64
        %v2533 = vpop.permute.xlu0 %2532
        %2534 = vrot.lane.b32.xlu0 %v2298, 64
        %v2535 = vpop.permute.xlu0 %2534
        %2536 = vrot.lane.b32.xlu0 %v2299, 64
        %v2537 = vpop.permute.xlu0 %2536
        %2538 = vrot.lane.b32.xlu0 %v2300, 64
        %v2539 = vpop.permute.xlu0 %2538
        %2540 = vrot.lane.b32.xlu0 %v2301, 64
        %v2541 = vpop.permute.xlu0 %2540
        %2542 = vrot.lane.b32.xlu0 %v2302, 64
        %v2543 = vpop.permute.xlu0 %2542
        %2544 = vrot.lane.b32.xlu0 %v2303, 64
        %v2545 = vpop.permute.xlu0 %2544
        %2546 = vrot.lane.b32.xlu0 %v2304, 64
        %v2547 = vpop.permute.xlu0 %2546
        %2548 = vrot.lane.b32.xlu0 %v2305, 64
        %v2549 = vpop.permute.xlu0 %2548
        %2550 = vrot.lane.b32.xlu0 %v2306, 64
        %v2551 = vpop.permute.xlu0 %2550
        %2552 = vrot.lane.b32.xlu0 %v2307, 64
        %v2553 = vpop.permute.xlu0 %2552
        %2554 = vrot.lane.b32.xlu0 %v2308, 64
        %v2555 = vpop.permute.xlu0 %2554
        %2556 = vrot.lane.b32.xlu0 %v2309, 64
        %v2557 = vpop.permute.xlu0 %2556
        %2558 = vrot.lane.b32.xlu0 %v2310, 64
        %v2559 = vpop.permute.xlu0 %2558
        %2560 = vrot.lane.b32.xlu0 %v2311, 64
        %v2561 = vpop.permute.xlu0 %2560
        %2562 = vrot.lane.b32.xlu0 %v2312, 64
        %v2563 = vpop.permute.xlu0 %2562
        %2564 = vrot.lane.b32.xlu0 %v2313, 64
        %v2565 = vpop.permute.xlu0 %2564
        %2566 = vrot.lane.b32.xlu0 %v2314, 64
        %v2567 = vpop.permute.xlu0 %2566
        %2568 = vrot.lane.b32.xlu0 %v2315, 64
        %v2569 = vpop.permute.xlu0 %2568
        %2570 = vrot.lane.b32.xlu0 %v2316, 64
        %v2571 = vpop.permute.xlu0 %2570
        %2572 = vrot.lane.b32.xlu0 %v2317, 64
        %v2573 = vpop.permute.xlu0 %2572
        %2574 = vrot.lane.b32.xlu0 %v2318, 64
        %v2575 = vpop.permute.xlu0 %2574
        %2576 = vrot.lane.b32.xlu0 %v2319, 64
        %v2577 = vpop.permute.xlu0 %2576
        %2610 = vst.msk [vmem:[#allocation3 + $0x8] sm:$0xff] %vm783, %v2515
        %2611 = vst.msk [vmem:[#allocation3 + $0x20] sm:$0xff] %vm783, %v2517
        %2612 = vst.msk [vmem:[#allocation3 + $0x38] sm:$0xff] %vm783, %v2519
        %2613 = vst.msk [vmem:[#allocation3 + $0x50] sm:$0xff] %vm783, %v2521
        %2614 = vst.msk [vmem:[#allocation3 + $0x68] sm:$0xff] %vm783, %v2523
        %2615 = vst.msk [vmem:[#allocation3 + $0x80] sm:$0xff] %vm783, %v2525
        %2616 = vst.msk [vmem:[#allocation3 + $0x98] sm:$0xff] %vm783, %v2527
        %2617 = vst.msk [vmem:[#allocation3 + $0xb0] sm:$0xff] %vm783, %v2529
        %2618 = vst.msk [vmem:[#allocation3 + $0xc8] sm:$0xff] %vm783, %v2531
        %2619 = vst.msk [vmem:[#allocation3 + $0xe0] sm:$0xff] %vm783, %v2533
        %2620 = vst.msk [vmem:[#allocation3 + $0xf8] sm:$0xff] %vm783, %v2535
        %2621 = vst.msk [vmem:[#allocation3 + $0x110] sm:$0xff] %vm783, %v2537
        %2622 = vst.msk [vmem:[#allocation3 + $0x128] sm:$0xff] %vm783, %v2539
        %2623 = vst.msk [vmem:[#allocation3 + $0x140] sm:$0xff] %vm783, %v2541
        %2624 = vst.msk [vmem:[#allocation3 + $0x158] sm:$0xff] %vm783, %v2543
        %2625 = vst.msk [vmem:[#allocation3 + $0x170] sm:$0xff] %vm783, %v2545
        %2626 = vst.msk [vmem:[#allocation3 + $0x188] sm:$0xff] %vm783, %v2547
        %2627 = vst.msk [vmem:[#allocation3 + $0x1a0] sm:$0xff] %vm783, %v2549
        %2628 = vst.msk [vmem:[#allocation3 + $0x1b8] sm:$0xff] %vm783, %v2551
        %2629 = vst.msk [vmem:[#allocation3 + $0x1d0] sm:$0xff] %vm783, %v2553
        %2630 = vst.msk [vmem:[#allocation3 + $0x1e8] sm:$0xff] %vm783, %v2555
        %2631 = vst.msk [vmem:[#allocation3 + $0x200] sm:$0xff] %vm783, %v2557
        %2632 = vst.msk [vmem:[#allocation3 + $0x218] sm:$0xff] %vm783, %v2559
        %2633 = vst.msk [vmem:[#allocation3 + $0x230] sm:$0xff] %vm783, %v2561
        %2634 = vst.msk [vmem:[#allocation3 + $0x248] sm:$0xff] %vm783, %v2563
        %2635 = vst.msk [vmem:[#allocation3 + $0x260] sm:$0xff] %vm783, %v2565
        %2636 = vst.msk [vmem:[#allocation3 + $0x278] sm:$0xff] %vm783, %v2567
        %2637 = vst.msk [vmem:[#allocation3 + $0x290] sm:$0xff] %vm783, %v2569
        %2638 = vst.msk [vmem:[#allocation3 + $0x2a8] sm:$0xff] %vm783, %v2571
        %2639 = vst.msk [vmem:[#allocation3 + $0x2c0] sm:$0xff] %vm783, %v2573
        %2640 = vst.msk [vmem:[#allocation3 + $0x2d8] sm:$0xff] %vm783, %v2575
        %2641 = vst.msk [vmem:[#allocation3 + $0x2f0] sm:$0xff] %vm783, %v2577
        %v2642 = vld [vmem:[#allocation2 + $0x8] sm:$0xff]
        %v2643 = vld [vmem:[#allocation2 + $0x10] sm:$0xff]
        %v2644 = vld [vmem:[#allocation2 + $0x28] sm:$0xff]
        %v2645 = vld [vmem:[#allocation2 + $0x30] sm:$0xff]
        %v2646 = vld [vmem:[#allocation2 + $0x48] sm:$0xff]
        %v2647 = vld [vmem:[#allocation2 + $0x50] sm:$0xff]
        %v2648 = vld [vmem:[#allocation2 + $0x68] sm:$0xff]
        %v2649 = vld [vmem:[#allocation2 + $0x70] sm:$0xff]
        %v2650 = vld [vmem:[#allocation2 + $0x88] sm:$0xff]
        %v2651 = vld [vmem:[#allocation2 + $0x90] sm:$0xff]
        %v2652 = vld [vmem:[#allocation2 + $0xa8] sm:$0xff]
        %v2653 = vld [vmem:[#allocation2 + $0xb0] sm:$0xff]
        %v2654 = vld [vmem:[#allocation2 + $0xc8] sm:$0xff]
        %v2655 = vld [vmem:[#allocation2 + $0xd0] sm:$0xff]
        %v2656 = vld [vmem:[#allocation2 + $0xe8] sm:$0xff]
        %v2657 = vld [vmem:[#allocation2 + $0xf0] sm:$0xff]
        %v2658 = vld [vmem:[#allocation2 + $0x108] sm:$0xff]
        %v2659 = vld [vmem:[#allocation2 + $0x110] sm:$0xff]
        %v2660 = vld [vmem:[#allocation2 + $0x128] sm:$0xff]
        %v2661 = vld [vmem:[#allocation2 + $0x130] sm:$0xff]
        %v2662 = vld [vmem:[#allocation2 + $0x148] sm:$0xff]
        %v2663 = vld [vmem:[#allocation2 + $0x150] sm:$0xff]
        %v2664 = vld [vmem:[#allocation2 + $0x168] sm:$0xff]
        %v2665 = vld [vmem:[#allocation2 + $0x170] sm:$0xff]
        %v2666 = vld [vmem:[#allocation2 + $0x188] sm:$0xff]
        %v2667 = vld [vmem:[#allocation2 + $0x190] sm:$0xff]
        %v2668 = vld [vmem:[#allocation2 + $0x1a8] sm:$0xff]
        %v2669 = vld [vmem:[#allocation2 + $0x1b0] sm:$0xff]
        %v2670 = vld [vmem:[#allocation2 + $0x1c8] sm:$0xff]
        %v2671 = vld [vmem:[#allocation2 + $0x1d0] sm:$0xff]
        %v2672 = vld [vmem:[#allocation2 + $0x1e8] sm:$0xff]
        %v2673 = vld [vmem:[#allocation2 + $0x1f0] sm:$0xff]
        %v2674 = vld [vmem:[#allocation2 + $0x208] sm:$0xff]
        %v2675 = vld [vmem:[#allocation2 + $0x210] sm:$0xff]
        %v2676 = vld [vmem:[#allocation2 + $0x228] sm:$0xff]
        %v2677 = vld [vmem:[#allocation2 + $0x230] sm:$0xff]
        %2710 = vrot.lane.b32.xlu0 %v2642, 32
        %v2711 = vpop.permute.xlu0 %2710
        %2712 = vrot.lane.b32.xlu0 %v2643, 32
        %v2713 = vpop.permute.xlu0 %2712
        %2714 = vrot.lane.b32.xlu0 %v2644, 32
        %v2715 = vpop.permute.xlu0 %2714
        %2716 = vrot.lane.b32.xlu0 %v2645, 32
        %v2717 = vpop.permute.xlu0 %2716
        %2718 = vrot.lane.b32.xlu0 %v2646, 32
        %v2719 = vpop.permute.xlu0 %2718
        %2720 = vrot.lane.b32.xlu0 %v2647, 32
        %v2721 = vpop.permute.xlu0 %2720
        %2722 = vrot.lane.b32.xlu0 %v2648, 32
        %v2723 = vpop.permute.xlu0 %2722
        %2724 = vrot.lane.b32.xlu0 %v2649, 32
        %v2725 = vpop.permute.xlu0 %2724
        %2726 = vrot.lane.b32.xlu0 %v2650, 32
        %v2727 = vpop.permute.xlu0 %2726
        %2728 = vrot.lane.b32.xlu0 %v2651, 32
        %v2729 = vpop.permute.xlu0 %2728
        %2730 = vrot.lane.b32.xlu0 %v2652, 32
        %v2731 = vpop.permute.xlu0 %2730
        %2732 = vrot.lane.b32.xlu0 %v2653, 32
        %v2733 = vpop.permute.xlu0 %2732
        %2734 = vrot.lane.b32.xlu0 %v2654, 32
        %v2735 = vpop.permute.xlu0 %2734
        %2736 = vrot.lane.b32.xlu0 %v2655, 32
        %v2737 = vpop.permute.xlu0 %2736
        %2738 = vrot.lane.b32.xlu0 %v2656, 32
        %v2739 = vpop.permute.xlu0 %2738
        %2740 = vrot.lane.b32.xlu0 %v2657, 32
        %v2741 = vpop.permute.xlu0 %2740
        %2742 = vrot.lane.b32.xlu0 %v2658, 32
        %v2743 = vpop.permute.xlu0 %2742
        %2744 = vrot.lane.b32.xlu0 %v2659, 32
        %v2745 = vpop.permute.xlu0 %2744
        %2746 = vrot.lane.b32.xlu0 %v2660, 32
        %v2747 = vpop.permute.xlu0 %2746
        %2748 = vrot.lane.b32.xlu0 %v2661, 32
        %v2749 = vpop.permute.xlu0 %2748
        %2750 = vrot.lane.b32.xlu0 %v2662, 32
        %v2751 = vpop.permute.xlu0 %2750
        %2752 = vrot.lane.b32.xlu0 %v2663, 32
        %v2753 = vpop.permute.xlu0 %2752
        %2754 = vrot.lane.b32.xlu0 %v2664, 32
        %v2755 = vpop.permute.xlu0 %2754
        %2756 = vrot.lane.b32.xlu0 %v2665, 32
        %v2757 = vpop.permute.xlu0 %2756
        %2758 = vrot.lane.b32.xlu0 %v2666, 32
        %v2759 = vpop.permute.xlu0 %2758
        %2760 = vrot.lane.b32.xlu0 %v2667, 32
        %v2761 = vpop.permute.xlu0 %2760
        %2762 = vrot.lane.b32.xlu0 %v2668, 32
        %v2763 = vpop.permute.xlu0 %2762
        %2764 = vrot.lane.b32.xlu0 %v2669, 32
        %v2765 = vpop.permute.xlu0 %2764
        %2766 = vrot.lane.b32.xlu0 %v2670, 32
        %v2767 = vpop.permute.xlu0 %2766
        %2768 = vrot.lane.b32.xlu0 %v2671, 32
        %v2769 = vpop.permute.xlu0 %2768
        %2770 = vrot.lane.b32.xlu0 %v2672, 32
        %v2771 = vpop.permute.xlu0 %2770
        %2772 = vrot.lane.b32.xlu0 %v2673, 32
        %v2773 = vpop.permute.xlu0 %2772
        %2806 = vst.msk [vmem:[#allocation3] sm:$0xff] %vm980, %v2711
        %2807 = vst.msk [vmem:[#allocation3 + $0x18] sm:$0xff] %vm980, %v2713
        %2808 = vst.msk [vmem:[#allocation3 + $0x30] sm:$0xff] %vm980, %v2715
        %2809 = vst.msk [vmem:[#allocation3 + $0x48] sm:$0xff] %vm980, %v2717
        %2810 = vst.msk [vmem:[#allocation3 + $0x60] sm:$0xff] %vm980, %v2719
        %2811 = vst.msk [vmem:[#allocation3 + $0x78] sm:$0xff] %vm980, %v2721
        %2812 = vst.msk [vmem:[#allocation3 + $0x90] sm:$0xff] %vm980, %v2723
        %2813 = vst.msk [vmem:[#allocation3 + $0xa8] sm:$0xff] %vm980, %v2725
        %2814 = vst.msk [vmem:[#allocation3 + $0xc0] sm:$0xff] %vm980, %v2727
        %2815 = vst.msk [vmem:[#allocation3 + $0xd8] sm:$0xff] %vm980, %v2729
        %2816 = vst.msk [vmem:[#allocation3 + $0xf0] sm:$0xff] %vm980, %v2731
        %2817 = vst.msk [vmem:[#allocation3 + $0x108] sm:$0xff] %vm980, %v2733
        %2818 = vst.msk [vmem:[#allocation3 + $0x120] sm:$0xff] %vm980, %v2735
        %2819 = vst.msk [vmem:[#allocation3 + $0x138] sm:$0xff] %vm980, %v2737
        %2820 = vst.msk [vmem:[#allocation3 + $0x150] sm:$0xff] %vm980, %v2739
        %2821 = vst.msk [vmem:[#allocation3 + $0x168] sm:$0xff] %vm980, %v2741
        %2822 = vst.msk [vmem:[#allocation3 + $0x180] sm:$0xff] %vm980, %v2743
        %2823 = vst.msk [vmem:[#allocation3 + $0x198] sm:$0xff] %vm980, %v2745
        %2824 = vst.msk [vmem:[#allocation3 + $0x1b0] sm:$0xff] %vm980, %v2747
        %2825 = vst.msk [vmem:[#allocation3 + $0x1c8] sm:$0xff] %vm980, %v2749
        %2826 = vst.msk [vmem:[#allocation3 + $0x1e0] sm:$0xff] %vm980, %v2751
        %2827 = vst.msk [vmem:[#allocation3 + $0x1f8] sm:$0xff] %vm980, %v2753
        %2828 = vst.msk [vmem:[#allocation3 + $0x210] sm:$0xff] %vm980, %v2755
        %2829 = vst.msk [vmem:[#allocation3 + $0x228] sm:$0xff] %vm980, %v2757
        %2830 = vst.msk [vmem:[#allocation3 + $0x240] sm:$0xff] %vm980, %v2759
        %2831 = vst.msk [vmem:[#allocation3 + $0x258] sm:$0xff] %vm980, %v2761
        %2832 = vst.msk [vmem:[#allocation3 + $0x270] sm:$0xff] %vm980, %v2763
        %2833 = vst.msk [vmem:[#allocation3 + $0x288] sm:$0xff] %vm980, %v2765
        %2834 = vst.msk [vmem:[#allocation3 + $0x2a0] sm:$0xff] %vm980, %v2767
        %2835 = vst.msk [vmem:[#allocation3 + $0x2b8] sm:$0xff] %vm980, %v2769
        %2836 = vst.msk [vmem:[#allocation3 + $0x2d0] sm:$0xff] %vm980, %v2771
        %2837 = vst.msk [vmem:[#allocation3 + $0x2e8] sm:$0xff] %vm980, %v2773
        %2838 = vst.msk [vmem:[#allocation3 + $0x8] sm:$0xff] %vm317, %v2644
        %2839 = vst.msk [vmem:[#allocation3 + $0x20] sm:$0xff] %vm317, %v2645
        %2840 = vst.msk [vmem:[#allocation3 + $0x38] sm:$0xff] %vm317, %v2646
        %2841 = vst.msk [vmem:[#allocation3 + $0x50] sm:$0xff] %vm317, %v2647
        %2842 = vst.msk [vmem:[#allocation3 + $0x68] sm:$0xff] %vm317, %v2648
        %2843 = vst.msk [vmem:[#allocation3 + $0x80] sm:$0xff] %vm317, %v2649
        %2844 = vst.msk [vmem:[#allocation3 + $0x98] sm:$0xff] %vm317, %v2650
        %2845 = vst.msk [vmem:[#allocation3 + $0xb0] sm:$0xff] %vm317, %v2651
        %2846 = vst.msk [vmem:[#allocation3 + $0xc8] sm:$0xff] %vm317, %v2652
        %2847 = vst.msk [vmem:[#allocation3 + $0xe0] sm:$0xff] %vm317, %v2653
        %2848 = vst.msk [vmem:[#allocation3 + $0xf8] sm:$0xff] %vm317, %v2654
        %2849 = vst.msk [vmem:[#allocation3 + $0x110] sm:$0xff] %vm317, %v2655
        %2850 = vst.msk [vmem:[#allocation3 + $0x128] sm:$0xff] %vm317, %v2656
        %2851 = vst.msk [vmem:[#allocation3 + $0x140] sm:$0xff] %vm317, %v2657
        %2852 = vst.msk [vmem:[#allocation3 + $0x158] sm:$0xff] %vm317, %v2658
        %2853 = vst.msk [vmem:[#allocation3 + $0x170] sm:$0xff] %vm317, %v2659
        %2854 = vst.msk [vmem:[#allocation3 + $0x188] sm:$0xff] %vm317, %v2660
        %2855 = vst.msk [vmem:[#allocation3 + $0x1a0] sm:$0xff] %vm317, %v2661
        %2856 = vst.msk [vmem:[#allocation3 + $0x1b8] sm:$0xff] %vm317, %v2662
        %2857 = vst.msk [vmem:[#allocation3 + $0x1d0] sm:$0xff] %vm317, %v2663
        %2858 = vst.msk [vmem:[#allocation3 + $0x1e8] sm:$0xff] %vm317, %v2664
        %2859 = vst.msk [vmem:[#allocation3 + $0x200] sm:$0xff] %vm317, %v2665
        %2860 = vst.msk [vmem:[#allocation3 + $0x218] sm:$0xff] %vm317, %v2666
        %2861 = vst.msk [vmem:[#allocation3 + $0x230] sm:$0xff] %vm317, %v2667
        %2862 = vst.msk [vmem:[#allocation3 + $0x248] sm:$0xff] %vm317, %v2668
        %2863 = vst.msk [vmem:[#allocation3 + $0x260] sm:$0xff] %vm317, %v2669
        %2864 = vst.msk [vmem:[#allocation3 + $0x278] sm:$0xff] %vm317, %v2670
        %2865 = vst.msk [vmem:[#allocation3 + $0x290] sm:$0xff] %vm317, %v2671
        %2866 = vst.msk [vmem:[#allocation3 + $0x2a8] sm:$0xff] %vm317, %v2672
        %2867 = vst.msk [vmem:[#allocation3 + $0x2c0] sm:$0xff] %vm317, %v2673
        %2868 = vst.msk [vmem:[#allocation3 + $0x2d8] sm:$0xff] %vm317, %v2674
        %2869 = vst.msk [vmem:[#allocation3 + $0x2f0] sm:$0xff] %vm317, %v2675
        %2874 = vrot.lane.b32.xlu0 %v2646, 96
        %v2875 = vpop.permute.xlu0 %2874
        %2876 = vrot.lane.b32.xlu0 %v2647, 96
        %v2877 = vpop.permute.xlu0 %2876
        %2878 = vrot.lane.b32.xlu0 %v2648, 96
        %v2879 = vpop.permute.xlu0 %2878
        %2880 = vrot.lane.b32.xlu0 %v2649, 96
        %v2881 = vpop.permute.xlu0 %2880
        %2882 = vrot.lane.b32.xlu0 %v2650, 96
        %v2883 = vpop.permute.xlu0 %2882
        %2884 = vrot.lane.b32.xlu0 %v2651, 96
        %v2885 = vpop.permute.xlu0 %2884
        %2886 = vrot.lane.b32.xlu0 %v2652, 96
        %v2887 = vpop.permute.xlu0 %2886
        %2888 = vrot.lane.b32.xlu0 %v2653, 96
        %v2889 = vpop.permute.xlu0 %2888
        %2890 = vrot.lane.b32.xlu0 %v2654, 96
        %v2891 = vpop.permute.xlu0 %2890
        %2892 = vrot.lane.b32.xlu0 %v2655, 96
        %v2893 = vpop.permute.xlu0 %2892
        %2894 = vrot.lane.b32.xlu0 %v2656, 96
        %v2895 = vpop.permute.xlu0 %2894
        %2896 = vrot.lane.b32.xlu0 %v2657, 96
        %v2897 = vpop.permute.xlu0 %2896
        %2898 = vrot.lane.b32.xlu0 %v2658, 96
        %v2899 = vpop.permute.xlu0 %2898
        %2900 = vrot.lane.b32.xlu0 %v2659, 96
        %v2901 = vpop.permute.xlu0 %2900
        %2902 = vrot.lane.b32.xlu0 %v2660, 96
        %v2903 = vpop.permute.xlu0 %2902
        %2904 = vrot.lane.b32.xlu0 %v2661, 96
        %v2905 = vpop.permute.xlu0 %2904
        %2906 = vrot.lane.b32.xlu0 %v2662, 96
        %v2907 = vpop.permute.xlu0 %2906
        %2908 = vrot.lane.b32.xlu0 %v2663, 96
        %v2909 = vpop.permute.xlu0 %2908
        %2910 = vrot.lane.b32.xlu0 %v2664, 96
        %v2911 = vpop.permute.xlu0 %2910
        %2912 = vrot.lane.b32.xlu0 %v2665, 96
        %v2913 = vpop.permute.xlu0 %2912
        %2914 = vrot.lane.b32.xlu0 %v2666, 96
        %v2915 = vpop.permute.xlu0 %2914
        %2916 = vrot.lane.b32.xlu0 %v2667, 96
        %v2917 = vpop.permute.xlu0 %2916
        %2918 = vrot.lane.b32.xlu0 %v2668, 96
        %v2919 = vpop.permute.xlu0 %2918
        %2920 = vrot.lane.b32.xlu0 %v2669, 96
        %v2921 = vpop.permute.xlu0 %2920
        %2922 = vrot.lane.b32.xlu0 %v2670, 96
        %v2923 = vpop.permute.xlu0 %2922
        %2924 = vrot.lane.b32.xlu0 %v2671, 96
        %v2925 = vpop.permute.xlu0 %2924
        %2926 = vrot.lane.b32.xlu0 %v2672, 96
        %v2927 = vpop.permute.xlu0 %2926
        %2928 = vrot.lane.b32.xlu0 %v2673, 96
        %v2929 = vpop.permute.xlu0 %2928
        %2930 = vrot.lane.b32.xlu0 %v2674, 96
        %v2931 = vpop.permute.xlu0 %2930
        %2932 = vrot.lane.b32.xlu0 %v2675, 96
        %v2933 = vpop.permute.xlu0 %2932
        %2934 = vrot.lane.b32.xlu0 %v2676, 96
        %v2935 = vpop.permute.xlu0 %2934
        %2936 = vrot.lane.b32.xlu0 %v2677, 96
        %v2937 = vpop.permute.xlu0 %2936
        %2970 = vst.msk [vmem:[#allocation3 + $0x8] sm:$0xff] %vm652, %v2875
        %2971 = vst.msk [vmem:[#allocation3 + $0x20] sm:$0xff] %vm652, %v2877
        %2972 = vst.msk [vmem:[#allocation3 + $0x38] sm:$0xff] %vm652, %v2879
        %2973 = vst.msk [vmem:[#allocation3 + $0x50] sm:$0xff] %vm652, %v2881
        %2974 = vst.msk [vmem:[#allocation3 + $0x68] sm:$0xff] %vm652, %v2883
        %2975 = vst.msk [vmem:[#allocation3 + $0x80] sm:$0xff] %vm652, %v2885
        %2976 = vst.msk [vmem:[#allocation3 + $0x98] sm:$0xff] %vm652, %v2887
        %2977 = vst.msk [vmem:[#allocation3 + $0xb0] sm:$0xff] %vm652, %v2889
        %2978 = vst.msk [vmem:[#allocation3 + $0xc8] sm:$0xff] %vm652, %v2891
        %2979 = vst.msk [vmem:[#allocation3 + $0xe0] sm:$0xff] %vm652, %v2893
        %2980 = vst.msk [vmem:[#allocation3 + $0xf8] sm:$0xff] %vm652, %v2895
        %2981 = vst.msk [vmem:[#allocation3 + $0x110] sm:$0xff] %vm652, %v2897
        %2982 = vst.msk [vmem:[#allocation3 + $0x128] sm:$0xff] %vm652, %v2899
        %2983 = vst.msk [vmem:[#allocation3 + $0x140] sm:$0xff] %vm652, %v2901
        %2984 = vst.msk [vmem:[#allocation3 + $0x158] sm:$0xff] %vm652, %v2903
        %2985 = vst.msk [vmem:[#allocation3 + $0x170] sm:$0xff] %vm652, %v2905
        %2986 = vst.msk [vmem:[#allocation3 + $0x188] sm:$0xff] %vm652, %v2907
        %2987 = vst.msk [vmem:[#allocation3 + $0x1a0] sm:$0xff] %vm652, %v2909
        %2988 = vst.msk [vmem:[#allocation3 + $0x1b8] sm:$0xff] %vm652, %v2911
        %2989 = vst.msk [vmem:[#allocation3 + $0x1d0] sm:$0xff] %vm652, %v2913
        %2990 = vst.msk [vmem:[#allocation3 + $0x1e8] sm:$0xff] %vm652, %v2915
        %2991 = vst.msk [vmem:[#allocation3 + $0x200] sm:$0xff] %vm652, %v2917
        %2992 = vst.msk [vmem:[#allocation3 + $0x218] sm:$0xff] %vm652, %v2919
        %2993 = vst.msk [vmem:[#allocation3 + $0x230] sm:$0xff] %vm652, %v2921
        %2994 = vst.msk [vmem:[#allocation3 + $0x248] sm:$0xff] %vm652, %v2923
        %2995 = vst.msk [vmem:[#allocation3 + $0x260] sm:$0xff] %vm652, %v2925
        %2996 = vst.msk [vmem:[#allocation3 + $0x278] sm:$0xff] %vm652, %v2927
        %2997 = vst.msk [vmem:[#allocation3 + $0x290] sm:$0xff] %vm652, %v2929
        %2998 = vst.msk [vmem:[#allocation3 + $0x2a8] sm:$0xff] %vm652, %v2931
        %2999 = vst.msk [vmem:[#allocation3 + $0x2c0] sm:$0xff] %vm652, %v2933
        %3000 = vst.msk [vmem:[#allocation3 + $0x2d8] sm:$0xff] %vm652, %v2935
        %3001 = vst.msk [vmem:[#allocation3 + $0x2f0] sm:$0xff] %vm652, %v2937
        %v3002 = vld [vmem:[#allocation2 + $0x9] sm:$0xff]
        %v3003 = vld [vmem:[#allocation2 + $0x11] sm:$0xff]
        %v3004 = vld [vmem:[#allocation2 + $0x29] sm:$0xff]
        %v3005 = vld [vmem:[#allocation2 + $0x31] sm:$0xff]
        %v3006 = vld [vmem:[#allocation2 + $0x49] sm:$0xff]
        %v3007 = vld [vmem:[#allocation2 + $0x51] sm:$0xff]
        %v3008 = vld [vmem:[#allocation2 + $0x69] sm:$0xff]
        %v3009 = vld [vmem:[#allocation2 + $0x71] sm:$0xff]
        %v3010 = vld [vmem:[#allocation2 + $0x89] sm:$0xff]
        %v3011 = vld [vmem:[#allocation2 + $0x91] sm:$0xff]
        %v3012 = vld [vmem:[#allocation2 + $0xa9] sm:$0xff]
        %v3013 = vld [vmem:[#allocation2 + $0xb1] sm:$0xff]
        %v3014 = vld [vmem:[#allocation2 + $0xc9] sm:$0xff]
        %v3015 = vld [vmem:[#allocation2 + $0xd1] sm:$0xff]
        %v3016 = vld [vmem:[#allocation2 + $0xe9] sm:$0xff]
        %v3017 = vld [vmem:[#allocation2 + $0xf1] sm:$0xff]
        %v3018 = vld [vmem:[#allocation2 + $0x109] sm:$0xff]
        %v3019 = vld [vmem:[#allocation2 + $0x111] sm:$0xff]
        %v3020 = vld [vmem:[#allocation2 + $0x129] sm:$0xff]
        %v3021 = vld [vmem:[#allocation2 + $0x131] sm:$0xff]
        %v3022 = vld [vmem:[#allocation2 + $0x149] sm:$0xff]
        %v3023 = vld [vmem:[#allocation2 + $0x151] sm:$0xff]
        %v3024 = vld [vmem:[#allocation2 + $0x169] sm:$0xff]
        %v3025 = vld [vmem:[#allocation2 + $0x171] sm:$0xff]
        %v3026 = vld [vmem:[#allocation2 + $0x189] sm:$0xff]
        %v3027 = vld [vmem:[#allocation2 + $0x191] sm:$0xff]
        %v3028 = vld [vmem:[#allocation2 + $0x1a9] sm:$0xff]
        %v3029 = vld [vmem:[#allocation2 + $0x1b1] sm:$0xff]
        %v3030 = vld [vmem:[#allocation2 + $0x1c9] sm:$0xff]
        %v3031 = vld [vmem:[#allocation2 + $0x1d1] sm:$0xff]
        %v3032 = vld [vmem:[#allocation2 + $0x1e9] sm:$0xff]
        %v3033 = vld [vmem:[#allocation2 + $0x1f1] sm:$0xff]
        %v3034 = vld [vmem:[#allocation2 + $0x209] sm:$0xff]
        %v3035 = vld [vmem:[#allocation2 + $0x211] sm:$0xff]
        %v3036 = vld [vmem:[#allocation2 + $0x229] sm:$0xff]
        %v3037 = vld [vmem:[#allocation2 + $0x231] sm:$0xff]
        %3070 = vrot.lane.b32.xlu0 %v3002, 64
        %v3071 = vpop.permute.xlu0 %3070
        %3072 = vrot.lane.b32.xlu0 %v3003, 64
        %v3073 = vpop.permute.xlu0 %3072
        %3074 = vrot.lane.b32.xlu0 %v3004, 64
        %v3075 = vpop.permute.xlu0 %3074
        %3076 = vrot.lane.b32.xlu0 %v3005, 64
        %v3077 = vpop.permute.xlu0 %3076
        %3078 = vrot.lane.b32.xlu0 %v3006, 64
        %v3079 = vpop.permute.xlu0 %3078
        %3080 = vrot.lane.b32.xlu0 %v3007, 64
        %v3081 = vpop.permute.xlu0 %3080
        %3082 = vrot.lane.b32.xlu0 %v3008, 64
        %v3083 = vpop.permute.xlu0 %3082
        %3084 = vrot.lane.b32.xlu0 %v3009, 64
        %v3085 = vpop.permute.xlu0 %3084
        %3086 = vrot.lane.b32.xlu0 %v3010, 64
        %v3087 = vpop.permute.xlu0 %3086
        %3088 = vrot.lane.b32.xlu0 %v3011, 64
        %v3089 = vpop.permute.xlu0 %3088
        %3090 = vrot.lane.b32.xlu0 %v3012, 64
        %v3091 = vpop.permute.xlu0 %3090
        %3092 = vrot.lane.b32.xlu0 %v3013, 64
        %v3093 = vpop.permute.xlu0 %3092
        %3094 = vrot.lane.b32.xlu0 %v3014, 64
        %v3095 = vpop.permute.xlu0 %3094
        %3096 = vrot.lane.b32.xlu0 %v3015, 64
        %v3097 = vpop.permute.xlu0 %3096
        %3098 = vrot.lane.b32.xlu0 %v3016, 64
        %v3099 = vpop.permute.xlu0 %3098
        %3100 = vrot.lane.b32.xlu0 %v3017, 64
        %v3101 = vpop.permute.xlu0 %3100
        %3102 = vrot.lane.b32.xlu0 %v3018, 64
        %v3103 = vpop.permute.xlu0 %3102
        %3104 = vrot.lane.b32.xlu0 %v3019, 64
        %v3105 = vpop.permute.xlu0 %3104
        %3106 = vrot.lane.b32.xlu0 %v3020, 64
        %v3107 = vpop.permute.xlu0 %3106
        %3108 = vrot.lane.b32.xlu0 %v3021, 64
        %v3109 = vpop.permute.xlu0 %3108
        %3110 = vrot.lane.b32.xlu0 %v3022, 64
        %v3111 = vpop.permute.xlu0 %3110
        %3112 = vrot.lane.b32.xlu0 %v3023, 64
        %v3113 = vpop.permute.xlu0 %3112
        %3114 = vrot.lane.b32.xlu0 %v3024, 64
        %v3115 = vpop.permute.xlu0 %3114
        %3116 = vrot.lane.b32.xlu0 %v3025, 64
        %v3117 = vpop.permute.xlu0 %3116
        %3118 = vrot.lane.b32.xlu0 %v3026, 64
        %v3119 = vpop.permute.xlu0 %3118
        %3120 = vrot.lane.b32.xlu0 %v3027, 64
        %v3121 = vpop.permute.xlu0 %3120
        %3122 = vrot.lane.b32.xlu0 %v3028, 64
        %v3123 = vpop.permute.xlu0 %3122
        %3124 = vrot.lane.b32.xlu0 %v3029, 64
        %v3125 = vpop.permute.xlu0 %3124
        %3126 = vrot.lane.b32.xlu0 %v3030, 64
        %v3127 = vpop.permute.xlu0 %3126
        %3128 = vrot.lane.b32.xlu0 %v3031, 64
        %v3129 = vpop.permute.xlu0 %3128
        %3130 = vrot.lane.b32.xlu0 %v3032, 64
        %v3131 = vpop.permute.xlu0 %3130
        %3132 = vrot.lane.b32.xlu0 %v3033, 64
        %v3133 = vpop.permute.xlu0 %3132
        %3166 = vst.msk [vmem:[#allocation3] sm:$0xff] %vm783, %v3071
        %3167 = vst.msk [vmem:[#allocation3 + $0x18] sm:$0xff] %vm783, %v3073
        %3168 = vst.msk [vmem:[#allocation3 + $0x30] sm:$0xff] %vm783, %v3075
        %3169 = vst.msk [vmem:[#allocation3 + $0x48] sm:$0xff] %vm783, %v3077
        %3170 = vst.msk [vmem:[#allocation3 + $0x60] sm:$0xff] %vm783, %v3079
        %3171 = vst.msk [vmem:[#allocation3 + $0x78] sm:$0xff] %vm783, %v3081
        %3172 = vst.msk [vmem:[#allocation3 + $0x90] sm:$0xff] %vm783, %v3083
        %3173 = vst.msk [vmem:[#allocation3 + $0xa8] sm:$0xff] %vm783, %v3085
        %3174 = vst.msk [vmem:[#allocation3 + $0xc0] sm:$0xff] %vm783, %v3087
        %3175 = vst.msk [vmem:[#allocation3 + $0xd8] sm:$0xff] %vm783, %v3089
        %3176 = vst.msk [vmem:[#allocation3 + $0xf0] sm:$0xff] %vm783, %v3091
        %3177 = vst.msk [vmem:[#allocation3 + $0x108] sm:$0xff] %vm783, %v3093
        %3178 = vst.msk [vmem:[#allocation3 + $0x120] sm:$0xff] %vm783, %v3095
        %3179 = vst.msk [vmem:[#allocation3 + $0x138] sm:$0xff] %vm783, %v3097
        %3180 = vst.msk [vmem:[#allocation3 + $0x150] sm:$0xff] %vm783, %v3099
        %3181 = vst.msk [vmem:[#allocation3 + $0x168] sm:$0xff] %vm783, %v3101
        %3182 = vst.msk [vmem:[#allocation3 + $0x180] sm:$0xff] %vm783, %v3103
        %3183 = vst.msk [vmem:[#allocation3 + $0x198] sm:$0xff] %vm783, %v3105
        %3184 = vst.msk [vmem:[#allocation3 + $0x1b0] sm:$0xff] %vm783, %v3107
        %3185 = vst.msk [vmem:[#allocation3 + $0x1c8] sm:$0xff] %vm783, %v3109
        %3186 = vst.msk [vmem:[#allocation3 + $0x1e0] sm:$0xff] %vm783, %v3111
        %3187 = vst.msk [vmem:[#allocation3 + $0x1f8] sm:$0xff] %vm783, %v3113
        %3188 = vst.msk [vmem:[#allocation3 + $0x210] sm:$0xff] %vm783, %v3115
        %3189 = vst.msk [vmem:[#allocation3 + $0x228] sm:$0xff] %vm783, %v3117
        %3190 = vst.msk [vmem:[#allocation3 + $0x240] sm:$0xff] %vm783, %v3119
        %3191 = vst.msk [vmem:[#allocation3 + $0x258] sm:$0xff] %vm783, %v3121
        %3192 = vst.msk [vmem:[#allocation3 + $0x270] sm:$0xff] %vm783, %v3123
        %3193 = vst.msk [vmem:[#allocation3 + $0x288] sm:$0xff] %vm783, %v3125
        %3194 = vst.msk [vmem:[#allocation3 + $0x2a0] sm:$0xff] %vm783, %v3127
        %3195 = vst.msk [vmem:[#allocation3 + $0x2b8] sm:$0xff] %vm783, %v3129
        %3196 = vst.msk [vmem:[#allocation3 + $0x2d0] sm:$0xff] %vm783, %v3131
        %3197 = vst.msk [vmem:[#allocation3 + $0x2e8] sm:$0xff] %vm783, %v3133
        %3200 = vrot.lane.b32.xlu0 %v3004, 32
        %v3201 = vpop.permute.xlu0 %3200
        %3202 = vrot.lane.b32.xlu0 %v3005, 32
        %v3203 = vpop.permute.xlu0 %3202
        %3204 = vrot.lane.b32.xlu0 %v3006, 32
        %v3205 = vpop.permute.xlu0 %3204
        %3206 = vrot.lane.b32.xlu0 %v3007, 32
        %v3207 = vpop.permute.xlu0 %3206
        %3208 = vrot.lane.b32.xlu0 %v3008, 32
        %v3209 = vpop.permute.xlu0 %3208
        %3210 = vrot.lane.b32.xlu0 %v3009, 32
        %v3211 = vpop.permute.xlu0 %3210
        %3212 = vrot.lane.b32.xlu0 %v3010, 32
        %v3213 = vpop.permute.xlu0 %3212
        %3214 = vrot.lane.b32.xlu0 %v3011, 32
        %v3215 = vpop.permute.xlu0 %3214
        %3216 = vrot.lane.b32.xlu0 %v3012, 32
        %v3217 = vpop.permute.xlu0 %3216
        %3218 = vrot.lane.b32.xlu0 %v3013, 32
        %v3219 = vpop.permute.xlu0 %3218
        %3220 = vrot.lane.b32.xlu0 %v3014, 32
        %v3221 = vpop.permute.xlu0 %3220
        %3222 = vrot.lane.b32.xlu0 %v3015, 32
        %v3223 = vpop.permute.xlu0 %3222
        %3224 = vrot.lane.b32.xlu0 %v3016, 32
        %v3225 = vpop.permute.xlu0 %3224
        %3226 = vrot.lane.b32.xlu0 %v3017, 32
        %v3227 = vpop.permute.xlu0 %3226
        %3228 = vrot.lane.b32.xlu0 %v3018, 32
        %v3229 = vpop.permute.xlu0 %3228
        %3230 = vrot.lane.b32.xlu0 %v3019, 32
        %v3231 = vpop.permute.xlu0 %3230
        %3232 = vrot.lane.b32.xlu0 %v3020, 32
        %v3233 = vpop.permute.xlu0 %3232
        %3234 = vrot.lane.b32.xlu0 %v3021, 32
        %v3235 = vpop.permute.xlu0 %3234
        %3236 = vrot.lane.b32.xlu0 %v3022, 32
        %v3237 = vpop.permute.xlu0 %3236
        %3238 = vrot.lane.b32.xlu0 %v3023, 32
        %v3239 = vpop.permute.xlu0 %3238
        %3240 = vrot.lane.b32.xlu0 %v3024, 32
        %v3241 = vpop.permute.xlu0 %3240
        %3242 = vrot.lane.b32.xlu0 %v3025, 32
        %v3243 = vpop.permute.xlu0 %3242
        %3244 = vrot.lane.b32.xlu0 %v3026, 32
        %v3245 = vpop.permute.xlu0 %3244
        %3246 = vrot.lane.b32.xlu0 %v3027, 32
        %v3247 = vpop.permute.xlu0 %3246
        %3248 = vrot.lane.b32.xlu0 %v3028, 32
        %v3249 = vpop.permute.xlu0 %3248
        %3250 = vrot.lane.b32.xlu0 %v3029, 32
        %v3251 = vpop.permute.xlu0 %3250
        %3252 = vrot.lane.b32.xlu0 %v3030, 32
        %v3253 = vpop.permute.xlu0 %3252
        %3254 = vrot.lane.b32.xlu0 %v3031, 32
        %v3255 = vpop.permute.xlu0 %3254
        %3256 = vrot.lane.b32.xlu0 %v3032, 32
        %v3257 = vpop.permute.xlu0 %3256
        %3258 = vrot.lane.b32.xlu0 %v3033, 32
        %v3259 = vpop.permute.xlu0 %3258
        %3260 = vrot.lane.b32.xlu0 %v3034, 32
        %v3261 = vpop.permute.xlu0 %3260
        %3262 = vrot.lane.b32.xlu0 %v3035, 32
        %v3263 = vpop.permute.xlu0 %3262
        %3296 = vst.msk [vmem:[#allocation3 + $0x8] sm:$0xff] %vm980, %v3201
        %3297 = vst.msk [vmem:[#allocation3 + $0x20] sm:$0xff] %vm980, %v3203
        %3298 = vst.msk [vmem:[#allocation3 + $0x38] sm:$0xff] %vm980, %v3205
        %3299 = vst.msk [vmem:[#allocation3 + $0x50] sm:$0xff] %vm980, %v3207
        %3300 = vst.msk [vmem:[#allocation3 + $0x68] sm:$0xff] %vm980, %v3209
        %3301 = vst.msk [vmem:[#allocation3 + $0x80] sm:$0xff] %vm980, %v3211
        %3302 = vst.msk [vmem:[#allocation3 + $0x98] sm:$0xff] %vm980, %v3213
        %3303 = vst.msk [vmem:[#allocation3 + $0xb0] sm:$0xff] %vm980, %v3215
        %3304 = vst.msk [vmem:[#allocation3 + $0xc8] sm:$0xff] %vm980, %v3217
        %3305 = vst.msk [vmem:[#allocation3 + $0xe0] sm:$0xff] %vm980, %v3219
        %3306 = vst.msk [vmem:[#allocation3 + $0xf8] sm:$0xff] %vm980, %v3221
        %3307 = vst.msk [vmem:[#allocation3 + $0x110] sm:$0xff] %vm980, %v3223
        %3308 = vst.msk [vmem:[#allocation3 + $0x128] sm:$0xff] %vm980, %v3225
        %3309 = vst.msk [vmem:[#allocation3 + $0x140] sm:$0xff] %vm980, %v3227
        %3310 = vst.msk [vmem:[#allocation3 + $0x158] sm:$0xff] %vm980, %v3229
        %3311 = vst.msk [vmem:[#allocation3 + $0x170] sm:$0xff] %vm980, %v3231
        %3312 = vst.msk [vmem:[#allocation3 + $0x188] sm:$0xff] %vm980, %v3233
        %3313 = vst.msk [vmem:[#allocation3 + $0x1a0] sm:$0xff] %vm980, %v3235
        %3314 = vst.msk [vmem:[#allocation3 + $0x1b8] sm:$0xff] %vm980, %v3237
        %3315 = vst.msk [vmem:[#allocation3 + $0x1d0] sm:$0xff] %vm980, %v3239
        %3316 = vst.msk [vmem:[#allocation3 + $0x1e8] sm:$0xff] %vm980, %v3241
        %3317 = vst.msk [vmem:[#allocation3 + $0x200] sm:$0xff] %vm980, %v3243
        %3318 = vst.msk [vmem:[#allocation3 + $0x218] sm:$0xff] %vm980, %v3245
        %3319 = vst.msk [vmem:[#allocation3 + $0x230] sm:$0xff] %vm980, %v3247
        %3320 = vst.msk [vmem:[#allocation3 + $0x248] sm:$0xff] %vm980, %v3249
        %3321 = vst.msk [vmem:[#allocation3 + $0x260] sm:$0xff] %vm980, %v3251
        %3322 = vst.msk [vmem:[#allocation3 + $0x278] sm:$0xff] %vm980, %v3253
        %3323 = vst.msk [vmem:[#allocation3 + $0x290] sm:$0xff] %vm980, %v3255
        %3324 = vst.msk [vmem:[#allocation3 + $0x2a8] sm:$0xff] %vm980, %v3257
        %3325 = vst.msk [vmem:[#allocation3 + $0x2c0] sm:$0xff] %vm980, %v3259
        %3326 = vst.msk [vmem:[#allocation3 + $0x2d8] sm:$0xff] %vm980, %v3261
        %3327 = vst.msk [vmem:[#allocation3 + $0x2f0] sm:$0xff] %vm980, %v3263
        %3328 = vst.msk [vmem:[#allocation3 + $0x10] sm:$0xff] %vm317, %v3006
        %3329 = vst.msk [vmem:[#allocation3 + $0x28] sm:$0xff] %vm317, %v3007
        %3330 = vst.msk [vmem:[#allocation3 + $0x40] sm:$0xff] %vm317, %v3008
        %3331 = vst.msk [vmem:[#allocation3 + $0x58] sm:$0xff] %vm317, %v3009
        %3332 = vst.msk [vmem:[#allocation3 + $0x70] sm:$0xff] %vm317, %v3010
        %3333 = vst.msk [vmem:[#allocation3 + $0x88] sm:$0xff] %vm317, %v3011
        %3334 = vst.msk [vmem:[#allocation3 + $0xa0] sm:$0xff] %vm317, %v3012
        %3335 = vst.msk [vmem:[#allocation3 + $0xb8] sm:$0xff] %vm317, %v3013
        %3336 = vst.msk [vmem:[#allocation3 + $0xd0] sm:$0xff] %vm317, %v3014
        %3337 = vst.msk [vmem:[#allocation3 + $0xe8] sm:$0xff] %vm317, %v3015
        %3338 = vst.msk [vmem:[#allocation3 + $0x100] sm:$0xff] %vm317, %v3016
        %3339 = vst.msk [vmem:[#allocation3 + $0x118] sm:$0xff] %vm317, %v3017
        %3340 = vst.msk [vmem:[#allocation3 + $0x130] sm:$0xff] %vm317, %v3018
        %3341 = vst.msk [vmem:[#allocation3 + $0x148] sm:$0xff] %vm317, %v3019
        %3342 = vst.msk [vmem:[#allocation3 + $0x160] sm:$0xff] %vm317, %v3020
        %3343 = vst.msk [vmem:[#allocation3 + $0x178] sm:$0xff] %vm317, %v3021
        %3344 = vst.msk [vmem:[#allocation3 + $0x190] sm:$0xff] %vm317, %v3022
        %3345 = vst.msk [vmem:[#allocation3 + $0x1a8] sm:$0xff] %vm317, %v3023
        %3346 = vst.msk [vmem:[#allocation3 + $0x1c0] sm:$0xff] %vm317, %v3024
        %3347 = vst.msk [vmem:[#allocation3 + $0x1d8] sm:$0xff] %vm317, %v3025
        %3348 = vst.msk [vmem:[#allocation3 + $0x1f0] sm:$0xff] %vm317, %v3026
        %3349 = vst.msk [vmem:[#allocation3 + $0x208] sm:$0xff] %vm317, %v3027
        %3350 = vst.msk [vmem:[#allocation3 + $0x220] sm:$0xff] %vm317, %v3028
        %3351 = vst.msk [vmem:[#allocation3 + $0x238] sm:$0xff] %vm317, %v3029
        %3352 = vst.msk [vmem:[#allocation3 + $0x250] sm:$0xff] %vm317, %v3030
        %3353 = vst.msk [vmem:[#allocation3 + $0x268] sm:$0xff] %vm317, %v3031
        %3354 = vst.msk [vmem:[#allocation3 + $0x280] sm:$0xff] %vm317, %v3032
        %3355 = vst.msk [vmem:[#allocation3 + $0x298] sm:$0xff] %vm317, %v3033
        %3356 = vst.msk [vmem:[#allocation3 + $0x2b0] sm:$0xff] %vm317, %v3034
        %3357 = vst.msk [vmem:[#allocation3 + $0x2c8] sm:$0xff] %vm317, %v3035
        %3358 = vst.msk [vmem:[#allocation3 + $0x2e0] sm:$0xff] %vm317, %v3036
        %3359 = vst.msk [vmem:[#allocation3 + $0x2f8] sm:$0xff] %vm317, %v3037
        %v3360 = vld [vmem:[#allocation3] sm:$0xff]
        %v3361 = vld [vmem:[#allocation3 + $0x8] sm:$0xff]
        %v3362 = vld [vmem:[#allocation3 + $0x10] sm:$0xff]
        %v3363 = vld [vmem:[#allocation3 + $0x18] sm:$0xff]
        %v3364 = vld [vmem:[#allocation3 + $0x20] sm:$0xff]
        %v3365 = vld [vmem:[#allocation3 + $0x28] sm:$0xff]
        %v3366 = vld [vmem:[#allocation3 + $0x30] sm:$0xff]
        %v3367 = vld [vmem:[#allocation3 + $0x38] sm:$0xff]
        %v3368 = vld [vmem:[#allocation3 + $0x40] sm:$0xff]
        %v3369 = vld [vmem:[#allocation3 + $0x48] sm:$0xff]
        %v3370 = vld [vmem:[#allocation3 + $0x50] sm:$0xff]
        %v3371 = vld [vmem:[#allocation3 + $0x58] sm:$0xff]
        %v3372 = vld [vmem:[#allocation3 + $0x60] sm:$0xff]
        %v3373 = vld [vmem:[#allocation3 + $0x68] sm:$0xff]
        %v3374 = vld [vmem:[#allocation3 + $0x70] sm:$0xff]
        %v3375 = vld [vmem:[#allocation3 + $0x78] sm:$0xff]
        %v3376 = vld [vmem:[#allocation3 + $0x80] sm:$0xff]
        %v3377 = vld [vmem:[#allocation3 + $0x88] sm:$0xff]
        %v3378 = vld [vmem:[#allocation3 + $0x90] sm:$0xff]
        %v3379 = vld [vmem:[#allocation3 + $0x98] sm:$0xff]
        %v3380 = vld [vmem:[#allocation3 + $0xa0] sm:$0xff]
        %v3381 = vld [vmem:[#allocation3 + $0xa8] sm:$0xff]
        %v3382 = vld [vmem:[#allocation3 + $0xb0] sm:$0xff]
        %v3383 = vld [vmem:[#allocation3 + $0xb8] sm:$0xff]
        %v3384 = vld [vmem:[#allocation3 + $0xc0] sm:$0xff]
        %v3385 = vld [vmem:[#allocation3 + $0xc8] sm:$0xff]
        %v3386 = vld [vmem:[#allocation3 + $0xd0] sm:$0xff]
        %v3387 = vld [vmem:[#allocation3 + $0xd8] sm:$0xff]
        %v3388 = vld [vmem:[#allocation3 + $0xe0] sm:$0xff]
        %v3389 = vld [vmem:[#allocation3 + $0xe8] sm:$0xff]
        %v3390 = vld [vmem:[#allocation3 + $0xf0] sm:$0xff]
        %v3391 = vld [vmem:[#allocation3 + $0xf8] sm:$0xff]
        %v3392 = vld [vmem:[#allocation3 + $0x100] sm:$0xff]
        %v3393 = vld [vmem:[#allocation3 + $0x108] sm:$0xff]
        %v3394 = vld [vmem:[#allocation3 + $0x110] sm:$0xff]
        %v3395 = vld [vmem:[#allocation3 + $0x118] sm:$0xff]
        %v3396 = vld [vmem:[#allocation3 + $0x120] sm:$0xff]
        %v3397 = vld [vmem:[#allocation3 + $0x128] sm:$0xff]
        %v3398 = vld [vmem:[#allocation3 + $0x130] sm:$0xff]
        %v3399 = vld [vmem:[#allocation3 + $0x138] sm:$0xff]
        %v3400 = vld [vmem:[#allocation3 + $0x140] sm:$0xff]
        %v3401 = vld [vmem:[#allocation3 + $0x148] sm:$0xff]
        %v3402 = vld [vmem:[#allocation3 + $0x150] sm:$0xff]
        %v3403 = vld [vmem:[#allocation3 + $0x158] sm:$0xff]
        %v3404 = vld [vmem:[#allocation3 + $0x160] sm:$0xff]
        %v3405 = vld [vmem:[#allocation3 + $0x168] sm:$0xff]
        %v3406 = vld [vmem:[#allocation3 + $0x170] sm:$0xff]
        %v3407 = vld [vmem:[#allocation3 + $0x178] sm:$0xff]
        %v3408 = vld [vmem:[#allocation3 + $0x180] sm:$0xff]
        %v3409 = vld [vmem:[#allocation3 + $0x188] sm:$0xff]
        %v3410 = vld [vmem:[#allocation3 + $0x190] sm:$0xff]
        %v3411 = vld [vmem:[#allocation3 + $0x198] sm:$0xff]
        %v3412 = vld [vmem:[#allocation3 + $0x1a0] sm:$0xff]
        %v3413 = vld [vmem:[#allocation3 + $0x1a8] sm:$0xff]
        %v3414 = vld [vmem:[#allocation3 + $0x1b0] sm:$0xff]
        %v3415 = vld [vmem:[#allocation3 + $0x1b8] sm:$0xff]
        %v3416 = vld [vmem:[#allocation3 + $0x1c0] sm:$0xff]
        %v3417 = vld [vmem:[#allocation3 + $0x1c8] sm:$0xff]
        %v3418 = vld [vmem:[#allocation3 + $0x1d0] sm:$0xff]
        %v3419 = vld [vmem:[#allocation3 + $0x1d8] sm:$0xff]
        %v3420 = vld [vmem:[#allocation3 + $0x1e0] sm:$0xff]
        %v3421 = vld [vmem:[#allocation3 + $0x1e8] sm:$0xff]
        %v3422 = vld [vmem:[#allocation3 + $0x1f0] sm:$0xff]
        %v3423 = vld [vmem:[#allocation3 + $0x1f8] sm:$0xff]
        %v3424 = vld [vmem:[#allocation3 + $0x200] sm:$0xff]
        %v3425 = vld [vmem:[#allocation3 + $0x208] sm:$0xff]
        %v3426 = vld [vmem:[#allocation3 + $0x210] sm:$0xff]
        %v3427 = vld [vmem:[#allocation3 + $0x218] sm:$0xff]
        %v3428 = vld [vmem:[#allocation3 + $0x220] sm:$0xff]
        %v3429 = vld [vmem:[#allocation3 + $0x228] sm:$0xff]
        %v3430 = vld [vmem:[#allocation3 + $0x230] sm:$0xff]
        %v3431 = vld [vmem:[#allocation3 + $0x238] sm:$0xff]
        %v3432 = vld [vmem:[#allocation3 + $0x240] sm:$0xff]
        %v3433 = vld [vmem:[#allocation3 + $0x248] sm:$0xff]
        %v3434 = vld [vmem:[#allocation3 + $0x250] sm:$0xff]
        %v3435 = vld [vmem:[#allocation3 + $0x258] sm:$0xff]
        %v3436 = vld [vmem:[#allocation3 + $0x260] sm:$0xff]
        %v3437 = vld [vmem:[#allocation3 + $0x268] sm:$0xff]
        %v3438 = vld [vmem:[#allocation3 + $0x270] sm:$0xff]
        %v3439 = vld [vmem:[#allocation3 + $0x278] sm:$0xff]
        %v3440 = vld [vmem:[#allocation3 + $0x280] sm:$0xff]
        %v3441 = vld [vmem:[#allocation3 + $0x288] sm:$0xff]
        %v3442 = vld [vmem:[#allocation3 + $0x290] sm:$0xff]
        %v3443 = vld [vmem:[#allocation3 + $0x298] sm:$0xff]
        %v3444 = vld [vmem:[#allocation3 + $0x2a0] sm:$0xff]
        %v3445 = vld [vmem:[#allocation3 + $0x2a8] sm:$0xff]
        %v3446 = vld [vmem:[#allocation3 + $0x2b0] sm:$0xff]
        %v3447 = vld [vmem:[#allocation3 + $0x2b8] sm:$0xff]
        %v3448 = vld [vmem:[#allocation3 + $0x2c0] sm:$0xff]
        %v3449 = vld [vmem:[#allocation3 + $0x2c8] sm:$0xff]
        %v3450 = vld [vmem:[#allocation3 + $0x2d0] sm:$0xff]
        %v3451 = vld [vmem:[#allocation3 + $0x2d8] sm:$0xff]
        %v3452 = vld [vmem:[#allocation3 + $0x2e0] sm:$0xff]
        %v3453 = vld [vmem:[#allocation3 + $0x2e8] sm:$0xff]
        %v3454 = vld [vmem:[#allocation3 + $0x2f0] sm:$0xff]
        %v3455 = vld [vmem:[#allocation3 + $0x2f8] sm:$0xff]
        %v3456 = vld [vmem:[%s3] sm:$0xff]
        %v3457 = vld [vmem:[%s3 + $0x8] sm:$0xff]
        %v3458 = vld [vmem:[%s3 + $0x10] sm:$0xff]
        %v3459 = vld [vmem:[%s3 + $0x18] sm:$0xff]
        %v3460 = vld [vmem:[%s3 + $0x20] sm:$0xff]
        %v3461 = vld [vmem:[%s3 + $0x28] sm:$0xff]
        %v3462 = vld [vmem:[%s3 + $0x30] sm:$0xff]
        %v3463 = vld [vmem:[%s3 + $0x38] sm:$0xff]
        %v3464 = vld [vmem:[%s3 + $0x40] sm:$0xff]
        %v3465 = vld [vmem:[%s3 + $0x48] sm:$0xff]
        %v3466 = vld [vmem:[%s3 + $0x50] sm:$0xff]
        %v3467 = vld [vmem:[%s3 + $0x58] sm:$0xff]
        %v3468 = vld [vmem:[%s3 + $0x60] sm:$0xff]
        %v3469 = vld [vmem:[%s3 + $0x68] sm:$0xff]
        %v3470 = vld [vmem:[%s3 + $0x70] sm:$0xff]
        %v3471 = vld [vmem:[%s3 + $0x78] sm:$0xff]
        %v3472 = vld [vmem:[%s3 + $0x80] sm:$0xff]
        %v3473 = vld [vmem:[%s3 + $0x88] sm:$0xff]
        %v3474 = vld [vmem:[%s3 + $0x90] sm:$0xff]
        %v3475 = vld [vmem:[%s3 + $0x98] sm:$0xff]
        %v3476 = vld [vmem:[%s3 + $0xa0] sm:$0xff]
        %v3477 = vld [vmem:[%s3 + $0xa8] sm:$0xff]
        %v3478 = vld [vmem:[%s3 + $0xb0] sm:$0xff]
        %v3479 = vld [vmem:[%s3 + $0xb8] sm:$0xff]
        %v3480 = vld [vmem:[%s3 + $0xc0] sm:$0xff]
        %v3481 = vld [vmem:[%s3 + $0xc8] sm:$0xff]
        %v3482 = vld [vmem:[%s3 + $0xd0] sm:$0xff]
        %v3483 = vld [vmem:[%s3 + $0xd8] sm:$0xff]
        %v3484 = vld [vmem:[%s3 + $0xe0] sm:$0xff]
        %v3485 = vld [vmem:[%s3 + $0xe8] sm:$0xff]
        %v3486 = vld [vmem:[%s3 + $0xf0] sm:$0xff]
        %v3487 = vld [vmem:[%s3 + $0xf8] sm:$0xff]
        %v3488 = vld [vmem:[%s3 + $0x100] sm:$0xff]
        %v3489 = vld [vmem:[%s3 + $0x108] sm:$0xff]
        %v3490 = vld [vmem:[%s3 + $0x110] sm:$0xff]
        %v3491 = vld [vmem:[%s3 + $0x118] sm:$0xff]
        %v3492 = vld [vmem:[#allocation6] sm:$0x1]
        %v3494 = vlaneseq
        %v3495 = vshrl.u32 %v3494, 7
        %v3496 = vsub.s32 0, %v3495
        %v3497 = vrot.slane %v3492, %v3496
        %v3500 = vsel %vm317, %v3362, 0
        %v3503 = vsel %vm317, %v3365, 0
        %v3506 = vsel %vm317, %v3368, 0
        %v3509 = vsel %vm317, %v3371, 0
        %v3512 = vsel %vm317, %v3374, 0
        %v3515 = vsel %vm317, %v3377, 0
        %v3518 = vsel %vm317, %v3380, 0
        %v3521 = vsel %vm317, %v3383, 0
        %v3524 = vsel %vm317, %v3386, 0
        %v3527 = vsel %vm317, %v3389, 0
        %v3530 = vsel %vm317, %v3392, 0
        %v3533 = vsel %vm317, %v3395, 0
        %v3536 = vsel %vm317, %v3398, 0
        %v3539 = vsel %vm317, %v3401, 0
        %v3542 = vsel %vm317, %v3404, 0
        %v3545 = vsel %vm317, %v3407, 0
        %v3548 = vsel %vm317, %v3410, 0
        %v3551 = vsel %vm317, %v3413, 0
        %v3554 = vsel %vm317, %v3416, 0
        %v3557 = vsel %vm317, %v3419, 0
        %v3560 = vsel %vm317, %v3422, 0
        %v3563 = vsel %vm317, %v3425, 0
        %v3566 = vsel %vm317, %v3428, 0
        %v3569 = vsel %vm317, %v3431, 0
        %v3572 = vsel %vm317, %v3434, 0
        %v3575 = vsel %vm317, %v3437, 0
        %v3578 = vsel %vm317, %v3440, 0
        %v3581 = vsel %vm317, %v3443, 0
        %v3584 = vsel %vm317, %v3446, 0
        %v3587 = vsel %vm317, %v3449, 0
        %v3590 = vsel %vm317, %v3452, 0
        %v3593 = vsel %vm317, %v3455, 0
        %3595 = vmatprep.subr.mxu0 0.0
        %3596 = vmatpush1.msra.mxu0 %v3471
        %3597 = vmatprep.subr.mxu0 0.0
        %3598 = vmatpush1.msra.mxu0 %v3470
        %3599 = vmatprep.subr.mxu0 0.0
        %3600 = vmatpush1.msra.mxu0 %v3469
        %3601 = vmatprep.subr.mxu0 0.0
        %3602 = vmatpush1.msra.mxu0 %v3468
        %3603 = vmatprep.subr.mxu0 0.0
        %3604 = vmatpush1.msra.mxu0 %v3467
        %3605 = vmatprep.subr.mxu0 0.0
        %3606 = vmatpush1.msra.mxu0 %v3466
        %3607 = vmatprep.subr.mxu0 0.0
        %3608 = vmatpush1.msra.mxu0 %v3465
        %3609 = vmatprep.subr.mxu0 0.0
        %3610 = vmatpush1.msra.mxu0 %v3464
        %3611 = vmatprep.subr.mxu0 0.0
        %3612 = vmatpush1.msra.mxu0 %v3463
        %3613 = vmatprep.subr.mxu0 0.0
        %3614 = vmatpush1.msra.mxu0 %v3462
        %3615 = vmatprep.subr.mxu0 0.0
        %3616 = vmatpush1.msra.mxu0 %v3461
        %3617 = vmatprep.subr.mxu0 0.0
        %3618 = vmatpush1.msra.mxu0 %v3460
        %3619 = vmatprep.subr.mxu0 0.0
        %3620 = vmatpush1.msra.mxu0 %v3459
        %3621 = vmatprep.subr.mxu0 0.0
        %3622 = vmatpush1.msra.mxu0 %v3458
        %3623 = vmatprep.subr.mxu0 0.0
        %3624 = vmatpush1.msra.mxu0 %v3457
        %3625 = vmatprep.subr.mxu0 0.0
        %3626 = vmatpush1.msra.mxu0 %v3456
        %3627 = vmatprep.subr.mxu0 0.0
        %3628 = vmatpush2.msra.mxu0 %v3487
        %3629 = vmatprep.subr.mxu0 0.0
        %3630 = vmatpush2.msra.mxu0 %v3486
        %3631 = vmatprep.subr.mxu0 0.0
        %3632 = vmatpush2.msra.mxu0 %v3485
        %3633 = vmatprep.subr.mxu0 0.0
        %3634 = vmatpush2.msra.mxu0 %v3484
        %3635 = vmatprep.subr.mxu0 0.0
        %3636 = vmatpush2.msra.mxu0 %v3483
        %3637 = vmatprep.subr.mxu0 0.0
        %3638 = vmatpush2.msra.mxu0 %v3482
        %3639 = vmatprep.subr.mxu0 0.0
        %3640 = vmatpush2.msra.mxu0 %v3481
        %3641 = vmatprep.subr.mxu0 0.0
        %3642 = vmatpush2.msra.mxu0 %v3480
        %3643 = vmatprep.subr.mxu0 0.0
        %3644 = vmatpush2.msra.mxu0 %v3479
        %3645 = vmatprep.subr.mxu0 0.0
        %3646 = vmatpush2.msra.mxu0 %v3478
        %3647 = vmatprep.subr.mxu0 0.0
        %3648 = vmatpush2.msra.mxu0 %v3477
        %3649 = vmatprep.subr.mxu0 0.0
        %3650 = vmatpush2.msra.mxu0 %v3476
        %3651 = vmatprep.subr.mxu0 0.0
        %3652 = vmatpush2.msra.mxu0 %v3475
        %3653 = vmatprep.subr.mxu0 0.0
        %3654 = vmatpush2.msra.mxu0 %v3474
        %3655 = vmatprep.subr.mxu0 0.0
        %3656 = vmatpush2.msra.mxu0 %v3473
        %3657 = vmatprep.subr.mxu0 0.0
        %3658 = vmatpush2.msra.mxu0 %v3472
        %3659 = vmatprep.mubr.f32.mxu0 %v3361
        %3660 = vmatmul.mubr.f32.gmra.mxu0 %v3360
        %v3661 = vpop.f32.mrf.mxu0
        %v3662 = vadd.f32 %v3497, %v3661
        %v3663 = vpop.f32.mrf.mxu0
        %3664 = vmatprep.mubr.f32.mxu0 %v3364
        %3665 = vmatmul.mubr.f32.gmra.mxu0 %v3363
        %v3666 = vpop.f32.mrf.mxu0
        %v3667 = vadd.f32 %v3497, %v3666
        %v3668 = vpop.f32.mrf.mxu0
        %3669 = vmatprep.mubr.f32.mxu0 %v3367
        %3670 = vmatmul.mubr.f32.gmra.mxu0 %v3366
        %v3671 = vpop.f32.mrf.mxu0
        %v3672 = vadd.f32 %v3497, %v3671
        %v3673 = vpop.f32.mrf.mxu0
        %3674 = vmatprep.mubr.f32.mxu0 %v3370
        %3675 = vmatmul.mubr.f32.gmra.mxu0 %v3369
        %v3676 = vpop.f32.mrf.mxu0
        %v3677 = vadd.f32 %v3497, %v3676
        %v3678 = vpop.f32.mrf.mxu0
        %3679 = vmatprep.mubr.f32.mxu0 %v3373
        %3680 = vmatmul.mubr.f32.gmra.mxu0 %v3372
        %v3681 = vpop.f32.mrf.mxu0
        %v3682 = vadd.f32 %v3497, %v3681
        %v3683 = vpop.f32.mrf.mxu0
        %3684 = vmatprep.mubr.f32.mxu0 %v3376
        %3685 = vmatmul.mubr.f32.gmra.mxu0 %v3375
        %v3686 = vpop.f32.mrf.mxu0
        %v3687 = vadd.f32 %v3497, %v3686
        %v3688 = vpop.f32.mrf.mxu0
        %3689 = vmatprep.mubr.f32.mxu0 %v3379
        %3690 = vmatmul.mubr.f32.gmra.mxu0 %v3378
        %v3691 = vpop.f32.mrf.mxu0
        %v3692 = vadd.f32 %v3497, %v3691
        %v3693 = vpop.f32.mrf.mxu0
        %3694 = vmatprep.mubr.f32.mxu0 %v3382
        %3695 = vmatmul.mubr.f32.gmra.mxu0 %v3381
        %v3696 = vpop.f32.mrf.mxu0
        %v3697 = vadd.f32 %v3497, %v3696
        %v3698 = vpop.f32.mrf.mxu0
        %3699 = vmatprep.mubr.f32.mxu0 %v3385
        %3700 = vmatmul.mubr.f32.gmra.mxu0 %v3384
        %v3701 = vpop.f32.mrf.mxu0
        %v3702 = vadd.f32 %v3497, %v3701
        %v3703 = vpop.f32.mrf.mxu0
        %3704 = vmatprep.mubr.f32.mxu0 %v3388
        %3705 = vmatmul.mubr.f32.gmra.mxu0 %v3387
        %v3706 = vpop.f32.mrf.mxu0
        %v3707 = vadd.f32 %v3497, %v3706
        %v3708 = vpop.f32.mrf.mxu0
        %3709 = vmatprep.mubr.f32.mxu0 %v3391
        %3710 = vmatmul.mubr.f32.gmra.mxu0 %v3390
        %v3711 = vpop.f32.mrf.mxu0
        %v3712 = vadd.f32 %v3497, %v3711
        %v3713 = vpop.f32.mrf.mxu0
        %3714 = vmatprep.mubr.f32.mxu0 %v3394
        %3715 = vmatmul.mubr.f32.gmra.mxu0 %v3393
        %v3716 = vpop.f32.mrf.mxu0
        %v3717 = vadd.f32 %v3497, %v3716
        %v3718 = vpop.f32.mrf.mxu0
        %3719 = vmatprep.mubr.f32.mxu0 %v3397
        %3720 = vmatmul.mubr.f32.gmra.mxu0 %v3396
        %v3721 = vpop.f32.mrf.mxu0
        %v3722 = vadd.f32 %v3497, %v3721
        %v3723 = vpop.f32.mrf.mxu0
        %3724 = vmatprep.mubr.f32.mxu0 %v3400
        %3725 = vmatmul.mubr.f32.gmra.mxu0 %v3399
        %v3726 = vpop.f32.mrf.mxu0
        %v3727 = vadd.f32 %v3497, %v3726
        %v3728 = vpop.f32.mrf.mxu0
        %3729 = vmatprep.mubr.f32.mxu0 %v3403
        %3730 = vmatmul.mubr.f32.gmra.mxu0 %v3402
        %v3731 = vpop.f32.mrf.mxu0
        %v3732 = vadd.f32 %v3497, %v3731
        %v3733 = vpop.f32.mrf.mxu0
        %3734 = vmatprep.mubr.f32.mxu0 %v3406
        %3735 = vmatmul.mubr.f32.gmra.mxu0 %v3405
        %v3736 = vpop.f32.mrf.mxu0
        %v3737 = vadd.f32 %v3497, %v3736
        %v3738 = vpop.f32.mrf.mxu0
        %3739 = vmatprep.mubr.f32.mxu0 %v3409
        %3740 = vmatmul.mubr.f32.gmra.mxu0 %v3408
        %v3741 = vpop.f32.mrf.mxu0
        %v3742 = vadd.f32 %v3497, %v3741
        %v3743 = vpop.f32.mrf.mxu0
        %3744 = vmatprep.mubr.f32.mxu0 %v3412
        %3745 = vmatmul.mubr.f32.gmra.mxu0 %v3411
        %v3746 = vpop.f32.mrf.mxu0
        %v3747 = vadd.f32 %v3497, %v3746
        %v3748 = vpop.f32.mrf.mxu0
        %3749 = vmatprep.mubr.f32.mxu0 %v3415
        %3750 = vmatmul.mubr.f32.gmra.mxu0 %v3414
        %v3751 = vpop.f32.mrf.mxu0
        %v3752 = vadd.f32 %v3497, %v3751
        %v3753 = vpop.f32.mrf.mxu0
        %3754 = vmatprep.mubr.f32.mxu0 %v3418
        %3755 = vmatmul.mubr.f32.gmra.mxu0 %v3417
        %v3756 = vpop.f32.mrf.mxu0
        %v3757 = vadd.f32 %v3497, %v3756
        %v3758 = vpop.f32.mrf.mxu0
        %3759 = vmatprep.mubr.f32.mxu0 %v3421
        %3760 = vmatmul.mubr.f32.gmra.mxu0 %v3420
        %v3761 = vpop.f32.mrf.mxu0
        %v3762 = vadd.f32 %v3497, %v3761
        %v3763 = vpop.f32.mrf.mxu0
        %3764 = vmatprep.mubr.f32.mxu0 %v3424
        %3765 = vmatmul.mubr.f32.gmra.mxu0 %v3423
        %v3766 = vpop.f32.mrf.mxu0
        %v3767 = vadd.f32 %v3497, %v3766
        %v3768 = vpop.f32.mrf.mxu0
        %3769 = vmatprep.mubr.f32.mxu0 %v3427
        %3770 = vmatmul.mubr.f32.gmra.mxu0 %v3426
        %v3771 = vpop.f32.mrf.mxu0
        %v3772 = vadd.f32 %v3497, %v3771
        %v3773 = vpop.f32.mrf.mxu0
        %3774 = vmatprep.mubr.f32.mxu0 %v3430
        %3775 = vmatmul.mubr.f32.gmra.mxu0 %v3429
        %v3776 = vpop.f32.mrf.mxu0
        %v3777 = vadd.f32 %v3497, %v3776
        %v3778 = vpop.f32.mrf.mxu0
        %3779 = vmatprep.mubr.f32.mxu0 %v3433
        %3780 = vmatmul.mubr.f32.gmra.mxu0 %v3432
        %v3781 = vpop.f32.mrf.mxu0
        %v3782 = vadd.f32 %v3497, %v3781
        %v3783 = vpop.f32.mrf.mxu0
        %3784 = vmatprep.mubr.f32.mxu0 %v3436
        %3785 = vmatmul.mubr.f32.gmra.mxu0 %v3435
        %v3786 = vpop.f32.mrf.mxu0
        %v3787 = vadd.f32 %v3497, %v3786
        %v3788 = vpop.f32.mrf.mxu0
        %3789 = vmatprep.mubr.f32.mxu0 %v3439
        %3790 = vmatmul.mubr.f32.gmra.mxu0 %v3438
        %v3791 = vpop.f32.mrf.mxu0
        %v3792 = vadd.f32 %v3497, %v3791
        %v3793 = vpop.f32.mrf.mxu0
        %3794 = vmatprep.mubr.f32.mxu0 %v3442
        %3795 = vmatmul.mubr.f32.gmra.mxu0 %v3441
        %v3796 = vpop.f32.mrf.mxu0
        %v3797 = vadd.f32 %v3497, %v3796
        %v3798 = vpop.f32.mrf.mxu0
        %3799 = vmatprep.mubr.f32.mxu0 %v3445
        %3800 = vmatmul.mubr.f32.gmra.mxu0 %v3444
        %v3801 = vpop.f32.mrf.mxu0
        %v3802 = vadd.f32 %v3497, %v3801
        %v3803 = vpop.f32.mrf.mxu0
        %3804 = vmatprep.mubr.f32.mxu0 %v3448
        %3805 = vmatmul.mubr.f32.gmra.mxu0 %v3447
        %v3806 = vpop.f32.mrf.mxu0
        %v3807 = vadd.f32 %v3497, %v3806
        %v3808 = vpop.f32.mrf.mxu0
        %3809 = vmatprep.mubr.f32.mxu0 %v3451
        %3810 = vmatmul.mubr.f32.gmra.mxu0 %v3450
        %v3811 = vpop.f32.mrf.mxu0
        %v3812 = vadd.f32 %v3497, %v3811
        %v3813 = vpop.f32.mrf.mxu0
        %3814 = vmatprep.mubr.f32.mxu0 %v3454
        %3815 = vmatmul.mubr.f32.gmra.mxu0 %v3453
        %v3816 = vpop.f32.mrf.mxu0
        %v3817 = vadd.f32 %v3497, %v3816
        %v3818 = vpop.f32.mrf.mxu0
        %3819 = vdwg.mxu0
        %3820 = vmatprep.subr.mxu0 0.0
        %3821 = vmatpush1.msra.mxu0 0.0
        %3822 = vmatprep.subr.mxu0 0.0
        %3823 = vmatpush1.msra.mxu0 0.0
        %3824 = vmatprep.subr.mxu0 0.0
        %3825 = vmatpush1.msra.mxu0 0.0
        %3826 = vmatprep.subr.mxu0 0.0
        %3827 = vmatpush1.msra.mxu0 0.0
        %3828 = vmatprep.subr.mxu0 0.0
        %3829 = vmatpush1.msra.mxu0 0.0
        %3830 = vmatprep.subr.mxu0 0.0
        %3831 = vmatpush1.msra.mxu0 0.0
        %3832 = vmatprep.subr.mxu0 0.0
        %3833 = vmatpush1.msra.mxu0 0.0
        %3834 = vmatprep.subr.mxu0 0.0
        %3835 = vmatpush1.msra.mxu0 0.0
        %3836 = vmatprep.subr.mxu0 0.0
        %3837 = vmatpush1.msra.mxu0 0.0
        %3838 = vmatprep.subr.mxu0 0.0
        %3839 = vmatpush1.msra.mxu0 0.0
        %3840 = vmatprep.subr.mxu0 0.0
        %3841 = vmatpush1.msra.mxu0 0.0
        %3842 = vmatprep.subr.mxu0 0.0
        %3843 = vmatpush1.msra.mxu0 0.0
        %3844 = vmatprep.subr.mxu0 0.0
        %3845 = vmatpush1.msra.mxu0 %v3491
        %3846 = vmatprep.subr.mxu0 0.0
        %3847 = vmatpush1.msra.mxu0 %v3490
        %3848 = vmatprep.subr.mxu0 0.0
        %3849 = vmatpush1.msra.mxu0 %v3489
        %3850 = vmatprep.subr.mxu0 0.0
        %3851 = vmatpush1.msra.mxu0 %v3488
        %3852 = vmatprep.subr.mxu0 0.0
        %3853 = vmatpush2.msra.mxu0 0.0
        %3854 = vmatprep.subr.mxu0 0.0
        %3855 = vmatpush2.msra.mxu0 0.0
        %3856 = vmatprep.subr.mxu0 0.0
        %3857 = vmatpush2.msra.mxu0 0.0
        %3858 = vmatprep.subr.mxu0 0.0
        %3859 = vmatpush2.msra.mxu0 0.0
        %3860 = vmatprep.subr.mxu0 0.0
        %3861 = vmatpush2.msra.mxu0 0.0
        %3862 = vmatprep.subr.mxu0 0.0
        %3863 = vmatpush2.msra.mxu0 0.0
        %3864 = vmatprep.subr.mxu0 0.0
        %3865 = vmatpush2.msra.mxu0 0.0
        %3866 = vmatprep.subr.mxu0 0.0
        %3867 = vmatpush2.msra.mxu0 0.0
        %3868 = vmatprep.subr.mxu0 0.0
        %3869 = vmatpush2.msra.mxu0 0.0
        %3870 = vmatprep.subr.mxu0 0.0
        %3871 = vmatpush2.msra.mxu0 0.0
        %3872 = vmatprep.subr.mxu0 0.0
        %3873 = vmatpush2.msra.mxu0 0.0
        %3874 = vmatprep.subr.mxu0 0.0
        %3875 = vmatpush2.msra.mxu0 0.0
        %3876 = vmatprep.subr.mxu0 0.0
        %3877 = vmatpush2.msra.mxu0 0.0
        %3878 = vmatprep.subr.mxu0 0.0
        %3879 = vmatpush2.msra.mxu0 0.0
        %3880 = vmatprep.subr.mxu0 0.0
        %3881 = vmatpush2.msra.mxu0 0.0
        %3882 = vmatprep.subr.mxu0 0.0
        %3883 = vmatpush2.msra.mxu0 0.0
        %3884 = vmatprep.mubr.f32.mxu0 0.0
        %3885 = vmatmul.mubr.f32.gmra.mxu0 %v3500
        %v3886 = vpop.f32.mrf.mxu0
        %v3887 = vadd.f32 %v3662, %v3886
        %v3888 = vpop.f32.mrf.mxu0
        %3889 = vmatprep.mubr.f32.mxu0 0.0
        %3890 = vmatmul.mubr.f32.gmra.mxu0 %v3503
        %v3891 = vpop.f32.mrf.mxu0
        %v3892 = vadd.f32 %v3667, %v3891
        %v3893 = vpop.f32.mrf.mxu0
        %3894 = vmatprep.mubr.f32.mxu0 0.0
        %3895 = vmatmul.mubr.f32.gmra.mxu0 %v3506
        %v3896 = vpop.f32.mrf.mxu0
        %v3897 = vadd.f32 %v3672, %v3896
        %v3898 = vpop.f32.mrf.mxu0
        %3899 = vmatprep.mubr.f32.mxu0 0.0
        %3900 = vmatmul.mubr.f32.gmra.mxu0 %v3509
        %v3901 = vpop.f32.mrf.mxu0
        %v3902 = vadd.f32 %v3677, %v3901
        %v3903 = vpop.f32.mrf.mxu0
        %3904 = vmatprep.mubr.f32.mxu0 0.0
        %3905 = vmatmul.mubr.f32.gmra.mxu0 %v3512
        %v3906 = vpop.f32.mrf.mxu0
        %v3907 = vadd.f32 %v3682, %v3906
        %v3908 = vpop.f32.mrf.mxu0
        %3909 = vmatprep.mubr.f32.mxu0 0.0
        %3910 = vmatmul.mubr.f32.gmra.mxu0 %v3515
        %v3911 = vpop.f32.mrf.mxu0
        %v3912 = vadd.f32 %v3687, %v3911
        %v3913 = vpop.f32.mrf.mxu0
        %3914 = vmatprep.mubr.f32.mxu0 0.0
        %3915 = vmatmul.mubr.f32.gmra.mxu0 %v3518
        %v3916 = vpop.f32.mrf.mxu0
        %v3917 = vadd.f32 %v3692, %v3916
        %v3918 = vpop.f32.mrf.mxu0
        %3919 = vmatprep.mubr.f32.mxu0 0.0
        %3920 = vmatmul.mubr.f32.gmra.mxu0 %v3521
        %v3921 = vpop.f32.mrf.mxu0
        %v3922 = vadd.f32 %v3697, %v3921
        %v3923 = vpop.f32.mrf.mxu0
        %3924 = vmatprep.mubr.f32.mxu0 0.0
        %3925 = vmatmul.mubr.f32.gmra.mxu0 %v3524
        %v3926 = vpop.f32.mrf.mxu0
        %v3927 = vadd.f32 %v3702, %v3926
        %v3928 = vpop.f32.mrf.mxu0
        %3929 = vmatprep.mubr.f32.mxu0 0.0
        %3930 = vmatmul.mubr.f32.gmra.mxu0 %v3527
        %v3931 = vpop.f32.mrf.mxu0
        %v3932 = vadd.f32 %v3707, %v3931
        %v3933 = vpop.f32.mrf.mxu0
        %3934 = vmatprep.mubr.f32.mxu0 0.0
        %3935 = vmatmul.mubr.f32.gmra.mxu0 %v3530
        %v3936 = vpop.f32.mrf.mxu0
        %v3937 = vadd.f32 %v3712, %v3936
        %v3938 = vpop.f32.mrf.mxu0
        %3939 = vmatprep.mubr.f32.mxu0 0.0
        %3940 = vmatmul.mubr.f32.gmra.mxu0 %v3533
        %v3941 = vpop.f32.mrf.mxu0
        %v3942 = vadd.f32 %v3717, %v3941
        %v3943 = vpop.f32.mrf.mxu0
        %3944 = vmatprep.mubr.f32.mxu0 0.0
        %3945 = vmatmul.mubr.f32.gmra.mxu0 %v3536
        %v3946 = vpop.f32.mrf.mxu0
        %v3947 = vadd.f32 %v3722, %v3946
        %v3948 = vpop.f32.mrf.mxu0
        %3949 = vmatprep.mubr.f32.mxu0 0.0
        %3950 = vmatmul.mubr.f32.gmra.mxu0 %v3539
        %v3951 = vpop.f32.mrf.mxu0
        %v3952 = vadd.f32 %v3727, %v3951
        %v3953 = vpop.f32.mrf.mxu0
        %3954 = vmatprep.mubr.f32.mxu0 0.0
        %3955 = vmatmul.mubr.f32.gmra.mxu0 %v3542
        %v3956 = vpop.f32.mrf.mxu0
        %v3957 = vadd.f32 %v3732, %v3956
        %v3958 = vpop.f32.mrf.mxu0
        %3959 = vmatprep.mubr.f32.mxu0 0.0
        %3960 = vmatmul.mubr.f32.gmra.mxu0 %v3545
        %v3961 = vpop.f32.mrf.mxu0
        %v3962 = vadd.f32 %v3737, %v3961
        %v3963 = vpop.f32.mrf.mxu0
        %3964 = vmatprep.mubr.f32.mxu0 0.0
        %3965 = vmatmul.mubr.f32.gmra.mxu0 %v3548
        %v3966 = vpop.f32.mrf.mxu0
        %v3967 = vadd.f32 %v3742, %v3966
        %v3968 = vpop.f32.mrf.mxu0
        %3969 = vmatprep.mubr.f32.mxu0 0.0
        %3970 = vmatmul.mubr.f32.gmra.mxu0 %v3551
        %v3971 = vpop.f32.mrf.mxu0
        %v3972 = vadd.f32 %v3747, %v3971
        %v3973 = vpop.f32.mrf.mxu0
        %3974 = vmatprep.mubr.f32.mxu0 0.0
        %3975 = vmatmul.mubr.f32.gmra.mxu0 %v3554
        %v3976 = vpop.f32.mrf.mxu0
        %v3977 = vadd.f32 %v3752, %v3976
        %v3978 = vpop.f32.mrf.mxu0
        %3979 = vmatprep.mubr.f32.mxu0 0.0
        %3980 = vmatmul.mubr.f32.gmra.mxu0 %v3557
        %v3981 = vpop.f32.mrf.mxu0
        %v3982 = vadd.f32 %v3757, %v3981
        %v3983 = vpop.f32.mrf.mxu0
        %3984 = vmatprep.mubr.f32.mxu0 0.0
        %3985 = vmatmul.mubr.f32.gmra.mxu0 %v3560
        %v3986 = vpop.f32.mrf.mxu0
        %v3987 = vadd.f32 %v3762, %v3986
        %v3988 = vpop.f32.mrf.mxu0
        %3989 = vmatprep.mubr.f32.mxu0 0.0
        %3990 = vmatmul.mubr.f32.gmra.mxu0 %v3563
        %v3991 = vpop.f32.mrf.mxu0
        %v3992 = vadd.f32 %v3767, %v3991
        %v3993 = vpop.f32.mrf.mxu0
        %3994 = vmatprep.mubr.f32.mxu0 0.0
        %3995 = vmatmul.mubr.f32.gmra.mxu0 %v3566
        %v3996 = vpop.f32.mrf.mxu0
        %v3997 = vadd.f32 %v3772, %v3996
        %v3998 = vpop.f32.mrf.mxu0
        %3999 = vmatprep.mubr.f32.mxu0 0.0
        %4000 = vmatmul.mubr.f32.gmra.mxu0 %v3569
        %v4001 = vpop.f32.mrf.mxu0
        %v4002 = vadd.f32 %v3777, %v4001
        %v4003 = vpop.f32.mrf.mxu0
        %4004 = vmatprep.mubr.f32.mxu0 0.0
        %4005 = vmatmul.mubr.f32.gmra.mxu0 %v3572
        %v4006 = vpop.f32.mrf.mxu0
        %v4007 = vadd.f32 %v3782, %v4006
        %v4008 = vpop.f32.mrf.mxu0
        %4009 = vmatprep.mubr.f32.mxu0 0.0
        %4010 = vmatmul.mubr.f32.gmra.mxu0 %v3575
        %v4011 = vpop.f32.mrf.mxu0
        %v4012 = vadd.f32 %v3787, %v4011
        %v4013 = vpop.f32.mrf.mxu0
        %4014 = vmatprep.mubr.f32.mxu0 0.0
        %4015 = vmatmul.mubr.f32.gmra.mxu0 %v3578
        %v4016 = vpop.f32.mrf.mxu0
        %v4017 = vadd.f32 %v3792, %v4016
        %v4018 = vpop.f32.mrf.mxu0
        %4019 = vmatprep.mubr.f32.mxu0 0.0
        %4020 = vmatmul.mubr.f32.gmra.mxu0 %v3581
        %v4021 = vpop.f32.mrf.mxu0
        %v4022 = vadd.f32 %v3797, %v4021
        %v4023 = vpop.f32.mrf.mxu0
        %4024 = vmatprep.mubr.f32.mxu0 0.0
        %4025 = vmatmul.mubr.f32.gmra.mxu0 %v3584
        %v4026 = vpop.f32.mrf.mxu0
        %v4027 = vadd.f32 %v3802, %v4026
        %v4028 = vpop.f32.mrf.mxu0
        %4029 = vmatprep.mubr.f32.mxu0 0.0
        %4030 = vmatmul.mubr.f32.gmra.mxu0 %v3587
        %v4031 = vpop.f32.mrf.mxu0
        %v4032 = vadd.f32 %v3807, %v4031
        %v4033 = vpop.f32.mrf.mxu0
        %4034 = vmatprep.mubr.f32.mxu0 0.0
        %4035 = vmatmul.mubr.f32.gmra.mxu0 %v3590
        %v4036 = vpop.f32.mrf.mxu0
        %v4037 = vadd.f32 %v3812, %v4036
        %v4038 = vpop.f32.mrf.mxu0
        %4039 = vmatprep.mubr.f32.mxu0 0.0
        %4040 = vmatmul.mubr.f32.gmra.mxu0 %v3593
        %v4041 = vpop.f32.mrf.mxu0
        %v4042 = vadd.f32 %v3817, %v4041
        %v4043 = vpop.f32.mrf.mxu0
        %4044 = vdwg.mxu0
        %v4045 = vmax.f32 %v3887, 0.0
        %v4046 = vmax.f32 %v3892, 0.0
        %v4047 = vmax.f32 %v3897, 0.0
        %v4048 = vmax.f32 %v3902, 0.0
        %v4049 = vmax.f32 %v3907, 0.0
        %v4050 = vmax.f32 %v3912, 0.0
        %v4051 = vmax.f32 %v3917, 0.0
        %v4052 = vmax.f32 %v3922, 0.0
        %v4053 = vmax.f32 %v3927, 0.0
        %v4054 = vmax.f32 %v3932, 0.0
        %v4055 = vmax.f32 %v3937, 0.0
        %v4056 = vmax.f32 %v3942, 0.0
        %v4057 = vmax.f32 %v3947, 0.0
        %v4058 = vmax.f32 %v3952, 0.0
        %v4059 = vmax.f32 %v3957, 0.0
        %v4060 = vmax.f32 %v3962, 0.0
        %v4061 = vmax.f32 %v3967, 0.0
        %v4062 = vmax.f32 %v3972, 0.0
        %v4063 = vmax.f32 %v3977, 0.0
        %v4064 = vmax.f32 %v3982, 0.0
        %v4065 = vmax.f32 %v3987, 0.0
        %v4066 = vmax.f32 %v3992, 0.0
        %v4067 = vmax.f32 %v3997, 0.0
        %v4068 = vmax.f32 %v4002, 0.0
        %v4069 = vmax.f32 %v4007, 0.0
        %v4070 = vmax.f32 %v4012, 0.0
        %v4071 = vmax.f32 %v4017, 0.0
        %v4072 = vmax.f32 %v4022, 0.0
        %v4073 = vmax.f32 %v4027, 0.0
        %v4074 = vmax.f32 %v4032, 0.0
        %v4075 = vmax.f32 %v4037, 0.0
        %v4076 = vmax.f32 %v4042, 0.0
        %4077 = vst.msk [vmem:[%s422 + $0x8] sm:$0xff] %vm317, %v4045
        %4078 = vst.msk [vmem:[%s422 + $0x10] sm:$0xff] %vm317, %v4046
        %4079 = vst.msk [vmem:[%s422 + $0x28] sm:$0xff] %vm317, %v4047
        %4080 = vst.msk [vmem:[%s422 + $0x30] sm:$0xff] %vm317, %v4048
        %4081 = vst.msk [vmem:[%s422 + $0x48] sm:$0xff] %vm317, %v4049
        %4082 = vst.msk [vmem:[%s422 + $0x50] sm:$0xff] %vm317, %v4050
        %4083 = vst.msk [vmem:[%s422 + $0x68] sm:$0xff] %vm317, %v4051
        %4084 = vst.msk [vmem:[%s422 + $0x70] sm:$0xff] %vm317, %v4052
        %4085 = vst.msk [vmem:[%s422 + $0x88] sm:$0xff] %vm317, %v4053
        %4086 = vst.msk [vmem:[%s422 + $0x90] sm:$0xff] %vm317, %v4054
        %4087 = vst.msk [vmem:[%s422 + $0xa8] sm:$0xff] %vm317, %v4055
        %4088 = vst.msk [vmem:[%s422 + $0xb0] sm:$0xff] %vm317, %v4056
        %4089 = vst.msk [vmem:[%s422 + $0xc8] sm:$0xff] %vm317, %v4057
        %4090 = vst.msk [vmem:[%s422 + $0xd0] sm:$0xff] %vm317, %v4058
        %4091 = vst.msk [vmem:[%s422 + $0xe8] sm:$0xff] %vm317, %v4059
        %4092 = vst.msk [vmem:[%s422 + $0xf0] sm:$0xff] %vm317, %v4060
        %4093 = vst.msk [vmem:[%s422 + $0x108] sm:$0xff] %vm317, %v4061
        %4094 = vst.msk [vmem:[%s422 + $0x110] sm:$0xff] %vm317, %v4062
        %4095 = vst.msk [vmem:[%s422 + $0x128] sm:$0xff] %vm317, %v4063
        %4096 = vst.msk [vmem:[%s422 + $0x130] sm:$0xff] %vm317, %v4064
        %4097 = vst.msk [vmem:[%s422 + $0x148] sm:$0xff] %vm317, %v4065
        %4098 = vst.msk [vmem:[%s422 + $0x150] sm:$0xff] %vm317, %v4066
        %4099 = vst.msk [vmem:[%s422 + $0x168] sm:$0xff] %vm317, %v4067
        %4100 = vst.msk [vmem:[%s422 + $0x170] sm:$0xff] %vm317, %v4068
        %4101 = vst.msk [vmem:[%s422 + $0x188] sm:$0xff] %vm317, %v4069
        %4102 = vst.msk [vmem:[%s422 + $0x190] sm:$0xff] %vm317, %v4070
        %4103 = vst.msk [vmem:[%s422 + $0x1a8] sm:$0xff] %vm317, %v4071
        %4104 = vst.msk [vmem:[%s422 + $0x1b0] sm:$0xff] %vm317, %v4072
        %4105 = vst.msk [vmem:[%s422 + $0x1c8] sm:$0xff] %vm317, %v4073
        %4106 = vst.msk [vmem:[%s422 + $0x1d0] sm:$0xff] %vm317, %v4074
        %4107 = vst.msk [vmem:[%s422 + $0x1e8] sm:$0xff] %vm317, %v4075
        %4108 = vst.msk [vmem:[%s422 + $0x1f0] sm:$0xff] %vm317, %v4076
        %v4109 = vld [vmem:[#allocation2 + $0x7] sm:$0xff]
        %v4110 = vld [vmem:[#allocation2 + $0xf] sm:$0xff]
        %v4111 = vld [vmem:[#allocation2 + $0x27] sm:$0xff]
        %v4112 = vld [vmem:[#allocation2 + $0x2f] sm:$0xff]
        %v4113 = vld [vmem:[#allocation2 + $0x47] sm:$0xff]
        %v4114 = vld [vmem:[#allocation2 + $0x4f] sm:$0xff]
        %v4115 = vld [vmem:[#allocation2 + $0x67] sm:$0xff]
        %v4116 = vld [vmem:[#allocation2 + $0x6f] sm:$0xff]
        %v4117 = vld [vmem:[#allocation2 + $0x87] sm:$0xff]
        %v4118 = vld [vmem:[#allocation2 + $0x8f] sm:$0xff]
        %v4119 = vld [vmem:[#allocation2 + $0xa7] sm:$0xff]
        %v4120 = vld [vmem:[#allocation2 + $0xaf] sm:$0xff]
        %v4121 = vld [vmem:[#allocation2 + $0xc7] sm:$0xff]
        %v4122 = vld [vmem:[#allocation2 + $0xcf] sm:$0xff]
        %v4123 = vld [vmem:[#allocation2 + $0xe7] sm:$0xff]
        %v4124 = vld [vmem:[#allocation2 + $0xef] sm:$0xff]
        %v4125 = vld [vmem:[#allocation2 + $0x107] sm:$0xff]
        %v4126 = vld [vmem:[#allocation2 + $0x10f] sm:$0xff]
        %v4127 = vld [vmem:[#allocation2 + $0x127] sm:$0xff]
        %v4128 = vld [vmem:[#allocation2 + $0x12f] sm:$0xff]
        %v4129 = vld [vmem:[#allocation2 + $0x147] sm:$0xff]
        %v4130 = vld [vmem:[#allocation2 + $0x14f] sm:$0xff]
        %v4131 = vld [vmem:[#allocation2 + $0x167] sm:$0xff]
        %v4132 = vld [vmem:[#allocation2 + $0x16f] sm:$0xff]
        %v4133 = vld [vmem:[#allocation2 + $0x187] sm:$0xff]
        %v4134 = vld [vmem:[#allocation2 + $0x18f] sm:$0xff]
        %v4135 = vld [vmem:[#allocation2 + $0x1a7] sm:$0xff]
        %v4136 = vld [vmem:[#allocation2 + $0x1af] sm:$0xff]
        %v4137 = vld [vmem:[#allocation2 + $0x1c7] sm:$0xff]
        %v4138 = vld [vmem:[#allocation2 + $0x1cf] sm:$0xff]
        %v4139 = vld [vmem:[#allocation2 + $0x1e7] sm:$0xff]
        %v4140 = vld [vmem:[#allocation2 + $0x1ef] sm:$0xff]
        %v4141 = vld [vmem:[#allocation2 + $0x207] sm:$0xff]
        %v4142 = vld [vmem:[#allocation2 + $0x20f] sm:$0xff]
        %v4143 = vld [vmem:[#allocation2 + $0x227] sm:$0xff]
        %v4144 = vld [vmem:[#allocation2 + $0x22f] sm:$0xff]
        %4145 = vst.msk [vmem:[#allocation3] sm:$0xff] %vm317, %v4109
        %4146 = vst.msk [vmem:[#allocation3 + $0x18] sm:$0xff] %vm317, %v4110
        %4147 = vst.msk [vmem:[#allocation3 + $0x30] sm:$0xff] %vm317, %v4111
        %4148 = vst.msk [vmem:[#allocation3 + $0x48] sm:$0xff] %vm317, %v4112
        %4149 = vst.msk [vmem:[#allocation3 + $0x60] sm:$0xff] %vm317, %v4113
        %4150 = vst.msk [vmem:[#allocation3 + $0x78] sm:$0xff] %vm317, %v4114
        %4151 = vst.msk [vmem:[#allocation3 + $0x90] sm:$0xff] %vm317, %v4115
        %4152 = vst.msk [vmem:[#allocation3 + $0xa8] sm:$0xff] %vm317, %v4116
        %4153 = vst.msk [vmem:[#allocation3 + $0xc0] sm:$0xff] %vm317, %v4117
        %4154 = vst.msk [vmem:[#allocation3 + $0xd8] sm:$0xff] %vm317, %v4118
        %4155 = vst.msk [vmem:[#allocation3 + $0xf0] sm:$0xff] %vm317, %v4119
        %4156 = vst.msk [vmem:[#allocation3 + $0x108] sm:$0xff] %vm317, %v4120
        %4157 = vst.msk [vmem:[#allocation3 + $0x120] sm:$0xff] %vm317, %v4121
        %4158 = vst.msk [vmem:[#allocation3 + $0x138] sm:$0xff] %vm317, %v4122
        %4159 = vst.msk [vmem:[#allocation3 + $0x150] sm:$0xff] %vm317, %v4123
        %4160 = vst.msk [vmem:[#allocation3 + $0x168] sm:$0xff] %vm317, %v4124
        %4161 = vst.msk [vmem:[#allocation3 + $0x180] sm:$0xff] %vm317, %v4125
        %4162 = vst.msk [vmem:[#allocation3 + $0x198] sm:$0xff] %vm317, %v4126
        %4163 = vst.msk [vmem:[#allocation3 + $0x1b0] sm:$0xff] %vm317, %v4127
        %4164 = vst.msk [vmem:[#allocation3 + $0x1c8] sm:$0xff] %vm317, %v4128
        %4165 = vst.msk [vmem:[#allocation3 + $0x1e0] sm:$0xff] %vm317, %v4129
        %4166 = vst.msk [vmem:[#allocation3 + $0x1f8] sm:$0xff] %vm317, %v4130
        %4167 = vst.msk [vmem:[#allocation3 + $0x210] sm:$0xff] %vm317, %v4131
        %4168 = vst.msk [vmem:[#allocation3 + $0x228] sm:$0xff] %vm317, %v4132
        %4169 = vst.msk [vmem:[#allocation3 + $0x240] sm:$0xff] %vm317, %v4133
        %4170 = vst.msk [vmem:[#allocation3 + $0x258] sm:$0xff] %vm317, %v4134
        %4171 = vst.msk [vmem:[#allocation3 + $0x270] sm:$0xff] %vm317, %v4135
        %4172 = vst.msk [vmem:[#allocation3 + $0x288] sm:$0xff] %vm317, %v4136
        %4173 = vst.msk [vmem:[#allocation3 + $0x2a0] sm:$0xff] %vm317, %v4137
        %4174 = vst.msk [vmem:[#allocation3 + $0x2b8] sm:$0xff] %vm317, %v4138
        %4175 = vst.msk [vmem:[#allocation3 + $0x2d0] sm:$0xff] %vm317, %v4139
        %4176 = vst.msk [vmem:[#allocation3 + $0x2e8] sm:$0xff] %vm317, %v4140
        %4209 = vrot.lane.b32.xlu0 %v4111, 96
        %v4210 = vpop.permute.xlu0 %4209
        %4211 = vrot.lane.b32.xlu0 %v4112, 96
        %v4212 = vpop.permute.xlu0 %4211
        %4213 = vrot.lane.b32.xlu0 %v4113, 96
        %v4214 = vpop.permute.xlu0 %4213
        %4215 = vrot.lane.b32.xlu0 %v4114, 96
        %v4216 = vpop.permute.xlu0 %4215
        %4217 = vrot.lane.b32.xlu0 %v4115, 96
        %v4218 = vpop.permute.xlu0 %4217
        %4219 = vrot.lane.b32.xlu0 %v4116, 96
        %v4220 = vpop.permute.xlu0 %4219
        %4221 = vrot.lane.b32.xlu0 %v4117, 96
        %v4222 = vpop.permute.xlu0 %4221
        %4223 = vrot.lane.b32.xlu0 %v4118, 96
        %v4224 = vpop.permute.xlu0 %4223
        %4225 = vrot.lane.b32.xlu0 %v4119, 96
        %v4226 = vpop.permute.xlu0 %4225
        %4227 = vrot.lane.b32.xlu0 %v4120, 96
        %v4228 = vpop.permute.xlu0 %4227
        %4229 = vrot.lane.b32.xlu0 %v4121, 96
        %v4230 = vpop.permute.xlu0 %4229
        %4231 = vrot.lane.b32.xlu0 %v4122, 96
        %v4232 = vpop.permute.xlu0 %4231
        %4233 = vrot.lane.b32.xlu0 %v4123, 96
        %v4234 = vpop.permute.xlu0 %4233
        %4235 = vrot.lane.b32.xlu0 %v4124, 96
        %v4236 = vpop.permute.xlu0 %4235
        %4237 = vrot.lane.b32.xlu0 %v4125, 96
        %v4238 = vpop.permute.xlu0 %4237
        %4239 = vrot.lane.b32.xlu0 %v4126, 96
        %v4240 = vpop.permute.xlu0 %4239
        %4241 = vrot.lane.b32.xlu0 %v4127, 96
        %v4242 = vpop.permute.xlu0 %4241
        %4243 = vrot.lane.b32.xlu0 %v4128, 96
        %v4244 = vpop.permute.xlu0 %4243
        %4245 = vrot.lane.b32.xlu0 %v4129, 96
        %v4246 = vpop.permute.xlu0 %4245
        %4247 = vrot.lane.b32.xlu0 %v4130, 96
        %v4248 = vpop.permute.xlu0 %4247
        %4249 = vrot.lane.b32.xlu0 %v4131, 96
        %v4250 = vpop.permute.xlu0 %4249
        %4251 = vrot.lane.b32.xlu0 %v4132, 96
        %v4252 = vpop.permute.xlu0 %4251
        %4253 = vrot.lane.b32.xlu0 %v4133, 96
        %v4254 = vpop.permute.xlu0 %4253
        %4255 = vrot.lane.b32.xlu0 %v4134, 96
        %v4256 = vpop.permute.xlu0 %4255
        %4257 = vrot.lane.b32.xlu0 %v4135, 96
        %v4258 = vpop.permute.xlu0 %4257
        %4259 = vrot.lane.b32.xlu0 %v4136, 96
        %v4260 = vpop.permute.xlu0 %4259
        %4261 = vrot.lane.b32.xlu0 %v4137, 96
        %v4262 = vpop.permute.xlu0 %4261
        %4263 = vrot.lane.b32.xlu0 %v4138, 96
        %v4264 = vpop.permute.xlu0 %4263
        %4265 = vrot.lane.b32.xlu0 %v4139, 96
        %v4266 = vpop.permute.xlu0 %4265
        %4267 = vrot.lane.b32.xlu0 %v4140, 96
        %v4268 = vpop.permute.xlu0 %4267
        %4269 = vrot.lane.b32.xlu0 %v4141, 96
        %v4270 = vpop.permute.xlu0 %4269
        %4271 = vrot.lane.b32.xlu0 %v4142, 96
        %v4272 = vpop.permute.xlu0 %4271
        %4305 = vst.msk [vmem:[#allocation3] sm:$0xff] %vm652, %v4210
        %4306 = vst.msk [vmem:[#allocation3 + $0x18] sm:$0xff] %vm652, %v4212
        %4307 = vst.msk [vmem:[#allocation3 + $0x30] sm:$0xff] %vm652, %v4214
        %4308 = vst.msk [vmem:[#allocation3 + $0x48] sm:$0xff] %vm652, %v4216
        %4309 = vst.msk [vmem:[#allocation3 + $0x60] sm:$0xff] %vm652, %v4218
        %4310 = vst.msk [vmem:[#allocation3 + $0x78] sm:$0xff] %vm652, %v4220
        %4311 = vst.msk [vmem:[#allocation3 + $0x90] sm:$0xff] %vm652, %v4222
        %4312 = vst.msk [vmem:[#allocation3 + $0xa8] sm:$0xff] %vm652, %v4224
        %4313 = vst.msk [vmem:[#allocation3 + $0xc0] sm:$0xff] %vm652, %v4226
        %4314 = vst.msk [vmem:[#allocation3 + $0xd8] sm:$0xff] %vm652, %v4228
        %4315 = vst.msk [vmem:[#allocation3 + $0xf0] sm:$0xff] %vm652, %v4230
        %4316 = vst.msk [vmem:[#allocation3 + $0x108] sm:$0xff] %vm652, %v4232
        %4317 = vst.msk [vmem:[#allocation3 + $0x120] sm:$0xff] %vm652, %v4234
        %4318 = vst.msk [vmem:[#allocation3 + $0x138] sm:$0xff] %vm652, %v4236
        %4319 = vst.msk [vmem:[#allocation3 + $0x150] sm:$0xff] %vm652, %v4238
        %4320 = vst.msk [vmem:[#allocation3 + $0x168] sm:$0xff] %vm652, %v4240
        %4321 = vst.msk [vmem:[#allocation3 + $0x180] sm:$0xff] %vm652, %v4242
        %4322 = vst.msk [vmem:[#allocation3 + $0x198] sm:$0xff] %vm652, %v4244
        %4323 = vst.msk [vmem:[#allocation3 + $0x1b0] sm:$0xff] %vm652, %v4246
        %4324 = vst.msk [vmem:[#allocation3 + $0x1c8] sm:$0xff] %vm652, %v4248
        %4325 = vst.msk [vmem:[#allocation3 + $0x1e0] sm:$0xff] %vm652, %v4250
        %4326 = vst.msk [vmem:[#allocation3 + $0x1f8] sm:$0xff] %vm652, %v4252
        %4327 = vst.msk [vmem:[#allocation3 + $0x210] sm:$0xff] %vm652, %v4254
        %4328 = vst.msk [vmem:[#allocation3 + $0x228] sm:$0xff] %vm652, %v4256
        %4329 = vst.msk [vmem:[#allocation3 + $0x240] sm:$0xff] %vm652, %v4258
        %4330 = vst.msk [vmem:[#allocation3 + $0x258] sm:$0xff] %vm652, %v4260
        %4331 = vst.msk [vmem:[#allocation3 + $0x270] sm:$0xff] %vm652, %v4262
        %4332 = vst.msk [vmem:[#allocation3 + $0x288] sm:$0xff] %vm652, %v4264
        %4333 = vst.msk [vmem:[#allocation3 + $0x2a0] sm:$0xff] %vm652, %v4266
        %4334 = vst.msk [vmem:[#allocation3 + $0x2b8] sm:$0xff] %vm652, %v4268
        %4335 = vst.msk [vmem:[#allocation3 + $0x2d0] sm:$0xff] %vm652, %v4270
        %4336 = vst.msk [vmem:[#allocation3 + $0x2e8] sm:$0xff] %vm652, %v4272
        %4339 = vrot.lane.b32.xlu0 %v4113, 64
        %v4340 = vpop.permute.xlu0 %4339
        %4341 = vrot.lane.b32.xlu0 %v4114, 64
        %v4342 = vpop.permute.xlu0 %4341
        %4343 = vrot.lane.b32.xlu0 %v4115, 64
        %v4344 = vpop.permute.xlu0 %4343
        %4345 = vrot.lane.b32.xlu0 %v4116, 64
        %v4346 = vpop.permute.xlu0 %4345
        %4347 = vrot.lane.b32.xlu0 %v4117, 64
        %v4348 = vpop.permute.xlu0 %4347
        %4349 = vrot.lane.b32.xlu0 %v4118, 64
        %v4350 = vpop.permute.xlu0 %4349
        %4351 = vrot.lane.b32.xlu0 %v4119, 64
        %v4352 = vpop.permute.xlu0 %4351
        %4353 = vrot.lane.b32.xlu0 %v4120, 64
        %v4354 = vpop.permute.xlu0 %4353
        %4355 = vrot.lane.b32.xlu0 %v4121, 64
        %v4356 = vpop.permute.xlu0 %4355
        %4357 = vrot.lane.b32.xlu0 %v4122, 64
        %v4358 = vpop.permute.xlu0 %4357
        %4359 = vrot.lane.b32.xlu0 %v4123, 64
        %v4360 = vpop.permute.xlu0 %4359
        %4361 = vrot.lane.b32.xlu0 %v4124, 64
        %v4362 = vpop.permute.xlu0 %4361
        %4363 = vrot.lane.b32.xlu0 %v4125, 64
        %v4364 = vpop.permute.xlu0 %4363
        %4365 = vrot.lane.b32.xlu0 %v4126, 64
        %v4366 = vpop.permute.xlu0 %4365
        %4367 = vrot.lane.b32.xlu0 %v4127, 64
        %v4368 = vpop.permute.xlu0 %4367
        %4369 = vrot.lane.b32.xlu0 %v4128, 64
        %v4370 = vpop.permute.xlu0 %4369
        %4371 = vrot.lane.b32.xlu0 %v4129, 64
        %v4372 = vpop.permute.xlu0 %4371
        %4373 = vrot.lane.b32.xlu0 %v4130, 64
        %v4374 = vpop.permute.xlu0 %4373
        %4375 = vrot.lane.b32.xlu0 %v4131, 64
        %v4376 = vpop.permute.xlu0 %4375
        %4377 = vrot.lane.b32.xlu0 %v4132, 64
        %v4378 = vpop.permute.xlu0 %4377
        %4379 = vrot.lane.b32.xlu0 %v4133, 64
        %v4380 = vpop.permute.xlu0 %4379
        %4381 = vrot.lane.b32.xlu0 %v4134, 64
        %v4382 = vpop.permute.xlu0 %4381
        %4383 = vrot.lane.b32.xlu0 %v4135, 64
        %v4384 = vpop.permute.xlu0 %4383
        %4385 = vrot.lane.b32.xlu0 %v4136, 64
        %v4386 = vpop.permute.xlu0 %4385
        %4387 = vrot.lane.b32.xlu0 %v4137, 64
        %v4388 = vpop.permute.xlu0 %4387
        %4389 = vrot.lane.b32.xlu0 %v4138, 64
        %v4390 = vpop.permute.xlu0 %4389
        %4391 = vrot.lane.b32.xlu0 %v4139, 64
        %v4392 = vpop.permute.xlu0 %4391
        %4393 = vrot.lane.b32.xlu0 %v4140, 64
        %v4394 = vpop.permute.xlu0 %4393
        %4395 = vrot.lane.b32.xlu0 %v4141, 64
        %v4396 = vpop.permute.xlu0 %4395
        %4397 = vrot.lane.b32.xlu0 %v4142, 64
        %v4398 = vpop.permute.xlu0 %4397
        %4399 = vrot.lane.b32.xlu0 %v4143, 64
        %v4400 = vpop.permute.xlu0 %4399
        %4401 = vrot.lane.b32.xlu0 %v4144, 64
        %v4402 = vpop.permute.xlu0 %4401
        %4435 = vst.msk [vmem:[#allocation3 + $0x8] sm:$0xff] %vm783, %v4340
        %4436 = vst.msk [vmem:[#allocation3 + $0x20] sm:$0xff] %vm783, %v4342
        %4437 = vst.msk [vmem:[#allocation3 + $0x38] sm:$0xff] %vm783, %v4344
        %4438 = vst.msk [vmem:[#allocation3 + $0x50] sm:$0xff] %vm783, %v4346
        %4439 = vst.msk [vmem:[#allocation3 + $0x68] sm:$0xff] %vm783, %v4348
        %4440 = vst.msk [vmem:[#allocation3 + $0x80] sm:$0xff] %vm783, %v4350
        %4441 = vst.msk [vmem:[#allocation3 + $0x98] sm:$0xff] %vm783, %v4352
        %4442 = vst.msk [vmem:[#allocation3 + $0xb0] sm:$0xff] %vm783, %v4354
        %4443 = vst.msk [vmem:[#allocation3 + $0xc8] sm:$0xff] %vm783, %v4356
        %4444 = vst.msk [vmem:[#allocation3 + $0xe0] sm:$0xff] %vm783, %v4358
        %4445 = vst.msk [vmem:[#allocation3 + $0xf8] sm:$0xff] %vm783, %v4360
        %4446 = vst.msk [vmem:[#allocation3 + $0x110] sm:$0xff] %vm783, %v4362
        %4447 = vst.msk [vmem:[#allocation3 + $0x128] sm:$0xff] %vm783, %v4364
        %4448 = vst.msk [vmem:[#allocation3 + $0x140] sm:$0xff] %vm783, %v4366
        %4449 = vst.msk [vmem:[#allocation3 + $0x158] sm:$0xff] %vm783, %v4368
        %4450 = vst.msk [vmem:[#allocation3 + $0x170] sm:$0xff] %vm783, %v4370
        %4451 = vst.msk [vmem:[#allocation3 + $0x188] sm:$0xff] %vm783, %v4372
        %4452 = vst.msk [vmem:[#allocation3 + $0x1a0] sm:$0xff] %vm783, %v4374
        %4453 = vst.msk [vmem:[#allocation3 + $0x1b8] sm:$0xff] %vm783, %v4376
        %4454 = vst.msk [vmem:[#allocation3 + $0x1d0] sm:$0xff] %vm783, %v4378
        %4455 = vst.msk [vmem:[#allocation3 + $0x1e8] sm:$0xff] %vm783, %v4380
        %4456 = vst.msk [vmem:[#allocation3 + $0x200] sm:$0xff] %vm783, %v4382
        %4457 = vst.msk [vmem:[#allocation3 + $0x218] sm:$0xff] %vm783, %v4384
        %4458 = vst.msk [vmem:[#allocation3 + $0x230] sm:$0xff] %vm783, %v4386
        %4459 = vst.msk [vmem:[#allocation3 + $0x248] sm:$0xff] %vm783, %v4388
        %4460 = vst.msk [vmem:[#allocation3 + $0x260] sm:$0xff] %vm783, %v4390
        %4461 = vst.msk [vmem:[#allocation3 + $0x278] sm:$0xff] %vm783, %v4392
        %4462 = vst.msk [vmem:[#allocation3 + $0x290] sm:$0xff] %vm783, %v4394
        %4463 = vst.msk [vmem:[#allocation3 + $0x2a8] sm:$0xff] %vm783, %v4396
        %4464 = vst.msk [vmem:[#allocation3 + $0x2c0] sm:$0xff] %vm783, %v4398
        %4465 = vst.msk [vmem:[#allocation3 + $0x2d8] sm:$0xff] %vm783, %v4400
        %4466 = vst.msk [vmem:[#allocation3 + $0x2f0] sm:$0xff] %vm783, %v4402
        %v4467 = vld [vmem:[#allocation2 + $0x8] sm:$0xff]
        %v4468 = vld [vmem:[#allocation2 + $0x10] sm:$0xff]
        %v4469 = vld [vmem:[#allocation2 + $0x28] sm:$0xff]
        %v4470 = vld [vmem:[#allocation2 + $0x30] sm:$0xff]
        %v4471 = vld [vmem:[#allocation2 + $0x48] sm:$0xff]
        %v4472 = vld [vmem:[#allocation2 + $0x50] sm:$0xff]
        %v4473 = vld [vmem:[#allocation2 + $0x68] sm:$0xff]
        %v4474 = vld [vmem:[#allocation2 + $0x70] sm:$0xff]
        %v4475 = vld [vmem:[#allocation2 + $0x88] sm:$0xff]
        %v4476 = vld [vmem:[#allocation2 + $0x90] sm:$0xff]
        %v4477 = vld [vmem:[#allocation2 + $0xa8] sm:$0xff]
        %v4478 = vld [vmem:[#allocation2 + $0xb0] sm:$0xff]
        %v4479 = vld [vmem:[#allocation2 + $0xc8] sm:$0xff]
        %v4480 = vld [vmem:[#allocation2 + $0xd0] sm:$0xff]
        %v4481 = vld [vmem:[#allocation2 + $0xe8] sm:$0xff]
        %v4482 = vld [vmem:[#allocation2 + $0xf0] sm:$0xff]
        %v4483 = vld [vmem:[#allocation2 + $0x108] sm:$0xff]
        %v4484 = vld [vmem:[#allocation2 + $0x110] sm:$0xff]
        %v4485 = vld [vmem:[#allocation2 + $0x128] sm:$0xff]
        %v4486 = vld [vmem:[#allocation2 + $0x130] sm:$0xff]
        %v4487 = vld [vmem:[#allocation2 + $0x148] sm:$0xff]
        %v4488 = vld [vmem:[#allocation2 + $0x150] sm:$0xff]
        %v4489 = vld [vmem:[#allocation2 + $0x168] sm:$0xff]
        %v4490 = vld [vmem:[#allocation2 + $0x170] sm:$0xff]
        %v4491 = vld [vmem:[#allocation2 + $0x188] sm:$0xff]
        %v4492 = vld [vmem:[#allocation2 + $0x190] sm:$0xff]
        %v4493 = vld [vmem:[#allocation2 + $0x1a8] sm:$0xff]
        %v4494 = vld [vmem:[#allocation2 + $0x1b0] sm:$0xff]
        %v4495 = vld [vmem:[#allocation2 + $0x1c8] sm:$0xff]
        %v4496 = vld [vmem:[#allocation2 + $0x1d0] sm:$0xff]
        %v4497 = vld [vmem:[#allocation2 + $0x1e8] sm:$0xff]
        %v4498 = vld [vmem:[#allocation2 + $0x1f0] sm:$0xff]
        %v4499 = vld [vmem:[#allocation2 + $0x208] sm:$0xff]
        %v4500 = vld [vmem:[#allocation2 + $0x210] sm:$0xff]
        %v4501 = vld [vmem:[#allocation2 + $0x228] sm:$0xff]
        %v4502 = vld [vmem:[#allocation2 + $0x230] sm:$0xff]
        %4535 = vrot.lane.b32.xlu0 %v4467, 32
        %v4536 = vpop.permute.xlu0 %4535
        %4537 = vrot.lane.b32.xlu0 %v4468, 32
        %v4538 = vpop.permute.xlu0 %4537
        %4539 = vrot.lane.b32.xlu0 %v4469, 32
        %v4540 = vpop.permute.xlu0 %4539
        %4541 = vrot.lane.b32.xlu0 %v4470, 32
        %v4542 = vpop.permute.xlu0 %4541
        %4543 = vrot.lane.b32.xlu0 %v4471, 32
        %v4544 = vpop.permute.xlu0 %4543
        %4545 = vrot.lane.b32.xlu0 %v4472, 32
        %v4546 = vpop.permute.xlu0 %4545
        %4547 = vrot.lane.b32.xlu0 %v4473, 32
        %v4548 = vpop.permute.xlu0 %4547
        %4549 = vrot.lane.b32.xlu0 %v4474, 32
        %v4550 = vpop.permute.xlu0 %4549
        %4551 = vrot.lane.b32.xlu0 %v4475, 32
        %v4552 = vpop.permute.xlu0 %4551
        %4553 = vrot.lane.b32.xlu0 %v4476, 32
        %v4554 = vpop.permute.xlu0 %4553
        %4555 = vrot.lane.b32.xlu0 %v4477, 32
        %v4556 = vpop.permute.xlu0 %4555
        %4557 = vrot.lane.b32.xlu0 %v4478, 32
        %v4558 = vpop.permute.xlu0 %4557
        %4559 = vrot.lane.b32.xlu0 %v4479, 32
        %v4560 = vpop.permute.xlu0 %4559
        %4561 = vrot.lane.b32.xlu0 %v4480, 32
        %v4562 = vpop.permute.xlu0 %4561
        %4563 = vrot.lane.b32.xlu0 %v4481, 32
        %v4564 = vpop.permute.xlu0 %4563
        %4565 = vrot.lane.b32.xlu0 %v4482, 32
        %v4566 = vpop.permute.xlu0 %4565
        %4567 = vrot.lane.b32.xlu0 %v4483, 32
        %v4568 = vpop.permute.xlu0 %4567
        %4569 = vrot.lane.b32.xlu0 %v4484, 32
        %v4570 = vpop.permute.xlu0 %4569
        %4571 = vrot.lane.b32.xlu0 %v4485, 32
        %v4572 = vpop.permute.xlu0 %4571
        %4573 = vrot.lane.b32.xlu0 %v4486, 32
        %v4574 = vpop.permute.xlu0 %4573
        %4575 = vrot.lane.b32.xlu0 %v4487, 32
        %v4576 = vpop.permute.xlu0 %4575
        %4577 = vrot.lane.b32.xlu0 %v4488, 32
        %v4578 = vpop.permute.xlu0 %4577
        %4579 = vrot.lane.b32.xlu0 %v4489, 32
        %v4580 = vpop.permute.xlu0 %4579
        %4581 = vrot.lane.b32.xlu0 %v4490, 32
        %v4582 = vpop.permute.xlu0 %4581
        %4583 = vrot.lane.b32.xlu0 %v4491, 32
        %v4584 = vpop.permute.xlu0 %4583
        %4585 = vrot.lane.b32.xlu0 %v4492, 32
        %v4586 = vpop.permute.xlu0 %4585
        %4587 = vrot.lane.b32.xlu0 %v4493, 32
        %v4588 = vpop.permute.xlu0 %4587
        %4589 = vrot.lane.b32.xlu0 %v4494, 32
        %v4590 = vpop.permute.xlu0 %4589
        %4591 = vrot.lane.b32.xlu0 %v4495, 32
        %v4592 = vpop.permute.xlu0 %4591
        %4593 = vrot.lane.b32.xlu0 %v4496, 32
        %v4594 = vpop.permute.xlu0 %4593
        %4595 = vrot.lane.b32.xlu0 %v4497, 32
        %v4596 = vpop.permute.xlu0 %4595
        %4597 = vrot.lane.b32.xlu0 %v4498, 32
        %v4598 = vpop.permute.xlu0 %4597
        %4631 = vst.msk [vmem:[#allocation3] sm:$0xff] %vm980, %v4536
        %4632 = vst.msk [vmem:[#allocation3 + $0x18] sm:$0xff] %vm980, %v4538
        %4633 = vst.msk [vmem:[#allocation3 + $0x30] sm:$0xff] %vm980, %v4540
        %4634 = vst.msk [vmem:[#allocation3 + $0x48] sm:$0xff] %vm980, %v4542
        %4635 = vst.msk [vmem:[#allocation3 + $0x60] sm:$0xff] %vm980, %v4544
        %4636 = vst.msk [vmem:[#allocation3 + $0x78] sm:$0xff] %vm980, %v4546
        %4637 = vst.msk [vmem:[#allocation3 + $0x90] sm:$0xff] %vm980, %v4548
        %4638 = vst.msk [vmem:[#allocation3 + $0xa8] sm:$0xff] %vm980, %v4550
        %4639 = vst.msk [vmem:[#allocation3 + $0xc0] sm:$0xff] %vm980, %v4552
        %4640 = vst.msk [vmem:[#allocation3 + $0xd8] sm:$0xff] %vm980, %v4554
        %4641 = vst.msk [vmem:[#allocation3 + $0xf0] sm:$0xff] %vm980, %v4556
        %4642 = vst.msk [vmem:[#allocation3 + $0x108] sm:$0xff] %vm980, %v4558
        %4643 = vst.msk [vmem:[#allocation3 + $0x120] sm:$0xff] %vm980, %v4560
        %4644 = vst.msk [vmem:[#allocation3 + $0x138] sm:$0xff] %vm980, %v4562
        %4645 = vst.msk [vmem:[#allocation3 + $0x150] sm:$0xff] %vm980, %v4564
        %4646 = vst.msk [vmem:[#allocation3 + $0x168] sm:$0xff] %vm980, %v4566
        %4647 = vst.msk [vmem:[#allocation3 + $0x180] sm:$0xff] %vm980, %v4568
        %4648 = vst.msk [vmem:[#allocation3 + $0x198] sm:$0xff] %vm980, %v4570
        %4649 = vst.msk [vmem:[#allocation3 + $0x1b0] sm:$0xff] %vm980, %v4572
        %4650 = vst.msk [vmem:[#allocation3 + $0x1c8] sm:$0xff] %vm980, %v4574
        %4651 = vst.msk [vmem:[#allocation3 + $0x1e0] sm:$0xff] %vm980, %v4576
        %4652 = vst.msk [vmem:[#allocation3 + $0x1f8] sm:$0xff] %vm980, %v4578
        %4653 = vst.msk [vmem:[#allocation3 + $0x210] sm:$0xff] %vm980, %v4580
        %4654 = vst.msk [vmem:[#allocation3 + $0x228] sm:$0xff] %vm980, %v4582
        %4655 = vst.msk [vmem:[#allocation3 + $0x240] sm:$0xff] %vm980, %v4584
        %4656 = vst.msk [vmem:[#allocation3 + $0x258] sm:$0xff] %vm980, %v4586
        %4657 = vst.msk [vmem:[#allocation3 + $0x270] sm:$0xff] %vm980, %v4588
        %4658 = vst.msk [vmem:[#allocation3 + $0x288] sm:$0xff] %vm980, %v4590
        %4659 = vst.msk [vmem:[#allocation3 + $0x2a0] sm:$0xff] %vm980, %v4592
        %4660 = vst.msk [vmem:[#allocation3 + $0x2b8] sm:$0xff] %vm980, %v4594
        %4661 = vst.msk [vmem:[#allocation3 + $0x2d0] sm:$0xff] %vm980, %v4596
        %4662 = vst.msk [vmem:[#allocation3 + $0x2e8] sm:$0xff] %vm980, %v4598
        %4663 = vst.msk [vmem:[#allocation3 + $0x8] sm:$0xff] %vm317, %v4469
        %4664 = vst.msk [vmem:[#allocation3 + $0x20] sm:$0xff] %vm317, %v4470
        %4665 = vst.msk [vmem:[#allocation3 + $0x38] sm:$0xff] %vm317, %v4471
        %4666 = vst.msk [vmem:[#allocation3 + $0x50] sm:$0xff] %vm317, %v4472
        %4667 = vst.msk [vmem:[#allocation3 + $0x68] sm:$0xff] %vm317, %v4473
        %4668 = vst.msk [vmem:[#allocation3 + $0x80] sm:$0xff] %vm317, %v4474
        %4669 = vst.msk [vmem:[#allocation3 + $0x98] sm:$0xff] %vm317, %v4475
        %4670 = vst.msk [vmem:[#allocation3 + $0xb0] sm:$0xff] %vm317, %v4476
        %4671 = vst.msk [vmem:[#allocation3 + $0xc8] sm:$0xff] %vm317, %v4477
        %4672 = vst.msk [vmem:[#allocation3 + $0xe0] sm:$0xff] %vm317, %v4478
        %4673 = vst.msk [vmem:[#allocation3 + $0xf8] sm:$0xff] %vm317, %v4479
        %4674 = vst.msk [vmem:[#allocation3 + $0x110] sm:$0xff] %vm317, %v4480
        %4675 = vst.msk [vmem:[#allocation3 + $0x128] sm:$0xff] %vm317, %v4481
        %4676 = vst.msk [vmem:[#allocation3 + $0x140] sm:$0xff] %vm317, %v4482
        %4677 = vst.msk [vmem:[#allocation3 + $0x158] sm:$0xff] %vm317, %v4483
        %4678 = vst.msk [vmem:[#allocation3 + $0x170] sm:$0xff] %vm317, %v4484
        %4679 = vst.msk [vmem:[#allocation3 + $0x188] sm:$0xff] %vm317, %v4485
        %4680 = vst.msk [vmem:[#allocation3 + $0x1a0] sm:$0xff] %vm317, %v4486
        %4681 = vst.msk [vmem:[#allocation3 + $0x1b8] sm:$0xff] %vm317, %v4487
        %4682 = vst.msk [vmem:[#allocation3 + $0x1d0] sm:$0xff] %vm317, %v4488
        %4683 = vst.msk [vmem:[#allocation3 + $0x1e8] sm:$0xff] %vm317, %v4489
        %4684 = vst.msk [vmem:[#allocation3 + $0x200] sm:$0xff] %vm317, %v4490
        %4685 = vst.msk [vmem:[#allocation3 + $0x218] sm:$0xff] %vm317, %v4491
        %4686 = vst.msk [vmem:[#allocation3 + $0x230] sm:$0xff] %vm317, %v4492
        %4687 = vst.msk [vmem:[#allocation3 + $0x248] sm:$0xff] %vm317, %v4493
        %4688 = vst.msk [vmem:[#allocation3 + $0x260] sm:$0xff] %vm317, %v4494
        %4689 = vst.msk [vmem:[#allocation3 + $0x278] sm:$0xff] %vm317, %v4495
        %4690 = vst.msk [vmem:[#allocation3 + $0x290] sm:$0xff] %vm317, %v4496
        %4691 = vst.msk [vmem:[#allocation3 + $0x2a8] sm:$0xff] %vm317, %v4497
        %4692 = vst.msk [vmem:[#allocation3 + $0x2c0] sm:$0xff] %vm317, %v4498
        %4693 = vst.msk [vmem:[#allocation3 + $0x2d8] sm:$0xff] %vm317, %v4499
        %4694 = vst.msk [vmem:[#allocation3 + $0x2f0] sm:$0xff] %vm317, %v4500
        %4699 = vrot.lane.b32.xlu0 %v4471, 96
        %v4700 = vpop.permute.xlu0 %4699
        %4701 = vrot.lane.b32.xlu0 %v4472, 96
        %v4702 = vpop.permute.xlu0 %4701
        %4703 = vrot.lane.b32.xlu0 %v4473, 96
        %v4704 = vpop.permute.xlu0 %4703
        %4705 = vrot.lane.b32.xlu0 %v4474, 96
        %v4706 = vpop.permute.xlu0 %4705
        %4707 = vrot.lane.b32.xlu0 %v4475, 96
        %v4708 = vpop.permute.xlu0 %4707
        %4709 = vrot.lane.b32.xlu0 %v4476, 96
        %v4710 = vpop.permute.xlu0 %4709
        %4711 = vrot.lane.b32.xlu0 %v4477, 96
        %v4712 = vpop.permute.xlu0 %4711
        %4713 = vrot.lane.b32.xlu0 %v4478, 96
        %v4714 = vpop.permute.xlu0 %4713
        %4715 = vrot.lane.b32.xlu0 %v4479, 96
        %v4716 = vpop.permute.xlu0 %4715
        %4717 = vrot.lane.b32.xlu0 %v4480, 96
        %v4718 = vpop.permute.xlu0 %4717
        %4719 = vrot.lane.b32.xlu0 %v4481, 96
        %v4720 = vpop.permute.xlu0 %4719
        %4721 = vrot.lane.b32.xlu0 %v4482, 96
        %v4722 = vpop.permute.xlu0 %4721
        %4723 = vrot.lane.b32.xlu0 %v4483, 96
        %v4724 = vpop.permute.xlu0 %4723
        %4725 = vrot.lane.b32.xlu0 %v4484, 96
        %v4726 = vpop.permute.xlu0 %4725
        %4727 = vrot.lane.b32.xlu0 %v4485, 96
        %v4728 = vpop.permute.xlu0 %4727
        %4729 = vrot.lane.b32.xlu0 %v4486, 96
        %v4730 = vpop.permute.xlu0 %4729
        %4731 = vrot.lane.b32.xlu0 %v4487, 96
        %v4732 = vpop.permute.xlu0 %4731
        %4733 = vrot.lane.b32.xlu0 %v4488, 96
        %v4734 = vpop.permute.xlu0 %4733
        %4735 = vrot.lane.b32.xlu0 %v4489, 96
        %v4736 = vpop.permute.xlu0 %4735
        %4737 = vrot.lane.b32.xlu0 %v4490, 96
        %v4738 = vpop.permute.xlu0 %4737
        %4739 = vrot.lane.b32.xlu0 %v4491, 96
        %v4740 = vpop.permute.xlu0 %4739
        %4741 = vrot.lane.b32.xlu0 %v4492, 96
        %v4742 = vpop.permute.xlu0 %4741
        %4743 = vrot.lane.b32.xlu0 %v4493, 96
        %v4744 = vpop.permute.xlu0 %4743
        %4745 = vrot.lane.b32.xlu0 %v4494, 96
        %v4746 = vpop.permute.xlu0 %4745
        %4747 = vrot.lane.b32.xlu0 %v4495, 96
        %v4748 = vpop.permute.xlu0 %4747
        %4749 = vrot.lane.b32.xlu0 %v4496, 96
        %v4750 = vpop.permute.xlu0 %4749
        %4751 = vrot.lane.b32.xlu0 %v4497, 96
        %v4752 = vpop.permute.xlu0 %4751
        %4753 = vrot.lane.b32.xlu0 %v4498, 96
        %v4754 = vpop.permute.xlu0 %4753
        %4755 = vrot.lane.b32.xlu0 %v4499, 96
        %v4756 = vpop.permute.xlu0 %4755
        %4757 = vrot.lane.b32.xlu0 %v4500, 96
        %v4758 = vpop.permute.xlu0 %4757
        %4759 = vrot.lane.b32.xlu0 %v4501, 96
        %v4760 = vpop.permute.xlu0 %4759
        %4761 = vrot.lane.b32.xlu0 %v4502, 96
        %v4762 = vpop.permute.xlu0 %4761
        %4795 = vst.msk [vmem:[#allocation3 + $0x8] sm:$0xff] %vm652, %v4700
        %4796 = vst.msk [vmem:[#allocation3 + $0x20] sm:$0xff] %vm652, %v4702
        %4797 = vst.msk [vmem:[#allocation3 + $0x38] sm:$0xff] %vm652, %v4704
        %4798 = vst.msk [vmem:[#allocation3 + $0x50] sm:$0xff] %vm652, %v4706
        %4799 = vst.msk [vmem:[#allocation3 + $0x68] sm:$0xff] %vm652, %v4708
        %4800 = vst.msk [vmem:[#allocation3 + $0x80] sm:$0xff] %vm652, %v4710
        %4801 = vst.msk [vmem:[#allocation3 + $0x98] sm:$0xff] %vm652, %v4712
        %4802 = vst.msk [vmem:[#allocation3 + $0xb0] sm:$0xff] %vm652, %v4714
        %4803 = vst.msk [vmem:[#allocation3 + $0xc8] sm:$0xff] %vm652, %v4716
        %4804 = vst.msk [vmem:[#allocation3 + $0xe0] sm:$0xff] %vm652, %v4718
        %4805 = vst.msk [vmem:[#allocation3 + $0xf8] sm:$0xff] %vm652, %v4720
        %4806 = vst.msk [vmem:[#allocation3 + $0x110] sm:$0xff] %vm652, %v4722
        %4807 = vst.msk [vmem:[#allocation3 + $0x128] sm:$0xff] %vm652, %v4724
        %4808 = vst.msk [vmem:[#allocation3 + $0x140] sm:$0xff] %vm652, %v4726
        %4809 = vst.msk [vmem:[#allocation3 + $0x158] sm:$0xff] %vm652, %v4728
        %4810 = vst.msk [vmem:[#allocation3 + $0x170] sm:$0xff] %vm652, %v4730
        %4811 = vst.msk [vmem:[#allocation3 + $0x188] sm:$0xff] %vm652, %v4732
        %4812 = vst.msk [vmem:[#allocation3 + $0x1a0] sm:$0xff] %vm652, %v4734
        %4813 = vst.msk [vmem:[#allocation3 + $0x1b8] sm:$0xff] %vm652, %v4736
        %4814 = vst.msk [vmem:[#allocation3 + $0x1d0] sm:$0xff] %vm652, %v4738
        %4815 = vst.msk [vmem:[#allocation3 + $0x1e8] sm:$0xff] %vm652, %v4740
        %4816 = vst.msk [vmem:[#allocation3 + $0x200] sm:$0xff] %vm652, %v4742
        %4817 = vst.msk [vmem:[#allocation3 + $0x218] sm:$0xff] %vm652, %v4744
        %4818 = vst.msk [vmem:[#allocation3 + $0x230] sm:$0xff] %vm652, %v4746
        %4819 = vst.msk [vmem:[#allocation3 + $0x248] sm:$0xff] %vm652, %v4748
        %4820 = vst.msk [vmem:[#allocation3 + $0x260] sm:$0xff] %vm652, %v4750
        %4821 = vst.msk [vmem:[#allocation3 + $0x278] sm:$0xff] %vm652, %v4752
        %4822 = vst.msk [vmem:[#allocation3 + $0x290] sm:$0xff] %vm652, %v4754
        %4823 = vst.msk [vmem:[#allocation3 + $0x2a8] sm:$0xff] %vm652, %v4756
        %4824 = vst.msk [vmem:[#allocation3 + $0x2c0] sm:$0xff] %vm652, %v4758
        %4825 = vst.msk [vmem:[#allocation3 + $0x2d8] sm:$0xff] %vm652, %v4760
        %4826 = vst.msk [vmem:[#allocation3 + $0x2f0] sm:$0xff] %vm652, %v4762
        %v4827 = vld [vmem:[#allocation2 + $0x9] sm:$0xff]
        %v4828 = vld [vmem:[#allocation2 + $0x11] sm:$0xff]
        %v4829 = vld [vmem:[#allocation2 + $0x29] sm:$0xff]
        %v4830 = vld [vmem:[#allocation2 + $0x31] sm:$0xff]
        %v4831 = vld [vmem:[#allocation2 + $0x49] sm:$0xff]
        %v4832 = vld [vmem:[#allocation2 + $0x51] sm:$0xff]
        %v4833 = vld [vmem:[#allocation2 + $0x69] sm:$0xff]
        %v4834 = vld [vmem:[#allocation2 + $0x71] sm:$0xff]
        %v4835 = vld [vmem:[#allocation2 + $0x89] sm:$0xff]
        %v4836 = vld [vmem:[#allocation2 + $0x91] sm:$0xff]
        %v4837 = vld [vmem:[#allocation2 + $0xa9] sm:$0xff]
        %v4838 = vld [vmem:[#allocation2 + $0xb1] sm:$0xff]
        %v4839 = vld [vmem:[#allocation2 + $0xc9] sm:$0xff]
        %v4840 = vld [vmem:[#allocation2 + $0xd1] sm:$0xff]
        %v4841 = vld [vmem:[#allocation2 + $0xe9] sm:$0xff]
        %v4842 = vld [vmem:[#allocation2 + $0xf1] sm:$0xff]
        %v4843 = vld [vmem:[#allocation2 + $0x109] sm:$0xff]
        %v4844 = vld [vmem:[#allocation2 + $0x111] sm:$0xff]
        %v4845 = vld [vmem:[#allocation2 + $0x129] sm:$0xff]
        %v4846 = vld [vmem:[#allocation2 + $0x131] sm:$0xff]
        %v4847 = vld [vmem:[#allocation2 + $0x149] sm:$0xff]
        %v4848 = vld [vmem:[#allocation2 + $0x151] sm:$0xff]
        %v4849 = vld [vmem:[#allocation2 + $0x169] sm:$0xff]
        %v4850 = vld [vmem:[#allocation2 + $0x171] sm:$0xff]
        %v4851 = vld [vmem:[#allocation2 + $0x189] sm:$0xff]
        %v4852 = vld [vmem:[#allocation2 + $0x191] sm:$0xff]
        %v4853 = vld [vmem:[#allocation2 + $0x1a9] sm:$0xff]
        %v4854 = vld [vmem:[#allocation2 + $0x1b1] sm:$0xff]
        %v4855 = vld [vmem:[#allocation2 + $0x1c9] sm:$0xff]
        %v4856 = vld [vmem:[#allocation2 + $0x1d1] sm:$0xff]
        %v4857 = vld [vmem:[#allocation2 + $0x1e9] sm:$0xff]
        %v4858 = vld [vmem:[#allocation2 + $0x1f1] sm:$0xff]
        %v4859 = vld [vmem:[#allocation2 + $0x209] sm:$0xff]
        %v4860 = vld [vmem:[#allocation2 + $0x211] sm:$0xff]
        %v4861 = vld [vmem:[#allocation2 + $0x229] sm:$0xff]
        %v4862 = vld [vmem:[#allocation2 + $0x231] sm:$0xff]
        %4895 = vrot.lane.b32.xlu0 %v4827, 64
        %v4896 = vpop.permute.xlu0 %4895
        %4897 = vrot.lane.b32.xlu0 %v4828, 64
        %v4898 = vpop.permute.xlu0 %4897
        %4899 = vrot.lane.b32.xlu0 %v4829, 64
        %v4900 = vpop.permute.xlu0 %4899
        %4901 = vrot.lane.b32.xlu0 %v4830, 64
        %v4902 = vpop.permute.xlu0 %4901
        %4903 = vrot.lane.b32.xlu0 %v4831, 64
        %v4904 = vpop.permute.xlu0 %4903
        %4905 = vrot.lane.b32.xlu0 %v4832, 64
        %v4906 = vpop.permute.xlu0 %4905
        %4907 = vrot.lane.b32.xlu0 %v4833, 64
        %v4908 = vpop.permute.xlu0 %4907
        %4909 = vrot.lane.b32.xlu0 %v4834, 64
        %v4910 = vpop.permute.xlu0 %4909
        %4911 = vrot.lane.b32.xlu0 %v4835, 64
        %v4912 = vpop.permute.xlu0 %4911
        %4913 = vrot.lane.b32.xlu0 %v4836, 64
        %v4914 = vpop.permute.xlu0 %4913
        %4915 = vrot.lane.b32.xlu0 %v4837, 64
        %v4916 = vpop.permute.xlu0 %4915
        %4917 = vrot.lane.b32.xlu0 %v4838, 64
        %v4918 = vpop.permute.xlu0 %4917
        %4919 = vrot.lane.b32.xlu0 %v4839, 64
        %v4920 = vpop.permute.xlu0 %4919
        %4921 = vrot.lane.b32.xlu0 %v4840, 64
        %v4922 = vpop.permute.xlu0 %4921
        %4923 = vrot.lane.b32.xlu0 %v4841, 64
        %v4924 = vpop.permute.xlu0 %4923
        %4925 = vrot.lane.b32.xlu0 %v4842, 64
        %v4926 = vpop.permute.xlu0 %4925
        %4927 = vrot.lane.b32.xlu0 %v4843, 64
        %v4928 = vpop.permute.xlu0 %4927
        %4929 = vrot.lane.b32.xlu0 %v4844, 64
        %v4930 = vpop.permute.xlu0 %4929
        %4931 = vrot.lane.b32.xlu0 %v4845, 64
        %v4932 = vpop.permute.xlu0 %4931
        %4933 = vrot.lane.b32.xlu0 %v4846, 64
        %v4934 = vpop.permute.xlu0 %4933
        %4935 = vrot.lane.b32.xlu0 %v4847, 64
        %v4936 = vpop.permute.xlu0 %4935
        %4937 = vrot.lane.b32.xlu0 %v4848, 64
        %v4938 = vpop.permute.xlu0 %4937
        %4939 = vrot.lane.b32.xlu0 %v4849, 64
        %v4940 = vpop.permute.xlu0 %4939
        %4941 = vrot.lane.b32.xlu0 %v4850, 64
        %v4942 = vpop.permute.xlu0 %4941
        %4943 = vrot.lane.b32.xlu0 %v4851, 64
        %v4944 = vpop.permute.xlu0 %4943
        %4945 = vrot.lane.b32.xlu0 %v4852, 64
        %v4946 = vpop.permute.xlu0 %4945
        %4947 = vrot.lane.b32.xlu0 %v4853, 64
        %v4948 = vpop.permute.xlu0 %4947
        %4949 = vrot.lane.b32.xlu0 %v4854, 64
        %v4950 = vpop.permute.xlu0 %4949
        %4951 = vrot.lane.b32.xlu0 %v4855, 64
        %v4952 = vpop.permute.xlu0 %4951
        %4953 = vrot.lane.b32.xlu0 %v4856, 64
        %v4954 = vpop.permute.xlu0 %4953
        %4955 = vrot.lane.b32.xlu0 %v4857, 64
        %v4956 = vpop.permute.xlu0 %4955
        %4957 = vrot.lane.b32.xlu0 %v4858, 64
        %v4958 = vpop.permute.xlu0 %4957
        %4991 = vst.msk [vmem:[#allocation3] sm:$0xff] %vm783, %v4896
        %4992 = vst.msk [vmem:[#allocation3 + $0x18] sm:$0xff] %vm783, %v4898
        %4993 = vst.msk [vmem:[#allocation3 + $0x30] sm:$0xff] %vm783, %v4900
        %4994 = vst.msk [vmem:[#allocation3 + $0x48] sm:$0xff] %vm783, %v4902
        %4995 = vst.msk [vmem:[#allocation3 + $0x60] sm:$0xff] %vm783, %v4904
        %4996 = vst.msk [vmem:[#allocation3 + $0x78] sm:$0xff] %vm783, %v4906
        %4997 = vst.msk [vmem:[#allocation3 + $0x90] sm:$0xff] %vm783, %v4908
        %4998 = vst.msk [vmem:[#allocation3 + $0xa8] sm:$0xff] %vm783, %v4910
        %4999 = vst.msk [vmem:[#allocation3 + $0xc0] sm:$0xff] %vm783, %v4912
        %5000 = vst.msk [vmem:[#allocation3 + $0xd8] sm:$0xff] %vm783, %v4914
        %5001 = vst.msk [vmem:[#allocation3 + $0xf0] sm:$0xff] %vm783, %v4916
        %5002 = vst.msk [vmem:[#allocation3 + $0x108] sm:$0xff] %vm783, %v4918
        %5003 = vst.msk [vmem:[#allocation3 + $0x120] sm:$0xff] %vm783, %v4920
        %5004 = vst.msk [vmem:[#allocation3 + $0x138] sm:$0xff] %vm783, %v4922
        %5005 = vst.msk [vmem:[#allocation3 + $0x150] sm:$0xff] %vm783, %v4924
        %5006 = vst.msk [vmem:[#allocation3 + $0x168] sm:$0xff] %vm783, %v4926
        %5007 = vst.msk [vmem:[#allocation3 + $0x180] sm:$0xff] %vm783, %v4928
        %5008 = vst.msk [vmem:[#allocation3 + $0x198] sm:$0xff] %vm783, %v4930
        %5009 = vst.msk [vmem:[#allocation3 + $0x1b0] sm:$0xff] %vm783, %v4932
        %5010 = vst.msk [vmem:[#allocation3 + $0x1c8] sm:$0xff] %vm783, %v4934
        %5011 = vst.msk [vmem:[#allocation3 + $0x1e0] sm:$0xff] %vm783, %v4936
        %5012 = vst.msk [vmem:[#allocation3 + $0x1f8] sm:$0xff] %vm783, %v4938
        %5013 = vst.msk [vmem:[#allocation3 + $0x210] sm:$0xff] %vm783, %v4940
        %5014 = vst.msk [vmem:[#allocation3 + $0x228] sm:$0xff] %vm783, %v4942
        %5015 = vst.msk [vmem:[#allocation3 + $0x240] sm:$0xff] %vm783, %v4944
        %5016 = vst.msk [vmem:[#allocation3 + $0x258] sm:$0xff] %vm783, %v4946
        %5017 = vst.msk [vmem:[#allocation3 + $0x270] sm:$0xff] %vm783, %v4948
        %5018 = vst.msk [vmem:[#allocation3 + $0x288] sm:$0xff] %vm783, %v4950
        %5019 = vst.msk [vmem:[#allocation3 + $0x2a0] sm:$0xff] %vm783, %v4952
        %5020 = vst.msk [vmem:[#allocation3 + $0x2b8] sm:$0xff] %vm783, %v4954
        %5021 = vst.msk [vmem:[#allocation3 + $0x2d0] sm:$0xff] %vm783, %v4956
        %5022 = vst.msk [vmem:[#allocation3 + $0x2e8] sm:$0xff] %vm783, %v4958
        %5025 = vrot.lane.b32.xlu0 %v4829, 32
        %v5026 = vpop.permute.xlu0 %5025
        %5027 = vrot.lane.b32.xlu0 %v4830, 32
        %v5028 = vpop.permute.xlu0 %5027
        %5029 = vrot.lane.b32.xlu0 %v4831, 32
        %v5030 = vpop.permute.xlu0 %5029
        %5031 = vrot.lane.b32.xlu0 %v4832, 32
        %v5032 = vpop.permute.xlu0 %5031
        %5033 = vrot.lane.b32.xlu0 %v4833, 32
        %v5034 = vpop.permute.xlu0 %5033
        %5035 = vrot.lane.b32.xlu0 %v4834, 32
        %v5036 = vpop.permute.xlu0 %5035
        %5037 = vrot.lane.b32.xlu0 %v4835, 32
        %v5038 = vpop.permute.xlu0 %5037
        %5039 = vrot.lane.b32.xlu0 %v4836, 32
        %v5040 = vpop.permute.xlu0 %5039
        %5041 = vrot.lane.b32.xlu0 %v4837, 32
        %v5042 = vpop.permute.xlu0 %5041
        %5043 = vrot.lane.b32.xlu0 %v4838, 32
        %v5044 = vpop.permute.xlu0 %5043
        %5045 = vrot.lane.b32.xlu0 %v4839, 32
        %v5046 = vpop.permute.xlu0 %5045
        %5047 = vrot.lane.b32.xlu0 %v4840, 32
        %v5048 = vpop.permute.xlu0 %5047
        %5049 = vrot.lane.b32.xlu0 %v4841, 32
        %v5050 = vpop.permute.xlu0 %5049
        %5051 = vrot.lane.b32.xlu0 %v4842, 32
        %v5052 = vpop.permute.xlu0 %5051
        %5053 = vrot.lane.b32.xlu0 %v4843, 32
        %v5054 = vpop.permute.xlu0 %5053
        %5055 = vrot.lane.b32.xlu0 %v4844, 32
        %v5056 = vpop.permute.xlu0 %5055
        %5057 = vrot.lane.b32.xlu0 %v4845, 32
        %v5058 = vpop.permute.xlu0 %5057
        %5059 = vrot.lane.b32.xlu0 %v4846, 32
        %v5060 = vpop.permute.xlu0 %5059
        %5061 = vrot.lane.b32.xlu0 %v4847, 32
        %v5062 = vpop.permute.xlu0 %5061
        %5063 = vrot.lane.b32.xlu0 %v4848, 32
        %v5064 = vpop.permute.xlu0 %5063
        %5065 = vrot.lane.b32.xlu0 %v4849, 32
        %v5066 = vpop.permute.xlu0 %5065
        %5067 = vrot.lane.b32.xlu0 %v4850, 32
        %v5068 = vpop.permute.xlu0 %5067
        %5069 = vrot.lane.b32.xlu0 %v4851, 32
        %v5070 = vpop.permute.xlu0 %5069
        %5071 = vrot.lane.b32.xlu0 %v4852, 32
        %v5072 = vpop.permute.xlu0 %5071
        %5073 = vrot.lane.b32.xlu0 %v4853, 32
        %v5074 = vpop.permute.xlu0 %5073
        %5075 = vrot.lane.b32.xlu0 %v4854, 32
        %v5076 = vpop.permute.xlu0 %5075
        %5077 = vrot.lane.b32.xlu0 %v4855, 32
        %v5078 = vpop.permute.xlu0 %5077
        %5079 = vrot.lane.b32.xlu0 %v4856, 32
        %v5080 = vpop.permute.xlu0 %5079
        %5081 = vrot.lane.b32.xlu0 %v4857, 32
        %v5082 = vpop.permute.xlu0 %5081
        %5083 = vrot.lane.b32.xlu0 %v4858, 32
        %v5084 = vpop.permute.xlu0 %5083
        %5085 = vrot.lane.b32.xlu0 %v4859, 32
        %v5086 = vpop.permute.xlu0 %5085
        %5087 = vrot.lane.b32.xlu0 %v4860, 32
        %v5088 = vpop.permute.xlu0 %5087
        %5121 = vst.msk [vmem:[#allocation3 + $0x8] sm:$0xff] %vm980, %v5026
        %5122 = vst.msk [vmem:[#allocation3 + $0x20] sm:$0xff] %vm980, %v5028
        %5123 = vst.msk [vmem:[#allocation3 + $0x38] sm:$0xff] %vm980, %v5030
        %5124 = vst.msk [vmem:[#allocation3 + $0x50] sm:$0xff] %vm980, %v5032
        %5125 = vst.msk [vmem:[#allocation3 + $0x68] sm:$0xff] %vm980, %v5034
        %5126 = vst.msk [vmem:[#allocation3 + $0x80] sm:$0xff] %vm980, %v5036
        %5127 = vst.msk [vmem:[#allocation3 + $0x98] sm:$0xff] %vm980, %v5038
        %5128 = vst.msk [vmem:[#allocation3 + $0xb0] sm:$0xff] %vm980, %v5040
        %5129 = vst.msk [vmem:[#allocation3 + $0xc8] sm:$0xff] %vm980, %v5042
        %5130 = vst.msk [vmem:[#allocation3 + $0xe0] sm:$0xff] %vm980, %v5044
        %5131 = vst.msk [vmem:[#allocation3 + $0xf8] sm:$0xff] %vm980, %v5046
        %5132 = vst.msk [vmem:[#allocation3 + $0x110] sm:$0xff] %vm980, %v5048
        %5133 = vst.msk [vmem:[#allocation3 + $0x128] sm:$0xff] %vm980, %v5050
        %5134 = vst.msk [vmem:[#allocation3 + $0x140] sm:$0xff] %vm980, %v5052
        %5135 = vst.msk [vmem:[#allocation3 + $0x158] sm:$0xff] %vm980, %v5054
        %5136 = vst.msk [vmem:[#allocation3 + $0x170] sm:$0xff] %vm980, %v5056
        %5137 = vst.msk [vmem:[#allocation3 + $0x188] sm:$0xff] %vm980, %v5058
        %5138 = vst.msk [vmem:[#allocation3 + $0x1a0] sm:$0xff] %vm980, %v5060
        %5139 = vst.msk [vmem:[#allocation3 + $0x1b8] sm:$0xff] %vm980, %v5062
        %5140 = vst.msk [vmem:[#allocation3 + $0x1d0] sm:$0xff] %vm980, %v5064
        %5141 = vst.msk [vmem:[#allocation3 + $0x1e8] sm:$0xff] %vm980, %v5066
        %5142 = vst.msk [vmem:[#allocation3 + $0x200] sm:$0xff] %vm980, %v5068
        %5143 = vst.msk [vmem:[#allocation3 + $0x218] sm:$0xff] %vm980, %v5070
        %5144 = vst.msk [vmem:[#allocation3 + $0x230] sm:$0xff] %vm980, %v5072
        %5145 = vst.msk [vmem:[#allocation3 + $0x248] sm:$0xff] %vm980, %v5074
        %5146 = vst.msk [vmem:[#allocation3 + $0x260] sm:$0xff] %vm980, %v5076
        %5147 = vst.msk [vmem:[#allocation3 + $0x278] sm:$0xff] %vm980, %v5078
        %5148 = vst.msk [vmem:[#allocation3 + $0x290] sm:$0xff] %vm980, %v5080
        %5149 = vst.msk [vmem:[#allocation3 + $0x2a8] sm:$0xff] %vm980, %v5082
        %5150 = vst.msk [vmem:[#allocation3 + $0x2c0] sm:$0xff] %vm980, %v5084
        %5151 = vst.msk [vmem:[#allocation3 + $0x2d8] sm:$0xff] %vm980, %v5086
        %5152 = vst.msk [vmem:[#allocation3 + $0x2f0] sm:$0xff] %vm980, %v5088
        %5153 = vst.msk [vmem:[#allocation3 + $0x10] sm:$0xff] %vm317, %v4831
        %5154 = vst.msk [vmem:[#allocation3 + $0x28] sm:$0xff] %vm317, %v4832
        %5155 = vst.msk [vmem:[#allocation3 + $0x40] sm:$0xff] %vm317, %v4833
        %5156 = vst.msk [vmem:[#allocation3 + $0x58] sm:$0xff] %vm317, %v4834
        %5157 = vst.msk [vmem:[#allocation3 + $0x70] sm:$0xff] %vm317, %v4835
        %5158 = vst.msk [vmem:[#allocation3 + $0x88] sm:$0xff] %vm317, %v4836
        %5159 = vst.msk [vmem:[#allocation3 + $0xa0] sm:$0xff] %vm317, %v4837
        %5160 = vst.msk [vmem:[#allocation3 + $0xb8] sm:$0xff] %vm317, %v4838
        %5161 = vst.msk [vmem:[#allocation3 + $0xd0] sm:$0xff] %vm317, %v4839
        %5162 = vst.msk [vmem:[#allocation3 + $0xe8] sm:$0xff] %vm317, %v4840
        %5163 = vst.msk [vmem:[#allocation3 + $0x100] sm:$0xff] %vm317, %v4841
        %5164 = vst.msk [vmem:[#allocation3 + $0x118] sm:$0xff] %vm317, %v4842
        %5165 = vst.msk [vmem:[#allocation3 + $0x130] sm:$0xff] %vm317, %v4843
        %5166 = vst.msk [vmem:[#allocation3 + $0x148] sm:$0xff] %vm317, %v4844
        %5167 = vst.msk [vmem:[#allocation3 + $0x160] sm:$0xff] %vm317, %v4845
        %5168 = vst.msk [vmem:[#allocation3 + $0x178] sm:$0xff] %vm317, %v4846
        %5169 = vst.msk [vmem:[#allocation3 + $0x190] sm:$0xff] %vm317, %v4847
        %5170 = vst.msk [vmem:[#allocation3 + $0x1a8] sm:$0xff] %vm317, %v4848
        %5171 = vst.msk [vmem:[#allocation3 + $0x1c0] sm:$0xff] %vm317, %v4849
        %5172 = vst.msk [vmem:[#allocation3 + $0x1d8] sm:$0xff] %vm317, %v4850
        %5173 = vst.msk [vmem:[#allocation3 + $0x1f0] sm:$0xff] %vm317, %v4851
        %5174 = vst.msk [vmem:[#allocation3 + $0x208] sm:$0xff] %vm317, %v4852
        %5175 = vst.msk [vmem:[#allocation3 + $0x220] sm:$0xff] %vm317, %v4853
        %5176 = vst.msk [vmem:[#allocation3 + $0x238] sm:$0xff] %vm317, %v4854
        %5177 = vst.msk [vmem:[#allocation3 + $0x250] sm:$0xff] %vm317, %v4855
        %5178 = vst.msk [vmem:[#allocation3 + $0x268] sm:$0xff] %vm317, %v4856
        %5179 = vst.msk [vmem:[#allocation3 + $0x280] sm:$0xff] %vm317, %v4857
        %5180 = vst.msk [vmem:[#allocation3 + $0x298] sm:$0xff] %vm317, %v4858
        %5181 = vst.msk [vmem:[#allocation3 + $0x2b0] sm:$0xff] %vm317, %v4859
        %5182 = vst.msk [vmem:[#allocation3 + $0x2c8] sm:$0xff] %vm317, %v4860
        %5183 = vst.msk [vmem:[#allocation3 + $0x2e0] sm:$0xff] %vm317, %v4861
        %5184 = vst.msk [vmem:[#allocation3 + $0x2f8] sm:$0xff] %vm317, %v4862
        %v5185 = vld [vmem:[#allocation3] sm:$0xff]
        %v5186 = vld [vmem:[#allocation3 + $0x8] sm:$0xff]
        %v5187 = vld [vmem:[#allocation3 + $0x10] sm:$0xff]
        %v5188 = vld [vmem:[#allocation3 + $0x18] sm:$0xff]
        %v5189 = vld [vmem:[#allocation3 + $0x20] sm:$0xff]
        %v5190 = vld [vmem:[#allocation3 + $0x28] sm:$0xff]
        %v5191 = vld [vmem:[#allocation3 + $0x30] sm:$0xff]
        %v5192 = vld [vmem:[#allocation3 + $0x38] sm:$0xff]
        %v5193 = vld [vmem:[#allocation3 + $0x40] sm:$0xff]
        %v5194 = vld [vmem:[#allocation3 + $0x48] sm:$0xff]
        %v5195 = vld [vmem:[#allocation3 + $0x50] sm:$0xff]
        %v5196 = vld [vmem:[#allocation3 + $0x58] sm:$0xff]
        %v5197 = vld [vmem:[#allocation3 + $0x60] sm:$0xff]
        %v5198 = vld [vmem:[#allocation3 + $0x68] sm:$0xff]
        %v5199 = vld [vmem:[#allocation3 + $0x70] sm:$0xff]
        %v5200 = vld [vmem:[#allocation3 + $0x78] sm:$0xff]
        %v5201 = vld [vmem:[#allocation3 + $0x80] sm:$0xff]
        %v5202 = vld [vmem:[#allocation3 + $0x88] sm:$0xff]
        %v5203 = vld [vmem:[#allocation3 + $0x90] sm:$0xff]
        %v5204 = vld [vmem:[#allocation3 + $0x98] sm:$0xff]
        %v5205 = vld [vmem:[#allocation3 + $0xa0] sm:$0xff]
        %v5206 = vld [vmem:[#allocation3 + $0xa8] sm:$0xff]
        %v5207 = vld [vmem:[#allocation3 + $0xb0] sm:$0xff]
        %v5208 = vld [vmem:[#allocation3 + $0xb8] sm:$0xff]
        %v5209 = vld [vmem:[#allocation3 + $0xc0] sm:$0xff]
        %v5210 = vld [vmem:[#allocation3 + $0xc8] sm:$0xff]
        %v5211 = vld [vmem:[#allocation3 + $0xd0] sm:$0xff]
        %v5212 = vld [vmem:[#allocation3 + $0xd8] sm:$0xff]
        %v5213 = vld [vmem:[#allocation3 + $0xe0] sm:$0xff]
        %v5214 = vld [vmem:[#allocation3 + $0xe8] sm:$0xff]
        %v5215 = vld [vmem:[#allocation3 + $0xf0] sm:$0xff]
        %v5216 = vld [vmem:[#allocation3 + $0xf8] sm:$0xff]
        %v5217 = vld [vmem:[#allocation3 + $0x100] sm:$0xff]
        %v5218 = vld [vmem:[#allocation3 + $0x108] sm:$0xff]
        %v5219 = vld [vmem:[#allocation3 + $0x110] sm:$0xff]
        %v5220 = vld [vmem:[#allocation3 + $0x118] sm:$0xff]
        %v5221 = vld [vmem:[#allocation3 + $0x120] sm:$0xff]
        %v5222 = vld [vmem:[#allocation3 + $0x128] sm:$0xff]
        %v5223 = vld [vmem:[#allocation3 + $0x130] sm:$0xff]
        %v5224 = vld [vmem:[#allocation3 + $0x138] sm:$0xff]
        %v5225 = vld [vmem:[#allocation3 + $0x140] sm:$0xff]
        %v5226 = vld [vmem:[#allocation3 + $0x148] sm:$0xff]
        %v5227 = vld [vmem:[#allocation3 + $0x150] sm:$0xff]
        %v5228 = vld [vmem:[#allocation3 + $0x158] sm:$0xff]
        %v5229 = vld [vmem:[#allocation3 + $0x160] sm:$0xff]
        %v5230 = vld [vmem:[#allocation3 + $0x168] sm:$0xff]
        %v5231 = vld [vmem:[#allocation3 + $0x170] sm:$0xff]
        %v5232 = vld [vmem:[#allocation3 + $0x178] sm:$0xff]
        %v5233 = vld [vmem:[#allocation3 + $0x180] sm:$0xff]
        %v5234 = vld [vmem:[#allocation3 + $0x188] sm:$0xff]
        %v5235 = vld [vmem:[#allocation3 + $0x190] sm:$0xff]
        %v5236 = vld [vmem:[#allocation3 + $0x198] sm:$0xff]
        %v5237 = vld [vmem:[#allocation3 + $0x1a0] sm:$0xff]
        %v5238 = vld [vmem:[#allocation3 + $0x1a8] sm:$0xff]
        %v5239 = vld [vmem:[#allocation3 + $0x1b0] sm:$0xff]
        %v5240 = vld [vmem:[#allocation3 + $0x1b8] sm:$0xff]
        %v5241 = vld [vmem:[#allocation3 + $0x1c0] sm:$0xff]
        %v5242 = vld [vmem:[#allocation3 + $0x1c8] sm:$0xff]
        %v5243 = vld [vmem:[#allocation3 + $0x1d0] sm:$0xff]
        %v5244 = vld [vmem:[#allocation3 + $0x1d8] sm:$0xff]
        %v5245 = vld [vmem:[#allocation3 + $0x1e0] sm:$0xff]
        %v5246 = vld [vmem:[#allocation3 + $0x1e8] sm:$0xff]
        %v5247 = vld [vmem:[#allocation3 + $0x1f0] sm:$0xff]
        %v5248 = vld [vmem:[#allocation3 + $0x1f8] sm:$0xff]
        %v5249 = vld [vmem:[#allocation3 + $0x200] sm:$0xff]
        %v5250 = vld [vmem:[#allocation3 + $0x208] sm:$0xff]
        %v5251 = vld [vmem:[#allocation3 + $0x210] sm:$0xff]
        %v5252 = vld [vmem:[#allocation3 + $0x218] sm:$0xff]
        %v5253 = vld [vmem:[#allocation3 + $0x220] sm:$0xff]
        %v5254 = vld [vmem:[#allocation3 + $0x228] sm:$0xff]
        %v5255 = vld [vmem:[#allocation3 + $0x230] sm:$0xff]
        %v5256 = vld [vmem:[#allocation3 + $0x238] sm:$0xff]
        %v5257 = vld [vmem:[#allocation3 + $0x240] sm:$0xff]
        %v5258 = vld [vmem:[#allocation3 + $0x248] sm:$0xff]
        %v5259 = vld [vmem:[#allocation3 + $0x250] sm:$0xff]
        %v5260 = vld [vmem:[#allocation3 + $0x258] sm:$0xff]
        %v5261 = vld [vmem:[#allocation3 + $0x260] sm:$0xff]
        %v5262 = vld [vmem:[#allocation3 + $0x268] sm:$0xff]
        %v5263 = vld [vmem:[#allocation3 + $0x270] sm:$0xff]
        %v5264 = vld [vmem:[#allocation3 + $0x278] sm:$0xff]
        %v5265 = vld [vmem:[#allocation3 + $0x280] sm:$0xff]
        %v5266 = vld [vmem:[#allocation3 + $0x288] sm:$0xff]
        %v5267 = vld [vmem:[#allocation3 + $0x290] sm:$0xff]
        %v5268 = vld [vmem:[#allocation3 + $0x298] sm:$0xff]
        %v5269 = vld [vmem:[#allocation3 + $0x2a0] sm:$0xff]
        %v5270 = vld [vmem:[#allocation3 + $0x2a8] sm:$0xff]
        %v5271 = vld [vmem:[#allocation3 + $0x2b0] sm:$0xff]
        %v5272 = vld [vmem:[#allocation3 + $0x2b8] sm:$0xff]
        %v5273 = vld [vmem:[#allocation3 + $0x2c0] sm:$0xff]
        %v5274 = vld [vmem:[#allocation3 + $0x2c8] sm:$0xff]
        %v5275 = vld [vmem:[#allocation3 + $0x2d0] sm:$0xff]
        %v5276 = vld [vmem:[#allocation3 + $0x2d8] sm:$0xff]
        %v5277 = vld [vmem:[#allocation3 + $0x2e0] sm:$0xff]
        %v5278 = vld [vmem:[#allocation3 + $0x2e8] sm:$0xff]
        %v5279 = vld [vmem:[#allocation3 + $0x2f0] sm:$0xff]
        %v5280 = vld [vmem:[#allocation3 + $0x2f8] sm:$0xff]
        %v5281 = vld [vmem:[%s5] sm:$0xff]
        %v5282 = vld [vmem:[%s5 + $0x8] sm:$0xff]
        %v5283 = vld [vmem:[%s5 + $0x10] sm:$0xff]
        %v5284 = vld [vmem:[%s5 + $0x18] sm:$0xff]
        %v5285 = vld [vmem:[%s5 + $0x20] sm:$0xff]
        %v5286 = vld [vmem:[%s5 + $0x28] sm:$0xff]
        %v5287 = vld [vmem:[%s5 + $0x30] sm:$0xff]
        %v5288 = vld [vmem:[%s5 + $0x38] sm:$0xff]
        %v5289 = vld [vmem:[%s5 + $0x40] sm:$0xff]
        %v5290 = vld [vmem:[%s5 + $0x48] sm:$0xff]
        %v5291 = vld [vmem:[%s5 + $0x50] sm:$0xff]
        %v5292 = vld [vmem:[%s5 + $0x58] sm:$0xff]
        %v5293 = vld [vmem:[%s5 + $0x60] sm:$0xff]
        %v5294 = vld [vmem:[%s5 + $0x68] sm:$0xff]
        %v5295 = vld [vmem:[%s5 + $0x70] sm:$0xff]
        %v5296 = vld [vmem:[%s5 + $0x78] sm:$0xff]
        %v5297 = vld [vmem:[%s5 + $0x80] sm:$0xff]
        %v5298 = vld [vmem:[%s5 + $0x88] sm:$0xff]
        %v5299 = vld [vmem:[%s5 + $0x90] sm:$0xff]
        %v5300 = vld [vmem:[%s5 + $0x98] sm:$0xff]
        %v5301 = vld [vmem:[%s5 + $0xa0] sm:$0xff]
        %v5302 = vld [vmem:[%s5 + $0xa8] sm:$0xff]
        %v5303 = vld [vmem:[%s5 + $0xb0] sm:$0xff]
        %v5304 = vld [vmem:[%s5 + $0xb8] sm:$0xff]
        %v5305 = vld [vmem:[%s5 + $0xc0] sm:$0xff]
        %v5306 = vld [vmem:[%s5 + $0xc8] sm:$0xff]
        %v5307 = vld [vmem:[%s5 + $0xd0] sm:$0xff]
        %v5308 = vld [vmem:[%s5 + $0xd8] sm:$0xff]
        %v5309 = vld [vmem:[%s5 + $0xe0] sm:$0xff]
        %v5310 = vld [vmem:[%s5 + $0xe8] sm:$0xff]
        %v5311 = vld [vmem:[%s5 + $0xf0] sm:$0xff]
        %v5312 = vld [vmem:[%s5 + $0xf8] sm:$0xff]
        %v5313 = vld [vmem:[%s5 + $0x100] sm:$0xff]
        %v5314 = vld [vmem:[%s5 + $0x108] sm:$0xff]
        %v5315 = vld [vmem:[%s5 + $0x110] sm:$0xff]
        %v5316 = vld [vmem:[%s5 + $0x118] sm:$0xff]
        %v5317 = vld [vmem:[#allocation8] sm:$0x1]
        %v5319 = vlaneseq
        %v5320 = vshrl.u32 %v5319, 7
        %v5321 = vsub.s32 0, %v5320
        %v5322 = vrot.slane %v5317, %v5321
        %v5325 = vsel %vm317, %v5187, 0
        %v5328 = vsel %vm317, %v5190, 0
        %v5331 = vsel %vm317, %v5193, 0
        %v5334 = vsel %vm317, %v5196, 0
        %v5337 = vsel %vm317, %v5199, 0
        %v5340 = vsel %vm317, %v5202, 0
        %v5343 = vsel %vm317, %v5205, 0
        %v5346 = vsel %vm317, %v5208, 0
        %v5349 = vsel %vm317, %v5211, 0
        %v5352 = vsel %vm317, %v5214, 0
        %v5355 = vsel %vm317, %v5217, 0
        %v5358 = vsel %vm317, %v5220, 0
        %v5361 = vsel %vm317, %v5223, 0
        %v5364 = vsel %vm317, %v5226, 0
        %v5367 = vsel %vm317, %v5229, 0
        %v5370 = vsel %vm317, %v5232, 0
        %v5373 = vsel %vm317, %v5235, 0
        %v5376 = vsel %vm317, %v5238, 0
        %v5379 = vsel %vm317, %v5241, 0
        %v5382 = vsel %vm317, %v5244, 0
        %v5385 = vsel %vm317, %v5247, 0
        %v5388 = vsel %vm317, %v5250, 0
        %v5391 = vsel %vm317, %v5253, 0
        %v5394 = vsel %vm317, %v5256, 0
        %v5397 = vsel %vm317, %v5259, 0
        %v5400 = vsel %vm317, %v5262, 0
        %v5403 = vsel %vm317, %v5265, 0
        %v5406 = vsel %vm317, %v5268, 0
        %v5409 = vsel %vm317, %v5271, 0
        %v5412 = vsel %vm317, %v5274, 0
        %v5415 = vsel %vm317, %v5277, 0
        %v5418 = vsel %vm317, %v5280, 0
        %5420 = vmatprep.subr.mxu0 0.0
        %5421 = vmatpush1.msra.mxu0 %v5296
        %5422 = vmatprep.subr.mxu0 0.0
        %5423 = vmatpush1.msra.mxu0 %v5295
        %5424 = vmatprep.subr.mxu0 0.0
        %5425 = vmatpush1.msra.mxu0 %v5294
        %5426 = vmatprep.subr.mxu0 0.0
        %5427 = vmatpush1.msra.mxu0 %v5293
        %5428 = vmatprep.subr.mxu0 0.0
        %5429 = vmatpush1.msra.mxu0 %v5292
        %5430 = vmatprep.subr.mxu0 0.0
        %5431 = vmatpush1.msra.mxu0 %v5291
        %5432 = vmatprep.subr.mxu0 0.0
        %5433 = vmatpush1.msra.mxu0 %v5290
        %5434 = vmatprep.subr.mxu0 0.0
        %5435 = vmatpush1.msra.mxu0 %v5289
        %5436 = vmatprep.subr.mxu0 0.0
        %5437 = vmatpush1.msra.mxu0 %v5288
        %5438 = vmatprep.subr.mxu0 0.0
        %5439 = vmatpush1.msra.mxu0 %v5287
        %5440 = vmatprep.subr.mxu0 0.0
        %5441 = vmatpush1.msra.mxu0 %v5286
        %5442 = vmatprep.subr.mxu0 0.0
        %5443 = vmatpush1.msra.mxu0 %v5285
        %5444 = vmatprep.subr.mxu0 0.0
        %5445 = vmatpush1.msra.mxu0 %v5284
        %5446 = vmatprep.subr.mxu0 0.0
        %5447 = vmatpush1.msra.mxu0 %v5283
        %5448 = vmatprep.subr.mxu0 0.0
        %5449 = vmatpush1.msra.mxu0 %v5282
        %5450 = vmatprep.subr.mxu0 0.0
        %5451 = vmatpush1.msra.mxu0 %v5281
        %5452 = vmatprep.subr.mxu0 0.0
        %5453 = vmatpush2.msra.mxu0 %v5312
        %5454 = vmatprep.subr.mxu0 0.0
        %5455 = vmatpush2.msra.mxu0 %v5311
        %5456 = vmatprep.subr.mxu0 0.0
        %5457 = vmatpush2.msra.mxu0 %v5310
        %5458 = vmatprep.subr.mxu0 0.0
        %5459 = vmatpush2.msra.mxu0 %v5309
        %5460 = vmatprep.subr.mxu0 0.0
        %5461 = vmatpush2.msra.mxu0 %v5308
        %5462 = vmatprep.subr.mxu0 0.0
        %5463 = vmatpush2.msra.mxu0 %v5307
        %5464 = vmatprep.subr.mxu0 0.0
        %5465 = vmatpush2.msra.mxu0 %v5306
        %5466 = vmatprep.subr.mxu0 0.0
        %5467 = vmatpush2.msra.mxu0 %v5305
        %5468 = vmatprep.subr.mxu0 0.0
        %5469 = vmatpush2.msra.mxu0 %v5304
        %5470 = vmatprep.subr.mxu0 0.0
        %5471 = vmatpush2.msra.mxu0 %v5303
        %5472 = vmatprep.subr.mxu0 0.0
        %5473 = vmatpush2.msra.mxu0 %v5302
        %5474 = vmatprep.subr.mxu0 0.0
        %5475 = vmatpush2.msra.mxu0 %v5301
        %5476 = vmatprep.subr.mxu0 0.0
        %5477 = vmatpush2.msra.mxu0 %v5300
        %5478 = vmatprep.subr.mxu0 0.0
        %5479 = vmatpush2.msra.mxu0 %v5299
        %5480 = vmatprep.subr.mxu0 0.0
        %5481 = vmatpush2.msra.mxu0 %v5298
        %5482 = vmatprep.subr.mxu0 0.0
        %5483 = vmatpush2.msra.mxu0 %v5297
        %5484 = vmatprep.mubr.f32.mxu0 %v5186
        %5485 = vmatmul.mubr.f32.gmra.mxu0 %v5185
        %v5486 = vpop.f32.mrf.mxu0
        %v5487 = vadd.f32 %v5322, %v5486
        %v5488 = vpop.f32.mrf.mxu0
        %5489 = vmatprep.mubr.f32.mxu0 %v5189
        %5490 = vmatmul.mubr.f32.gmra.mxu0 %v5188
        %v5491 = vpop.f32.mrf.mxu0
        %v5492 = vadd.f32 %v5322, %v5491
        %v5493 = vpop.f32.mrf.mxu0
        %5494 = vmatprep.mubr.f32.mxu0 %v5192
        %5495 = vmatmul.mubr.f32.gmra.mxu0 %v5191
        %v5496 = vpop.f32.mrf.mxu0
        %v5497 = vadd.f32 %v5322, %v5496
        %v5498 = vpop.f32.mrf.mxu0
        %5499 = vmatprep.mubr.f32.mxu0 %v5195
        %5500 = vmatmul.mubr.f32.gmra.mxu0 %v5194
        %v5501 = vpop.f32.mrf.mxu0
        %v5502 = vadd.f32 %v5322, %v5501
        %v5503 = vpop.f32.mrf.mxu0
        %5504 = vmatprep.mubr.f32.mxu0 %v5198
        %5505 = vmatmul.mubr.f32.gmra.mxu0 %v5197
        %v5506 = vpop.f32.mrf.mxu0
        %v5507 = vadd.f32 %v5322, %v5506
        %v5508 = vpop.f32.mrf.mxu0
        %5509 = vmatprep.mubr.f32.mxu0 %v5201
        %5510 = vmatmul.mubr.f32.gmra.mxu0 %v5200
        %v5511 = vpop.f32.mrf.mxu0
        %v5512 = vadd.f32 %v5322, %v5511
        %v5513 = vpop.f32.mrf.mxu0
        %5514 = vmatprep.mubr.f32.mxu0 %v5204
        %5515 = vmatmul.mubr.f32.gmra.mxu0 %v5203
        %v5516 = vpop.f32.mrf.mxu0
        %v5517 = vadd.f32 %v5322, %v5516
        %v5518 = vpop.f32.mrf.mxu0
        %5519 = vmatprep.mubr.f32.mxu0 %v5207
        %5520 = vmatmul.mubr.f32.gmra.mxu0 %v5206
        %v5521 = vpop.f32.mrf.mxu0
        %v5522 = vadd.f32 %v5322, %v5521
        %v5523 = vpop.f32.mrf.mxu0
        %5524 = vmatprep.mubr.f32.mxu0 %v5210
        %5525 = vmatmul.mubr.f32.gmra.mxu0 %v5209
        %v5526 = vpop.f32.mrf.mxu0
        %v5527 = vadd.f32 %v5322, %v5526
        %v5528 = vpop.f32.mrf.mxu0
        %5529 = vmatprep.mubr.f32.mxu0 %v5213
        %5530 = vmatmul.mubr.f32.gmra.mxu0 %v5212
        %v5531 = vpop.f32.mrf.mxu0
        %v5532 = vadd.f32 %v5322, %v5531
        %v5533 = vpop.f32.mrf.mxu0
        %5534 = vmatprep.mubr.f32.mxu0 %v5216
        %5535 = vmatmul.mubr.f32.gmra.mxu0 %v5215
        %v5536 = vpop.f32.mrf.mxu0
        %v5537 = vadd.f32 %v5322, %v5536
        %v5538 = vpop.f32.mrf.mxu0
        %5539 = vmatprep.mubr.f32.mxu0 %v5219
        %5540 = vmatmul.mubr.f32.gmra.mxu0 %v5218
        %v5541 = vpop.f32.mrf.mxu0
        %v5542 = vadd.f32 %v5322, %v5541
        %v5543 = vpop.f32.mrf.mxu0
        %5544 = vmatprep.mubr.f32.mxu0 %v5222
        %5545 = vmatmul.mubr.f32.gmra.mxu0 %v5221
        %v5546 = vpop.f32.mrf.mxu0
        %v5547 = vadd.f32 %v5322, %v5546
        %v5548 = vpop.f32.mrf.mxu0
        %5549 = vmatprep.mubr.f32.mxu0 %v5225
        %5550 = vmatmul.mubr.f32.gmra.mxu0 %v5224
        %v5551 = vpop.f32.mrf.mxu0
        %v5552 = vadd.f32 %v5322, %v5551
        %v5553 = vpop.f32.mrf.mxu0
        %5554 = vmatprep.mubr.f32.mxu0 %v5228
        %5555 = vmatmul.mubr.f32.gmra.mxu0 %v5227
        %v5556 = vpop.f32.mrf.mxu0
        %v5557 = vadd.f32 %v5322, %v5556
        %v5558 = vpop.f32.mrf.mxu0
        %5559 = vmatprep.mubr.f32.mxu0 %v5231
        %5560 = vmatmul.mubr.f32.gmra.mxu0 %v5230
        %v5561 = vpop.f32.mrf.mxu0
        %v5562 = vadd.f32 %v5322, %v5561
        %v5563 = vpop.f32.mrf.mxu0
        %5564 = vmatprep.mubr.f32.mxu0 %v5234
        %5565 = vmatmul.mubr.f32.gmra.mxu0 %v5233
        %v5566 = vpop.f32.mrf.mxu0
        %v5567 = vadd.f32 %v5322, %v5566
        %v5568 = vpop.f32.mrf.mxu0
        %5569 = vmatprep.mubr.f32.mxu0 %v5237
        %5570 = vmatmul.mubr.f32.gmra.mxu0 %v5236
        %v5571 = vpop.f32.mrf.mxu0
        %v5572 = vadd.f32 %v5322, %v5571
        %v5573 = vpop.f32.mrf.mxu0
        %5574 = vmatprep.mubr.f32.mxu0 %v5240
        %5575 = vmatmul.mubr.f32.gmra.mxu0 %v5239
        %v5576 = vpop.f32.mrf.mxu0
        %v5577 = vadd.f32 %v5322, %v5576
        %v5578 = vpop.f32.mrf.mxu0
        %5579 = vmatprep.mubr.f32.mxu0 %v5243
        %5580 = vmatmul.mubr.f32.gmra.mxu0 %v5242
        %v5581 = vpop.f32.mrf.mxu0
        %v5582 = vadd.f32 %v5322, %v5581
        %v5583 = vpop.f32.mrf.mxu0
        %5584 = vmatprep.mubr.f32.mxu0 %v5246
        %5585 = vmatmul.mubr.f32.gmra.mxu0 %v5245
        %v5586 = vpop.f32.mrf.mxu0
        %v5587 = vadd.f32 %v5322, %v5586
        %v5588 = vpop.f32.mrf.mxu0
        %5589 = vmatprep.mubr.f32.mxu0 %v5249
        %5590 = vmatmul.mubr.f32.gmra.mxu0 %v5248
        %v5591 = vpop.f32.mrf.mxu0
        %v5592 = vadd.f32 %v5322, %v5591
        %v5593 = vpop.f32.mrf.mxu0
        %5594 = vmatprep.mubr.f32.mxu0 %v5252
        %5595 = vmatmul.mubr.f32.gmra.mxu0 %v5251
        %v5596 = vpop.f32.mrf.mxu0
        %v5597 = vadd.f32 %v5322, %v5596
        %v5598 = vpop.f32.mrf.mxu0
        %5599 = vmatprep.mubr.f32.mxu0 %v5255
        %5600 = vmatmul.mubr.f32.gmra.mxu0 %v5254
        %v5601 = vpop.f32.mrf.mxu0
        %v5602 = vadd.f32 %v5322, %v5601
        %v5603 = vpop.f32.mrf.mxu0
        %5604 = vmatprep.mubr.f32.mxu0 %v5258
        %5605 = vmatmul.mubr.f32.gmra.mxu0 %v5257
        %v5606 = vpop.f32.mrf.mxu0
        %v5607 = vadd.f32 %v5322, %v5606
        %v5608 = vpop.f32.mrf.mxu0
        %5609 = vmatprep.mubr.f32.mxu0 %v5261
        %5610 = vmatmul.mubr.f32.gmra.mxu0 %v5260
        %v5611 = vpop.f32.mrf.mxu0
        %v5612 = vadd.f32 %v5322, %v5611
        %v5613 = vpop.f32.mrf.mxu0
        %5614 = vmatprep.mubr.f32.mxu0 %v5264
        %5615 = vmatmul.mubr.f32.gmra.mxu0 %v5263
        %v5616 = vpop.f32.mrf.mxu0
        %v5617 = vadd.f32 %v5322, %v5616
        %v5618 = vpop.f32.mrf.mxu0
        %5619 = vmatprep.mubr.f32.mxu0 %v5267
        %5620 = vmatmul.mubr.f32.gmra.mxu0 %v5266
        %v5621 = vpop.f32.mrf.mxu0
        %v5622 = vadd.f32 %v5322, %v5621
        %v5623 = vpop.f32.mrf.mxu0
        %5624 = vmatprep.mubr.f32.mxu0 %v5270
        %5625 = vmatmul.mubr.f32.gmra.mxu0 %v5269
        %v5626 = vpop.f32.mrf.mxu0
        %v5627 = vadd.f32 %v5322, %v5626
        %v5628 = vpop.f32.mrf.mxu0
        %5629 = vmatprep.mubr.f32.mxu0 %v5273
        %5630 = vmatmul.mubr.f32.gmra.mxu0 %v5272
        %v5631 = vpop.f32.mrf.mxu0
        %v5632 = vadd.f32 %v5322, %v5631
        %v5633 = vpop.f32.mrf.mxu0
        %5634 = vmatprep.mubr.f32.mxu0 %v5276
        %5635 = vmatmul.mubr.f32.gmra.mxu0 %v5275
        %v5636 = vpop.f32.mrf.mxu0
        %v5637 = vadd.f32 %v5322, %v5636
        %v5638 = vpop.f32.mrf.mxu0
        %5639 = vmatprep.mubr.f32.mxu0 %v5279
        %5640 = vmatmul.mubr.f32.gmra.mxu0 %v5278
        %v5641 = vpop.f32.mrf.mxu0
        %v5642 = vadd.f32 %v5322, %v5641
        %v5643 = vpop.f32.mrf.mxu0
        %5644 = vdwg.mxu0
        %5645 = vmatprep.subr.mxu0 0.0
        %5646 = vmatpush1.msra.mxu0 0.0
        %5647 = vmatprep.subr.mxu0 0.0
        %5648 = vmatpush1.msra.mxu0 0.0
        %5649 = vmatprep.subr.mxu0 0.0
        %5650 = vmatpush1.msra.mxu0 0.0
        %5651 = vmatprep.subr.mxu0 0.0
        %5652 = vmatpush1.msra.mxu0 0.0
        %5653 = vmatprep.subr.mxu0 0.0
        %5654 = vmatpush1.msra.mxu0 0.0
        %5655 = vmatprep.subr.mxu0 0.0
        %5656 = vmatpush1.msra.mxu0 0.0
        %5657 = vmatprep.subr.mxu0 0.0
        %5658 = vmatpush1.msra.mxu0 0.0
        %5659 = vmatprep.subr.mxu0 0.0
        %5660 = vmatpush1.msra.mxu0 0.0
        %5661 = vmatprep.subr.mxu0 0.0
        %5662 = vmatpush1.msra.mxu0 0.0
        %5663 = vmatprep.subr.mxu0 0.0
        %5664 = vmatpush1.msra.mxu0 0.0
        %5665 = vmatprep.subr.mxu0 0.0
        %5666 = vmatpush1.msra.mxu0 0.0
        %5667 = vmatprep.subr.mxu0 0.0
        %5668 = vmatpush1.msra.mxu0 0.0
        %5669 = vmatprep.subr.mxu0 0.0
        %5670 = vmatpush1.msra.mxu0 %v5316
        %5671 = vmatprep.subr.mxu0 0.0
        %5672 = vmatpush1.msra.mxu0 %v5315
        %5673 = vmatprep.subr.mxu0 0.0
        %5674 = vmatpush1.msra.mxu0 %v5314
        %5675 = vmatprep.subr.mxu0 0.0
        %5676 = vmatpush1.msra.mxu0 %v5313
        %5677 = vmatprep.subr.mxu0 0.0
        %5678 = vmatpush2.msra.mxu0 0.0
        %5679 = vmatprep.subr.mxu0 0.0
        %5680 = vmatpush2.msra.mxu0 0.0
        %5681 = vmatprep.subr.mxu0 0.0
        %5682 = vmatpush2.msra.mxu0 0.0
        %5683 = vmatprep.subr.mxu0 0.0
        %5684 = vmatpush2.msra.mxu0 0.0
        %5685 = vmatprep.subr.mxu0 0.0
        %5686 = vmatpush2.msra.mxu0 0.0
        %5687 = vmatprep.subr.mxu0 0.0
        %5688 = vmatpush2.msra.mxu0 0.0
        %5689 = vmatprep.subr.mxu0 0.0
        %5690 = vmatpush2.msra.mxu0 0.0
        %5691 = vmatprep.subr.mxu0 0.0
        %5692 = vmatpush2.msra.mxu0 0.0
        %5693 = vmatprep.subr.mxu0 0.0
        %5694 = vmatpush2.msra.mxu0 0.0
        %5695 = vmatprep.subr.mxu0 0.0
        %5696 = vmatpush2.msra.mxu0 0.0
        %5697 = vmatprep.subr.mxu0 0.0
        %5698 = vmatpush2.msra.mxu0 0.0
        %5699 = vmatprep.subr.mxu0 0.0
        %5700 = vmatpush2.msra.mxu0 0.0
        %5701 = vmatprep.subr.mxu0 0.0
        %5702 = vmatpush2.msra.mxu0 0.0
        %5703 = vmatprep.subr.mxu0 0.0
        %5704 = vmatpush2.msra.mxu0 0.0
        %5705 = vmatprep.subr.mxu0 0.0
        %5706 = vmatpush2.msra.mxu0 0.0
        %5707 = vmatprep.subr.mxu0 0.0
        %5708 = vmatpush2.msra.mxu0 0.0
        %5709 = vmatprep.mubr.f32.mxu0 0.0
        %5710 = vmatmul.mubr.f32.gmra.mxu0 %v5325
        %v5711 = vpop.f32.mrf.mxu0
        %v5712 = vadd.f32 %v5487, %v5711
        %v5713 = vpop.f32.mrf.mxu0
        %5714 = vmatprep.mubr.f32.mxu0 0.0
        %5715 = vmatmul.mubr.f32.gmra.mxu0 %v5328
        %v5716 = vpop.f32.mrf.mxu0
        %v5717 = vadd.f32 %v5492, %v5716
        %v5718 = vpop.f32.mrf.mxu0
        %5719 = vmatprep.mubr.f32.mxu0 0.0
        %5720 = vmatmul.mubr.f32.gmra.mxu0 %v5331
        %v5721 = vpop.f32.mrf.mxu0
        %v5722 = vadd.f32 %v5497, %v5721
        %v5723 = vpop.f32.mrf.mxu0
        %5724 = vmatprep.mubr.f32.mxu0 0.0
        %5725 = vmatmul.mubr.f32.gmra.mxu0 %v5334
        %v5726 = vpop.f32.mrf.mxu0
        %v5727 = vadd.f32 %v5502, %v5726
        %v5728 = vpop.f32.mrf.mxu0
        %5729 = vmatprep.mubr.f32.mxu0 0.0
        %5730 = vmatmul.mubr.f32.gmra.mxu0 %v5337
        %v5731 = vpop.f32.mrf.mxu0
        %v5732 = vadd.f32 %v5507, %v5731
        %v5733 = vpop.f32.mrf.mxu0
        %5734 = vmatprep.mubr.f32.mxu0 0.0
        %5735 = vmatmul.mubr.f32.gmra.mxu0 %v5340
        %v5736 = vpop.f32.mrf.mxu0
        %v5737 = vadd.f32 %v5512, %v5736
        %v5738 = vpop.f32.mrf.mxu0
        %5739 = vmatprep.mubr.f32.mxu0 0.0
        %5740 = vmatmul.mubr.f32.gmra.mxu0 %v5343
        %v5741 = vpop.f32.mrf.mxu0
        %v5742 = vadd.f32 %v5517, %v5741
        %v5743 = vpop.f32.mrf.mxu0
        %5744 = vmatprep.mubr.f32.mxu0 0.0
        %5745 = vmatmul.mubr.f32.gmra.mxu0 %v5346
        %v5746 = vpop.f32.mrf.mxu0
        %v5747 = vadd.f32 %v5522, %v5746
        %v5748 = vpop.f32.mrf.mxu0
        %5749 = vmatprep.mubr.f32.mxu0 0.0
        %5750 = vmatmul.mubr.f32.gmra.mxu0 %v5349
        %v5751 = vpop.f32.mrf.mxu0
        %v5752 = vadd.f32 %v5527, %v5751
        %v5753 = vpop.f32.mrf.mxu0
        %5754 = vmatprep.mubr.f32.mxu0 0.0
        %5755 = vmatmul.mubr.f32.gmra.mxu0 %v5352
        %v5756 = vpop.f32.mrf.mxu0
        %v5757 = vadd.f32 %v5532, %v5756
        %v5758 = vpop.f32.mrf.mxu0
        %5759 = vmatprep.mubr.f32.mxu0 0.0
        %5760 = vmatmul.mubr.f32.gmra.mxu0 %v5355
        %v5761 = vpop.f32.mrf.mxu0
        %v5762 = vadd.f32 %v5537, %v5761
        %v5763 = vpop.f32.mrf.mxu0
        %5764 = vmatprep.mubr.f32.mxu0 0.0
        %5765 = vmatmul.mubr.f32.gmra.mxu0 %v5358
        %v5766 = vpop.f32.mrf.mxu0
        %v5767 = vadd.f32 %v5542, %v5766
        %v5768 = vpop.f32.mrf.mxu0
        %5769 = vmatprep.mubr.f32.mxu0 0.0
        %5770 = vmatmul.mubr.f32.gmra.mxu0 %v5361
        %v5771 = vpop.f32.mrf.mxu0
        %v5772 = vadd.f32 %v5547, %v5771
        %v5773 = vpop.f32.mrf.mxu0
        %5774 = vmatprep.mubr.f32.mxu0 0.0
        %5775 = vmatmul.mubr.f32.gmra.mxu0 %v5364
        %v5776 = vpop.f32.mrf.mxu0
        %v5777 = vadd.f32 %v5552, %v5776
        %v5778 = vpop.f32.mrf.mxu0
        %5779 = vmatprep.mubr.f32.mxu0 0.0
        %5780 = vmatmul.mubr.f32.gmra.mxu0 %v5367
        %v5781 = vpop.f32.mrf.mxu0
        %v5782 = vadd.f32 %v5557, %v5781
        %v5783 = vpop.f32.mrf.mxu0
        %5784 = vmatprep.mubr.f32.mxu0 0.0
        %5785 = vmatmul.mubr.f32.gmra.mxu0 %v5370
        %v5786 = vpop.f32.mrf.mxu0
        %v5787 = vadd.f32 %v5562, %v5786
        %v5788 = vpop.f32.mrf.mxu0
        %5789 = vmatprep.mubr.f32.mxu0 0.0
        %5790 = vmatmul.mubr.f32.gmra.mxu0 %v5373
        %v5791 = vpop.f32.mrf.mxu0
        %v5792 = vadd.f32 %v5567, %v5791
        %v5793 = vpop.f32.mrf.mxu0
        %5794 = vmatprep.mubr.f32.mxu0 0.0
        %5795 = vmatmul.mubr.f32.gmra.mxu0 %v5376
        %v5796 = vpop.f32.mrf.mxu0
        %v5797 = vadd.f32 %v5572, %v5796
        %v5798 = vpop.f32.mrf.mxu0
        %5799 = vmatprep.mubr.f32.mxu0 0.0
        %5800 = vmatmul.mubr.f32.gmra.mxu0 %v5379
        %v5801 = vpop.f32.mrf.mxu0
        %v5802 = vadd.f32 %v5577, %v5801
        %v5803 = vpop.f32.mrf.mxu0
        %5804 = vmatprep.mubr.f32.mxu0 0.0
        %5805 = vmatmul.mubr.f32.gmra.mxu0 %v5382
        %v5806 = vpop.f32.mrf.mxu0
        %v5807 = vadd.f32 %v5582, %v5806
        %v5808 = vpop.f32.mrf.mxu0
        %5809 = vmatprep.mubr.f32.mxu0 0.0
        %5810 = vmatmul.mubr.f32.gmra.mxu0 %v5385
        %v5811 = vpop.f32.mrf.mxu0
        %v5812 = vadd.f32 %v5587, %v5811
        %v5813 = vpop.f32.mrf.mxu0
        %5814 = vmatprep.mubr.f32.mxu0 0.0
        %5815 = vmatmul.mubr.f32.gmra.mxu0 %v5388
        %v5816 = vpop.f32.mrf.mxu0
        %v5817 = vadd.f32 %v5592, %v5816
        %v5818 = vpop.f32.mrf.mxu0
        %5819 = vmatprep.mubr.f32.mxu0 0.0
        %5820 = vmatmul.mubr.f32.gmra.mxu0 %v5391
        %v5821 = vpop.f32.mrf.mxu0
        %v5822 = vadd.f32 %v5597, %v5821
        %v5823 = vpop.f32.mrf.mxu0
        %5824 = vmatprep.mubr.f32.mxu0 0.0
        %5825 = vmatmul.mubr.f32.gmra.mxu0 %v5394
        %v5826 = vpop.f32.mrf.mxu0
        %v5827 = vadd.f32 %v5602, %v5826
        %v5828 = vpop.f32.mrf.mxu0
        %5829 = vmatprep.mubr.f32.mxu0 0.0
        %5830 = vmatmul.mubr.f32.gmra.mxu0 %v5397
        %v5831 = vpop.f32.mrf.mxu0
        %v5832 = vadd.f32 %v5607, %v5831
        %v5833 = vpop.f32.mrf.mxu0
        %5834 = vmatprep.mubr.f32.mxu0 0.0
        %5835 = vmatmul.mubr.f32.gmra.mxu0 %v5400
        %v5836 = vpop.f32.mrf.mxu0
        %v5837 = vadd.f32 %v5612, %v5836
        %v5838 = vpop.f32.mrf.mxu0
        %5839 = vmatprep.mubr.f32.mxu0 0.0
        %5840 = vmatmul.mubr.f32.gmra.mxu0 %v5403
        %v5841 = vpop.f32.mrf.mxu0
        %v5842 = vadd.f32 %v5617, %v5841
        %v5843 = vpop.f32.mrf.mxu0
        %5844 = vmatprep.mubr.f32.mxu0 0.0
        %5845 = vmatmul.mubr.f32.gmra.mxu0 %v5406
        %v5846 = vpop.f32.mrf.mxu0
        %v5847 = vadd.f32 %v5622, %v5846
        %v5848 = vpop.f32.mrf.mxu0
        %5849 = vmatprep.mubr.f32.mxu0 0.0
        %5850 = vmatmul.mubr.f32.gmra.mxu0 %v5409
        %v5851 = vpop.f32.mrf.mxu0
        %v5852 = vadd.f32 %v5627, %v5851
        %v5853 = vpop.f32.mrf.mxu0
        %5854 = vmatprep.mubr.f32.mxu0 0.0
        %5855 = vmatmul.mubr.f32.gmra.mxu0 %v5412
        %v5856 = vpop.f32.mrf.mxu0
        %v5857 = vadd.f32 %v5632, %v5856
        %v5858 = vpop.f32.mrf.mxu0
        %5859 = vmatprep.mubr.f32.mxu0 0.0
        %5860 = vmatmul.mubr.f32.gmra.mxu0 %v5415
        %v5861 = vpop.f32.mrf.mxu0
        %v5862 = vadd.f32 %v5637, %v5861
        %v5863 = vpop.f32.mrf.mxu0
        %5864 = vmatprep.mubr.f32.mxu0 0.0
        %5865 = vmatmul.mubr.f32.gmra.mxu0 %v5418
        %v5866 = vpop.f32.mrf.mxu0
        %v5867 = vadd.f32 %v5642, %v5866
        %v5868 = vpop.f32.mrf.mxu0
        %5869 = vdwg.mxu0
        %v5870 = vmax.f32 %v5712, 0.0
        %v5871 = vmax.f32 %v5717, 0.0
        %v5872 = vmax.f32 %v5722, 0.0
        %v5873 = vmax.f32 %v5727, 0.0
        %v5874 = vmax.f32 %v5732, 0.0
        %v5875 = vmax.f32 %v5737, 0.0
        %v5876 = vmax.f32 %v5742, 0.0
        %v5877 = vmax.f32 %v5747, 0.0
        %v5878 = vmax.f32 %v5752, 0.0
        %v5879 = vmax.f32 %v5757, 0.0
        %v5880 = vmax.f32 %v5762, 0.0
        %v5881 = vmax.f32 %v5767, 0.0
        %v5882 = vmax.f32 %v5772, 0.0
        %v5883 = vmax.f32 %v5777, 0.0
        %v5884 = vmax.f32 %v5782, 0.0
        %v5885 = vmax.f32 %v5787, 0.0
        %v5886 = vmax.f32 %v5792, 0.0
        %v5887 = vmax.f32 %v5797, 0.0
        %v5888 = vmax.f32 %v5802, 0.0
        %v5889 = vmax.f32 %v5807, 0.0
        %v5890 = vmax.f32 %v5812, 0.0
        %v5891 = vmax.f32 %v5817, 0.0
        %v5892 = vmax.f32 %v5822, 0.0
        %v5893 = vmax.f32 %v5827, 0.0
        %v5894 = vmax.f32 %v5832, 0.0
        %v5895 = vmax.f32 %v5837, 0.0
        %v5896 = vmax.f32 %v5842, 0.0
        %v5897 = vmax.f32 %v5847, 0.0
        %v5898 = vmax.f32 %v5852, 0.0
        %v5899 = vmax.f32 %v5857, 0.0
        %v5900 = vmax.f32 %v5862, 0.0
        %v5901 = vmax.f32 %v5867, 0.0
        %5902 = vst.msk [vmem:[%s316] sm:$0xff] %vm317, %v5870
        %5903 = vst.msk [vmem:[%s316 + $0x8] sm:$0xff] %vm317, %v5871
        %5904 = vst.msk [vmem:[%s316 + $0x10] sm:$0xff] %vm317, %v5872
        %5905 = vst.msk [vmem:[%s316 + $0x18] sm:$0xff] %vm317, %v5873
        %5906 = vst.msk [vmem:[%s316 + $0x20] sm:$0xff] %vm317, %v5874
        %5907 = vst.msk [vmem:[%s316 + $0x28] sm:$0xff] %vm317, %v5875
        %5908 = vst.msk [vmem:[%s316 + $0x30] sm:$0xff] %vm317, %v5876
        %5909 = vst.msk [vmem:[%s316 + $0x38] sm:$0xff] %vm317, %v5877
        %5910 = vst.msk [vmem:[%s316 + $0x40] sm:$0xff] %vm317, %v5878
        %5911 = vst.msk [vmem:[%s316 + $0x48] sm:$0xff] %vm317, %v5879
        %5912 = vst.msk [vmem:[%s316 + $0x50] sm:$0xff] %vm317, %v5880
        %5913 = vst.msk [vmem:[%s316 + $0x58] sm:$0xff] %vm317, %v5881
        %5914 = vst.msk [vmem:[%s316 + $0x60] sm:$0xff] %vm317, %v5882
        %5915 = vst.msk [vmem:[%s316 + $0x68] sm:$0xff] %vm317, %v5883
        %5916 = vst.msk [vmem:[%s316 + $0x70] sm:$0xff] %vm317, %v5884
        %5917 = vst.msk [vmem:[%s316 + $0x78] sm:$0xff] %vm317, %v5885
        %5918 = vst.msk [vmem:[%s316 + $0x80] sm:$0xff] %vm317, %v5886
        %5919 = vst.msk [vmem:[%s316 + $0x88] sm:$0xff] %vm317, %v5887
        %5920 = vst.msk [vmem:[%s316 + $0x90] sm:$0xff] %vm317, %v5888
        %5921 = vst.msk [vmem:[%s316 + $0x98] sm:$0xff] %vm317, %v5889
        %5922 = vst.msk [vmem:[%s316 + $0xa0] sm:$0xff] %vm317, %v5890
        %5923 = vst.msk [vmem:[%s316 + $0xa8] sm:$0xff] %vm317, %v5891
        %5924 = vst.msk [vmem:[%s316 + $0xb0] sm:$0xff] %vm317, %v5892
        %5925 = vst.msk [vmem:[%s316 + $0xb8] sm:$0xff] %vm317, %v5893
        %5926 = vst.msk [vmem:[%s316 + $0xc0] sm:$0xff] %vm317, %v5894
        %5927 = vst.msk [vmem:[%s316 + $0xc8] sm:$0xff] %vm317, %v5895
        %5928 = vst.msk [vmem:[%s316 + $0xd0] sm:$0xff] %vm317, %v5896
        %5929 = vst.msk [vmem:[%s316 + $0xd8] sm:$0xff] %vm317, %v5897
        %5930 = vst.msk [vmem:[%s316 + $0xe0] sm:$0xff] %vm317, %v5898
        %5931 = vst.msk [vmem:[%s316 + $0xe8] sm:$0xff] %vm317, %v5899
        %5932 = vst.msk [vmem:[%s316 + $0xf0] sm:$0xff] %vm317, %v5900
        %5933 = vst.msk [vmem:[%s316 + $0xf8] sm:$0xff] %vm317, %v5901
        %p5934 = scmp.lt.s32.totalorder %s20, 1
        %s5935 = scalar_select %p5934, %s20, 1
        %s5936 = smul.addr %s5935, 32
        %s5937 = smul.addr %s5936, 8
        %s5938 = scalar_lea.vmem %s7, %s5937
        // Predicated region
        $region61: #{my_model_forward.2} parent=47 // pred_check
          %p5939 = pneg %p190
        $region62: #{my_model_forward.2} parent=47 // pred_check_branch
          %5941 = sbr.rel (%p5939) target = $region64
        $region63: #{my_model_forward.2} parent=47 // pred_region
          _
        $region64: #{my_model_forward.2} parent=47 // pred_fallthru
          _
      $region48: #{my_model_forward.2} parent=5 // pred_fallthru
        _
      %p5942 = scmp.le.s32.totalorder 2, %s15
      // Predicated region
      $region65: #{my_model_forward.2} parent=5 // pred_check
        %p5943 = pneg %p5942
      $region66: #{my_model_forward.2} parent=5 // pred_check_branch
        %5945 = sbr.rel (%p5943) target = $region68
      $region67: #{my_model_forward.2} parent=5 // pred_region
        %s5946 = ssub.s32 %s15, 2
        // Predicated region
        $region69: #{my_model_forward.2} parent=67 // pred_check
          %p5947 = pneg %p196
        $region70: #{my_model_forward.2} parent=67 // pred_check_branch
          %5949 = sbr.rel (%p5947) target = $region72
        $region71: #{my_model_forward.2} parent=67 // pred_region
          %p5950 = scmp.lt.s32.totalorder %s21, 1
          %s5951 = scalar_select %p5950, %s21, 1
          %s5952 = smul.addr %s5951, 32
          %s5953 = smul.addr %s5952, 8
          %s5954 = scalar_lea.vmem %s7, %s5953
        $region72: #{my_model_forward.2} parent=67 // pred_fallthru
          _
      $region68: #{my_model_forward.2} parent=5 // pred_fallthru
        _
    $region6: #{my_model_forward.2} parent=1 // loop_footer
      %s19 = sadd.s32 1, %s15
    $region7: #{my_model_forward.2} parent=1 // loop_footer_branch
      %14 = sbr.rel target = $region3
    $region8: #{my_model_forward.2} parent=1 // loop_exit
      _
    %5955 = vsyncpa [#allocation5], 1
    %s5956 = scalar_lea.sflag [#allocation5], 1
    %5957 = vsyncpa %s5956, 1
    %5958 = vsyncpa [#allocation7], 1

</llo_original>
